<compile_context>
chip_gen: v5e
topology: v5e:2x2
jax: 0.10.0
libtpu: 0.0.40
codegen_flags: <defaults>
</compile_context>

<pallas_src>
import math

import jax
import jax.numpy as jnp
from jax.experimental import pallas as pl
from jax.experimental.pallas import tpu as pltpu


# Explicit scoped-VMEM budget: above the 16/32 MiB defaults, below v7x's
# 64 MiB physical per-TensorCore VMEM (v5e/v6e have 128 MiB physical).
_VMEM_LIMIT_BYTES = 48 * 1024 * 1024


def _compiler_params(semantics):
    return pltpu.CompilerParams(dimension_semantics=semantics,
                                vmem_limit_bytes=_VMEM_LIMIT_BYTES)


# ---------------------------------------------------------------------------
# Host-side layout prep (plain JAX glue, static shapes only)
# ---------------------------------------------------------------------------
def _pad_dhw(x, p):
    if p == 0:
        return x
    return jnp.pad(x, ((0, 0), (p, p), (p, p), (p, p), (0, 0)))


def _im2col_w(x, K, p):
    """(N,D,H,W,C) -> (N, Dp, Hp*W, K*C) bf16.

    Zero-pad D/H/W by p, im2col along W only (factor K, not K^3), flatten
    (Hp, W) so for tap kh the A rows of one padded depth plane are the
    contiguous range [kh*W, kh*W + H*W).  Column layout: kw*C + ci.
    """
    N, D, H, W, C = x.shape
    xp = _pad_dhw(x, p)
    if K > 1:
        xp = jnp.concatenate([xp[:, :, :, kw:kw + W, :] for kw in range(K)],
                             axis=-1)
    Dp, Hp = D + 2 * p, H + 2 * p
    return xp.reshape(N, Dp, Hp * W, K * C).astype(jnp.bfloat16)


def _im2col_hw(x, K, p):
    """(N,D,H,W,C) -> (N, Dp, H*W, K*K*C) bf16 (H and W im2col; rows are the
    output pixels).  Column layout: (kh*K + kw)*C + ci."""
    N, D, H, W, C = x.shape
    xp = _pad_dhw(x, p)
    cols = [xp[:, :, kh:kh + H, kw:kw + W, :]
            for kh in range(K) for kw in range(K)]
    a = jnp.concatenate(cols, axis=-1)
    return a.reshape(N, D + 2 * p, H * W, K * K * C).astype(jnp.bfloat16)


def _prep_tap_weight(w):
    """Torch Conv3d weight (Cout, Cin, K, K, K) -> (K*K, K*Cin, Cout) bf16,
    row = kd*K + kh, column = kw*Cin + ci (matches _im2col_w ordering)."""
    Cout, Cin, K, _, _ = w.shape
    wt = jnp.transpose(w, (2, 3, 4, 1, 0))              # (kd, kh, kw, ci, co)
    return wt.reshape(K * K, K * Cin, Cout).astype(jnp.bfloat16)


def _prep_full_tap_weight(w):
    """(Cout, Cin, K, K, K) -> (K, K*K*Cin, Cout) bf16 (H&W-im2col path)."""
    Cout, Cin, K, _, _ = w.shape
    wt = jnp.transpose(w, (2, 3, 4, 1, 0))
    return wt.reshape(K, K * K * Cin, Cout).astype(jnp.bfloat16)


def _pick_row_tile(hw, max_rows=512):
    if hw <= max_rows:
        return hw
    for t in range(max_rows, 7, -1):
        if hw % t == 0 and t % 8 == 0:
            return t
    return hw


# ---------------------------------------------------------------------------
# Plane-resident fused conv kernel (kh taps in-kernel, kd on the grid)
# ---------------------------------------------------------------------------
def _make_plane_kernel(K, W, hw, cout, n_ops, has_proj, has_pass, n_valid,
                       acc_in_scratch):
    """Ref order:
       a_0..a_{n-1}   (1, 1, Hp*W, K*Ci)   bf16 padded depth plane (W-im2col)
       [w_proj]       (K*Cp, K*Cproj)      bf16 block-diag 1x1x1 projection
       w_0..w_{n-1}   (K*K, K*Ci, Cout)    bf16, row = kd*K + kh
       bias           (1, Cout)            f32
       [pass]         (1, 1, hw, Cpass)    f32 raw-flow passthrough
       out            (1, 1, hw, Cout)
       [acc]          (hw, Cout)           f32 scratch (bf16-output layers)
       [proj]         (Hp*W, K*Cproj)      bf16 scratch (projected planes)
    """

    def kernel(*refs):
        i = 0
        a_refs = refs[i:i + n_ops]; i += n_ops
        wproj_ref = None
        if has_proj:
            wproj_ref = refs[i]; i += 1
        w_refs = refs[i:i + n_ops]; i += n_ops
        b_ref = refs[i]; i += 1
        pass_ref = None
        if has_pass:
            pass_ref = refs[i]; i += 1
        o_ref = refs[i]; i += 1
        acc_ref = None
        if acc_in_scratch:
            acc_ref = refs[i]; i += 1
        proj_ref = refs[i] if has_proj else None

        kd = pl.program_id(2)

        def acc_get():
            return acc_ref[...] if acc_in_scratch else o_ref[0, 0]

        def acc_set(v):
            if acc_in_scratch:
                acc_ref[...] = v
            else:
                o_ref[0, 0] = v.astype(o_ref.dtype)

        @pl.when(kd == 0)
        def _init():
            acc_set(jnp.zeros((hw, cout), jnp.float32))

        # Optional fused 1x1x1 projection (convc1): one block-diagonal dot
        # turns the K w-shifted low-channel planes into K w-shifted projected
        # 256-channel planes, ReLU'd once and stored as bf16.
        if has_proj:
            pj = jnp.dot(a_refs[0][0, 0], wproj_ref[...],
                         preferred_element_type=jnp.float32)
            proj_ref[...] = jnp.maximum(pj, 0.0).astype(proj_ref.dtype)

        for op in range(n_ops):
            if has_proj and op == 0:
                src = lambda kh: proj_ref[kh * W:kh * W + hw, :]
            else:
                a_r = a_refs[op]
                src = lambda kh, a_r=a_r: a_r[0, 0, kh * W:kh * W + hw, :]
            w_r = w_refs[op]
            for kh in range(K):
                t = jnp.dot(src(kh), w_r[kd * K + kh],
                            preferred_element_type=jnp.float32)
                acc_set(acc_get() + t)

        @pl.when(kd == K - 1)
        def _finalize():
            res = jnp.maximum(acc_get() + b_ref[...], 0.0)
            if has_pass:
                # Exact f32 raw-flow passthrough into the padded tail columns.
                fp = pass_ref[0, 0].astype(res.dtype)
                res = jnp.concatenate([res[:, :n_valid], fp], axis=-1)
            o_ref[0, 0] = res.astype(o_ref.dtype)

    return kernel


def _plane_conv(xs, tap_ws, bias, *, K, p, out_dtype,
                proj_w=None, passthrough=None, n_valid=None):
    """Fused Conv3d(+channel concat of xs) + bias + ReLU, stride 1, 'same' p.

    Grid = (N, D, K): one padded depth plane resident per step, kd innermost
    accumulation axis; kh taps are in-kernel sublane slices, kw taps live in
    the im2col'd channel axis.  bf16 MXU, f32 accumulation.
    """
    N, D, H, W, _ = xs[0].shape
    hw = H * W
    Hp = H + 2 * p
    Cout = tap_ws[0].shape[-1]

    a_list = [_im2col_w(x, K, p) for x in xs]
    b2 = bias.reshape(1, Cout).astype(jnp.float32)

    has_proj = proj_w is not None
    has_pass = passthrough is not None
    acc_in_scratch = out_dtype != jnp.float32   # f32 output doubles as the acc
    if has_pass:
        assert n_valid + passthrough.shape[-1] == Cout

    operands = list(a_list)
    in_specs = [pl.BlockSpec((1, 1, Hp * W, a.shape[-1]),
                             lambda n, d, kd: (n, d + kd, 0, 0))
                for a in a_list]
    if has_proj:
        operands.append(proj_w)
        in_specs.append(pl.BlockSpec(proj_w.shape, lambda n, d, kd: (0, 0),
                                     pipeline_mode=pl.Buffered(1)))
    for wm in tap_ws:
        operands.append(wm)
        in_specs.append(pl.BlockSpec(wm.shape, lambda n, d, kd: (0, 0, 0),
                                     pipeline_mode=pl.Buffered(1)))
    operands.append(b2)
    in_specs.append(pl.BlockSpec(b2.shape, lambda n, d, kd: (0, 0),
                                 pipeline_mode=pl.Buffered(1)))
    if has_pass:
        pt = passthrough.reshape(N, D, hw,
                                 passthrough.shape[-1]).astype(jnp.float32)
        operands.append(pt)
        in_specs.append(pl.BlockSpec((1, 1, hw, pt.shape[-1]),
                                     lambda n, d, kd: (n, d, 0, 0)))

    scratch = []
    if acc_in_scratch:
        scratch.append(pltpu.VMEM((hw, Cout), jnp.float32))
    if has_proj:
        scratch.append(pltpu.VMEM((Hp * W, proj_w.shape[-1]), jnp.bfloat16))

    kernel = _make_plane_kernel(K, W, hw, Cout, len(a_list), has_proj,
                                has_pass, n_valid, acc_in_scratch)

    out = pl.pallas_call(
        kernel,
        out_shape=jax.ShapeDtypeStruct((N, D, hw, Cout), out_dtype),
        grid=(N, D, K),
        in_specs=in_specs,
        out_specs=pl.BlockSpec((1, 1, hw, Cout), lambda n, d, kd: (n, d, 0, 0)),
        scratch_shapes=scratch,
        compiler_params=_compiler_params(("parallel", "parallel", "arbitrary")),
    )(*operands)
    return out.reshape(N, D, H, W, Cout)


# ---------------------------------------------------------------------------
# Row-tiled conv kernel with full H&W im2col (used for convf1, Cin=3, K=7)
# ---------------------------------------------------------------------------
def _dense_tap_conv(x, w_torch, bias, *, p, out_dtype, max_rows=512):
    """Conv3d + bias + ReLU with contraction K*K*Cin (feeds the 256-deep MXU)
    and row-tiled outputs; kd is the only reduction grid axis."""
    Cout, Cin, K, _, _ = w_torch.shape
    N, D, H, W, _ = x.shape
    hw = H * W

    a = _im2col_hw(x, K, p)                        # (N, Dp, hw, K*K*Cin) bf16
    wk = _prep_full_tap_weight(w_torch)            # (K, K*K*Cin, Cout)   bf16
    b2 = bias.reshape(1, Cout).astype(jnp.float32)

    tm = _pick_row_tile(hw, max_rows)

    def kernel(a_ref, w_ref, b_ref, o_ref, acc_ref):
        kd = pl.program_id(3)

        @pl.when(kd == 0)
        def _init():
            acc_ref[...] = jnp.zeros_like(acc_ref)

        acc_ref[...] += jnp.dot(a_ref[0, 0], w_ref[kd],
                                preferred_element_type=jnp.float32)

        @pl.when(kd == K - 1)
        def _finalize():
            o_ref[0, 0] = jnp.maximum(acc_ref[...] + b_ref[...],
                                      0.0).astype(o_ref.dtype)

    out = pl.pallas_call(
        kernel,
        out_shape=jax.ShapeDtypeStruct((N, D, hw, Cout), out_dtype),
        grid=(N, D, hw // tm, K),
        in_specs=[
            pl.BlockSpec((1, 1, tm, a.shape[-1]),
                         lambda n, d, r, kd: (n, d + kd, r, 0)),
            pl.BlockSpec(wk.shape, lambda n, d, r, kd: (0, 0, 0),
                         pipeline_mode=pl.Buffered(1)),
            pl.BlockSpec(b2.shape, lambda n, d, r, kd: (0, 0),
                         pipeline_mode=pl.Buffered(1)),
        ],
        out_specs=pl.BlockSpec((1, 1, tm, Cout),
                               lambda n, d, r, kd: (n, d, r, 0)),
        scratch_shapes=[pltpu.VMEM((tm, Cout), jnp.float32)],
        compiler_params=_compiler_params(
            ("parallel", "parallel", "parallel", "arbitrary")),
    )(a, wk, b2)
    return out.reshape(N, D, H, W, Cout)


# ---------------------------------------------------------------------------
# MotionEncoder3D parameters + forward
# ---------------------------------------------------------------------------
def init_params(key, cor_planes):
    layer_defs = {
        "convc1": (256, cor_planes, 1),
        "convc2": (128, 256, 3),
        "convf1": (128, 3, 7),
        "convf2": (64, 128, 3),
        "conv":   (64 - 3, 64 + 128, 3),
    }
    params = {}
    keys = jax.random.split(key, len(layer_defs))
    for (name, (cout, cin, k)), kk in zip(layer_defs.items(), keys):
        wkey, bkey = jax.random.split(kk)
        bound = 1.0 / math.sqrt(cin * k ** 3)   # PyTorch default uniform bound
        params[name + "_w"] = jax.random.uniform(
            wkey, (cout, cin, k, k, k), jnp.float32, -bound, bound)
        params[name + "_b"] = jax.random.uniform(
            bkey, (cout,), jnp.float32, -bound, bound)
    return params


def motion_encoder_3d(params, flow, corr):
    """flow: (N, 3, D, H, W), corr: (N, cor_planes, D, H, W) — PyTorch NCDHW.
    Returns (N, 64, D, H, W), matching torch.cat([conv_out, flow], dim=1)."""
    flow_cl = jnp.transpose(flow, (0, 2, 3, 4, 1))   # NDHWC
    corr_cl = jnp.transpose(corr, (0, 2, 3, 4, 1))

    # --- fused convc1 (1x1x1, 27->256) + convc2 (3x3x3, 256->128) ----------
    # A constant indicator channel folds convc1's bias into the weight so the
    # zero-padded halo stays exactly zero after the in-kernel projection.
    ones = jnp.ones(corr_cl.shape[:-1] + (1,), corr_cl.dtype)
    corr_aug = jnp.concatenate([corr_cl, ones], axis=-1)           # (..., 28)

    w1 = params["convc1_w"][:, :, 0, 0, 0]                         # (256, 27)
    w1_aug = jnp.concatenate([w1.T, params["convc1_b"][None, :]],
                             axis=0)                               # (28, 256)
    K2, cpin, cproj = 3, w1_aug.shape[0], w1_aug.shape[1]
    w1_bd = jnp.zeros((K2 * cpin, K2 * cproj), jnp.float32)
    for kw in range(K2):
        w1_bd = w1_bd.at[kw * cpin:(kw + 1) * cpin,
                         kw * cproj:(kw + 1) * cproj].set(w1_aug)
    w1_bd = w1_bd.astype(jnp.bfloat16)

    cor = _plane_conv([corr_aug], [_prep_tap_weight(params["convc2_w"])],
                      params["convc2_b"], K=3, p=1, out_dtype=jnp.bfloat16,
                      proj_w=w1_bd)

    # --- convf1 (7x7x7, 3->128): H&W im2col -> contraction 147 -------------
    flo = _dense_tap_conv(flow_cl, params["convf1_w"], params["convf1_b"],
                          p=3, out_dtype=jnp.bfloat16)
    # --- convf2 (3x3x3, 128->64) --------------------------------------------
    flo = _plane_conv([flo], [_prep_tap_weight(params["convf2_w"])],
                      params["convf2_b"], K=3, p=1, out_dtype=jnp.bfloat16)

    # --- final conv (3x3x3, 192->61) + fused torch.cat([out, flow], dim=1) --
    # cor/flo channel concat fused as two operands, Cout padded 61 -> 64
    # (lane-dense), raw flow copied into columns 61..63 at finalize (exact).
    w = params["conv_w"]                     # (61, 192, 3, 3, 3)
    w_pad = jnp.pad(w, ((0, 3), (0, 0), (0, 0), (0, 0), (0, 0)))
    b_pad = jnp.pad(params["conv_b"], (0, 3))
    out = _plane_conv(
        [cor, flo],
        [_prep_tap_weight(w_pad[:, :128]), _prep_tap_weight(w_pad[:, 128:])],
        b_pad, K=3, p=1, out_dtype=jnp.float32,
        passthrough=flow_cl, n_valid=61)

    return jnp.transpose(out, (0, 4, 1, 2, 3))       # back to NCDHW


# ---------------------------------------------------------------------------
if __name__ == "__main__":
    corr_levels, corr_radius = 1, 1
    cor_planes = corr_levels * (2 * corr_radius + 1) ** 3   # 27
    N, D, H, W = 2, 4, 8, 8

    key = jax.random.PRNGKey(0)
    pkey, fkey, ckey = jax.random.split(key, 3)

    params = init_params(pkey, cor_planes)
    flow = jax.random.normal(fkey, (N, 3, D, H, W), jnp.float32)
    corr = jax.random.normal(ckey, (N, cor_planes, D, H, W), jnp.float32)

    out = jax.jit(motion_encoder_3d)(params, flow, corr)
    jax.block_until_ready(out)

    assert out.shape == (N, 64, D, H, W), out.shape
    assert out.dtype == jnp.float32
    # The raw-flow passthrough (channels 61..63) is routed through an f32
    # direct copy and must be bit-exact.
    assert bool(jnp.all(out[:, 61:64] == flow)), "flow passthrough mismatch"
    print("KERNEL_OK")
</pallas_src>

<mosaic_0001>
module attributes {stable_mosaic.version = 11 : i64} {
  func.func @kernel(%arg0: i32, %arg1: i32, %arg2: i32, %arg3: i32, %arg4: memref<1x1x64x147xbf16, #tpu.memory_space<vmem>>, %arg5: memref<7x147x128xbf16, #tpu.memory_space<vmem>>, %arg6: memref<1x128xf32, #tpu.memory_space<vmem>>, %arg7: memref<1x1x64x128xbf16, #tpu.memory_space<vmem>>, %arg8: memref<64x128xf32, #tpu.memory_space<vmem>>) attributes {dimension_semantics = [#tpu.dimension_semantics<parallel>, #tpu.dimension_semantics<parallel>, #tpu.dimension_semantics<parallel>, #tpu.dimension_semantics<arbitrary>], iteration_bounds = array<i64: 2, 4, 1, 7>, scalar_prefetch = 0 : i64, scratch_operands = 1 : i64, tpu.core_type = #tpu.core_type<tc>, window_params = [{transform_indices = @transform_0, window_bounds = array<i64: 1, 1, 64, 147>}, {pipeline_mode = #tpu.pipeline_mode<synchronous>, transform_indices = @transform_1, window_bounds = array<i64: 7, 147, 128>}, {pipeline_mode = #tpu.pipeline_mode<synchronous>, transform_indices = @transform_2, window_bounds = array<i64: 1, 128>}, {transform_indices = @transform_3, window_bounds = array<i64: 1, 1, 64, 128>}]} {
    %c0_i32 = arith.constant 0 : i32
    %0 = arith.cmpi eq, %arg3, %c0_i32 : i32
    %1 = arith.extui %0 : i1 to i32
    %c0_i32_0 = arith.constant 0 : i32
    %2 = arith.cmpi ne, %1, %c0_i32_0 : i32
    scf.if %2 {
      %cst_11 = arith.constant 0.000000e+00 : f32
      %15 = vector.broadcast %cst_11 : f32 to vector<64x128xf32>
      %c0_12 = arith.constant 0 : index
      %c0_13 = arith.constant 0 : index
      %16 = vector.load %arg8[%c0_12, %c0_13] : memref<64x128xf32, #tpu.memory_space<vmem>>, vector<64x128xf32>
      tpu.vector_store %arg8[%c0_12, %c0_13], %15 {strides = array<i32>} : memref<64x128xf32, #tpu.memory_space<vmem>>, vector<64x128xf32>,
    } else {
    }
    %c0 = arith.constant 0 : index
    %c0_1 = arith.constant 0 : index
    %3 = vector.load %arg8[%c0, %c0_1] : memref<64x128xf32, #tpu.memory_space<vmem>>, vector<64x128xf32>
    %c0_2 = arith.constant 0 : index
    %c0_3 = arith.constant 0 : index
    %c0_4 = arith.constant 0 : index
    %c0_5 = arith.constant 0 : index
    %4 = vector.load %arg4[%c0_2, %c0_3, %c0_4, %c0_5] : memref<1x1x64x147xbf16, #tpu.memory_space<vmem>>, vector<1x1x64x147xbf16>
    %5 = vector.shape_cast %4 : vector<1x1x64x147xbf16> to vector<64x147xbf16>
    %6 = arith.index_cast %arg3 : i32 to index
    %c0_6 = arith.constant 0 : index
    %c0_7 = arith.constant 0 : index
    %7 = vector.load %arg5[%6, %c0_6, %c0_7] : memref<7x147x128xbf16, #tpu.memory_space<vmem>>, vector<1x147x128xbf16>
    %8 = vector.shape_cast %7 : vector<1x147x128xbf16> to vector<147x128xbf16>
    %cst = arith.constant dense<0.000000e+00> : vector<64x128xf32>
    %9 = tpu.matmul %5, %8, %cst {dimension_numbers = #tpu.dot_dimension_numbers<[1], [0], [0], [1], [0, 0, 1, 1], [], []>} : vector<64x147xbf16>, vector<147x128xbf16>, vector<64x128xf32> -> vector<64x128xf32>
    %10 = arith.addf %3, %9 : vector<64x128xf32>
    %c0_8 = arith.constant 0 : index
    %c0_9 = arith.constant 0 : index
    %11 = vector.load %arg8[%c0_8, %c0_9] : memref<64x128xf32, #tpu.memory_space<vmem>>, vector<64x128xf32>
    tpu.vector_store %arg8[%c0_8, %c0_9], %10 {strides = array<i32>} : memref<64x128xf32, #tpu.memory_space<vmem>>, vector<64x128xf32>,
    %c6_i32 = arith.constant 6 : i32
    %12 = arith.cmpi eq, %arg3, %c6_i32 : i32
    %13 = arith.extui %12 : i1 to i32
    %c0_i32_10 = arith.constant 0 : i32
    %14 = arith.cmpi ne, %13, %c0_i32_10 : i32
    scf.if %14 {
      %c0_11 = arith.constant 0 : index
      %c0_12 = arith.constant 0 : index
      %15 = vector.load %arg8[%c0_11, %c0_12] : memref<64x128xf32, #tpu.memory_space<vmem>>, vector<64x128xf32>
      %c0_13 = arith.constant 0 : index
      %c0_14 = arith.constant 0 : index
      %16 = vector.load %arg6[%c0_13, %c0_14] : memref<1x128xf32, #tpu.memory_space<vmem>>, vector<1x128xf32>
      %17 = vector.broadcast %16 : vector<1x128xf32> to vector<64x128xf32>
      %18 = arith.addf %15, %17 : vector<64x128xf32>
      %cst_15 = arith.constant 0.000000e+00 : f32
      %19 = vector.broadcast %cst_15 : f32 to vector<64x128xf32>
      %20 = arith.maximumf %18, %19 : vector<64x128xf32>
      %21 = arith.truncf %20 : vector<64x128xf32> to vector<64x128xbf16>
      %c0_16 = arith.constant 0 : index
      %c0_17 = arith.constant 0 : index
      %c0_18 = arith.constant 0 : index
      %c0_19 = arith.constant 0 : index
      %22 = vector.load %arg7[%c0_16, %c0_17, %c0_18, %c0_19] : memref<1x1x64x128xbf16, #tpu.memory_space<vmem>>, vector<1x1x64x128xbf16>
      %23 = vector.shape_cast %22 : vector<1x1x64x128xbf16> to vector<64x128xbf16>
      %24 = vector.shape_cast %21 : vector<64x128xbf16> to vector<1x1x64x128xbf16>
      tpu.vector_store %arg7[%c0_16, %c0_17, %c0_18, %c0_19], %24 {strides = array<i32>} : memref<1x1x64x128xbf16, #tpu.memory_space<vmem>>, vector<1x1x64x128xbf16>,
    } else {
    }
    return
  }
  func.func @transform_0(%arg0: i32, %arg1: i32, %arg2: i32, %arg3: i32) -> (i32, i32, i32, i32) {
    %0 = arith.addi %arg1, %arg3 : i32
    %c0_i32 = arith.constant 0 : i32
    %c0_i32_0 = arith.constant 0 : i32
    return %arg0, %0, %arg2, %c0_i32 : i32, i32, i32, i32
  }
  func.func @transform_1(%arg0: i32, %arg1: i32, %arg2: i32, %arg3: i32) -> (i32, i32, i32) {
    %c0_i32 = arith.constant 0 : i32
    %c0_i32_0 = arith.constant 0 : i32
    %c0_i32_1 = arith.constant 0 : i32
    %c0_i32_2 = arith.constant 0 : i32
    return %c0_i32, %c0_i32_0, %c0_i32_1 : i32, i32, i32
  }
  func.func @transform_2(%arg0: i32, %arg1: i32, %arg2: i32, %arg3: i32) -> (i32, i32) {
    %c0_i32 = arith.constant 0 : i32
    %c0_i32_0 = arith.constant 0 : i32
    %c0_i32_1 = arith.constant 0 : i32
    return %c0_i32, %c0_i32_0 : i32, i32
  }
  func.func @transform_3(%arg0: i32, %arg1: i32, %arg2: i32, %arg3: i32) -> (i32, i32, i32, i32) {
    %c0_i32 = arith.constant 0 : i32
    %c0_i32_0 = arith.constant 0 : i32
    return %arg0, %arg1, %arg2, %c0_i32 : i32, i32, i32, i32
  }
}

module attributes {stable_mosaic.version = 11 : i64} {
  func.func @kernel(%arg0: i32, %arg1: i32, %arg2: i32, %arg3: memref<1x1x80x384xbf16, #tpu.memory_space<vmem>>, %arg4: memref<9x384x64xbf16, #tpu.memory_space<vmem>>, %arg5: memref<1x64xf32, #tpu.memory_space<vmem>>, %arg6: memref<1x1x64x64xbf16, #tpu.memory_space<vmem>>, %arg7: memref<64x64xf32, #tpu.memory_space<vmem>>) attributes {dimension_semantics = [#tpu.dimension_semantics<parallel>, #tpu.dimension_semantics<parallel>, #tpu.dimension_semantics<arbitrary>], iteration_bounds = array<i64: 2, 4, 3>, scalar_prefetch = 0 : i64, scratch_operands = 1 : i64, tpu.core_type = #tpu.core_type<tc>, window_params = [{transform_indices = @transform_0, window_bounds = array<i64: 1, 1, 80, 384>}, {pipeline_mode = #tpu.pipeline_mode<synchronous>, transform_indices = @transform_1, window_bounds = array<i64: 9, 384, 64>}, {pipeline_mode = #tpu.pipeline_mode<synchronous>, transform_indices = @transform_2, window_bounds = array<i64: 1, 64>}, {transform_indices = @transform_3, window_bounds = array<i64: 1, 1, 64, 64>}]} {
    %c0_i32 = arith.constant 0 : i32
    %0 = arith.cmpi eq, %arg2, %c0_i32 : i32
    %1 = arith.extui %0 : i1 to i32
    %c0_i32_0 = arith.constant 0 : i32
    %2 = arith.cmpi ne, %1, %c0_i32_0 : i32
    scf.if %2 {
      %cst_35 = arith.constant 0.000000e+00 : f32
      %39 = vector.broadcast %cst_35 : f32 to vector<64x64xf32>
      %c0_36 = arith.constant 0 : index
      %c0_37 = arith.constant 0 : index
      %40 = vector.load %arg7[%c0_36, %c0_37] : memref<64x64xf32, #tpu.memory_space<vmem>>, vector<64x64xf32>
      tpu.vector_store %arg7[%c0_36, %c0_37], %39 {strides = array<i32>} : memref<64x64xf32, #tpu.memory_space<vmem>>, vector<64x64xf32>,
    } else {
    }
    %c0 = arith.constant 0 : index
    %c0_1 = arith.constant 0 : index
    %c0_2 = arith.constant 0 : index
    %c0_3 = arith.constant 0 : index
    %3 = vector.load %arg3[%c0, %c0_1, %c0_2, %c0_3] : memref<1x1x80x384xbf16, #tpu.memory_space<vmem>>, vector<1x1x64x384xbf16>
    %4 = vector.shape_cast %3 : vector<1x1x64x384xbf16> to vector<64x384xbf16>
    %c3_i32 = arith.constant 3 : i32
    %5 = arith.muli %arg2, %c3_i32 : i32
    %c0_i32_4 = arith.constant 0 : i32
    %6 = arith.addi %5, %c0_i32_4 : i32
    %7 = arith.index_cast %6 : i32 to index
    %c0_5 = arith.constant 0 : index
    %c0_6 = arith.constant 0 : index
    %8 = vector.load %arg4[%7, %c0_5, %c0_6] : memref<9x384x64xbf16, #tpu.memory_space<vmem>>, vector<1x384x64xbf16>
    %9 = vector.shape_cast %8 : vector<1x384x64xbf16> to vector<384x64xbf16>
    %cst = arith.constant dense<0.000000e+00> : vector<64x64xf32>
    %10 = tpu.matmul %4, %9, %cst {dimension_numbers = #tpu.dot_dimension_numbers<[1], [0], [0], [1], [0, 0, 1, 1], [], []>} : vector<64x384xbf16>, vector<384x64xbf16>, vector<64x64xf32> -> vector<64x64xf32>
    %c0_7 = arith.constant 0 : index
    %c0_8 = arith.constant 0 : index
    %11 = vector.load %arg7[%c0_7, %c0_8] : memref<64x64xf32, #tpu.memory_space<vmem>>, vector<64x64xf32>
    %12 = arith.addf %11, %10 : vector<64x64xf32>
    %c0_9 = arith.constant 0 : index
    %c0_10 = arith.constant 0 : index
    %13 = vector.load %arg7[%c0_9, %c0_10] : memref<64x64xf32, #tpu.memory_space<vmem>>, vector<64x64xf32>
    tpu.vector_store %arg7[%c0_9, %c0_10], %12 {strides = array<i32>} : memref<64x64xf32, #tpu.memory_space<vmem>>, vector<64x64xf32>,
    %c0_11 = arith.constant 0 : index
    %c0_12 = arith.constant 0 : index
    %c8 = arith.constant 8 : index
    %c0_13 = arith.constant 0 : index
    %14 = vector.load %arg3[%c0_11, %c0_12, %c8, %c0_13] : memref<1x1x80x384xbf16, #tpu.memory_space<vmem>>, vector<1x1x64x384xbf16>
    %15 = vector.shape_cast %14 : vector<1x1x64x384xbf16> to vector<64x384xbf16>
    %c3_i32_14 = arith.constant 3 : i32
    %16 = arith.muli %arg2, %c3_i32_14 : i32
    %c1_i32 = arith.constant 1 : i32
    %17 = arith.addi %16, %c1_i32 : i32
    %18 = arith.index_cast %17 : i32 to index
    %c0_15 = arith.constant 0 : index
    %c0_16 = arith.constant 0 : index
    %19 = vector.load %arg4[%18, %c0_15, %c0_16] : memref<9x384x64xbf16, #tpu.memory_space<vmem>>, vector<1x384x64xbf16>
    %20 = vector.shape_cast %19 : vector<1x384x64xbf16> to vector<384x64xbf16>
    %cst_17 = arith.constant dense<0.000000e+00> : vector<64x64xf32>
    %21 = tpu.matmul %15, %20, %cst_17 {dimension_numbers = #tpu.dot_dimension_numbers<[1], [0], [0], [1], [0, 0, 1, 1], [], []>} : vector<64x384xbf16>, vector<384x64xbf16>, vector<64x64xf32> -> vector<64x64xf32>
    %c0_18 = arith.constant 0 : index
    %c0_19 = arith.constant 0 : index
    %22 = vector.load %arg7[%c0_18, %c0_19] : memref<64x64xf32, #tpu.memory_space<vmem>>, vector<64x64xf32>
    %23 = arith.addf %22, %21 : vector<64x64xf32>
    %c0_20 = arith.constant 0 : index
    %c0_21 = arith.constant 0 : index
    %24 = vector.load %arg7[%c0_20, %c0_21] : memref<64x64xf32, #tpu.memory_space<vmem>>, vector<64x64xf32>
    tpu.vector_store %arg7[%c0_20, %c0_21], %23 {strides = array<i32>} : memref<64x64xf32, #tpu.memory_space<vmem>>, vector<64x64xf32>,
    %c0_22 = arith.constant 0 : index
    %c0_23 = arith.constant 0 : index
    %c16 = arith.constant 16 : index
    %c0_24 = arith.constant 0 : index
    %25 = vector.load %arg3[%c0_22, %c0_23, %c16, %c0_24] : memref<1x1x80x384xbf16, #tpu.memory_space<vmem>>, vector<1x1x64x384xbf16>
    %26 = vector.shape_cast %25 : vector<1x1x64x384xbf16> to vector<64x384xbf16>
    %c3_i32_25 = arith.constant 3 : i32
    %27 = arith.muli %arg2, %c3_i32_25 : i32
    %c2_i32 = arith.constant 2 : i32
    %28 = arith.addi %27, %c2_i32 : i32
    %29 = arith.index_cast %28 : i32 to index
    %c0_26 = arith.constant 0 : index
    %c0_27 = arith.constant 0 : index
    %30 = vector.load %arg4[%29, %c0_26, %c0_27] : memref<9x384x64xbf16, #tpu.memory_space<vmem>>, vector<1x384x64xbf16>
    %31 = vector.shape_cast %30 : vector<1x384x64xbf16> to vector<384x64xbf16>
    %cst_28 = arith.constant dense<0.000000e+00> : vector<64x64xf32>
    %32 = tpu.matmul %26, %31, %cst_28 {dimension_numbers = #tpu.dot_dimension_numbers<[1], [0], [0], [1], [0, 0, 1, 1], [], []>} : vector<64x384xbf16>, vector<384x64xbf16>, vector<64x64xf32> -> vector<64x64xf32>
    %c0_29 = arith.constant 0 : index
    %c0_30 = arith.constant 0 : index
    %33 = vector.load %arg7[%c0_29, %c0_30] : memref<64x64xf32, #tpu.memory_space<vmem>>, vector<64x64xf32>
    %34 = arith.addf %33, %32 : vector<64x64xf32>
    %c0_31 = arith.constant 0 : index
    %c0_32 = arith.constant 0 : index
    %35 = vector.load %arg7[%c0_31, %c0_32] : memref<64x64xf32, #tpu.memory_space<vmem>>, vector<64x64xf32>
    tpu.vector_store %arg7[%c0_31, %c0_32], %34 {strides = array<i32>} : memref<64x64xf32, #tpu.memory_space<vmem>>, vector<64x64xf32>,
    %c2_i32_33 = arith.constant 2 : i32
    %36 = arith.cmpi eq, %arg2, %c2_i32_33 : i32
    %37 = arith.extui %36 : i1 to i32
    %c0_i32_34 = arith.constant 0 : i32
    %38 = arith.cmpi ne, %37, %c0_i32_34 : i32
    scf.if %38 {
      %c0_35 = arith.constant 0 : index
      %c0_36 = arith.constant 0 : index
      %39 = vector.load %arg7[%c0_35, %c0_36] : memref<64x64xf32, #tpu.memory_space<vmem>>, vector<64x64xf32>
      %c0_37 = arith.constant 0 : index
      %c0_38 = arith.constant 0 : index
      %40 = vector.load %arg5[%c0_37, %c0_38] : memref<1x64xf32, #tpu.memory_space<vmem>>, vector<1x64xf32>
      %41 = vector.broadcast %40 : vector<1x64xf32> to vector<64x64xf32>
      %42 = arith.addf %39, %41 : vector<64x64xf32>
      %cst_39 = arith.constant 0.000000e+00 : f32
      %43 = vector.broadcast %cst_39 : f32 to vector<64x64xf32>
      %44 = arith.maximumf %42, %43 : vector<64x64xf32>
      %45 = arith.truncf %44 : vector<64x64xf32> to vector<64x64xbf16>
      %c0_40 = arith.constant 0 : index
      %c0_41 = arith.constant 0 : index
      %c0_42 = arith.constant 0 : index
      %c0_43 = arith.constant 0 : index
      %46 = vector.load %arg6[%c0_40, %c0_41, %c0_42, %c0_43] : memref<1x1x64x64xbf16, #tpu.memory_space<vmem>>, vector<1x1x64x64xbf16>
      %47 = vector.shape_cast %46 : vector<1x1x64x64xbf16> to vector<64x64xbf16>
      %48 = vector.shape_cast %45 : vector<64x64xbf16> to vector<1x1x64x64xbf16>
      tpu.vector_store %arg6[%c0_40, %c0_41, %c0_42, %c0_43], %48 {strides = array<i32>} : memref<1x1x64x64xbf16, #tpu.memory_space<vmem>>, vector<1x1x64x64xbf16>,
    } else {
    }
    return
  }
  func.func @transform_0(%arg0: i32, %arg1: i32, %arg2: i32) -> (i32, i32, i32, i32) {
    %0 = arith.addi %arg1, %arg2 : i32
    %c0_i32 = arith.constant 0 : i32
    %c0_i32_0 = arith.constant 0 : i32
    %c0_i32_1 = arith.constant 0 : i32
    return %arg0, %0, %c0_i32, %c0_i32_0 : i32, i32, i32, i32
  }
  func.func @transform_1(%arg0: i32, %arg1: i32, %arg2: i32) -> (i32, i32, i32) {
    %c0_i32 = arith.constant 0 : i32
    %c0_i32_0 = arith.constant 0 : i32
    %c0_i32_1 = arith.constant 0 : i32
    %c0_i32_2 = arith.constant 0 : i32
    return %c0_i32, %c0_i32_0, %c0_i32_1 : i32, i32, i32
  }
  func.func @transform_2(%arg0: i32, %arg1: i32, %arg2: i32) -> (i32, i32) {
    %c0_i32 = arith.constant 0 : i32
    %c0_i32_0 = arith.constant 0 : i32
    %c0_i32_1 = arith.constant 0 : i32
    return %c0_i32, %c0_i32_0 : i32, i32
  }
  func.func @transform_3(%arg0: i32, %arg1: i32, %arg2: i32) -> (i32, i32, i32, i32) {
    %c0_i32 = arith.constant 0 : i32
    %c0_i32_0 = arith.constant 0 : i32
    %c0_i32_1 = arith.constant 0 : i32
    return %arg0, %arg1, %c0_i32, %c0_i32_0 : i32, i32, i32, i32
  }
}

module attributes {stable_mosaic.version = 11 : i64} {
  func.func @kernel(%arg0: i32, %arg1: i32, %arg2: i32, %arg3: memref<1x1x80x84xbf16, #tpu.memory_space<vmem>>, %arg4: memref<84x768xbf16, #tpu.memory_space<vmem>>, %arg5: memref<9x768x128xbf16, #tpu.memory_space<vmem>>, %arg6: memref<1x128xf32, #tpu.memory_space<vmem>>, %arg7: memref<1x1x64x128xbf16, #tpu.memory_space<vmem>>, %arg8: memref<64x128xf32, #tpu.memory_space<vmem>>, %arg9: memref<80x768xbf16, #tpu.memory_space<vmem>>) attributes {dimension_semantics = [#tpu.dimension_semantics<parallel>, #tpu.dimension_semantics<parallel>, #tpu.dimension_semantics<arbitrary>], iteration_bounds = array<i64: 2, 4, 3>, scalar_prefetch = 0 : i64, scratch_operands = 2 : i64, tpu.core_type = #tpu.core_type<tc>, window_params = [{transform_indices = @transform_0, window_bounds = array<i64: 1, 1, 80, 84>}, {pipeline_mode = #tpu.pipeline_mode<synchronous>, transform_indices = @transform_1, window_bounds = array<i64: 84, 768>}, {pipeline_mode = #tpu.pipeline_mode<synchronous>, transform_indices = @transform_2, window_bounds = array<i64: 9, 768, 128>}, {pipeline_mode = #tpu.pipeline_mode<synchronous>, transform_indices = @transform_3, window_bounds = array<i64: 1, 128>}, {transform_indices = @transform_4, window_bounds = array<i64: 1, 1, 64, 128>}]} {
    %c0_i32 = arith.constant 0 : i32
    %0 = arith.cmpi eq, %arg2, %c0_i32 : i32
    %1 = arith.extui %0 : i1 to i32
    %c0_i32_0 = arith.constant 0 : i32
    %2 = arith.cmpi ne, %1, %c0_i32_0 : i32
    scf.if %2 {
      %cst_39 = arith.constant 0.000000e+00 : f32
      %44 = vector.broadcast %cst_39 : f32 to vector<64x128xf32>
      %c0_40 = arith.constant 0 : index
      %c0_41 = arith.constant 0 : index
      %45 = vector.load %arg8[%c0_40, %c0_41] : memref<64x128xf32, #tpu.memory_space<vmem>>, vector<64x128xf32>
      tpu.vector_store %arg8[%c0_40, %c0_41], %44 {strides = array<i32>} : memref<64x128xf32, #tpu.memory_space<vmem>>, vector<64x128xf32>,
    } else {
    }
    %c0 = arith.constant 0 : index
    %c0_1 = arith.constant 0 : index
    %c0_2 = arith.constant 0 : index
    %c0_3 = arith.constant 0 : index
    %3 = vector.load %arg3[%c0, %c0_1, %c0_2, %c0_3] : memref<1x1x80x84xbf16, #tpu.memory_space<vmem>>, vector<1x1x80x84xbf16>
    %4 = vector.shape_cast %3 : vector<1x1x80x84xbf16> to vector<80x84xbf16>
    %c0_4 = arith.constant 0 : index
    %c0_5 = arith.constant 0 : index
    %5 = vector.load %arg4[%c0_4, %c0_5] : memref<84x768xbf16, #tpu.memory_space<vmem>>, vector<84x768xbf16>
    %cst = arith.constant dense<0.000000e+00> : vector<80x768xf32>
    %6 = tpu.matmul %4, %5, %cst {dimension_numbers = #tpu.dot_dimension_numbers<[1], [0], [0], [1], [0, 0, 1, 1], [], []>} : vector<80x84xbf16>, vector<84x768xbf16>, vector<80x768xf32> -> vector<80x768xf32>
    %cst_6 = arith.constant 0.000000e+00 : f32
    %7 = vector.broadcast %cst_6 : f32 to vector<80x768xf32>
    %8 = arith.maximumf %6, %7 : vector<80x768xf32>
    %9 = arith.truncf %8 : vector<80x768xf32> to vector<80x768xbf16>
    %c0_7 = arith.constant 0 : index
    %c0_8 = arith.constant 0 : index
    %10 = vector.load %arg9[%c0_7, %c0_8] : memref<80x768xbf16, #tpu.memory_space<vmem>>, vector<80x768xbf16>
    tpu.vector_store %arg9[%c0_7, %c0_8], %9 {strides = array<i32>} : memref<80x768xbf16, #tpu.memory_space<vmem>>, vector<80x768xbf16>,
    %c0_9 = arith.constant 0 : index
    %c0_10 = arith.constant 0 : index
    %11 = vector.load %arg9[%c0_9, %c0_10] : memref<80x768xbf16, #tpu.memory_space<vmem>>, vector<64x768xbf16>
    %c3_i32 = arith.constant 3 : i32
    %12 = arith.muli %arg2, %c3_i32 : i32
    %c0_i32_11 = arith.constant 0 : i32
    %13 = arith.addi %12, %c0_i32_11 : i32
    %14 = arith.index_cast %13 : i32 to index
    %c0_12 = arith.constant 0 : index
    %c0_13 = arith.constant 0 : index
    %15 = vector.load %arg5[%14, %c0_12, %c0_13] : memref<9x768x128xbf16, #tpu.memory_space<vmem>>, vector<1x768x128xbf16>
    %16 = vector.shape_cast %15 : vector<1x768x128xbf16> to vector<768x128xbf16>
    %cst_14 = arith.constant dense<0.000000e+00> : vector<64x128xf32>
    %17 = tpu.matmul %11, %16, %cst_14 {dimension_numbers = #tpu.dot_dimension_numbers<[1], [0], [0], [1], [0, 0, 1, 1], [], []>} : vector<64x768xbf16>, vector<768x128xbf16>, vector<64x128xf32> -> vector<64x128xf32>
    %c0_15 = arith.constant 0 : index
    %c0_16 = arith.constant 0 : index
    %18 = vector.load %arg8[%c0_15, %c0_16] : memref<64x128xf32, #tpu.memory_space<vmem>>, vector<64x128xf32>
    %19 = arith.addf %18, %17 : vector<64x128xf32>
    %c0_17 = arith.constant 0 : index
    %c0_18 = arith.constant 0 : index
    %20 = vector.load %arg8[%c0_17, %c0_18] : memref<64x128xf32, #tpu.memory_space<vmem>>, vector<64x128xf32>
    tpu.vector_store %arg8[%c0_17, %c0_18], %19 {strides = array<i32>} : memref<64x128xf32, #tpu.memory_space<vmem>>, vector<64x128xf32>,
    %c8 = arith.constant 8 : index
    %c0_19 = arith.constant 0 : index
    %21 = vector.load %arg9[%c8, %c0_19] : memref<80x768xbf16, #tpu.memory_space<vmem>>, vector<64x768xbf16>
    %c3_i32_20 = arith.constant 3 : i32
    %22 = arith.muli %arg2, %c3_i32_20 : i32
    %c1_i32 = arith.constant 1 : i32
    %23 = arith.addi %22, %c1_i32 : i32
    %24 = arith.index_cast %23 : i32 to index
    %c0_21 = arith.constant 0 : index
    %c0_22 = arith.constant 0 : index
    %25 = vector.load %arg5[%24, %c0_21, %c0_22] : memref<9x768x128xbf16, #tpu.memory_space<vmem>>, vector<1x768x128xbf16>
    %26 = vector.shape_cast %25 : vector<1x768x128xbf16> to vector<768x128xbf16>
    %cst_23 = arith.constant dense<0.000000e+00> : vector<64x128xf32>
    %27 = tpu.matmul %21, %26, %cst_23 {dimension_numbers = #tpu.dot_dimension_numbers<[1], [0], [0], [1], [0, 0, 1, 1], [], []>} : vector<64x768xbf16>, vector<768x128xbf16>, vector<64x128xf32> -> vector<64x128xf32>
    %c0_24 = arith.constant 0 : index
    %c0_25 = arith.constant 0 : index
    %28 = vector.load %arg8[%c0_24, %c0_25] : memref<64x128xf32, #tpu.memory_space<vmem>>, vector<64x128xf32>
    %29 = arith.addf %28, %27 : vector<64x128xf32>
    %c0_26 = arith.constant 0 : index
    %c0_27 = arith.constant 0 : index
    %30 = vector.load %arg8[%c0_26, %c0_27] : memref<64x128xf32, #tpu.memory_space<vmem>>, vector<64x128xf32>
    tpu.vector_store %arg8[%c0_26, %c0_27], %29 {strides = array<i32>} : memref<64x128xf32, #tpu.memory_space<vmem>>, vector<64x128xf32>,
    %c16 = arith.constant 16 : index
    %c0_28 = arith.constant 0 : index
    %31 = vector.load %arg9[%c16, %c0_28] : memref<80x768xbf16, #tpu.memory_space<vmem>>, vector<64x768xbf16>
    %c3_i32_29 = arith.constant 3 : i32
    %32 = arith.muli %arg2, %c3_i32_29 : i32
    %c2_i32 = arith.constant 2 : i32
    %33 = arith.addi %32, %c2_i32 : i32
    %34 = arith.index_cast %33 : i32 to index
    %c0_30 = arith.constant 0 : index
    %c0_31 = arith.constant 0 : index
    %35 = vector.load %arg5[%34, %c0_30, %c0_31] : memref<9x768x128xbf16, #tpu.memory_space<vmem>>, vector<1x768x128xbf16>
    %36 = vector.shape_cast %35 : vector<1x768x128xbf16> to vector<768x128xbf16>
    %cst_32 = arith.constant dense<0.000000e+00> : vector<64x128xf32>
    %37 = tpu.matmul %31, %36, %cst_32 {dimension_numbers = #tpu.dot_dimension_numbers<[1], [0], [0], [1], [0, 0, 1, 1], [], []>} : vector<64x768xbf16>, vector<768x128xbf16>, vector<64x128xf32> -> vector<64x128xf32>
    %c0_33 = arith.constant 0 : index
    %c0_34 = arith.constant 0 : index
    %38 = vector.load %arg8[%c0_33, %c0_34] : memref<64x128xf32, #tpu.memory_space<vmem>>, vector<64x128xf32>
    %39 = arith.addf %38, %37 : vector<64x128xf32>
    %c0_35 = arith.constant 0 : index
    %c0_36 = arith.constant 0 : index
    %40 = vector.load %arg8[%c0_35, %c0_36] : memref<64x128xf32, #tpu.memory_space<vmem>>, vector<64x128xf32>
    tpu.vector_store %arg8[%c0_35, %c0_36], %39 {strides = array<i32>} : memref<64x128xf32, #tpu.memory_space<vmem>>, vector<64x128xf32>,
    %c2_i32_37 = arith.constant 2 : i32
    %41 = arith.cmpi eq, %arg2, %c2_i32_37 : i32
    %42 = arith.extui %41 : i1 to i32
    %c0_i32_38 = arith.constant 0 : i32
    %43 = arith.cmpi ne, %42, %c0_i32_38 : i32
    scf.if %43 {
      %c0_39 = arith.constant 0 : index
      %c0_40 = arith.constant 0 : index
      %44 = vector.load %arg8[%c0_39, %c0_40] : memref<64x128xf32, #tpu.memory_space<vmem>>, vector<64x128xf32>
      %c0_41 = arith.constant 0 : index
      %c0_42 = arith.constant 0 : index
      %45 = vector.load %arg6[%c0_41, %c0_42] : memref<1x128xf32, #tpu.memory_space<vmem>>, vector<1x128xf32>
      %46 = vector.broadcast %45 : vector<1x128xf32> to vector<64x128xf32>
      %47 = arith.addf %44, %46 : vector<64x128xf32>
      %cst_43 = arith.constant 0.000000e+00 : f32
      %48 = vector.broadcast %cst_43 : f32 to vector<64x128xf32>
      %49 = arith.maximumf %47, %48 : vector<64x128xf32>
      %50 = arith.truncf %49 : vector<64x128xf32> to vector<64x128xbf16>
      %c0_44 = arith.constant 0 : index
      %c0_45 = arith.constant 0 : index
      %c0_46 = arith.constant 0 : index
      %c0_47 = arith.constant 0 : index
      %51 = vector.load %arg7[%c0_44, %c0_45, %c0_46, %c0_47] : memref<1x1x64x128xbf16, #tpu.memory_space<vmem>>, vector<1x1x64x128xbf16>
      %52 = vector.shape_cast %51 : vector<1x1x64x128xbf16> to vector<64x128xbf16>
      %53 = vector.shape_cast %50 : vector<64x128xbf16> to vector<1x1x64x128xbf16>
      tpu.vector_store %arg7[%c0_44, %c0_45, %c0_46, %c0_47], %53 {strides = array<i32>} : memref<1x1x64x128xbf16, #tpu.memory_space<vmem>>, vector<1x1x64x128xbf16>,
    } else {
    }
    return
  }
  func.func @transform_0(%arg0: i32, %arg1: i32, %arg2: i32) -> (i32, i32, i32, i32) {
    %0 = arith.addi %arg1, %arg2 : i32
    %c0_i32 = arith.constant 0 : i32
    %c0_i32_0 = arith.constant 0 : i32
    %c0_i32_1 = arith.constant 0 : i32
    return %arg0, %0, %c0_i32, %c0_i32_0 : i32, i32, i32, i32
  }
  func.func @transform_1(%arg0: i32, %arg1: i32, %arg2: i32) -> (i32, i32) {
    %c0_i32 = arith.constant 0 : i32
    %c0_i32_0 = arith.constant 0 : i32
    %c0_i32_1 = arith.constant 0 : i32
    return %c0_i32, %c0_i32_0 : i32, i32
  }
  func.func @transform_2(%arg0: i32, %arg1: i32, %arg2: i32) -> (i32, i32, i32) {
    %c0_i32 = arith.constant 0 : i32
    %c0_i32_0 = arith.constant 0 : i32
    %c0_i32_1 = arith.constant 0 : i32
    %c0_i32_2 = arith.constant 0 : i32
    return %c0_i32, %c0_i32_0, %c0_i32_1 : i32, i32, i32
  }
  func.func @transform_3(%arg0: i32, %arg1: i32, %arg2: i32) -> (i32, i32) {
    %c0_i32 = arith.constant 0 : i32
    %c0_i32_0 = arith.constant 0 : i32
    %c0_i32_1 = arith.constant 0 : i32
    return %c0_i32, %c0_i32_0 : i32, i32
  }
  func.func @transform_4(%arg0: i32, %arg1: i32, %arg2: i32) -> (i32, i32, i32, i32) {
    %c0_i32 = arith.constant 0 : i32
    %c0_i32_0 = arith.constant 0 : i32
    %c0_i32_1 = arith.constant 0 : i32
    return %arg0, %arg1, %c0_i32, %c0_i32_0 : i32, i32, i32, i32
  }
}

module attributes {stable_mosaic.version = 11 : i64} {
  func.func @kernel(%arg0: i32, %arg1: i32, %arg2: i32, %arg3: memref<1x1x80x384xbf16, #tpu.memory_space<vmem>>, %arg4: memref<1x1x80x192xbf16, #tpu.memory_space<vmem>>, %arg5: memref<9x384x64xbf16, #tpu.memory_space<vmem>>, %arg6: memref<9x192x64xbf16, #tpu.memory_space<vmem>>, %arg7: memref<1x64xf32, #tpu.memory_space<vmem>>, %arg8: memref<1x1x64x3xf32, #tpu.memory_space<vmem>>, %arg9: memref<1x1x64x64xf32, #tpu.memory_space<vmem>>) attributes {dimension_semantics = [#tpu.dimension_semantics<parallel>, #tpu.dimension_semantics<parallel>, #tpu.dimension_semantics<arbitrary>], iteration_bounds = array<i64: 2, 4, 3>, scalar_prefetch = 0 : i64, scratch_operands = 0 : i64, tpu.core_type = #tpu.core_type<tc>, window_params = [{transform_indices = @transform_0, window_bounds = array<i64: 1, 1, 80, 384>}, {transform_indices = @transform_1, window_bounds = array<i64: 1, 1, 80, 192>}, {pipeline_mode = #tpu.pipeline_mode<synchronous>, transform_indices = @transform_2, window_bounds = array<i64: 9, 384, 64>}, {pipeline_mode = #tpu.pipeline_mode<synchronous>, transform_indices = @transform_3, window_bounds = array<i64: 9, 192, 64>}, {pipeline_mode = #tpu.pipeline_mode<synchronous>, transform_indices = @transform_4, window_bounds = array<i64: 1, 64>}, {transform_indices = @transform_5, window_bounds = array<i64: 1, 1, 64, 3>}, {transform_indices = @transform_6, window_bounds = array<i64: 1, 1, 64, 64>}]} {
    %c0_i32 = arith.constant 0 : i32
    %0 = arith.cmpi eq, %arg2, %c0_i32 : i32
    %1 = arith.extui %0 : i1 to i32
    %c0_i32_0 = arith.constant 0 : i32
    %2 = arith.cmpi ne, %1, %c0_i32_0 : i32
    scf.if %2 {
      %cst_98 = arith.constant 0.000000e+00 : f32
      %90 = vector.broadcast %cst_98 : f32 to vector<64x64xf32>
      %c0_99 = arith.constant 0 : index
      %c0_100 = arith.constant 0 : index
      %c0_101 = arith.constant 0 : index
      %c0_102 = arith.constant 0 : index
      %91 = vector.load %arg9[%c0_99, %c0_100, %c0_101, %c0_102] : memref<1x1x64x64xf32, #tpu.memory_space<vmem>>, vector<1x1x64x64xf32>
      %92 = vector.shape_cast %91 : vector<1x1x64x64xf32> to vector<64x64xf32>
      %93 = vector.shape_cast %90 : vector<64x64xf32> to vector<1x1x64x64xf32>
      tpu.vector_store %arg9[%c0_99, %c0_100, %c0_101, %c0_102], %93 {strides = array<i32>} : memref<1x1x64x64xf32, #tpu.memory_space<vmem>>, vector<1x1x64x64xf32>,
    } else {
    }
    %c0 = arith.constant 0 : index
    %c0_1 = arith.constant 0 : index
    %c0_2 = arith.constant 0 : index
    %c0_3 = arith.constant 0 : index
    %3 = vector.load %arg3[%c0, %c0_1, %c0_2, %c0_3] : memref<1x1x80x384xbf16, #tpu.memory_space<vmem>>, vector<1x1x64x384xbf16>
    %4 = vector.shape_cast %3 : vector<1x1x64x384xbf16> to vector<64x384xbf16>
    %c3_i32 = arith.constant 3 : i32
    %5 = arith.muli %arg2, %c3_i32 : i32
    %c0_i32_4 = arith.constant 0 : i32
    %6 = arith.addi %5, %c0_i32_4 : i32
    %7 = arith.index_cast %6 : i32 to index
    %c0_5 = arith.constant 0 : index
    %c0_6 = arith.constant 0 : index
    %8 = vector.load %arg5[%7, %c0_5, %c0_6] : memref<9x384x64xbf16, #tpu.memory_space<vmem>>, vector<1x384x64xbf16>
    %9 = vector.shape_cast %8 : vector<1x384x64xbf16> to vector<384x64xbf16>
    %cst = arith.constant dense<0.000000e+00> : vector<64x64xf32>
    %10 = tpu.matmul %4, %9, %cst {dimension_numbers = #tpu.dot_dimension_numbers<[1], [0], [0], [1], [0, 0, 1, 1], [], []>} : vector<64x384xbf16>, vector<384x64xbf16>, vector<64x64xf32> -> vector<64x64xf32>
    %c0_7 = arith.constant 0 : index
    %c0_8 = arith.constant 0 : index
    %c0_9 = arith.constant 0 : index
    %c0_10 = arith.constant 0 : index
    %11 = vector.load %arg9[%c0_7, %c0_8, %c0_9, %c0_10] : memref<1x1x64x64xf32, #tpu.memory_space<vmem>>, vector<1x1x64x64xf32>
    %12 = vector.shape_cast %11 : vector<1x1x64x64xf32> to vector<64x64xf32>
    %13 = arith.addf %12, %10 : vector<64x64xf32>
    %c0_11 = arith.constant 0 : index
    %c0_12 = arith.constant 0 : index
    %c0_13 = arith.constant 0 : index
    %c0_14 = arith.constant 0 : index
    %14 = vector.load %arg9[%c0_11, %c0_12, %c0_13, %c0_14] : memref<1x1x64x64xf32, #tpu.memory_space<vmem>>, vector<1x1x64x64xf32>
    %15 = vector.shape_cast %14 : vector<1x1x64x64xf32> to vector<64x64xf32>
    %16 = vector.shape_cast %13 : vector<64x64xf32> to vector<1x1x64x64xf32>
    tpu.vector_store %arg9[%c0_11, %c0_12, %c0_13, %c0_14], %16 {strides = array<i32>} : memref<1x1x64x64xf32, #tpu.memory_space<vmem>>, vector<1x1x64x64xf32>,
    %c0_15 = arith.constant 0 : index
    %c0_16 = arith.constant 0 : index
    %c8 = arith.constant 8 : index
    %c0_17 = arith.constant 0 : index
    %17 = vector.load %arg3[%c0_15, %c0_16, %c8, %c0_17] : memref<1x1x80x384xbf16, #tpu.memory_space<vmem>>, vector<1x1x64x384xbf16>
    %18 = vector.shape_cast %17 : vector<1x1x64x384xbf16> to vector<64x384xbf16>
    %c3_i32_18 = arith.constant 3 : i32
    %19 = arith.muli %arg2, %c3_i32_18 : i32
    %c1_i32 = arith.constant 1 : i32
    %20 = arith.addi %19, %c1_i32 : i32
    %21 = arith.index_cast %20 : i32 to index
    %c0_19 = arith.constant 0 : index
    %c0_20 = arith.constant 0 : index
    %22 = vector.load %arg5[%21, %c0_19, %c0_20] : memref<9x384x64xbf16, #tpu.memory_space<vmem>>, vector<1x384x64xbf16>
    %23 = vector.shape_cast %22 : vector<1x384x64xbf16> to vector<384x64xbf16>
    %cst_21 = arith.constant dense<0.000000e+00> : vector<64x64xf32>
    %24 = tpu.matmul %18, %23, %cst_21 {dimension_numbers = #tpu.dot_dimension_numbers<[1], [0], [0], [1], [0, 0, 1, 1], [], []>} : vector<64x384xbf16>, vector<384x64xbf16>, vector<64x64xf32> -> vector<64x64xf32>
    %c0_22 = arith.constant 0 : index
    %c0_23 = arith.constant 0 : index
    %c0_24 = arith.constant 0 : index
    %c0_25 = arith.constant 0 : index
    %25 = vector.load %arg9[%c0_22, %c0_23, %c0_24, %c0_25] : memref<1x1x64x64xf32, #tpu.memory_space<vmem>>, vector<1x1x64x64xf32>
    %26 = vector.shape_cast %25 : vector<1x1x64x64xf32> to vector<64x64xf32>
    %27 = arith.addf %26, %24 : vector<64x64xf32>
    %c0_26 = arith.constant 0 : index
    %c0_27 = arith.constant 0 : index
    %c0_28 = arith.constant 0 : index
    %c0_29 = arith.constant 0 : index
    %28 = vector.load %arg9[%c0_26, %c0_27, %c0_28, %c0_29] : memref<1x1x64x64xf32, #tpu.memory_space<vmem>>, vector<1x1x64x64xf32>
    %29 = vector.shape_cast %28 : vector<1x1x64x64xf32> to vector<64x64xf32>
    %30 = vector.shape_cast %27 : vector<64x64xf32> to vector<1x1x64x64xf32>
    tpu.vector_store %arg9[%c0_26, %c0_27, %c0_28, %c0_29], %30 {strides = array<i32>} : memref<1x1x64x64xf32, #tpu.memory_space<vmem>>, vector<1x1x64x64xf32>,
    %c0_30 = arith.constant 0 : index
    %c0_31 = arith.constant 0 : index
    %c16 = arith.constant 16 : index
    %c0_32 = arith.constant 0 : index
    %31 = vector.load %arg3[%c0_30, %c0_31, %c16, %c0_32] : memref<1x1x80x384xbf16, #tpu.memory_space<vmem>>, vector<1x1x64x384xbf16>
    %32 = vector.shape_cast %31 : vector<1x1x64x384xbf16> to vector<64x384xbf16>
    %c3_i32_33 = arith.constant 3 : i32
    %33 = arith.muli %arg2, %c3_i32_33 : i32
    %c2_i32 = arith.constant 2 : i32
    %34 = arith.addi %33, %c2_i32 : i32
    %35 = arith.index_cast %34 : i32 to index
    %c0_34 = arith.constant 0 : index
    %c0_35 = arith.constant 0 : index
    %36 = vector.load %arg5[%35, %c0_34, %c0_35] : memref<9x384x64xbf16, #tpu.memory_space<vmem>>, vector<1x384x64xbf16>
    %37 = vector.shape_cast %36 : vector<1x384x64xbf16> to vector<384x64xbf16>
    %cst_36 = arith.constant dense<0.000000e+00> : vector<64x64xf32>
    %38 = tpu.matmul %32, %37, %cst_36 {dimension_numbers = #tpu.dot_dimension_numbers<[1], [0], [0], [1], [0, 0, 1, 1], [], []>} : vector<64x384xbf16>, vector<384x64xbf16>, vector<64x64xf32> -> vector<64x64xf32>
    %c0_37 = arith.constant 0 : index
    %c0_38 = arith.constant 0 : index
    %c0_39 = arith.constant 0 : index
    %c0_40 = arith.constant 0 : index
    %39 = vector.load %arg9[%c0_37, %c0_38, %c0_39, %c0_40] : memref<1x1x64x64xf32, #tpu.memory_space<vmem>>, vector<1x1x64x64xf32>
    %40 = vector.shape_cast %39 : vector<1x1x64x64xf32> to vector<64x64xf32>
    %41 = arith.addf %40, %38 : vector<64x64xf32>
    %c0_41 = arith.constant 0 : index
    %c0_42 = arith.constant 0 : index
    %c0_43 = arith.constant 0 : index
    %c0_44 = arith.constant 0 : index
    %42 = vector.load %arg9[%c0_41, %c0_42, %c0_43, %c0_44] : memref<1x1x64x64xf32, #tpu.memory_space<vmem>>, vector<1x1x64x64xf32>
    %43 = vector.shape_cast %42 : vector<1x1x64x64xf32> to vector<64x64xf32>
    %44 = vector.shape_cast %41 : vector<64x64xf32> to vector<1x1x64x64xf32>
    tpu.vector_store %arg9[%c0_41, %c0_42, %c0_43, %c0_44], %44 {strides = array<i32>} : memref<1x1x64x64xf32, #tpu.memory_space<vmem>>, vector<1x1x64x64xf32>,
    %c0_45 = arith.constant 0 : index
    %c0_46 = arith.constant 0 : index
    %c0_47 = arith.constant 0 : index
    %c0_48 = arith.constant 0 : index
    %45 = vector.load %arg4[%c0_45, %c0_46, %c0_47, %c0_48] : memref<1x1x80x192xbf16, #tpu.memory_space<vmem>>, vector<1x1x64x192xbf16>
    %46 = vector.shape_cast %45 : vector<1x1x64x192xbf16> to vector<64x192xbf16>
    %c3_i32_49 = arith.constant 3 : i32
    %47 = arith.muli %arg2, %c3_i32_49 : i32
    %c0_i32_50 = arith.constant 0 : i32
    %48 = arith.addi %47, %c0_i32_50 : i32
    %49 = arith.index_cast %48 : i32 to index
    %c0_51 = arith.constant 0 : index
    %c0_52 = arith.constant 0 : index
    %50 = vector.load %arg6[%49, %c0_51, %c0_52] : memref<9x192x64xbf16, #tpu.memory_space<vmem>>, vector<1x192x64xbf16>
    %51 = vector.shape_cast %50 : vector<1x192x64xbf16> to vector<192x64xbf16>
    %cst_53 = arith.constant dense<0.000000e+00> : vector<64x64xf32>
    %52 = tpu.matmul %46, %51, %cst_53 {dimension_numbers = #tpu.dot_dimension_numbers<[1], [0], [0], [1], [0, 0, 1, 1], [], []>} : vector<64x192xbf16>, vector<192x64xbf16>, vector<64x64xf32> -> vector<64x64xf32>
    %c0_54 = arith.constant 0 : index
    %c0_55 = arith.constant 0 : index
    %c0_56 = arith.constant 0 : index
    %c0_57 = arith.constant 0 : index
    %53 = vector.load %arg9[%c0_54, %c0_55, %c0_56, %c0_57] : memref<1x1x64x64xf32, #tpu.memory_space<vmem>>, vector<1x1x64x64xf32>
    %54 = vector.shape_cast %53 : vector<1x1x64x64xf32> to vector<64x64xf32>
    %55 = arith.addf %54, %52 : vector<64x64xf32>
    %c0_58 = arith.constant 0 : index
    %c0_59 = arith.constant 0 : index
    %c0_60 = arith.constant 0 : index
    %c0_61 = arith.constant 0 : index
    %56 = vector.load %arg9[%c0_58, %c0_59, %c0_60, %c0_61] : memref<1x1x64x64xf32, #tpu.memory_space<vmem>>, vector<1x1x64x64xf32>
    %57 = vector.shape_cast %56 : vector<1x1x64x64xf32> to vector<64x64xf32>
    %58 = vector.shape_cast %55 : vector<64x64xf32> to vector<1x1x64x64xf32>
    tpu.vector_store %arg9[%c0_58, %c0_59, %c0_60, %c0_61], %58 {strides = array<i32>} : memref<1x1x64x64xf32, #tpu.memory_space<vmem>>, vector<1x1x64x64xf32>,
    %c0_62 = arith.constant 0 : index
    %c0_63 = arith.constant 0 : index
    %c8_64 = arith.constant 8 : index
    %c0_65 = arith.constant 0 : index
    %59 = vector.load %arg4[%c0_62, %c0_63, %c8_64, %c0_65] : memref<1x1x80x192xbf16, #tpu.memory_space<vmem>>, vector<1x1x64x192xbf16>
    %60 = vector.shape_cast %59 : vector<1x1x64x192xbf16> to vector<64x192xbf16>
    %c3_i32_66 = arith.constant 3 : i32
    %61 = arith.muli %arg2, %c3_i32_66 : i32
    %c1_i32_67 = arith.constant 1 : i32
    %62 = arith.addi %61, %c1_i32_67 : i32
    %63 = arith.index_cast %62 : i32 to index
    %c0_68 = arith.constant 0 : index
    %c0_69 = arith.constant 0 : index
    %64 = vector.load %arg6[%63, %c0_68, %c0_69] : memref<9x192x64xbf16, #tpu.memory_space<vmem>>, vector<1x192x64xbf16>
    %65 = vector.shape_cast %64 : vector<1x192x64xbf16> to vector<192x64xbf16>
    %cst_70 = arith.constant dense<0.000000e+00> : vector<64x64xf32>
    %66 = tpu.matmul %60, %65, %cst_70 {dimension_numbers = #tpu.dot_dimension_numbers<[1], [0], [0], [1], [0, 0, 1, 1], [], []>} : vector<64x192xbf16>, vector<192x64xbf16>, vector<64x64xf32> -> vector<64x64xf32>
    %c0_71 = arith.constant 0 : index
    %c0_72 = arith.constant 0 : index
    %c0_73 = arith.constant 0 : index
    %c0_74 = arith.constant 0 : index
    %67 = vector.load %arg9[%c0_71, %c0_72, %c0_73, %c0_74] : memref<1x1x64x64xf32, #tpu.memory_space<vmem>>, vector<1x1x64x64xf32>
    %68 = vector.shape_cast %67 : vector<1x1x64x64xf32> to vector<64x64xf32>
    %69 = arith.addf %68, %66 : vector<64x64xf32>
    %c0_75 = arith.constant 0 : index
    %c0_76 = arith.constant 0 : index
    %c0_77 = arith.constant 0 : index
    %c0_78 = arith.constant 0 : index
    %70 = vector.load %arg9[%c0_75, %c0_76, %c0_77, %c0_78] : memref<1x1x64x64xf32, #tpu.memory_space<vmem>>, vector<1x1x64x64xf32>
    %71 = vector.shape_cast %70 : vector<1x1x64x64xf32> to vector<64x64xf32>
    %72 = vector.shape_cast %69 : vector<64x64xf32> to vector<1x1x64x64xf32>
    tpu.vector_store %arg9[%c0_75, %c0_76, %c0_77, %c0_78], %72 {strides = array<i32>} : memref<1x1x64x64xf32, #tpu.memory_space<vmem>>, vector<1x1x64x64xf32>,
    %c0_79 = arith.constant 0 : index
    %c0_80 = arith.constant 0 : index
    %c16_81 = arith.constant 16 : index
    %c0_82 = arith.constant 0 : index
    %73 = vector.load %arg4[%c0_79, %c0_80, %c16_81, %c0_82] : memref<1x1x80x192xbf16, #tpu.memory_space<vmem>>, vector<1x1x64x192xbf16>
    %74 = vector.shape_cast %73 : vector<1x1x64x192xbf16> to vector<64x192xbf16>
    %c3_i32_83 = arith.constant 3 : i32
    %75 = arith.muli %arg2, %c3_i32_83 : i32
    %c2_i32_84 = arith.constant 2 : i32
    %76 = arith.addi %75, %c2_i32_84 : i32
    %77 = arith.index_cast %76 : i32 to index
    %c0_85 = arith.constant 0 : index
    %c0_86 = arith.constant 0 : index
    %78 = vector.load %arg6[%77, %c0_85, %c0_86] : memref<9x192x64xbf16, #tpu.memory_space<vmem>>, vector<1x192x64xbf16>
    %79 = vector.shape_cast %78 : vector<1x192x64xbf16> to vector<192x64xbf16>
    %cst_87 = arith.constant dense<0.000000e+00> : vector<64x64xf32>
    %80 = tpu.matmul %74, %79, %cst_87 {dimension_numbers = #tpu.dot_dimension_numbers<[1], [0], [0], [1], [0, 0, 1, 1], [], []>} : vector<64x192xbf16>, vector<192x64xbf16>, vector<64x64xf32> -> vector<64x64xf32>
    %c0_88 = arith.constant 0 : index
    %c0_89 = arith.constant 0 : index
    %c0_90 = arith.constant 0 : index
    %c0_91 = arith.constant 0 : index
    %81 = vector.load %arg9[%c0_88, %c0_89, %c0_90, %c0_91] : memref<1x1x64x64xf32, #tpu.memory_space<vmem>>, vector<1x1x64x64xf32>
    %82 = vector.shape_cast %81 : vector<1x1x64x64xf32> to vector<64x64xf32>
    %83 = arith.addf %82, %80 : vector<64x64xf32>
    %c0_92 = arith.constant 0 : index
    %c0_93 = arith.constant 0 : index
    %c0_94 = arith.constant 0 : index
    %c0_95 = arith.constant 0 : index
    %84 = vector.load %arg9[%c0_92, %c0_93, %c0_94, %c0_95] : memref<1x1x64x64xf32, #tpu.memory_space<vmem>>, vector<1x1x64x64xf32>
    %85 = vector.shape_cast %84 : vector<1x1x64x64xf32> to vector<64x64xf32>
    %86 = vector.shape_cast %83 : vector<64x64xf32> to vector<1x1x64x64xf32>
    tpu.vector_store %arg9[%c0_92, %c0_93, %c0_94, %c0_95], %86 {strides = array<i32>} : memref<1x1x64x64xf32, #tpu.memory_space<vmem>>, vector<1x1x64x64xf32>,
    %c2_i32_96 = arith.constant 2 : i32
    %87 = arith.cmpi eq, %arg2, %c2_i32_96 : i32
    %88 = arith.extui %87 : i1 to i32
    %c0_i32_97 = arith.constant 0 : i32
    %89 = arith.cmpi ne, %88, %c0_i32_97 : i32
    scf.if %89 {
      %c0_98 = arith.constant 0 : index
      %c0_99 = arith.constant 0 : index
      %c0_100 = arith.constant 0 : index
      %c0_101 = arith.constant 0 : index
      %90 = vector.load %arg9[%c0_98, %c0_99, %c0_100, %c0_101] : memref<1x1x64x64xf32, #tpu.memory_space<vmem>>, vector<1x1x64x64xf32>
      %91 = vector.shape_cast %90 : vector<1x1x64x64xf32> to vector<64x64xf32>
      %c0_102 = arith.constant 0 : index
      %c0_103 = arith.constant 0 : index
      %92 = vector.load %arg7[%c0_102, %c0_103] : memref<1x64xf32, #tpu.memory_space<vmem>>, vector<1x64xf32>
      %93 = vector.broadcast %92 : vector<1x64xf32> to vector<64x64xf32>
      %94 = arith.addf %91, %93 : vector<64x64xf32>
      %cst_104 = arith.constant 0.000000e+00 : f32
      %95 = vector.broadcast %cst_104 : f32 to vector<64x64xf32>
      %96 = arith.maximumf %94, %95 : vector<64x64xf32>
      %c0_105 = arith.constant 0 : index
      %c0_106 = arith.constant 0 : index
      %c0_107 = arith.constant 0 : index
      %c0_108 = arith.constant 0 : index
      %97 = vector.load %arg8[%c0_105, %c0_106, %c0_107, %c0_108] : memref<1x1x64x3xf32, #tpu.memory_space<vmem>>, vector<1x1x64x3xf32>
      %98 = vector.shape_cast %97 : vector<1x1x64x3xf32> to vector<64x3xf32>
      %99 = vector.extract_strided_slice %96 {offsets = [0, 0], sizes = [64, 61], strides = [1, 1]} : vector<64x64xf32> to vector<64x61xf32>
      %100 = tpu.concatenate %99, %98 in 1 : vector<64x61xf32>, vector<64x3xf32> -> vector<64x64xf32>
      %c0_109 = arith.constant 0 : index
      %c0_110 = arith.constant 0 : index
      %c0_111 = arith.constant 0 : index
      %c0_112 = arith.constant 0 : index
      %101 = vector.load %arg9[%c0_109, %c0_110, %c0_111, %c0_112] : memref<1x1x64x64xf32, #tpu.memory_space<vmem>>, vector<1x1x64x64xf32>
      %102 = vector.shape_cast %101 : vector<1x1x64x64xf32> to vector<64x64xf32>
      %103 = vector.shape_cast %100 : vector<64x64xf32> to vector<1x1x64x64xf32>
      tpu.vector_store %arg9[%c0_109, %c0_110, %c0_111, %c0_112], %103 {strides = array<i32>} : memref<1x1x64x64xf32, #tpu.memory_space<vmem>>, vector<1x1x64x64xf32>,
    } else {
    }
    return
  }
  func.func @transform_0(%arg0: i32, %arg1: i32, %arg2: i32) -> (i32, i32, i32, i32) {
    %0 = arith.addi %arg1, %arg2 : i32
    %c0_i32 = arith.constant 0 : i32
    %c0_i32_0 = arith.constant 0 : i32
    %c0_i32_1 = arith.constant 0 : i32
    return %arg0, %0, %c0_i32, %c0_i32_0 : i32, i32, i32, i32
  }
  func.func @transform_1(%arg0: i32, %arg1: i32, %arg2: i32) -> (i32, i32, i32, i32) {
    %0 = arith.addi %arg1, %arg2 : i32
    %c0_i32 = arith.constant 0 : i32
    %c0_i32_0 = arith.constant 0 : i32
    %c0_i32_1 = arith.constant 0 : i32
    return %arg0, %0, %c0_i32, %c0_i32_0 : i32, i32, i32, i32
  }
  func.func @transform_2(%arg0: i32, %arg1: i32, %arg2: i32) -> (i32, i32, i32) {
    %c0_i32 = arith.constant 0 : i32
    %c0_i32_0 = arith.constant 0 : i32
    %c0_i32_1 = arith.constant 0 : i32
    %c0_i32_2 = arith.constant 0 : i32
    return %c0_i32, %c0_i32_0, %c0_i32_1 : i32, i32, i32
  }
  func.func @transform_3(%arg0: i32, %arg1: i32, %arg2: i32) -> (i32, i32, i32) {
    %c0_i32 = arith.constant 0 : i32
    %c0_i32_0 = arith.constant 0 : i32
    %c0_i32_1 = arith.constant 0 : i32
    %c0_i32_2 = arith.constant 0 : i32
    return %c0_i32, %c0_i32_0, %c0_i32_1 : i32, i32, i32
  }
  func.func @transform_4(%arg0: i32, %arg1: i32, %arg2: i32) -> (i32, i32) {
    %c0_i32 = arith.constant 0 : i32
    %c0_i32_0 = arith.constant 0 : i32
    %c0_i32_1 = arith.constant 0 : i32
    return %c0_i32, %c0_i32_0 : i32, i32
  }
  func.func @transform_5(%arg0: i32, %arg1: i32, %arg2: i32) -> (i32, i32, i32, i32) {
    %c0_i32 = arith.constant 0 : i32
    %c0_i32_0 = arith.constant 0 : i32
    %c0_i32_1 = arith.constant 0 : i32
    return %arg0, %arg1, %c0_i32, %c0_i32_0 : i32, i32, i32, i32
  }
  func.func @transform_6(%arg0: i32, %arg1: i32, %arg2: i32) -> (i32, i32, i32, i32) {
    %c0_i32 = arith.constant 0 : i32
    %c0_i32_0 = arith.constant 0 : i32
    %c0_i32_1 = arith.constant 0 : i32
    return %arg0, %arg1, %c0_i32, %c0_i32_0 : i32, i32, i32, i32
  }
}

</mosaic_0001>

<llo_original>
// kernel: motion_encoder_3d.5
$region0: #{motion_encoder_3d.5}
  #allocation0 [shape = 'u32[]', space=smem, size = 0x4, offset = 0x4, fixed_abs, tag = 'smem constant byte address 0x4 - core index']
  #allocation1 [shape = 'u32[72,128]{1,0:T(1,128)}', space=vmem, size = 0x9000, scoped, tag = 'internal scratch']
  #allocation2 [shape = 'f32[64,128]{1,0:T(8,128)}', space=vmem, size = 0x8000, scoped, tag = 'scratch operand']
  %s0 = inlined_call_operand.vmem [shape: bf16[2,10,64,147], index: 0, kind: input, shape index: {}]
  %s1 = inlined_call_operand.vmem [shape: bf16[7,147,128], index: 1, kind: input, shape index: {}]
  %s2 = inlined_call_operand.vmem [shape: f32[1,128], index: 2, kind: input, shape index: {}]
  %s3 = inlined_call_operand.vmem [shape: bf16[2,4,64,128], index: 3, kind: output, shape index: {}]
  %s4 = sld [smem:[#allocation0]]
  $region53: #{motion_encoder_3d.5} parent=0
    _
  %s6 = ssub.s32 1, %s4
  %s7 = scalar_select 0, %s6, %s4
  loop: start=0, step=1, limit=58
  $region2: #{motion_encoder_3d.5} parent=0 // loop_pre_header
    _
  $region3: #{motion_encoder_3d.5} parent=0 // loop_header
    %s9 = sphi 0, %s13
    %p10 = scmp.ge.s32.totalorder %s9, 58
    %s16 = sphi 0, %s42
    %s17 = sphi 0, %s38
    %s18 = sphi 0, %s34
    %s19 = sphi 0, %s30
    %s20 = sphi 0, %s16
    %s21 = sphi 0, %s17
    %s22 = sphi 0, %s18
    %s23 = sphi 0, %s19
    %s24 = sphi 0, %s20
    %s25 = sphi 0, %s21
    %s26 = sphi 0, %s22
    %s27 = sphi 0, %s23
    %s51 = sphi 0, %s53
    %s54 = sphi 0, %s51
    %s55 = sphi 0, %s54
    %s71 = sphi 0, %s55
    %s75 = sphi 0, %s75
    %s77 = sphi 0, %s75
    %s78 = sphi 0, %s77
    %s92 = sphi 0, %s78
    %s96 = sphi 0, %s96
    %s98 = sphi 0, %s96
    %s99 = sphi 0, %s98
    %s113 = sphi 0, %s99
    %s123 = sphi 0, %s125
    %s126 = sphi 0, %s123
    %s127 = sphi 0, %s126
    %s143 = sphi 0, %s127
  $region4: #{motion_encoder_3d.5} parent=0 // loop_header_branch
    %12 = sbr.rel (%p10) target = $region8
  $region5: #{motion_encoder_3d.5} parent=0 // loop_body
    %s14 = ssub.s32 %s9, 1
    %s15 = ssub.s32 %s9, 2
    %s28 = sadd.s32 1, %s19
    %p29 = scmp.ge.s32.totalorder %s28, 7
    %s30 = scalar_select %p29, 0, %s28
    %s31 = sadd.s32 1, %s18
    %s32 = scalar_select %p29, %s31, %s18
    %p33 = scmp.ge.s32.totalorder %s32, 1
    %s34 = scalar_select %p33, 0, %s32
    %s35 = sadd.s32 1, %s17
    %s36 = scalar_select %p33, %s35, %s17
    %p37 = scmp.ge.s32.totalorder %s36, 4
    %s38 = scalar_select %p37, 0, %s36
    %s39 = sadd.s32 1, %s16
    %s40 = scalar_select %p37, %s39, %s16
    %p41 = scmp.ge.s32.totalorder %s40, 2
    %s42 = scalar_select %p41, 0, %s40
    %s43 = sadd.s32 %s17, %s19
    %s44 = sadd.s32 %s38, %s30
    %s45 = ssub.s32 %s16, %s42
    %s46 = ssub.s32 %s43, %s44
    %s47 = sor.u32 %s45, %s46
    %s48 = ssub.s32 %s18, %s34
    %s49 = sor.u32 %s47, %s48
    %p50 = scmp.eq.s32.totalorder %s49, 0
    %s52 = sadd.s32 %s51, 1
    %s53 = scalar_select %p50, %s51, %s52
    %p56 = pneg %p50
    %p57 = scmp.eq.s32.totalorder %s9, 55
    %p58 = por %p56, %p57
    %p59 = scmp.ne.s32.totalorder %s51, %s54
    %p60 = scmp.eq.s32.totalorder %s9, 0
    %p61 = por %p59, %p60
    %p62 = scmp.ne.s32.totalorder %s51, %s54
    %p63 = scmp.eq.s32.totalorder %s14, 55
    %p64 = por %p62, %p63
    %p65 = scmp.ne.s32.totalorder %s54, %s55
    %p66 = scmp.eq.s32.totalorder %s14, 0
    %p67 = por %p65, %p66
    %p68 = scmp.ne.s32.totalorder %s54, %s55
    %p69 = scmp.eq.s32.totalorder %s15, 55
    %p70 = por %p68, %p69
    %p72 = scmp.ne.s32.totalorder %s55, %s71
    %p73 = scmp.eq.s32.totalorder %s15, 0
    %p74 = por %p72, %p73
    %s76 = sadd.s32 %s75, 1
    %p79 = scmp.eq.s32.totalorder %s9, 55
    %p80 = scmp.ne.s32.totalorder %s75, %s77
    %p81 = scmp.eq.s32.totalorder %s9, 0
    %p82 = por %p80, %p81
    %p83 = scmp.ne.s32.totalorder %s75, %s77
    %p84 = scmp.eq.s32.totalorder %s14, 55
    %p85 = por %p83, %p84
    %p86 = scmp.ne.s32.totalorder %s77, %s78
    %p87 = scmp.eq.s32.totalorder %s14, 0
    %p88 = por %p86, %p87
    %p89 = scmp.ne.s32.totalorder %s77, %s78
    %p90 = scmp.eq.s32.totalorder %s15, 55
    %p91 = por %p89, %p90
    %p93 = scmp.ne.s32.totalorder %s78, %s92
    %p94 = scmp.eq.s32.totalorder %s15, 0
    %p95 = por %p93, %p94
    %s97 = sadd.s32 %s96, 1
    %p100 = scmp.eq.s32.totalorder %s9, 55
    %p101 = scmp.ne.s32.totalorder %s96, %s98
    %p102 = scmp.eq.s32.totalorder %s9, 0
    %p103 = por %p101, %p102
    %p104 = scmp.ne.s32.totalorder %s96, %s98
    %p105 = scmp.eq.s32.totalorder %s14, 55
    %p106 = por %p104, %p105
    %p107 = scmp.ne.s32.totalorder %s98, %s99
    %p108 = scmp.eq.s32.totalorder %s14, 0
    %p109 = por %p107, %p108
    %p110 = scmp.ne.s32.totalorder %s98, %s99
    %p111 = scmp.eq.s32.totalorder %s15, 55
    %p112 = por %p110, %p111
    %p114 = scmp.ne.s32.totalorder %s99, %s113
    %p115 = scmp.eq.s32.totalorder %s15, 0
    %p116 = por %p114, %p115
    %s117 = ssub.s32 %s16, %s42
    %s118 = ssub.s32 %s17, %s38
    %s119 = sor.u32 %s117, %s118
    %s120 = ssub.s32 %s18, %s34
    %s121 = sor.u32 %s119, %s120
    %p122 = scmp.eq.s32.totalorder %s121, 0
    %s124 = sadd.s32 %s123, 1
    %s125 = scalar_select %p122, %s123, %s124
    %p128 = pneg %p122
    %p129 = scmp.eq.s32.totalorder %s9, 55
    %p130 = por %p128, %p129
    %p131 = scmp.ne.s32.totalorder %s123, %s126
    %p132 = scmp.eq.s32.totalorder %s9, 0
    %p133 = por %p131, %p132
    %p134 = scmp.ne.s32.totalorder %s123, %s126
    %p135 = scmp.eq.s32.totalorder %s14, 55
    %p136 = por %p134, %p135
    %p137 = scmp.ne.s32.totalorder %s126, %s127
    %p138 = scmp.eq.s32.totalorder %s14, 0
    %p139 = por %p137, %p138
    %p140 = scmp.ne.s32.totalorder %s126, %s127
    %p141 = scmp.eq.s32.totalorder %s15, 55
    %p142 = por %p140, %p141
    %p144 = scmp.ne.s32.totalorder %s127, %s143
    %p145 = scmp.eq.s32.totalorder %s15, 0
    %p146 = por %p144, %p145
    %p147 = scmp.le.s32.totalorder 1, %s9
    %p148 = scmp.lt.s32.totalorder %s9, 57
    %p149 = pnand %p147, %p148
    %p150 = pneg %p149
    // Predicated region
    $region9: #{motion_encoder_3d.5} parent=5 // pred_check
      _
    $region10: #{motion_encoder_3d.5} parent=5 // pred_check_branch
      %152 = sbr.rel (%p149) target = $region12
    $region11: #{motion_encoder_3d.5} parent=5 // pred_region
      %s153 = ssub.s32 %s9, 1
      // Predicated region
      $region13: #{motion_encoder_3d.5} parent=11 // pred_check
        %p154 = pneg %p88
      $region14: #{motion_encoder_3d.5} parent=11 // pred_check_branch
        %156 = sbr.rel (%p154) target = $region16
      $region15: #{motion_encoder_3d.5} parent=11 // pred_region
        _
      $region16: #{motion_encoder_3d.5} parent=11 // pred_fallthru
        _
      // Predicated region
      $region17: #{motion_encoder_3d.5} parent=11 // pred_check
        %p157 = pneg %p109
      $region18: #{motion_encoder_3d.5} parent=11 // pred_check_branch
        %159 = sbr.rel (%p157) target = $region20
      $region19: #{motion_encoder_3d.5} parent=11 // pred_region
        _
      $region20: #{motion_encoder_3d.5} parent=11 // pred_fallthru
        _
    $region12: #{motion_encoder_3d.5} parent=5 // pred_fallthru
      _
    %p160 = scmp.lt.s32.totalorder %s9, 56
    // Predicated region
    $region21: #{motion_encoder_3d.5} parent=5 // pred_check
      %p161 = pneg %p160
    $region22: #{motion_encoder_3d.5} parent=5 // pred_check_branch
      %163 = sbr.rel (%p161) target = $region24
    $region23: #{motion_encoder_3d.5} parent=5 // pred_region
      // Predicated region
      $region25: #{motion_encoder_3d.5} parent=23 // pred_check
        %p164 = pneg %p61
      $region26: #{motion_encoder_3d.5} parent=23 // pred_check_branch
        %166 = sbr.rel (%p164) target = $region28
      $region27: #{motion_encoder_3d.5} parent=23 // pred_region
        %s167 = sadd.s32 %s17, %s19
        %s168 = smul.u32 8, %s18
        %p169 = scmp.lt.s32.totalorder %s16, 1
        %s170 = scalar_select %p169, %s16, 1
        %p171 = scmp.lt.s32.totalorder %s167, 9
        %s172 = scalar_select %p171, %s167, 9
        %p173 = scmp.lt.s32.totalorder %s168, 7
        %s174 = scalar_select %p173, %s168, 7
        %s175 = smul.addr %s174, 2
        %s176 = smul.addr %s172, 16
        %s177 = sadd.s32 %s175, %s176
        %s178 = smul.addr %s170, 160
        %s179 = sadd.s32 %s177, %s178
        %s180 = smul.addr %s179, 4
        %s181 = scalar_lea.vmem %s0, %s180
        %s182 = sadd.s32 %s17, %s19
        %s183 = smul.u32 8, %s18
      $region28: #{motion_encoder_3d.5} parent=23 // pred_fallthru
        _
    $region24: #{motion_encoder_3d.5} parent=5 // pred_fallthru
      _
    %p184 = scmp.le.s32.totalorder 1, %s9
    %p185 = scmp.lt.s32.totalorder %s9, 57
    %p186 = pnand %p184, %p185
    %p187 = pneg %p186
    // Predicated region
    $region29: #{motion_encoder_3d.5} parent=5 // pred_check
      _
    $region30: #{motion_encoder_3d.5} parent=5 // pred_check_branch
      %189 = sbr.rel (%p186) target = $region32
    $region31: #{motion_encoder_3d.5} parent=5 // pred_region
      %s190 = ssub.s32 %s9, 1
      %s191 = sadd.s32 %s21, %s23
      %s192 = smul.u32 8, %s22
      %p193 = scmp.lt.s32.totalorder %s20, 1
      %s194 = scalar_select %p193, %s20, 1
      %p195 = scmp.lt.s32.totalorder %s191, 9
      %s196 = scalar_select %p195, %s191, 9
      %p197 = scmp.lt.s32.totalorder %s192, 7
      %s198 = scalar_select %p197, %s192, 7
      %s199 = smul.addr %s198, 2
      %s200 = smul.addr %s196, 16
      %s201 = sadd.s32 %s199, %s200
      %s202 = smul.addr %s194, 160
      %s203 = sadd.s32 %s201, %s202
      %s204 = smul.addr %s203, 4
      %s205 = scalar_lea.vmem %s0, %s204
      %p206 = pneg %p67
      %p207 = pneg %p64
      %p208 = pneg %p88
      %p209 = pneg %p85
      %p210 = pneg %p109
      %p211 = pneg %p106
      %p212 = pneg %p139
      %p213 = pneg %p136
      %s214 = smul.u32 8, %s22
      %p215 = scmp.lt.s32.totalorder %s20, 1
      %s216 = scalar_select %p215, %s20, 1
      %p217 = scmp.lt.s32.totalorder %s21, 3
      %s218 = scalar_select %p217, %s21, 3
      %p219 = scmp.lt.s32.totalorder %s214, 7
      %s220 = scalar_select %p219, %s214, 7
      %s221 = smul.addr %s218, 8
      %s222 = sadd.s32 %s220, %s221
      %s223 = smul.addr %s216, 32
      %s224 = sadd.s32 %s222, %s223
      %s225 = smul.addr %s224, 4
      %s226 = scalar_lea.vmem %s3, %s225
      %s227 = sadd.s32 %s21, %s23
      %s228 = smul.u32 8, %s22
      %p229 = scmp.lt.s32.totalorder %s20, 1
      %s230 = scalar_select %p229, %s20, 1
      %p231 = scmp.lt.s32.totalorder %s227, 9
      %s232 = scalar_select %p231, %s227, 9
      %p233 = scmp.lt.s32.totalorder %s228, 7
      %s234 = scalar_select %p233, %s228, 7
      %s235 = smul.addr %s234, 2
      %s236 = smul.addr %s232, 16
      %s237 = sadd.s32 %s235, %s236
      %s238 = smul.addr %s230, 160
      %s239 = sadd.s32 %s237, %s238
      %s240 = smul.addr %s239, 4
      %s241 = scalar_lea.vmem %s0, %s240
      %s242 = sadd.s32 %s21, %s23
      %s243 = smul.u32 8, %s22
      %s244 = smul.u32 8, %s22
      %p245 = scmp.lt.s32.totalorder %s20, 1
      %s246 = scalar_select %p245, %s20, 1
      %p247 = scmp.lt.s32.totalorder %s21, 3
      %s248 = scalar_select %p247, %s21, 3
      %p249 = scmp.lt.s32.totalorder %s244, 7
      %s250 = scalar_select %p249, %s244, 7
      %s251 = smul.addr %s248, 8
      %s252 = sadd.s32 %s250, %s251
      %s253 = smul.addr %s246, 32
      %s254 = sadd.s32 %s252, %s253
      %s255 = smul.addr %s254, 4
      %s256 = scalar_lea.vmem %s3, %s255
      %s257 = smul.u32 8, %s22
      %p259 = scmp.eq.s32.totalorder %s23, 0
      // Predicated region
      $region33: #{motion_encoder_3d.5} parent=31 // pred_check
        %p260 = pneg %p259
      $region34: #{motion_encoder_3d.5} parent=31 // pred_check_branch
        %262 = sbr.rel (%p260) target = $region36
      $region35: #{motion_encoder_3d.5} parent=31 // pred_region
        %263 = vst [vmem:[#allocation2] sm:$0xff] 0.0
        %264 = vst [vmem:[#allocation2 + $0x8] sm:$0xff] 0.0
        %265 = vst [vmem:[#allocation2 + $0x10] sm:$0xff] 0.0
        %266 = vst [vmem:[#allocation2 + $0x18] sm:$0xff] 0.0
        %267 = vst [vmem:[#allocation2 + $0x20] sm:$0xff] 0.0
        %268 = vst [vmem:[#allocation2 + $0x28] sm:$0xff] 0.0
        %269 = vst [vmem:[#allocation2 + $0x30] sm:$0xff] 0.0
        %270 = vst [vmem:[#allocation2 + $0x38] sm:$0xff] 0.0
      $region36: #{motion_encoder_3d.5} parent=31 // pred_fallthru
        _
      %v271 = vld [vmem:[#allocation2] sm:$0xff]
      %v272 = vld [vmem:[#allocation2 + $0x8] sm:$0xff]
      %v273 = vld [vmem:[#allocation2 + $0x10] sm:$0xff]
      %v274 = vld [vmem:[#allocation2 + $0x18] sm:$0xff]
      %v275 = vld [vmem:[#allocation2 + $0x20] sm:$0xff]
      %v276 = vld [vmem:[#allocation2 + $0x28] sm:$0xff]
      %v277 = vld [vmem:[#allocation2 + $0x30] sm:$0xff]
      %v278 = vld [vmem:[#allocation2 + $0x38] sm:$0xff]
      %v279 = vld [vmem:[%s241] sm:$0xff]
      %v280 = vld [vmem:[%s241 + $0x8] sm:$0xff]
      %v281 = vld [vmem:[%s241 + $0x10] sm:$0xff]
      %v282 = vld [vmem:[%s241 + $0x18] sm:$0xff]
      %v283 = vld [vmem:[%s241 + $0x20] sm:$0xff]
      %v284 = vld [vmem:[%s241 + $0x28] sm:$0xff]
      %v285 = vld [vmem:[%s241 + $0x30] sm:$0xff]
      %v286 = vld [vmem:[%s241 + $0x38] sm:$0xff]
      %s287 = smul.u32 %s23, 19
      %s288 = smul.addr %s287, 4
      %s289 = scalar_lea.vmem %s1, %s288
      %v290 = vld [vmem:[%s289] sm:$0xf]
      %v291 = vld [vmem:[%s289 + $0x4] sm:$0xf]
      %v292 = vld [vmem:[%s289 + $0x8] sm:$0xf]
      %v293 = vld [vmem:[%s289 + $0xc] sm:$0xf]
      %v294 = vld [vmem:[%s289 + $0x10] sm:$0xf]
      %v295 = vld [vmem:[%s289 + $0x14] sm:$0xf]
      %v296 = vld [vmem:[%s289 + $0x18] sm:$0xf]
      %v297 = vld [vmem:[%s289 + $0x1c] sm:$0xf]
      %v298 = vld [vmem:[%s289 + $0x20] sm:$0xf]
      %v299 = vld [vmem:[%s289 + $0x24] sm:$0xf]
      %v300 = vld [vmem:[%s289 + $0x28] sm:$0xf]
      %v301 = vld [vmem:[%s289 + $0x2c] sm:$0xf]
      %v302 = vld [vmem:[%s289 + $0x30] sm:$0xf]
      %v303 = vld [vmem:[%s289 + $0x34] sm:$0xf]
      %v304 = vld [vmem:[%s289 + $0x38] sm:$0xf]
      %v305 = vld [vmem:[%s289 + $0x3c] sm:$0xf]
      %v306 = vld [vmem:[%s289 + $0x40] sm:$0xf]
      %v307 = vld [vmem:[%s289 + $0x44] sm:$0xf]
      %v308 = vld [vmem:[%s289 + $0x48] sm:$0x3]
      %v317 = vunpack.c.l.b16 %v279
      %v318 = vunpack.c.h.b16 %v279
      %v319 = vunpack.c.l.b16 %v280
      %v320 = vunpack.c.h.b16 %v280
      %v321 = vunpack.c.l.b16 %v281
      %v322 = vunpack.c.h.b16 %v281
      %v323 = vunpack.c.l.b16 %v282
      %v324 = vunpack.c.h.b16 %v282
      %v325 = vunpack.c.l.b16 %v283
      %v326 = vunpack.c.h.b16 %v283
      %v327 = vunpack.c.l.b16 %v284
      %v328 = vunpack.c.h.b16 %v284
      %v329 = vunpack.c.l.b16 %v285
      %v330 = vunpack.c.h.b16 %v285
      %v331 = vunpack.c.l.b16 %v286
      %v332 = vunpack.c.h.b16 %v286
      %v333 = vpack.c.b16 %v319, %v317
      %v334 = vpack.c.b16 %v320, %v318
      %v335 = vpack.c.b16 %v323, %v321
      %v336 = vpack.c.b16 %v324, %v322
      %v337 = vpack.c.b16 %v327, %v325
      %v338 = vpack.c.b16 %v328, %v326
      %v339 = vpack.c.b16 %v331, %v329
      %v340 = vpack.c.b16 %v332, %v330
      %v364 = vunpack.c.l.b16 %v290
      %v365 = vunpack.c.l.b16 %v291
      %v366 = vunpack.c.l.b16 %v292
      %v367 = vunpack.c.l.b16 %v293
      %v368 = vunpack.c.l.b16 %v294
      %v369 = vunpack.c.l.b16 %v295
      %v370 = vunpack.c.l.b16 %v296
      %v371 = vunpack.c.l.b16 %v297
      %v372 = vunpack.c.l.b16 %v298
      %v373 = vunpack.c.l.b16 %v299
      %v374 = vunpack.c.l.b16 %v300
      %v375 = vunpack.c.l.b16 %v301
      %v376 = vunpack.c.l.b16 %v302
      %v377 = vunpack.c.l.b16 %v303
      %v378 = vunpack.c.l.b16 %v304
      %v379 = vunpack.c.l.b16 %v305
      %v380 = vunpack.c.l.b16 %v306
      %v381 = vunpack.c.l.b16 %v307
      %v382 = vunpack.c.l.b16 %v308
      %v383 = vpack.c.b16 %v365, %v364
      %v384 = vpack.c.b16 %v367, %v366
      %v385 = vpack.c.b16 %v369, %v368
      %v386 = vpack.c.b16 %v371, %v370
      %v387 = vpack.c.b16 %v373, %v372
      %v388 = vpack.c.b16 %v375, %v374
      %v389 = vpack.c.b16 %v377, %v376
      %v390 = vpack.c.b16 %v379, %v378
      %v391 = vpack.c.b16 %v381, %v380
      %v392 = vpack.c.b16 %v382, %v382
      %vm402 = vcmask 154624
      %v404 = vsel %vm402, %v334, 0
      %v407 = vsel %vm402, %v336, 0
      %v410 = vsel %vm402, %v338, 0
      %v413 = vsel %vm402, %v340, 0
      %vm415 = vcmask 1040384
      %vm416 = vcmask 1041408
      %v417 = vsel %vm415, 4294967295, 65535
      %v418 = vsel %vm416, %v417, 0
      %v420 = vand.u32 %v392, %v418
      %422 = vmatpush.bf16.msra.mxu0 %v390
      %423 = vmatpush.bf16.msra.mxu0 %v389
      %424 = vmatpush.bf16.msra.mxu0 %v388
      %425 = vmatpush.bf16.msra.mxu0 %v387
      %426 = vmatpush.bf16.msra.mxu0 %v386
      %427 = vmatpush.bf16.msra.mxu0 %v385
      %428 = vmatpush.bf16.msra.mxu0 %v384
      %429 = vmatpush.bf16.msra.mxu0 %v383
      %430 = vmatmul.bf16.gmra.mxu0 %v333
      %v431 = vpop.f32.mrf.mxu0
      %v432 = vadd.f32 0.0, %v431
      %v433 = vpop.f32.mrf.mxu0
      %v434 = vadd.f32 0.0, %v433
      %435 = vmatmul.bf16.gmra.mxu0 %v335
      %v436 = vpop.f32.mrf.mxu0
      %v437 = vadd.f32 0.0, %v436
      %v438 = vpop.f32.mrf.mxu0
      %v439 = vadd.f32 0.0, %v438
      %440 = vmatmul.bf16.gmra.mxu0 %v337
      %v441 = vpop.f32.mrf.mxu0
      %v442 = vadd.f32 0.0, %v441
      %v443 = vpop.f32.mrf.mxu0
      %v444 = vadd.f32 0.0, %v443
      %445 = vmatmul.bf16.gmra.mxu0 %v339
      %v446 = vpop.f32.mrf.mxu0
      %v447 = vadd.f32 0.0, %v446
      %v448 = vpop.f32.mrf.mxu0
      %v449 = vadd.f32 0.0, %v448
      %450 = vdwg.mxu0
      %451 = vmatpush.bf16.msra.mxu0 0
      %452 = vmatpush.bf16.msra.mxu0 0
      %453 = vmatpush.bf16.msra.mxu0 0
      %454 = vmatpush.bf16.msra.mxu0 0
      %455 = vmatpush.bf16.msra.mxu0 0
      %456 = vmatpush.bf16.msra.mxu0 0
      %457 = vmatpush.bf16.msra.mxu0 %v420
      %458 = vmatpush.bf16.msra.mxu0 %v391
      %459 = vmatmul.bf16.gmra.mxu0 %v404
      %v460 = vpop.f32.mrf.mxu0
      %v461 = vadd.f32 %v432, %v460
      %v462 = vpop.f32.mrf.mxu0
      %v463 = vadd.f32 %v434, %v462
      %464 = vmatmul.bf16.gmra.mxu0 %v407
      %v465 = vpop.f32.mrf.mxu0
      %v466 = vadd.f32 %v437, %v465
      %v467 = vpop.f32.mrf.mxu0
      %v468 = vadd.f32 %v439, %v467
      %469 = vmatmul.bf16.gmra.mxu0 %v410
      %v470 = vpop.f32.mrf.mxu0
      %v471 = vadd.f32 %v442, %v470
      %v472 = vpop.f32.mrf.mxu0
      %v473 = vadd.f32 %v444, %v472
      %474 = vmatmul.bf16.gmra.mxu0 %v413
      %v475 = vpop.f32.mrf.mxu0
      %v476 = vadd.f32 %v447, %v475
      %v477 = vpop.f32.mrf.mxu0
      %v478 = vadd.f32 %v449, %v477
      %479 = vdwg.mxu0
      %v480 = vadd.f32 %v271, %v461
      %v481 = vadd.f32 %v272, %v463
      %v482 = vadd.f32 %v273, %v466
      %v483 = vadd.f32 %v274, %v468
      %v484 = vadd.f32 %v275, %v471
      %v485 = vadd.f32 %v276, %v473
      %v486 = vadd.f32 %v277, %v476
      %v487 = vadd.f32 %v278, %v478
      %488 = vst [vmem:[#allocation2] sm:$0xff] %v480
      %489 = vst [vmem:[#allocation2 + $0x8] sm:$0xff] %v481
      %490 = vst [vmem:[#allocation2 + $0x10] sm:$0xff] %v482
      %491 = vst [vmem:[#allocation2 + $0x18] sm:$0xff] %v483
      %492 = vst [vmem:[#allocation2 + $0x20] sm:$0xff] %v484
      %493 = vst [vmem:[#allocation2 + $0x28] sm:$0xff] %v485
      %494 = vst [vmem:[#allocation2 + $0x30] sm:$0xff] %v486
      %495 = vst [vmem:[#allocation2 + $0x38] sm:$0xff] %v487
      %p496 = scmp.eq.s32.totalorder %s23, 6
      // Predicated region
      $region37: #{motion_encoder_3d.5} parent=31 // pred_check
        %p497 = pneg %p496
      $region38: #{motion_encoder_3d.5} parent=31 // pred_check_branch
        %499 = sbr.rel (%p497) target = $region40
      $region39: #{motion_encoder_3d.5} parent=31 // pred_region
        %v500 = vld [vmem:[#allocation2] sm:$0xff]
        %v501 = vld [vmem:[#allocation2 + $0x8] sm:$0xff]
        %v502 = vld [vmem:[#allocation2 + $0x10] sm:$0xff]
        %v503 = vld [vmem:[#allocation2 + $0x18] sm:$0xff]
        %v504 = vld [vmem:[#allocation2 + $0x20] sm:$0xff]
        %v505 = vld [vmem:[#allocation2 + $0x28] sm:$0xff]
        %v506 = vld [vmem:[#allocation2 + $0x30] sm:$0xff]
        %v507 = vld [vmem:[#allocation2 + $0x38] sm:$0xff]
        %v508 = vld [vmem:[%s2] sm:$0x1]
        %v510 = vperm.slane %v508, 0
        %v512 = vadd.f32 %v500, %v510
        %v513 = vadd.f32 %v501, %v510
        %v514 = vadd.f32 %v502, %v510
        %v515 = vadd.f32 %v503, %v510
        %v516 = vadd.f32 %v504, %v510
        %v517 = vadd.f32 %v505, %v510
        %v518 = vadd.f32 %v506, %v510
        %v519 = vadd.f32 %v507, %v510
        %v520 = vmax.f32 %v512, 0.0
        %v521 = vmax.f32 %v513, 0.0
        %v522 = vmax.f32 %v514, 0.0
        %v523 = vmax.f32 %v515, 0.0
        %v524 = vmax.f32 %v516, 0.0
        %v525 = vmax.f32 %v517, 0.0
        %v526 = vmax.f32 %v518, 0.0
        %v527 = vmax.f32 %v519, 0.0
        %v528 = vpack.c.bf16 %v520, %v520
        %v529 = vpack.c.bf16 %v521, %v521
        %v530 = vpack.c.bf16 %v522, %v522
        %v531 = vpack.c.bf16 %v523, %v523
        %v532 = vpack.c.bf16 %v524, %v524
        %v533 = vpack.c.bf16 %v525, %v525
        %v534 = vpack.c.bf16 %v526, %v526
        %v535 = vpack.c.bf16 %v527, %v527
        %536 = vst [vmem:[%s256] sm:$0xf] %v528
        %537 = vst [vmem:[%s256 + $0x4] sm:$0xf] %v529
        %538 = vst [vmem:[%s256 + $0x8] sm:$0xf] %v530
        %539 = vst [vmem:[%s256 + $0xc] sm:$0xf] %v531
        %540 = vst [vmem:[%s256 + $0x10] sm:$0xf] %v532
        %541 = vst [vmem:[%s256 + $0x14] sm:$0xf] %v533
        %542 = vst [vmem:[%s256 + $0x18] sm:$0xf] %v534
        %543 = vst [vmem:[%s256 + $0x1c] sm:$0xf] %v535
      $region40: #{motion_encoder_3d.5} parent=31 // pred_fallthru
        _
      %s544 = smul.u32 8, %s22
      %p545 = scmp.lt.s32.totalorder %s20, 1
      %s546 = scalar_select %p545, %s20, 1
      %p547 = scmp.lt.s32.totalorder %s21, 3
      %s548 = scalar_select %p547, %s21, 3
      %p549 = scmp.lt.s32.totalorder %s544, 7
      %s550 = scalar_select %p549, %s544, 7
      %s551 = smul.addr %s548, 8
      %s552 = sadd.s32 %s550, %s551
      %s553 = smul.addr %s546, 32
      %s554 = sadd.s32 %s552, %s553
      %s555 = smul.addr %s554, 4
      %s556 = scalar_lea.vmem %s3, %s555
      // Predicated region
      $region41: #{motion_encoder_3d.5} parent=31 // pred_check
        %p557 = pneg %p136
      $region42: #{motion_encoder_3d.5} parent=31 // pred_check_branch
        %559 = sbr.rel (%p557) target = $region44
      $region43: #{motion_encoder_3d.5} parent=31 // pred_region
        %s560 = smul.u32 8, %s22
      $region44: #{motion_encoder_3d.5} parent=31 // pred_fallthru
        _
    $region32: #{motion_encoder_3d.5} parent=5 // pred_fallthru
      _
    %p561 = scmp.le.s32.totalorder 2, %s9
    // Predicated region
    $region45: #{motion_encoder_3d.5} parent=5 // pred_check
      %p562 = pneg %p561
    $region46: #{motion_encoder_3d.5} parent=5 // pred_check_branch
      %564 = sbr.rel (%p562) target = $region48
    $region47: #{motion_encoder_3d.5} parent=5 // pred_region
      %s565 = ssub.s32 %s9, 2
      // Predicated region
      $region49: #{motion_encoder_3d.5} parent=47 // pred_check
        %p566 = pneg %p142
      $region50: #{motion_encoder_3d.5} parent=47 // pred_check_branch
        %568 = sbr.rel (%p566) target = $region52
      $region51: #{motion_encoder_3d.5} parent=47 // pred_region
        %s569 = smul.u32 8, %s26
        %p570 = scmp.lt.s32.totalorder %s24, 1
        %s571 = scalar_select %p570, %s24, 1
        %p572 = scmp.lt.s32.totalorder %s25, 3
        %s573 = scalar_select %p572, %s25, 3
        %p574 = scmp.lt.s32.totalorder %s569, 7
        %s575 = scalar_select %p574, %s569, 7
        %s576 = smul.addr %s573, 8
        %s577 = sadd.s32 %s575, %s576
        %s578 = smul.addr %s571, 32
        %s579 = sadd.s32 %s577, %s578
        %s580 = smul.addr %s579, 4
        %s581 = scalar_lea.vmem %s3, %s580
      $region52: #{motion_encoder_3d.5} parent=47 // pred_fallthru
        _
    $region48: #{motion_encoder_3d.5} parent=5 // pred_fallthru
      _
  $region6: #{motion_encoder_3d.5} parent=0 // loop_footer
    %s13 = sadd.s32 1, %s9
  $region7: #{motion_encoder_3d.5} parent=0 // loop_footer_branch
    %8 = sbr.rel target = $region3
  $region8: #{motion_encoder_3d.5} parent=0 // loop_exit
    _

// kernel: motion_encoder_3d.6
$region0: #{motion_encoder_3d.6}
  #allocation0 [shape = 'u32[]', space=smem, size = 0x4, offset = 0x4, fixed_abs, tag = 'smem constant byte address 0x4 - core index']
  #allocation1 [shape = 'u32[72,128]{1,0:T(1,128)}', space=vmem, size = 0x9000, scoped, tag = 'internal scratch']
  #allocation2 [shape = 'f32[64,64]{1,0:T(8,128)}', space=vmem, size = 0x8000, scoped, tag = 'scratch operand']
  %s0 = inlined_call_operand.vmem [shape: bf16[2,6,80,384], index: 0, kind: input, shape index: {}]
  %s1 = inlined_call_operand.vmem [shape: bf16[9,384,64], index: 1, kind: input, shape index: {}]
  %s2 = inlined_call_operand.vmem [shape: f32[1,64], index: 2, kind: input, shape index: {}]
  %s3 = inlined_call_operand.vmem [shape: bf16[2,4,64,64], index: 3, kind: output, shape index: {}]
  %s4 = sld [smem:[#allocation0]]
  $region53: #{motion_encoder_3d.6} parent=0
    _
  %s6 = ssub.s32 1, %s4
  %s7 = scalar_select 0, %s6, %s4
  loop: start=0, step=1, limit=26
  $region2: #{motion_encoder_3d.6} parent=0 // loop_pre_header
    _
  $region3: #{motion_encoder_3d.6} parent=0 // loop_header
    %s9 = sphi 0, %s13
    %p10 = scmp.ge.s32.totalorder %s9, 26
    %s16 = sphi 0, %s35
    %s17 = sphi 0, %s31
    %s18 = sphi 0, %s27
    %s19 = sphi 0, %s16
    %s20 = sphi 0, %s17
    %s21 = sphi 0, %s18
    %s22 = sphi 0, %s19
    %s23 = sphi 0, %s20
    %s24 = sphi 0, %s21
    %s42 = sphi 0, %s44
    %s45 = sphi 0, %s42
    %s46 = sphi 0, %s45
    %s62 = sphi 0, %s46
    %s66 = sphi 0, %s66
    %s68 = sphi 0, %s66
    %s69 = sphi 0, %s68
    %s83 = sphi 0, %s69
    %s87 = sphi 0, %s87
    %s89 = sphi 0, %s87
    %s90 = sphi 0, %s89
    %s104 = sphi 0, %s90
    %s112 = sphi 0, %s114
    %s115 = sphi 0, %s112
    %s116 = sphi 0, %s115
    %s132 = sphi 0, %s116
  $region4: #{motion_encoder_3d.6} parent=0 // loop_header_branch
    %12 = sbr.rel (%p10) target = $region8
  $region5: #{motion_encoder_3d.6} parent=0 // loop_body
    %s14 = ssub.s32 %s9, 1
    %s15 = ssub.s32 %s9, 2
    %s25 = sadd.s32 1, %s18
    %p26 = scmp.ge.s32.totalorder %s25, 3
    %s27 = scalar_select %p26, 0, %s25
    %s28 = sadd.s32 1, %s17
    %s29 = scalar_select %p26, %s28, %s17
    %p30 = scmp.ge.s32.totalorder %s29, 4
    %s31 = scalar_select %p30, 0, %s29
    %s32 = sadd.s32 1, %s16
    %s33 = scalar_select %p30, %s32, %s16
    %p34 = scmp.ge.s32.totalorder %s33, 2
    %s35 = scalar_select %p34, 0, %s33
    %s36 = sadd.s32 %s17, %s18
    %s37 = sadd.s32 %s31, %s27
    %s38 = ssub.s32 %s16, %s35
    %s39 = ssub.s32 %s36, %s37
    %s40 = sor.u32 %s38, %s39
    %p41 = scmp.eq.s32.totalorder %s40, 0
    %s43 = sadd.s32 %s42, 1
    %s44 = scalar_select %p41, %s42, %s43
    %p47 = pneg %p41
    %p48 = scmp.eq.s32.totalorder %s9, 23
    %p49 = por %p47, %p48
    %p50 = scmp.ne.s32.totalorder %s42, %s45
    %p51 = scmp.eq.s32.totalorder %s9, 0
    %p52 = por %p50, %p51
    %p53 = scmp.ne.s32.totalorder %s42, %s45
    %p54 = scmp.eq.s32.totalorder %s14, 23
    %p55 = por %p53, %p54
    %p56 = scmp.ne.s32.totalorder %s45, %s46
    %p57 = scmp.eq.s32.totalorder %s14, 0
    %p58 = por %p56, %p57
    %p59 = scmp.ne.s32.totalorder %s45, %s46
    %p60 = scmp.eq.s32.totalorder %s15, 23
    %p61 = por %p59, %p60
    %p63 = scmp.ne.s32.totalorder %s46, %s62
    %p64 = scmp.eq.s32.totalorder %s15, 0
    %p65 = por %p63, %p64
    %s67 = sadd.s32 %s66, 1
    %p70 = scmp.eq.s32.totalorder %s9, 23
    %p71 = scmp.ne.s32.totalorder %s66, %s68
    %p72 = scmp.eq.s32.totalorder %s9, 0
    %p73 = por %p71, %p72
    %p74 = scmp.ne.s32.totalorder %s66, %s68
    %p75 = scmp.eq.s32.totalorder %s14, 23
    %p76 = por %p74, %p75
    %p77 = scmp.ne.s32.totalorder %s68, %s69
    %p78 = scmp.eq.s32.totalorder %s14, 0
    %p79 = por %p77, %p78
    %p80 = scmp.ne.s32.totalorder %s68, %s69
    %p81 = scmp.eq.s32.totalorder %s15, 23
    %p82 = por %p80, %p81
    %p84 = scmp.ne.s32.totalorder %s69, %s83
    %p85 = scmp.eq.s32.totalorder %s15, 0
    %p86 = por %p84, %p85
    %s88 = sadd.s32 %s87, 1
    %p91 = scmp.eq.s32.totalorder %s9, 23
    %p92 = scmp.ne.s32.totalorder %s87, %s89
    %p93 = scmp.eq.s32.totalorder %s9, 0
    %p94 = por %p92, %p93
    %p95 = scmp.ne.s32.totalorder %s87, %s89
    %p96 = scmp.eq.s32.totalorder %s14, 23
    %p97 = por %p95, %p96
    %p98 = scmp.ne.s32.totalorder %s89, %s90
    %p99 = scmp.eq.s32.totalorder %s14, 0
    %p100 = por %p98, %p99
    %p101 = scmp.ne.s32.totalorder %s89, %s90
    %p102 = scmp.eq.s32.totalorder %s15, 23
    %p103 = por %p101, %p102
    %p105 = scmp.ne.s32.totalorder %s90, %s104
    %p106 = scmp.eq.s32.totalorder %s15, 0
    %p107 = por %p105, %p106
    %s108 = ssub.s32 %s16, %s35
    %s109 = ssub.s32 %s17, %s31
    %s110 = sor.u32 %s108, %s109
    %p111 = scmp.eq.s32.totalorder %s110, 0
    %s113 = sadd.s32 %s112, 1
    %s114 = scalar_select %p111, %s112, %s113
    %p117 = pneg %p111
    %p118 = scmp.eq.s32.totalorder %s9, 23
    %p119 = por %p117, %p118
    %p120 = scmp.ne.s32.totalorder %s112, %s115
    %p121 = scmp.eq.s32.totalorder %s9, 0
    %p122 = por %p120, %p121
    %p123 = scmp.ne.s32.totalorder %s112, %s115
    %p124 = scmp.eq.s32.totalorder %s14, 23
    %p125 = por %p123, %p124
    %p126 = scmp.ne.s32.totalorder %s115, %s116
    %p127 = scmp.eq.s32.totalorder %s14, 0
    %p128 = por %p126, %p127
    %p129 = scmp.ne.s32.totalorder %s115, %s116
    %p130 = scmp.eq.s32.totalorder %s15, 23
    %p131 = por %p129, %p130
    %p133 = scmp.ne.s32.totalorder %s116, %s132
    %p134 = scmp.eq.s32.totalorder %s15, 0
    %p135 = por %p133, %p134
    %p136 = scmp.le.s32.totalorder 1, %s9
    %p137 = scmp.lt.s32.totalorder %s9, 25
    %p138 = pnand %p136, %p137
    %p139 = pneg %p138
    // Predicated region
    $region9: #{motion_encoder_3d.6} parent=5 // pred_check
      _
    $region10: #{motion_encoder_3d.6} parent=5 // pred_check_branch
      %141 = sbr.rel (%p138) target = $region12
    $region11: #{motion_encoder_3d.6} parent=5 // pred_region
      %s142 = ssub.s32 %s9, 1
      // Predicated region
      $region13: #{motion_encoder_3d.6} parent=11 // pred_check
        %p143 = pneg %p79
      $region14: #{motion_encoder_3d.6} parent=11 // pred_check_branch
        %145 = sbr.rel (%p143) target = $region16
      $region15: #{motion_encoder_3d.6} parent=11 // pred_region
        _
      $region16: #{motion_encoder_3d.6} parent=11 // pred_fallthru
        _
      // Predicated region
      $region17: #{motion_encoder_3d.6} parent=11 // pred_check
        %p146 = pneg %p100
      $region18: #{motion_encoder_3d.6} parent=11 // pred_check_branch
        %148 = sbr.rel (%p146) target = $region20
      $region19: #{motion_encoder_3d.6} parent=11 // pred_region
        _
      $region20: #{motion_encoder_3d.6} parent=11 // pred_fallthru
        _
    $region12: #{motion_encoder_3d.6} parent=5 // pred_fallthru
      _
    %p149 = scmp.lt.s32.totalorder %s9, 24
    // Predicated region
    $region21: #{motion_encoder_3d.6} parent=5 // pred_check
      %p150 = pneg %p149
    $region22: #{motion_encoder_3d.6} parent=5 // pred_check_branch
      %152 = sbr.rel (%p150) target = $region24
    $region23: #{motion_encoder_3d.6} parent=5 // pred_region
      // Predicated region
      $region25: #{motion_encoder_3d.6} parent=23 // pred_check
        %p153 = pneg %p52
      $region26: #{motion_encoder_3d.6} parent=23 // pred_check_branch
        %155 = sbr.rel (%p153) target = $region28
      $region27: #{motion_encoder_3d.6} parent=23 // pred_region
        %s156 = sadd.s32 %s17, %s18
        %p157 = scmp.lt.s32.totalorder %s16, 1
        %s158 = scalar_select %p157, %s16, 1
        %p159 = scmp.lt.s32.totalorder %s156, 5
        %s160 = scalar_select %p159, %s156, 5
        %s161 = smul.addr %s160, 30
        %s162 = smul.addr %s158, 180
        %s163 = sadd.s32 %s161, %s162
        %s164 = smul.addr %s163, 4
        %s165 = scalar_lea.vmem %s0, %s164
        %s166 = sadd.s32 %s17, %s18
      $region28: #{motion_encoder_3d.6} parent=23 // pred_fallthru
        _
    $region24: #{motion_encoder_3d.6} parent=5 // pred_fallthru
      _
    %p167 = scmp.le.s32.totalorder 1, %s9
    %p168 = scmp.lt.s32.totalorder %s9, 25
    %p169 = pnand %p167, %p168
    %p170 = pneg %p169
    // Predicated region
    $region29: #{motion_encoder_3d.6} parent=5 // pred_check
      _
    $region30: #{motion_encoder_3d.6} parent=5 // pred_check_branch
      %172 = sbr.rel (%p169) target = $region32
    $region31: #{motion_encoder_3d.6} parent=5 // pred_region
      %s173 = ssub.s32 %s9, 1
      %s174 = sadd.s32 %s20, %s21
      %p175 = scmp.lt.s32.totalorder %s19, 1
      %s176 = scalar_select %p175, %s19, 1
      %p177 = scmp.lt.s32.totalorder %s174, 5
      %s178 = scalar_select %p177, %s174, 5
      %s179 = smul.addr %s178, 30
      %s180 = smul.addr %s176, 180
      %s181 = sadd.s32 %s179, %s180
      %s182 = smul.addr %s181, 4
      %s183 = scalar_lea.vmem %s0, %s182
      %p184 = pneg %p58
      %p185 = pneg %p55
      %p186 = pneg %p79
      %p187 = pneg %p76
      %p188 = pneg %p100
      %p189 = pneg %p97
      %p190 = pneg %p128
      %p191 = pneg %p125
      %p192 = scmp.lt.s32.totalorder %s19, 1
      %s193 = scalar_select %p192, %s19, 1
      %p194 = scmp.lt.s32.totalorder %s20, 3
      %s195 = scalar_select %p194, %s20, 3
      %s196 = smul.addr %s195, 8
      %s197 = smul.addr %s193, 32
      %s198 = sadd.s32 %s196, %s197
      %s199 = smul.addr %s198, 4
      %s200 = scalar_lea.vmem %s3, %s199
      %s201 = sadd.s32 %s20, %s21
      %p202 = scmp.lt.s32.totalorder %s19, 1
      %s203 = scalar_select %p202, %s19, 1
      %p204 = scmp.lt.s32.totalorder %s201, 5
      %s205 = scalar_select %p204, %s201, 5
      %s206 = smul.addr %s205, 30
      %s207 = smul.addr %s203, 180
      %s208 = sadd.s32 %s206, %s207
      %s209 = smul.addr %s208, 4
      %s210 = scalar_lea.vmem %s0, %s209
      %s211 = sadd.s32 %s20, %s21
      %p212 = scmp.lt.s32.totalorder %s19, 1
      %s213 = scalar_select %p212, %s19, 1
      %p214 = scmp.lt.s32.totalorder %s20, 3
      %s215 = scalar_select %p214, %s20, 3
      %s216 = smul.addr %s215, 8
      %s217 = smul.addr %s213, 32
      %s218 = sadd.s32 %s216, %s217
      %s219 = smul.addr %s218, 4
      %s220 = scalar_lea.vmem %s3, %s219
      %p221 = scmp.eq.s32.totalorder %s21, 0
      // Predicated region
      $region33: #{motion_encoder_3d.6} parent=31 // pred_check
        %p222 = pneg %p221
      $region34: #{motion_encoder_3d.6} parent=31 // pred_check_branch
        %224 = sbr.rel (%p222) target = $region36
      $region35: #{motion_encoder_3d.6} parent=31 // pred_region
        %vm225 = vcmask 523264
        %226 = vst.msk [vmem:[#allocation2] sm:$0xff] %vm225, 0.0
        %227 = vst.msk [vmem:[#allocation2 + $0x8] sm:$0xff] %vm225, 0.0
        %228 = vst.msk [vmem:[#allocation2 + $0x10] sm:$0xff] %vm225, 0.0
        %229 = vst.msk [vmem:[#allocation2 + $0x18] sm:$0xff] %vm225, 0.0
        %230 = vst.msk [vmem:[#allocation2 + $0x20] sm:$0xff] %vm225, 0.0
        %231 = vst.msk [vmem:[#allocation2 + $0x28] sm:$0xff] %vm225, 0.0
        %232 = vst.msk [vmem:[#allocation2 + $0x30] sm:$0xff] %vm225, 0.0
        %233 = vst.msk [vmem:[#allocation2 + $0x38] sm:$0xff] %vm225, 0.0
      $region36: #{motion_encoder_3d.6} parent=31 // pred_fallthru
        _
      %v234 = vld [vmem:[%s210] sm:$0xff]
      %v235 = vld [vmem:[%s210 + $0x8] sm:$0xf]
      %v236 = vld [vmem:[%s210 + $0xc] sm:$0xff]
      %v237 = vld [vmem:[%s210 + $0x14] sm:$0xf]
      %v238 = vld [vmem:[%s210 + $0x18] sm:$0xff]
      %v239 = vld [vmem:[%s210 + $0x20] sm:$0xf]
      %v240 = vld [vmem:[%s210 + $0x24] sm:$0xff]
      %v241 = vld [vmem:[%s210 + $0x2c] sm:$0xf]
      %v242 = vld [vmem:[%s210 + $0x30] sm:$0xff]
      %v243 = vld [vmem:[%s210 + $0x38] sm:$0xf]
      %v244 = vld [vmem:[%s210 + $0x3c] sm:$0xff]
      %v245 = vld [vmem:[%s210 + $0x44] sm:$0xf]
      %v246 = vld [vmem:[%s210 + $0x48] sm:$0xff]
      %v247 = vld [vmem:[%s210 + $0x50] sm:$0xf]
      %v248 = vld [vmem:[%s210 + $0x54] sm:$0xff]
      %v249 = vld [vmem:[%s210 + $0x5c] sm:$0xf]
      %s250 = smul.u32 %s21, 3
      %s251 = smul.u32 %s250, 48
      %s252 = smul.addr %s251, 4
      %s253 = scalar_lea.vmem %s1, %s252
      %v254 = vld [vmem:[%s253] sm:$0xf]
      %v255 = vld [vmem:[%s253 + $0x4] sm:$0xf]
      %v256 = vld [vmem:[%s253 + $0x8] sm:$0xf]
      %v257 = vld [vmem:[%s253 + $0xc] sm:$0xf]
      %v258 = vld [vmem:[%s253 + $0x10] sm:$0xf]
      %v259 = vld [vmem:[%s253 + $0x14] sm:$0xf]
      %v260 = vld [vmem:[%s253 + $0x18] sm:$0xf]
      %v261 = vld [vmem:[%s253 + $0x1c] sm:$0xf]
      %v262 = vld [vmem:[%s253 + $0x20] sm:$0xf]
      %v263 = vld [vmem:[%s253 + $0x24] sm:$0xf]
      %v264 = vld [vmem:[%s253 + $0x28] sm:$0xf]
      %v265 = vld [vmem:[%s253 + $0x2c] sm:$0xf]
      %v266 = vld [vmem:[%s253 + $0x30] sm:$0xf]
      %v267 = vld [vmem:[%s253 + $0x34] sm:$0xf]
      %v268 = vld [vmem:[%s253 + $0x38] sm:$0xf]
      %v269 = vld [vmem:[%s253 + $0x3c] sm:$0xf]
      %v270 = vld [vmem:[%s253 + $0x40] sm:$0xf]
      %v271 = vld [vmem:[%s253 + $0x44] sm:$0xf]
      %v272 = vld [vmem:[%s253 + $0x48] sm:$0xf]
      %v273 = vld [vmem:[%s253 + $0x4c] sm:$0xf]
      %v274 = vld [vmem:[%s253 + $0x50] sm:$0xf]
      %v275 = vld [vmem:[%s253 + $0x54] sm:$0xf]
      %v276 = vld [vmem:[%s253 + $0x58] sm:$0xf]
      %v277 = vld [vmem:[%s253 + $0x5c] sm:$0xf]
      %v278 = vld [vmem:[%s253 + $0x60] sm:$0xf]
      %v279 = vld [vmem:[%s253 + $0x64] sm:$0xf]
      %v280 = vld [vmem:[%s253 + $0x68] sm:$0xf]
      %v281 = vld [vmem:[%s253 + $0x6c] sm:$0xf]
      %v282 = vld [vmem:[%s253 + $0x70] sm:$0xf]
      %v283 = vld [vmem:[%s253 + $0x74] sm:$0xf]
      %v284 = vld [vmem:[%s253 + $0x78] sm:$0xf]
      %v285 = vld [vmem:[%s253 + $0x7c] sm:$0xf]
      %v286 = vld [vmem:[%s253 + $0x80] sm:$0xf]
      %v287 = vld [vmem:[%s253 + $0x84] sm:$0xf]
      %v288 = vld [vmem:[%s253 + $0x88] sm:$0xf]
      %v289 = vld [vmem:[%s253 + $0x8c] sm:$0xf]
      %v290 = vld [vmem:[%s253 + $0x90] sm:$0xf]
      %v291 = vld [vmem:[%s253 + $0x94] sm:$0xf]
      %v292 = vld [vmem:[%s253 + $0x98] sm:$0xf]
      %v293 = vld [vmem:[%s253 + $0x9c] sm:$0xf]
      %v294 = vld [vmem:[%s253 + $0xa0] sm:$0xf]
      %v295 = vld [vmem:[%s253 + $0xa4] sm:$0xf]
      %v296 = vld [vmem:[%s253 + $0xa8] sm:$0xf]
      %v297 = vld [vmem:[%s253 + $0xac] sm:$0xf]
      %v298 = vld [vmem:[%s253 + $0xb0] sm:$0xf]
      %v299 = vld [vmem:[%s253 + $0xb4] sm:$0xf]
      %v300 = vld [vmem:[%s253 + $0xb8] sm:$0xf]
      %v301 = vld [vmem:[%s253 + $0xbc] sm:$0xf]
      %v318 = vunpack.c.l.b16 %v234
      %v319 = vunpack.c.h.b16 %v234
      %v320 = vunpack.c.l.b16 %v235
      %v321 = vunpack.c.l.b16 %v236
      %v322 = vunpack.c.h.b16 %v236
      %v323 = vunpack.c.l.b16 %v237
      %v324 = vunpack.c.l.b16 %v238
      %v325 = vunpack.c.h.b16 %v238
      %v326 = vunpack.c.l.b16 %v239
      %v327 = vunpack.c.l.b16 %v240
      %v328 = vunpack.c.h.b16 %v240
      %v329 = vunpack.c.l.b16 %v241
      %v330 = vunpack.c.l.b16 %v242
      %v331 = vunpack.c.h.b16 %v242
      %v332 = vunpack.c.l.b16 %v243
      %v333 = vunpack.c.l.b16 %v244
      %v334 = vunpack.c.h.b16 %v244
      %v335 = vunpack.c.l.b16 %v245
      %v336 = vunpack.c.l.b16 %v246
      %v337 = vunpack.c.h.b16 %v246
      %v338 = vunpack.c.l.b16 %v247
      %v339 = vunpack.c.l.b16 %v248
      %v340 = vunpack.c.h.b16 %v248
      %v341 = vunpack.c.l.b16 %v249
      %v342 = vpack.c.b16 %v321, %v318
      %v343 = vpack.c.b16 %v322, %v319
      %v344 = vpack.c.b16 %v323, %v320
      %v345 = vpack.c.b16 %v327, %v324
      %v346 = vpack.c.b16 %v328, %v325
      %v347 = vpack.c.b16 %v329, %v326
      %v348 = vpack.c.b16 %v333, %v330
      %v349 = vpack.c.b16 %v334, %v331
      %v350 = vpack.c.b16 %v335, %v332
      %v351 = vpack.c.b16 %v339, %v336
      %v352 = vpack.c.b16 %v340, %v337
      %v353 = vpack.c.b16 %v341, %v338
      %v414 = vunpack.c.l.b16 %v254
      %v415 = vunpack.c.l.b16 %v255
      %v416 = vunpack.c.l.b16 %v256
      %v417 = vunpack.c.l.b16 %v257
      %v418 = vunpack.c.l.b16 %v258
      %v419 = vunpack.c.l.b16 %v259
      %v420 = vunpack.c.l.b16 %v260
      %v421 = vunpack.c.l.b16 %v261
      %v422 = vunpack.c.l.b16 %v262
      %v423 = vunpack.c.l.b16 %v263
      %v424 = vunpack.c.l.b16 %v264
      %v425 = vunpack.c.l.b16 %v265
      %v426 = vunpack.c.l.b16 %v266
      %v427 = vunpack.c.l.b16 %v267
      %v428 = vunpack.c.l.b16 %v268
      %v429 = vunpack.c.l.b16 %v269
      %v430 = vunpack.c.l.b16 %v270
      %v431 = vunpack.c.l.b16 %v271
      %v432 = vunpack.c.l.b16 %v272
      %v433 = vunpack.c.l.b16 %v273
      %v434 = vunpack.c.l.b16 %v274
      %v435 = vunpack.c.l.b16 %v275
      %v436 = vunpack.c.l.b16 %v276
      %v437 = vunpack.c.l.b16 %v277
      %v438 = vunpack.c.l.b16 %v278
      %v439 = vunpack.c.l.b16 %v279
      %v440 = vunpack.c.l.b16 %v280
      %v441 = vunpack.c.l.b16 %v281
      %v442 = vunpack.c.l.b16 %v282
      %v443 = vunpack.c.l.b16 %v283
      %v444 = vunpack.c.l.b16 %v284
      %v445 = vunpack.c.l.b16 %v285
      %v446 = vunpack.c.l.b16 %v286
      %v447 = vunpack.c.l.b16 %v287
      %v448 = vunpack.c.l.b16 %v288
      %v449 = vunpack.c.l.b16 %v289
      %v450 = vunpack.c.l.b16 %v290
      %v451 = vunpack.c.l.b16 %v291
      %v452 = vunpack.c.l.b16 %v292
      %v453 = vunpack.c.l.b16 %v293
      %v454 = vunpack.c.l.b16 %v294
      %v455 = vunpack.c.l.b16 %v295
      %v456 = vunpack.c.l.b16 %v296
      %v457 = vunpack.c.l.b16 %v297
      %v458 = vunpack.c.l.b16 %v298
      %v459 = vunpack.c.l.b16 %v299
      %v460 = vunpack.c.l.b16 %v300
      %v461 = vunpack.c.l.b16 %v301
      %v462 = vpack.c.b16 %v415, %v414
      %v463 = vpack.c.b16 %v417, %v416
      %v464 = vpack.c.b16 %v419, %v418
      %v465 = vpack.c.b16 %v421, %v420
      %v466 = vpack.c.b16 %v423, %v422
      %v467 = vpack.c.b16 %v425, %v424
      %v468 = vpack.c.b16 %v427, %v426
      %v469 = vpack.c.b16 %v429, %v428
      %v470 = vpack.c.b16 %v431, %v430
      %v471 = vpack.c.b16 %v433, %v432
      %v472 = vpack.c.b16 %v435, %v434
      %v473 = vpack.c.b16 %v437, %v436
      %v474 = vpack.c.b16 %v439, %v438
      %v475 = vpack.c.b16 %v441, %v440
      %v476 = vpack.c.b16 %v443, %v442
      %v477 = vpack.c.b16 %v445, %v444
      %v478 = vpack.c.b16 %v447, %v446
      %v479 = vpack.c.b16 %v449, %v448
      %v480 = vpack.c.b16 %v451, %v450
      %v481 = vpack.c.b16 %v453, %v452
      %v482 = vpack.c.b16 %v455, %v454
      %v483 = vpack.c.b16 %v457, %v456
      %v484 = vpack.c.b16 %v459, %v458
      %v485 = vpack.c.b16 %v461, %v460
      %510 = vmatpush.bf16.msra.mxu0 %v469
      %511 = vmatpush.bf16.msra.mxu0 %v468
      %512 = vmatpush.bf16.msra.mxu0 %v467
      %513 = vmatpush.bf16.msra.mxu0 %v466
      %514 = vmatpush.bf16.msra.mxu0 %v465
      %515 = vmatpush.bf16.msra.mxu0 %v464
      %516 = vmatpush.bf16.msra.mxu0 %v463
      %517 = vmatpush.bf16.msra.mxu0 %v462
      %518 = vmatmul.bf16.gmra.mxu0 %v342
      %v519 = vpop.f32.mrf.mxu0
      %v520 = vadd.f32 0.0, %v519
      %v521 = vpop.f32.mrf.mxu0
      %v522 = vadd.f32 0.0, %v521
      %523 = vmatmul.bf16.gmra.mxu0 %v345
      %v524 = vpop.f32.mrf.mxu0
      %v525 = vadd.f32 0.0, %v524
      %v526 = vpop.f32.mrf.mxu0
      %v527 = vadd.f32 0.0, %v526
      %528 = vmatmul.bf16.gmra.mxu0 %v348
      %v529 = vpop.f32.mrf.mxu0
      %v530 = vadd.f32 0.0, %v529
      %v531 = vpop.f32.mrf.mxu0
      %v532 = vadd.f32 0.0, %v531
      %533 = vmatmul.bf16.gmra.mxu0 %v351
      %v534 = vpop.f32.mrf.mxu0
      %v535 = vadd.f32 0.0, %v534
      %v536 = vpop.f32.mrf.mxu0
      %v537 = vadd.f32 0.0, %v536
      %538 = vdwg.mxu0
      %539 = vmatpush.bf16.msra.mxu0 %v477
      %540 = vmatpush.bf16.msra.mxu0 %v476
      %541 = vmatpush.bf16.msra.mxu0 %v475
      %542 = vmatpush.bf16.msra.mxu0 %v474
      %543 = vmatpush.bf16.msra.mxu0 %v473
      %544 = vmatpush.bf16.msra.mxu0 %v472
      %545 = vmatpush.bf16.msra.mxu0 %v471
      %546 = vmatpush.bf16.msra.mxu0 %v470
      %547 = vmatmul.bf16.gmra.mxu0 %v343
      %v548 = vpop.f32.mrf.mxu0
      %v549 = vadd.f32 %v520, %v548
      %v550 = vpop.f32.mrf.mxu0
      %v551 = vadd.f32 %v522, %v550
      %552 = vmatmul.bf16.gmra.mxu0 %v346
      %v553 = vpop.f32.mrf.mxu0
      %v554 = vadd.f32 %v525, %v553
      %v555 = vpop.f32.mrf.mxu0
      %v556 = vadd.f32 %v527, %v555
      %557 = vmatmul.bf16.gmra.mxu0 %v349
      %v558 = vpop.f32.mrf.mxu0
      %v559 = vadd.f32 %v530, %v558
      %v560 = vpop.f32.mrf.mxu0
      %v561 = vadd.f32 %v532, %v560
      %562 = vmatmul.bf16.gmra.mxu0 %v352
      %v563 = vpop.f32.mrf.mxu0
      %v564 = vadd.f32 %v535, %v563
      %v565 = vpop.f32.mrf.mxu0
      %v566 = vadd.f32 %v537, %v565
      %567 = vdwg.mxu0
      %568 = vmatpush.bf16.msra.mxu0 %v485
      %569 = vmatpush.bf16.msra.mxu0 %v484
      %570 = vmatpush.bf16.msra.mxu0 %v483
      %571 = vmatpush.bf16.msra.mxu0 %v482
      %572 = vmatpush.bf16.msra.mxu0 %v481
      %573 = vmatpush.bf16.msra.mxu0 %v480
      %574 = vmatpush.bf16.msra.mxu0 %v479
      %575 = vmatpush.bf16.msra.mxu0 %v478
      %576 = vmatmul.bf16.gmra.mxu0 %v344
      %v577 = vpop.f32.mrf.mxu0
      %v578 = vadd.f32 %v549, %v577
      %v579 = vpop.f32.mrf.mxu0
      %v580 = vadd.f32 %v551, %v579
      %581 = vmatmul.bf16.gmra.mxu0 %v347
      %v582 = vpop.f32.mrf.mxu0
      %v583 = vadd.f32 %v554, %v582
      %v584 = vpop.f32.mrf.mxu0
      %v585 = vadd.f32 %v556, %v584
      %586 = vmatmul.bf16.gmra.mxu0 %v350
      %v587 = vpop.f32.mrf.mxu0
      %v588 = vadd.f32 %v559, %v587
      %v589 = vpop.f32.mrf.mxu0
      %v590 = vadd.f32 %v561, %v589
      %591 = vmatmul.bf16.gmra.mxu0 %v353
      %v592 = vpop.f32.mrf.mxu0
      %v593 = vadd.f32 %v564, %v592
      %v594 = vpop.f32.mrf.mxu0
      %v595 = vadd.f32 %v566, %v594
      %596 = vdwg.mxu0
      %v597 = vld [vmem:[#allocation2] sm:$0xff]
      %v598 = vld [vmem:[#allocation2 + $0x8] sm:$0xff]
      %v599 = vld [vmem:[#allocation2 + $0x10] sm:$0xff]
      %v600 = vld [vmem:[#allocation2 + $0x18] sm:$0xff]
      %v601 = vld [vmem:[#allocation2 + $0x20] sm:$0xff]
      %v602 = vld [vmem:[#allocation2 + $0x28] sm:$0xff]
      %v603 = vld [vmem:[#allocation2 + $0x30] sm:$0xff]
      %v604 = vld [vmem:[#allocation2 + $0x38] sm:$0xff]
      %v605 = vadd.f32 %v597, %v578
      %v606 = vadd.f32 %v598, %v580
      %v607 = vadd.f32 %v599, %v583
      %v608 = vadd.f32 %v600, %v585
      %v609 = vadd.f32 %v601, %v588
      %v610 = vadd.f32 %v602, %v590
      %v611 = vadd.f32 %v603, %v593
      %v612 = vadd.f32 %v604, %v595
      %vm613 = vcmask 523264
      %614 = vst.msk [vmem:[#allocation2] sm:$0xff] %vm613, %v605
      %615 = vst.msk [vmem:[#allocation2 + $0x8] sm:$0xff] %vm613, %v606
      %616 = vst.msk [vmem:[#allocation2 + $0x10] sm:$0xff] %vm613, %v607
      %617 = vst.msk [vmem:[#allocation2 + $0x18] sm:$0xff] %vm613, %v608
      %618 = vst.msk [vmem:[#allocation2 + $0x20] sm:$0xff] %vm613, %v609
      %619 = vst.msk [vmem:[#allocation2 + $0x28] sm:$0xff] %vm613, %v610
      %620 = vst.msk [vmem:[#allocation2 + $0x30] sm:$0xff] %vm613, %v611
      %621 = vst.msk [vmem:[#allocation2 + $0x38] sm:$0xff] %vm613, %v612
      %v622 = vld [vmem:[%s210 + $0xc] sm:$0xff]
      %v623 = vld [vmem:[%s210 + $0x14] sm:$0xf]
      %v624 = vld [vmem:[%s210 + $0x18] sm:$0xff]
      %v625 = vld [vmem:[%s210 + $0x20] sm:$0xf]
      %v626 = vld [vmem:[%s210 + $0x24] sm:$0xff]
      %v627 = vld [vmem:[%s210 + $0x2c] sm:$0xf]
      %v628 = vld [vmem:[%s210 + $0x30] sm:$0xff]
      %v629 = vld [vmem:[%s210 + $0x38] sm:$0xf]
      %v630 = vld [vmem:[%s210 + $0x3c] sm:$0xff]
      %v631 = vld [vmem:[%s210 + $0x44] sm:$0xf]
      %v632 = vld [vmem:[%s210 + $0x48] sm:$0xff]
      %v633 = vld [vmem:[%s210 + $0x50] sm:$0xf]
      %v634 = vld [vmem:[%s210 + $0x54] sm:$0xff]
      %v635 = vld [vmem:[%s210 + $0x5c] sm:$0xf]
      %v636 = vld [vmem:[%s210 + $0x60] sm:$0xff]
      %v637 = vld [vmem:[%s210 + $0x68] sm:$0xf]
      %s638 = sadd.s32 %s250, 1
      %s639 = smul.u32 %s638, 48
      %s640 = smul.addr %s639, 4
      %s641 = scalar_lea.vmem %s1, %s640
      %v642 = vld [vmem:[%s641] sm:$0xf]
      %v643 = vld [vmem:[%s641 + $0x4] sm:$0xf]
      %v644 = vld [vmem:[%s641 + $0x8] sm:$0xf]
      %v645 = vld [vmem:[%s641 + $0xc] sm:$0xf]
      %v646 = vld [vmem:[%s641 + $0x10] sm:$0xf]
      %v647 = vld [vmem:[%s641 + $0x14] sm:$0xf]
      %v648 = vld [vmem:[%s641 + $0x18] sm:$0xf]
      %v649 = vld [vmem:[%s641 + $0x1c] sm:$0xf]
      %v650 = vld [vmem:[%s641 + $0x20] sm:$0xf]
      %v651 = vld [vmem:[%s641 + $0x24] sm:$0xf]
      %v652 = vld [vmem:[%s641 + $0x28] sm:$0xf]
      %v653 = vld [vmem:[%s641 + $0x2c] sm:$0xf]
      %v654 = vld [vmem:[%s641 + $0x30] sm:$0xf]
      %v655 = vld [vmem:[%s641 + $0x34] sm:$0xf]
      %v656 = vld [vmem:[%s641 + $0x38] sm:$0xf]
      %v657 = vld [vmem:[%s641 + $0x3c] sm:$0xf]
      %v658 = vld [vmem:[%s641 + $0x40] sm:$0xf]
      %v659 = vld [vmem:[%s641 + $0x44] sm:$0xf]
      %v660 = vld [vmem:[%s641 + $0x48] sm:$0xf]
      %v661 = vld [vmem:[%s641 + $0x4c] sm:$0xf]
      %v662 = vld [vmem:[%s641 + $0x50] sm:$0xf]
      %v663 = vld [vmem:[%s641 + $0x54] sm:$0xf]
      %v664 = vld [vmem:[%s641 + $0x58] sm:$0xf]
      %v665 = vld [vmem:[%s641 + $0x5c] sm:$0xf]
      %v666 = vld [vmem:[%s641 + $0x60] sm:$0xf]
      %v667 = vld [vmem:[%s641 + $0x64] sm:$0xf]
      %v668 = vld [vmem:[%s641 + $0x68] sm:$0xf]
      %v669 = vld [vmem:[%s641 + $0x6c] sm:$0xf]
      %v670 = vld [vmem:[%s641 + $0x70] sm:$0xf]
      %v671 = vld [vmem:[%s641 + $0x74] sm:$0xf]
      %v672 = vld [vmem:[%s641 + $0x78] sm:$0xf]
      %v673 = vld [vmem:[%s641 + $0x7c] sm:$0xf]
      %v674 = vld [vmem:[%s641 + $0x80] sm:$0xf]
      %v675 = vld [vmem:[%s641 + $0x84] sm:$0xf]
      %v676 = vld [vmem:[%s641 + $0x88] sm:$0xf]
      %v677 = vld [vmem:[%s641 + $0x8c] sm:$0xf]
      %v678 = vld [vmem:[%s641 + $0x90] sm:$0xf]
      %v679 = vld [vmem:[%s641 + $0x94] sm:$0xf]
      %v680 = vld [vmem:[%s641 + $0x98] sm:$0xf]
      %v681 = vld [vmem:[%s641 + $0x9c] sm:$0xf]
      %v682 = vld [vmem:[%s641 + $0xa0] sm:$0xf]
      %v683 = vld [vmem:[%s641 + $0xa4] sm:$0xf]
      %v684 = vld [vmem:[%s641 + $0xa8] sm:$0xf]
      %v685 = vld [vmem:[%s641 + $0xac] sm:$0xf]
      %v686 = vld [vmem:[%s641 + $0xb0] sm:$0xf]
      %v687 = vld [vmem:[%s641 + $0xb4] sm:$0xf]
      %v688 = vld [vmem:[%s641 + $0xb8] sm:$0xf]
      %v689 = vld [vmem:[%s641 + $0xbc] sm:$0xf]
      %v706 = vunpack.c.l.b16 %v622
      %v707 = vunpack.c.h.b16 %v622
      %v708 = vunpack.c.l.b16 %v623
      %v709 = vunpack.c.l.b16 %v624
      %v710 = vunpack.c.h.b16 %v624
      %v711 = vunpack.c.l.b16 %v625
      %v712 = vunpack.c.l.b16 %v626
      %v713 = vunpack.c.h.b16 %v626
      %v714 = vunpack.c.l.b16 %v627
      %v715 = vunpack.c.l.b16 %v628
      %v716 = vunpack.c.h.b16 %v628
      %v717 = vunpack.c.l.b16 %v629
      %v718 = vunpack.c.l.b16 %v630
      %v719 = vunpack.c.h.b16 %v630
      %v720 = vunpack.c.l.b16 %v631
      %v721 = vunpack.c.l.b16 %v632
      %v722 = vunpack.c.h.b16 %v632
      %v723 = vunpack.c.l.b16 %v633
      %v724 = vunpack.c.l.b16 %v634
      %v725 = vunpack.c.h.b16 %v634
      %v726 = vunpack.c.l.b16 %v635
      %v727 = vunpack.c.l.b16 %v636
      %v728 = vunpack.c.h.b16 %v636
      %v729 = vunpack.c.l.b16 %v637
      %v730 = vpack.c.b16 %v709, %v706
      %v731 = vpack.c.b16 %v710, %v707
      %v732 = vpack.c.b16 %v711, %v708
      %v733 = vpack.c.b16 %v715, %v712
      %v734 = vpack.c.b16 %v716, %v713
      %v735 = vpack.c.b16 %v717, %v714
      %v736 = vpack.c.b16 %v721, %v718
      %v737 = vpack.c.b16 %v722, %v719
      %v738 = vpack.c.b16 %v723, %v720
      %v739 = vpack.c.b16 %v727, %v724
      %v740 = vpack.c.b16 %v728, %v725
      %v741 = vpack.c.b16 %v729, %v726
      %v802 = vunpack.c.l.b16 %v642
      %v803 = vunpack.c.l.b16 %v643
      %v804 = vunpack.c.l.b16 %v644
      %v805 = vunpack.c.l.b16 %v645
      %v806 = vunpack.c.l.b16 %v646
      %v807 = vunpack.c.l.b16 %v647
      %v808 = vunpack.c.l.b16 %v648
      %v809 = vunpack.c.l.b16 %v649
      %v810 = vunpack.c.l.b16 %v650
      %v811 = vunpack.c.l.b16 %v651
      %v812 = vunpack.c.l.b16 %v652
      %v813 = vunpack.c.l.b16 %v653
      %v814 = vunpack.c.l.b16 %v654
      %v815 = vunpack.c.l.b16 %v655
      %v816 = vunpack.c.l.b16 %v656
      %v817 = vunpack.c.l.b16 %v657
      %v818 = vunpack.c.l.b16 %v658
      %v819 = vunpack.c.l.b16 %v659
      %v820 = vunpack.c.l.b16 %v660
      %v821 = vunpack.c.l.b16 %v661
      %v822 = vunpack.c.l.b16 %v662
      %v823 = vunpack.c.l.b16 %v663
      %v824 = vunpack.c.l.b16 %v664
      %v825 = vunpack.c.l.b16 %v665
      %v826 = vunpack.c.l.b16 %v666
      %v827 = vunpack.c.l.b16 %v667
      %v828 = vunpack.c.l.b16 %v668
      %v829 = vunpack.c.l.b16 %v669
      %v830 = vunpack.c.l.b16 %v670
      %v831 = vunpack.c.l.b16 %v671
      %v832 = vunpack.c.l.b16 %v672
      %v833 = vunpack.c.l.b16 %v673
      %v834 = vunpack.c.l.b16 %v674
      %v835 = vunpack.c.l.b16 %v675
      %v836 = vunpack.c.l.b16 %v676
      %v837 = vunpack.c.l.b16 %v677
      %v838 = vunpack.c.l.b16 %v678
      %v839 = vunpack.c.l.b16 %v679
      %v840 = vunpack.c.l.b16 %v680
      %v841 = vunpack.c.l.b16 %v681
      %v842 = vunpack.c.l.b16 %v682
      %v843 = vunpack.c.l.b16 %v683
      %v844 = vunpack.c.l.b16 %v684
      %v845 = vunpack.c.l.b16 %v685
      %v846 = vunpack.c.l.b16 %v686
      %v847 = vunpack.c.l.b16 %v687
      %v848 = vunpack.c.l.b16 %v688
      %v849 = vunpack.c.l.b16 %v689
      %v850 = vpack.c.b16 %v803, %v802
      %v851 = vpack.c.b16 %v805, %v804
      %v852 = vpack.c.b16 %v807, %v806
      %v853 = vpack.c.b16 %v809, %v808
      %v854 = vpack.c.b16 %v811, %v810
      %v855 = vpack.c.b16 %v813, %v812
      %v856 = vpack.c.b16 %v815, %v814
      %v857 = vpack.c.b16 %v817, %v816
      %v858 = vpack.c.b16 %v819, %v818
      %v859 = vpack.c.b16 %v821, %v820
      %v860 = vpack.c.b16 %v823, %v822
      %v861 = vpack.c.b16 %v825, %v824
      %v862 = vpack.c.b16 %v827, %v826
      %v863 = vpack.c.b16 %v829, %v828
      %v864 = vpack.c.b16 %v831, %v830
      %v865 = vpack.c.b16 %v833, %v832
      %v866 = vpack.c.b16 %v835, %v834
      %v867 = vpack.c.b16 %v837, %v836
      %v868 = vpack.c.b16 %v839, %v838
      %v869 = vpack.c.b16 %v841, %v840
      %v870 = vpack.c.b16 %v843, %v842
      %v871 = vpack.c.b16 %v845, %v844
      %v872 = vpack.c.b16 %v847, %v846
      %v873 = vpack.c.b16 %v849, %v848
      %898 = vmatpush.bf16.msra.mxu0 %v857
      %899 = vmatpush.bf16.msra.mxu0 %v856
      %900 = vmatpush.bf16.msra.mxu0 %v855
      %901 = vmatpush.bf16.msra.mxu0 %v854
      %902 = vmatpush.bf16.msra.mxu0 %v853
      %903 = vmatpush.bf16.msra.mxu0 %v852
      %904 = vmatpush.bf16.msra.mxu0 %v851
      %905 = vmatpush.bf16.msra.mxu0 %v850
      %906 = vmatmul.bf16.gmra.mxu0 %v730
      %v907 = vpop.f32.mrf.mxu0
      %v908 = vadd.f32 0.0, %v907
      %v909 = vpop.f32.mrf.mxu0
      %v910 = vadd.f32 0.0, %v909
      %911 = vmatmul.bf16.gmra.mxu0 %v733
      %v912 = vpop.f32.mrf.mxu0
      %v913 = vadd.f32 0.0, %v912
      %v914 = vpop.f32.mrf.mxu0
      %v915 = vadd.f32 0.0, %v914
      %916 = vmatmul.bf16.gmra.mxu0 %v736
      %v917 = vpop.f32.mrf.mxu0
      %v918 = vadd.f32 0.0, %v917
      %v919 = vpop.f32.mrf.mxu0
      %v920 = vadd.f32 0.0, %v919
      %921 = vmatmul.bf16.gmra.mxu0 %v739
      %v922 = vpop.f32.mrf.mxu0
      %v923 = vadd.f32 0.0, %v922
      %v924 = vpop.f32.mrf.mxu0
      %v925 = vadd.f32 0.0, %v924
      %926 = vdwg.mxu0
      %927 = vmatpush.bf16.msra.mxu0 %v865
      %928 = vmatpush.bf16.msra.mxu0 %v864
      %929 = vmatpush.bf16.msra.mxu0 %v863
      %930 = vmatpush.bf16.msra.mxu0 %v862
      %931 = vmatpush.bf16.msra.mxu0 %v861
      %932 = vmatpush.bf16.msra.mxu0 %v860
      %933 = vmatpush.bf16.msra.mxu0 %v859
      %934 = vmatpush.bf16.msra.mxu0 %v858
      %935 = vmatmul.bf16.gmra.mxu0 %v731
      %v936 = vpop.f32.mrf.mxu0
      %v937 = vadd.f32 %v908, %v936
      %v938 = vpop.f32.mrf.mxu0
      %v939 = vadd.f32 %v910, %v938
      %940 = vmatmul.bf16.gmra.mxu0 %v734
      %v941 = vpop.f32.mrf.mxu0
      %v942 = vadd.f32 %v913, %v941
      %v943 = vpop.f32.mrf.mxu0
      %v944 = vadd.f32 %v915, %v943
      %945 = vmatmul.bf16.gmra.mxu0 %v737
      %v946 = vpop.f32.mrf.mxu0
      %v947 = vadd.f32 %v918, %v946
      %v948 = vpop.f32.mrf.mxu0
      %v949 = vadd.f32 %v920, %v948
      %950 = vmatmul.bf16.gmra.mxu0 %v740
      %v951 = vpop.f32.mrf.mxu0
      %v952 = vadd.f32 %v923, %v951
      %v953 = vpop.f32.mrf.mxu0
      %v954 = vadd.f32 %v925, %v953
      %955 = vdwg.mxu0
      %956 = vmatpush.bf16.msra.mxu0 %v873
      %957 = vmatpush.bf16.msra.mxu0 %v872
      %958 = vmatpush.bf16.msra.mxu0 %v871
      %959 = vmatpush.bf16.msra.mxu0 %v870
      %960 = vmatpush.bf16.msra.mxu0 %v869
      %961 = vmatpush.bf16.msra.mxu0 %v868
      %962 = vmatpush.bf16.msra.mxu0 %v867
      %963 = vmatpush.bf16.msra.mxu0 %v866
      %964 = vmatmul.bf16.gmra.mxu0 %v732
      %v965 = vpop.f32.mrf.mxu0
      %v966 = vadd.f32 %v937, %v965
      %v967 = vpop.f32.mrf.mxu0
      %v968 = vadd.f32 %v939, %v967
      %969 = vmatmul.bf16.gmra.mxu0 %v735
      %v970 = vpop.f32.mrf.mxu0
      %v971 = vadd.f32 %v942, %v970
      %v972 = vpop.f32.mrf.mxu0
      %v973 = vadd.f32 %v944, %v972
      %974 = vmatmul.bf16.gmra.mxu0 %v738
      %v975 = vpop.f32.mrf.mxu0
      %v976 = vadd.f32 %v947, %v975
      %v977 = vpop.f32.mrf.mxu0
      %v978 = vadd.f32 %v949, %v977
      %979 = vmatmul.bf16.gmra.mxu0 %v741
      %v980 = vpop.f32.mrf.mxu0
      %v981 = vadd.f32 %v952, %v980
      %v982 = vpop.f32.mrf.mxu0
      %v983 = vadd.f32 %v954, %v982
      %984 = vdwg.mxu0
      %v985 = vld [vmem:[#allocation2] sm:$0xff]
      %v986 = vld [vmem:[#allocation2 + $0x8] sm:$0xff]
      %v987 = vld [vmem:[#allocation2 + $0x10] sm:$0xff]
      %v988 = vld [vmem:[#allocation2 + $0x18] sm:$0xff]
      %v989 = vld [vmem:[#allocation2 + $0x20] sm:$0xff]
      %v990 = vld [vmem:[#allocation2 + $0x28] sm:$0xff]
      %v991 = vld [vmem:[#allocation2 + $0x30] sm:$0xff]
      %v992 = vld [vmem:[#allocation2 + $0x38] sm:$0xff]
      %v993 = vadd.f32 %v985, %v966
      %v994 = vadd.f32 %v986, %v968
      %v995 = vadd.f32 %v987, %v971
      %v996 = vadd.f32 %v988, %v973
      %v997 = vadd.f32 %v989, %v976
      %v998 = vadd.f32 %v990, %v978
      %v999 = vadd.f32 %v991, %v981
      %v1000 = vadd.f32 %v992, %v983
      %1001 = vst.msk [vmem:[#allocation2] sm:$0xff] %vm613, %v993
      %1002 = vst.msk [vmem:[#allocation2 + $0x8] sm:$0xff] %vm613, %v994
      %1003 = vst.msk [vmem:[#allocation2 + $0x10] sm:$0xff] %vm613, %v995
      %1004 = vst.msk [vmem:[#allocation2 + $0x18] sm:$0xff] %vm613, %v996
      %1005 = vst.msk [vmem:[#allocation2 + $0x20] sm:$0xff] %vm613, %v997
      %1006 = vst.msk [vmem:[#allocation2 + $0x28] sm:$0xff] %vm613, %v998
      %1007 = vst.msk [vmem:[#allocation2 + $0x30] sm:$0xff] %vm613, %v999
      %1008 = vst.msk [vmem:[#allocation2 + $0x38] sm:$0xff] %vm613, %v1000
      %v1009 = vld [vmem:[%s210 + $0x18] sm:$0xff]
      %v1010 = vld [vmem:[%s210 + $0x20] sm:$0xf]
      %v1011 = vld [vmem:[%s210 + $0x24] sm:$0xff]
      %v1012 = vld [vmem:[%s210 + $0x2c] sm:$0xf]
      %v1013 = vld [vmem:[%s210 + $0x30] sm:$0xff]
      %v1014 = vld [vmem:[%s210 + $0x38] sm:$0xf]
      %v1015 = vld [vmem:[%s210 + $0x3c] sm:$0xff]
      %v1016 = vld [vmem:[%s210 + $0x44] sm:$0xf]
      %v1017 = vld [vmem:[%s210 + $0x48] sm:$0xff]
      %v1018 = vld [vmem:[%s210 + $0x50] sm:$0xf]
      %v1019 = vld [vmem:[%s210 + $0x54] sm:$0xff]
      %v1020 = vld [vmem:[%s210 + $0x5c] sm:$0xf]
      %v1021 = vld [vmem:[%s210 + $0x60] sm:$0xff]
      %v1022 = vld [vmem:[%s210 + $0x68] sm:$0xf]
      %v1023 = vld [vmem:[%s210 + $0x6c] sm:$0xff]
      %v1024 = vld [vmem:[%s210 + $0x74] sm:$0xf]
      %s1025 = sadd.s32 %s250, 2
      %s1026 = smul.u32 %s1025, 48
      %s1027 = smul.addr %s1026, 4
      %s1028 = scalar_lea.vmem %s1, %s1027
      %v1029 = vld [vmem:[%s1028] sm:$0xf]
      %v1030 = vld [vmem:[%s1028 + $0x4] sm:$0xf]
      %v1031 = vld [vmem:[%s1028 + $0x8] sm:$0xf]
      %v1032 = vld [vmem:[%s1028 + $0xc] sm:$0xf]
      %v1033 = vld [vmem:[%s1028 + $0x10] sm:$0xf]
      %v1034 = vld [vmem:[%s1028 + $0x14] sm:$0xf]
      %v1035 = vld [vmem:[%s1028 + $0x18] sm:$0xf]
      %v1036 = vld [vmem:[%s1028 + $0x1c] sm:$0xf]
      %v1037 = vld [vmem:[%s1028 + $0x20] sm:$0xf]
      %v1038 = vld [vmem:[%s1028 + $0x24] sm:$0xf]
      %v1039 = vld [vmem:[%s1028 + $0x28] sm:$0xf]
      %v1040 = vld [vmem:[%s1028 + $0x2c] sm:$0xf]
      %v1041 = vld [vmem:[%s1028 + $0x30] sm:$0xf]
      %v1042 = vld [vmem:[%s1028 + $0x34] sm:$0xf]
      %v1043 = vld [vmem:[%s1028 + $0x38] sm:$0xf]
      %v1044 = vld [vmem:[%s1028 + $0x3c] sm:$0xf]
      %v1045 = vld [vmem:[%s1028 + $0x40] sm:$0xf]
      %v1046 = vld [vmem:[%s1028 + $0x44] sm:$0xf]
      %v1047 = vld [vmem:[%s1028 + $0x48] sm:$0xf]
      %v1048 = vld [vmem:[%s1028 + $0x4c] sm:$0xf]
      %v1049 = vld [vmem:[%s1028 + $0x50] sm:$0xf]
      %v1050 = vld [vmem:[%s1028 + $0x54] sm:$0xf]
      %v1051 = vld [vmem:[%s1028 + $0x58] sm:$0xf]
      %v1052 = vld [vmem:[%s1028 + $0x5c] sm:$0xf]
      %v1053 = vld [vmem:[%s1028 + $0x60] sm:$0xf]
      %v1054 = vld [vmem:[%s1028 + $0x64] sm:$0xf]
      %v1055 = vld [vmem:[%s1028 + $0x68] sm:$0xf]
      %v1056 = vld [vmem:[%s1028 + $0x6c] sm:$0xf]
      %v1057 = vld [vmem:[%s1028 + $0x70] sm:$0xf]
      %v1058 = vld [vmem:[%s1028 + $0x74] sm:$0xf]
      %v1059 = vld [vmem:[%s1028 + $0x78] sm:$0xf]
      %v1060 = vld [vmem:[%s1028 + $0x7c] sm:$0xf]
      %v1061 = vld [vmem:[%s1028 + $0x80] sm:$0xf]
      %v1062 = vld [vmem:[%s1028 + $0x84] sm:$0xf]
      %v1063 = vld [vmem:[%s1028 + $0x88] sm:$0xf]
      %v1064 = vld [vmem:[%s1028 + $0x8c] sm:$0xf]
      %v1065 = vld [vmem:[%s1028 + $0x90] sm:$0xf]
      %v1066 = vld [vmem:[%s1028 + $0x94] sm:$0xf]
      %v1067 = vld [vmem:[%s1028 + $0x98] sm:$0xf]
      %v1068 = vld [vmem:[%s1028 + $0x9c] sm:$0xf]
      %v1069 = vld [vmem:[%s1028 + $0xa0] sm:$0xf]
      %v1070 = vld [vmem:[%s1028 + $0xa4] sm:$0xf]
      %v1071 = vld [vmem:[%s1028 + $0xa8] sm:$0xf]
      %v1072 = vld [vmem:[%s1028 + $0xac] sm:$0xf]
      %v1073 = vld [vmem:[%s1028 + $0xb0] sm:$0xf]
      %v1074 = vld [vmem:[%s1028 + $0xb4] sm:$0xf]
      %v1075 = vld [vmem:[%s1028 + $0xb8] sm:$0xf]
      %v1076 = vld [vmem:[%s1028 + $0xbc] sm:$0xf]
      %v1093 = vunpack.c.l.b16 %v1009
      %v1094 = vunpack.c.h.b16 %v1009
      %v1095 = vunpack.c.l.b16 %v1010
      %v1096 = vunpack.c.l.b16 %v1011
      %v1097 = vunpack.c.h.b16 %v1011
      %v1098 = vunpack.c.l.b16 %v1012
      %v1099 = vunpack.c.l.b16 %v1013
      %v1100 = vunpack.c.h.b16 %v1013
      %v1101 = vunpack.c.l.b16 %v1014
      %v1102 = vunpack.c.l.b16 %v1015
      %v1103 = vunpack.c.h.b16 %v1015
      %v1104 = vunpack.c.l.b16 %v1016
      %v1105 = vunpack.c.l.b16 %v1017
      %v1106 = vunpack.c.h.b16 %v1017
      %v1107 = vunpack.c.l.b16 %v1018
      %v1108 = vunpack.c.l.b16 %v1019
      %v1109 = vunpack.c.h.b16 %v1019
      %v1110 = vunpack.c.l.b16 %v1020
      %v1111 = vunpack.c.l.b16 %v1021
      %v1112 = vunpack.c.h.b16 %v1021
      %v1113 = vunpack.c.l.b16 %v1022
      %v1114 = vunpack.c.l.b16 %v1023
      %v1115 = vunpack.c.h.b16 %v1023
      %v1116 = vunpack.c.l.b16 %v1024
      %v1117 = vpack.c.b16 %v1096, %v1093
      %v1118 = vpack.c.b16 %v1097, %v1094
      %v1119 = vpack.c.b16 %v1098, %v1095
      %v1120 = vpack.c.b16 %v1102, %v1099
      %v1121 = vpack.c.b16 %v1103, %v1100
      %v1122 = vpack.c.b16 %v1104, %v1101
      %v1123 = vpack.c.b16 %v1108, %v1105
      %v1124 = vpack.c.b16 %v1109, %v1106
      %v1125 = vpack.c.b16 %v1110, %v1107
      %v1126 = vpack.c.b16 %v1114, %v1111
      %v1127 = vpack.c.b16 %v1115, %v1112
      %v1128 = vpack.c.b16 %v1116, %v1113
      %v1189 = vunpack.c.l.b16 %v1029
      %v1190 = vunpack.c.l.b16 %v1030
      %v1191 = vunpack.c.l.b16 %v1031
      %v1192 = vunpack.c.l.b16 %v1032
      %v1193 = vunpack.c.l.b16 %v1033
      %v1194 = vunpack.c.l.b16 %v1034
      %v1195 = vunpack.c.l.b16 %v1035
      %v1196 = vunpack.c.l.b16 %v1036
      %v1197 = vunpack.c.l.b16 %v1037
      %v1198 = vunpack.c.l.b16 %v1038
      %v1199 = vunpack.c.l.b16 %v1039
      %v1200 = vunpack.c.l.b16 %v1040
      %v1201 = vunpack.c.l.b16 %v1041
      %v1202 = vunpack.c.l.b16 %v1042
      %v1203 = vunpack.c.l.b16 %v1043
      %v1204 = vunpack.c.l.b16 %v1044
      %v1205 = vunpack.c.l.b16 %v1045
      %v1206 = vunpack.c.l.b16 %v1046
      %v1207 = vunpack.c.l.b16 %v1047
      %v1208 = vunpack.c.l.b16 %v1048
      %v1209 = vunpack.c.l.b16 %v1049
      %v1210 = vunpack.c.l.b16 %v1050
      %v1211 = vunpack.c.l.b16 %v1051
      %v1212 = vunpack.c.l.b16 %v1052
      %v1213 = vunpack.c.l.b16 %v1053
      %v1214 = vunpack.c.l.b16 %v1054
      %v1215 = vunpack.c.l.b16 %v1055
      %v1216 = vunpack.c.l.b16 %v1056
      %v1217 = vunpack.c.l.b16 %v1057
      %v1218 = vunpack.c.l.b16 %v1058
      %v1219 = vunpack.c.l.b16 %v1059
      %v1220 = vunpack.c.l.b16 %v1060
      %v1221 = vunpack.c.l.b16 %v1061
      %v1222 = vunpack.c.l.b16 %v1062
      %v1223 = vunpack.c.l.b16 %v1063
      %v1224 = vunpack.c.l.b16 %v1064
      %v1225 = vunpack.c.l.b16 %v1065
      %v1226 = vunpack.c.l.b16 %v1066
      %v1227 = vunpack.c.l.b16 %v1067
      %v1228 = vunpack.c.l.b16 %v1068
      %v1229 = vunpack.c.l.b16 %v1069
      %v1230 = vunpack.c.l.b16 %v1070
      %v1231 = vunpack.c.l.b16 %v1071
      %v1232 = vunpack.c.l.b16 %v1072
      %v1233 = vunpack.c.l.b16 %v1073
      %v1234 = vunpack.c.l.b16 %v1074
      %v1235 = vunpack.c.l.b16 %v1075
      %v1236 = vunpack.c.l.b16 %v1076
      %v1237 = vpack.c.b16 %v1190, %v1189
      %v1238 = vpack.c.b16 %v1192, %v1191
      %v1239 = vpack.c.b16 %v1194, %v1193
      %v1240 = vpack.c.b16 %v1196, %v1195
      %v1241 = vpack.c.b16 %v1198, %v1197
      %v1242 = vpack.c.b16 %v1200, %v1199
      %v1243 = vpack.c.b16 %v1202, %v1201
      %v1244 = vpack.c.b16 %v1204, %v1203
      %v1245 = vpack.c.b16 %v1206, %v1205
      %v1246 = vpack.c.b16 %v1208, %v1207
      %v1247 = vpack.c.b16 %v1210, %v1209
      %v1248 = vpack.c.b16 %v1212, %v1211
      %v1249 = vpack.c.b16 %v1214, %v1213
      %v1250 = vpack.c.b16 %v1216, %v1215
      %v1251 = vpack.c.b16 %v1218, %v1217
      %v1252 = vpack.c.b16 %v1220, %v1219
      %v1253 = vpack.c.b16 %v1222, %v1221
      %v1254 = vpack.c.b16 %v1224, %v1223
      %v1255 = vpack.c.b16 %v1226, %v1225
      %v1256 = vpack.c.b16 %v1228, %v1227
      %v1257 = vpack.c.b16 %v1230, %v1229
      %v1258 = vpack.c.b16 %v1232, %v1231
      %v1259 = vpack.c.b16 %v1234, %v1233
      %v1260 = vpack.c.b16 %v1236, %v1235
      %1285 = vmatpush.bf16.msra.mxu0 %v1244
      %1286 = vmatpush.bf16.msra.mxu0 %v1243
      %1287 = vmatpush.bf16.msra.mxu0 %v1242
      %1288 = vmatpush.bf16.msra.mxu0 %v1241
      %1289 = vmatpush.bf16.msra.mxu0 %v1240
      %1290 = vmatpush.bf16.msra.mxu0 %v1239
      %1291 = vmatpush.bf16.msra.mxu0 %v1238
      %1292 = vmatpush.bf16.msra.mxu0 %v1237
      %1293 = vmatmul.bf16.gmra.mxu0 %v1117
      %v1294 = vpop.f32.mrf.mxu0
      %v1295 = vadd.f32 0.0, %v1294
      %v1296 = vpop.f32.mrf.mxu0
      %v1297 = vadd.f32 0.0, %v1296
      %1298 = vmatmul.bf16.gmra.mxu0 %v1120
      %v1299 = vpop.f32.mrf.mxu0
      %v1300 = vadd.f32 0.0, %v1299
      %v1301 = vpop.f32.mrf.mxu0
      %v1302 = vadd.f32 0.0, %v1301
      %1303 = vmatmul.bf16.gmra.mxu0 %v1123
      %v1304 = vpop.f32.mrf.mxu0
      %v1305 = vadd.f32 0.0, %v1304
      %v1306 = vpop.f32.mrf.mxu0
      %v1307 = vadd.f32 0.0, %v1306
      %1308 = vmatmul.bf16.gmra.mxu0 %v1126
      %v1309 = vpop.f32.mrf.mxu0
      %v1310 = vadd.f32 0.0, %v1309
      %v1311 = vpop.f32.mrf.mxu0
      %v1312 = vadd.f32 0.0, %v1311
      %1313 = vdwg.mxu0
      %1314 = vmatpush.bf16.msra.mxu0 %v1252
      %1315 = vmatpush.bf16.msra.mxu0 %v1251
      %1316 = vmatpush.bf16.msra.mxu0 %v1250
      %1317 = vmatpush.bf16.msra.mxu0 %v1249
      %1318 = vmatpush.bf16.msra.mxu0 %v1248
      %1319 = vmatpush.bf16.msra.mxu0 %v1247
      %1320 = vmatpush.bf16.msra.mxu0 %v1246
      %1321 = vmatpush.bf16.msra.mxu0 %v1245
      %1322 = vmatmul.bf16.gmra.mxu0 %v1118
      %v1323 = vpop.f32.mrf.mxu0
      %v1324 = vadd.f32 %v1295, %v1323
      %v1325 = vpop.f32.mrf.mxu0
      %v1326 = vadd.f32 %v1297, %v1325
      %1327 = vmatmul.bf16.gmra.mxu0 %v1121
      %v1328 = vpop.f32.mrf.mxu0
      %v1329 = vadd.f32 %v1300, %v1328
      %v1330 = vpop.f32.mrf.mxu0
      %v1331 = vadd.f32 %v1302, %v1330
      %1332 = vmatmul.bf16.gmra.mxu0 %v1124
      %v1333 = vpop.f32.mrf.mxu0
      %v1334 = vadd.f32 %v1305, %v1333
      %v1335 = vpop.f32.mrf.mxu0
      %v1336 = vadd.f32 %v1307, %v1335
      %1337 = vmatmul.bf16.gmra.mxu0 %v1127
      %v1338 = vpop.f32.mrf.mxu0
      %v1339 = vadd.f32 %v1310, %v1338
      %v1340 = vpop.f32.mrf.mxu0
      %v1341 = vadd.f32 %v1312, %v1340
      %1342 = vdwg.mxu0
      %1343 = vmatpush.bf16.msra.mxu0 %v1260
      %1344 = vmatpush.bf16.msra.mxu0 %v1259
      %1345 = vmatpush.bf16.msra.mxu0 %v1258
      %1346 = vmatpush.bf16.msra.mxu0 %v1257
      %1347 = vmatpush.bf16.msra.mxu0 %v1256
      %1348 = vmatpush.bf16.msra.mxu0 %v1255
      %1349 = vmatpush.bf16.msra.mxu0 %v1254
      %1350 = vmatpush.bf16.msra.mxu0 %v1253
      %1351 = vmatmul.bf16.gmra.mxu0 %v1119
      %v1352 = vpop.f32.mrf.mxu0
      %v1353 = vadd.f32 %v1324, %v1352
      %v1354 = vpop.f32.mrf.mxu0
      %v1355 = vadd.f32 %v1326, %v1354
      %1356 = vmatmul.bf16.gmra.mxu0 %v1122
      %v1357 = vpop.f32.mrf.mxu0
      %v1358 = vadd.f32 %v1329, %v1357
      %v1359 = vpop.f32.mrf.mxu0
      %v1360 = vadd.f32 %v1331, %v1359
      %1361 = vmatmul.bf16.gmra.mxu0 %v1125
      %v1362 = vpop.f32.mrf.mxu0
      %v1363 = vadd.f32 %v1334, %v1362
      %v1364 = vpop.f32.mrf.mxu0
      %v1365 = vadd.f32 %v1336, %v1364
      %1366 = vmatmul.bf16.gmra.mxu0 %v1128
      %v1367 = vpop.f32.mrf.mxu0
      %v1368 = vadd.f32 %v1339, %v1367
      %v1369 = vpop.f32.mrf.mxu0
      %v1370 = vadd.f32 %v1341, %v1369
      %1371 = vdwg.mxu0
      %v1372 = vld [vmem:[#allocation2] sm:$0xff]
      %v1373 = vld [vmem:[#allocation2 + $0x8] sm:$0xff]
      %v1374 = vld [vmem:[#allocation2 + $0x10] sm:$0xff]
      %v1375 = vld [vmem:[#allocation2 + $0x18] sm:$0xff]
      %v1376 = vld [vmem:[#allocation2 + $0x20] sm:$0xff]
      %v1377 = vld [vmem:[#allocation2 + $0x28] sm:$0xff]
      %v1378 = vld [vmem:[#allocation2 + $0x30] sm:$0xff]
      %v1379 = vld [vmem:[#allocation2 + $0x38] sm:$0xff]
      %v1380 = vadd.f32 %v1372, %v1353
      %v1381 = vadd.f32 %v1373, %v1355
      %v1382 = vadd.f32 %v1374, %v1358
      %v1383 = vadd.f32 %v1375, %v1360
      %v1384 = vadd.f32 %v1376, %v1363
      %v1385 = vadd.f32 %v1377, %v1365
      %v1386 = vadd.f32 %v1378, %v1368
      %v1387 = vadd.f32 %v1379, %v1370
      %1388 = vst.msk [vmem:[#allocation2] sm:$0xff] %vm613, %v1380
      %1389 = vst.msk [vmem:[#allocation2 + $0x8] sm:$0xff] %vm613, %v1381
      %1390 = vst.msk [vmem:[#allocation2 + $0x10] sm:$0xff] %vm613, %v1382
      %1391 = vst.msk [vmem:[#allocation2 + $0x18] sm:$0xff] %vm613, %v1383
      %1392 = vst.msk [vmem:[#allocation2 + $0x20] sm:$0xff] %vm613, %v1384
      %1393 = vst.msk [vmem:[#allocation2 + $0x28] sm:$0xff] %vm613, %v1385
      %1394 = vst.msk [vmem:[#allocation2 + $0x30] sm:$0xff] %vm613, %v1386
      %1395 = vst.msk [vmem:[#allocation2 + $0x38] sm:$0xff] %vm613, %v1387
      %p1396 = scmp.eq.s32.totalorder %s21, 2
      // Predicated region
      $region37: #{motion_encoder_3d.6} parent=31 // pred_check
        %p1397 = pneg %p1396
      $region38: #{motion_encoder_3d.6} parent=31 // pred_check_branch
        %1399 = sbr.rel (%p1397) target = $region40
      $region39: #{motion_encoder_3d.6} parent=31 // pred_region
        %v1400 = vld [vmem:[#allocation2] sm:$0xff]
        %v1401 = vld [vmem:[#allocation2 + $0x8] sm:$0xff]
        %v1402 = vld [vmem:[#allocation2 + $0x10] sm:$0xff]
        %v1403 = vld [vmem:[#allocation2 + $0x18] sm:$0xff]
        %v1404 = vld [vmem:[#allocation2 + $0x20] sm:$0xff]
        %v1405 = vld [vmem:[#allocation2 + $0x28] sm:$0xff]
        %v1406 = vld [vmem:[#allocation2 + $0x30] sm:$0xff]
        %v1407 = vld [vmem:[#allocation2 + $0x38] sm:$0xff]
        %v1408 = vld [vmem:[%s2] sm:$0x1]
        %v1410 = vperm.slane %v1408, 0
        %v1412 = vadd.f32 %v1400, %v1410
        %v1413 = vadd.f32 %v1401, %v1410
        %v1414 = vadd.f32 %v1402, %v1410
        %v1415 = vadd.f32 %v1403, %v1410
        %v1416 = vadd.f32 %v1404, %v1410
        %v1417 = vadd.f32 %v1405, %v1410
        %v1418 = vadd.f32 %v1406, %v1410
        %v1419 = vadd.f32 %v1407, %v1410
        %v1420 = vmax.f32 %v1412, 0.0
        %v1421 = vmax.f32 %v1413, 0.0
        %v1422 = vmax.f32 %v1414, 0.0
        %v1423 = vmax.f32 %v1415, 0.0
        %v1424 = vmax.f32 %v1416, 0.0
        %v1425 = vmax.f32 %v1417, 0.0
        %v1426 = vmax.f32 %v1418, 0.0
        %v1427 = vmax.f32 %v1419, 0.0
        %v1428 = vpack.c.bf16 %v1420, %v1420
        %v1429 = vpack.c.bf16 %v1421, %v1421
        %v1430 = vpack.c.bf16 %v1422, %v1422
        %v1431 = vpack.c.bf16 %v1423, %v1423
        %v1432 = vpack.c.bf16 %v1424, %v1424
        %v1433 = vpack.c.bf16 %v1425, %v1425
        %v1434 = vpack.c.bf16 %v1426, %v1426
        %v1435 = vpack.c.bf16 %v1427, %v1427
        %vm1436 = vcmask 519168
        %1437 = vst.msk [vmem:[%s220] sm:$0xf] %vm1436, %v1428
        %1438 = vst.msk [vmem:[%s220 + $0x4] sm:$0xf] %vm1436, %v1429
        %1439 = vst.msk [vmem:[%s220 + $0x8] sm:$0xf] %vm1436, %v1430
        %1440 = vst.msk [vmem:[%s220 + $0xc] sm:$0xf] %vm1436, %v1431
        %1441 = vst.msk [vmem:[%s220 + $0x10] sm:$0xf] %vm1436, %v1432
        %1442 = vst.msk [vmem:[%s220 + $0x14] sm:$0xf] %vm1436, %v1433
        %1443 = vst.msk [vmem:[%s220 + $0x18] sm:$0xf] %vm1436, %v1434
        %1444 = vst.msk [vmem:[%s220 + $0x1c] sm:$0xf] %vm1436, %v1435
      $region40: #{motion_encoder_3d.6} parent=31 // pred_fallthru
        _
      %p1445 = scmp.lt.s32.totalorder %s19, 1
      %s1446 = scalar_select %p1445, %s19, 1
      %p1447 = scmp.lt.s32.totalorder %s20, 3
      %s1448 = scalar_select %p1447, %s20, 3
      %s1449 = smul.addr %s1448, 8
      %s1450 = smul.addr %s1446, 32
      %s1451 = sadd.s32 %s1449, %s1450
      %s1452 = smul.addr %s1451, 4
      %s1453 = scalar_lea.vmem %s3, %s1452
      // Predicated region
      $region41: #{motion_encoder_3d.6} parent=31 // pred_check
        %p1454 = pneg %p125
      $region42: #{motion_encoder_3d.6} parent=31 // pred_check_branch
        %1456 = sbr.rel (%p1454) target = $region44
      $region43: #{motion_encoder_3d.6} parent=31 // pred_region
        _
      $region44: #{motion_encoder_3d.6} parent=31 // pred_fallthru
        _
    $region32: #{motion_encoder_3d.6} parent=5 // pred_fallthru
      _
    %p1457 = scmp.le.s32.totalorder 2, %s9
    // Predicated region
    $region45: #{motion_encoder_3d.6} parent=5 // pred_check
      %p1458 = pneg %p1457
    $region46: #{motion_encoder_3d.6} parent=5 // pred_check_branch
      %1460 = sbr.rel (%p1458) target = $region48
    $region47: #{motion_encoder_3d.6} parent=5 // pred_region
      %s1461 = ssub.s32 %s9, 2
      // Predicated region
      $region49: #{motion_encoder_3d.6} parent=47 // pred_check
        %p1462 = pneg %p131
      $region50: #{motion_encoder_3d.6} parent=47 // pred_check_branch
        %1464 = sbr.rel (%p1462) target = $region52
      $region51: #{motion_encoder_3d.6} parent=47 // pred_region
        %p1465 = scmp.lt.s32.totalorder %s22, 1
        %s1466 = scalar_select %p1465, %s22, 1
        %p1467 = scmp.lt.s32.totalorder %s23, 3
        %s1468 = scalar_select %p1467, %s23, 3
        %s1469 = smul.addr %s1468, 8
        %s1470 = smul.addr %s1466, 32
        %s1471 = sadd.s32 %s1469, %s1470
        %s1472 = smul.addr %s1471, 4
        %s1473 = scalar_lea.vmem %s3, %s1472
      $region52: #{motion_encoder_3d.6} parent=47 // pred_fallthru
        _
    $region48: #{motion_encoder_3d.6} parent=5 // pred_fallthru
      _
  $region6: #{motion_encoder_3d.6} parent=0 // loop_footer
    %s13 = sadd.s32 1, %s9
  $region7: #{motion_encoder_3d.6} parent=0 // loop_footer_branch
    %8 = sbr.rel target = $region3
  $region8: #{motion_encoder_3d.6} parent=0 // loop_exit
    _

// kernel: motion_encoder_3d.4
$region0: #{motion_encoder_3d.4}
  #allocation0 [shape = 'u32[]', space=smem, size = 0x4, offset = 0x4, fixed_abs, tag = 'smem constant byte address 0x4 - core index']
  #allocation1 [shape = 'u32[72,128]{1,0:T(1,128)}', space=vmem, size = 0x9000, scoped, tag = 'internal scratch']
  #allocation2 [shape = 'f32[64,128]{1,0:T(8,128)}', space=vmem, size = 0x8000, scoped, tag = 'scratch operand']
  #allocation3 [shape = 'bf16[80,768]{1,0:T(8,128)(2,1)}', space=vmem, size = 0x1e000, scoped, tag = 'scratch operand']
  %s0 = inlined_call_operand.vmem [shape: bf16[2,6,80,84], index: 0, kind: input, shape index: {}]
  %s1 = inlined_call_operand.vmem [shape: bf16[84,768], index: 1, kind: input, shape index: {}]
  %s2 = inlined_call_operand.vmem [shape: bf16[9,768,128], index: 2, kind: input, shape index: {}]
  %s3 = inlined_call_operand.vmem [shape: f32[1,128], index: 3, kind: input, shape index: {}]
  %s4 = inlined_call_operand.vmem [shape: bf16[2,4,64,128], index: 4, kind: output, shape index: {}]
  %s5 = sld [smem:[#allocation0]]
  $region57: #{motion_encoder_3d.4} parent=0
    _
  %s7 = ssub.s32 1, %s5
  %s8 = scalar_select 0, %s7, %s5
  loop: start=0, step=1, limit=26
  $region2: #{motion_encoder_3d.4} parent=0 // loop_pre_header
    _
  $region3: #{motion_encoder_3d.4} parent=0 // loop_header
    %s10 = sphi 0, %s14
    %p11 = scmp.ge.s32.totalorder %s10, 26
    %s17 = sphi 0, %s36
    %s18 = sphi 0, %s32
    %s19 = sphi 0, %s28
    %s20 = sphi 0, %s17
    %s21 = sphi 0, %s18
    %s22 = sphi 0, %s19
    %s23 = sphi 0, %s20
    %s24 = sphi 0, %s21
    %s25 = sphi 0, %s22
    %s43 = sphi 0, %s45
    %s46 = sphi 0, %s43
    %s47 = sphi 0, %s46
    %s63 = sphi 0, %s47
    %s67 = sphi 0, %s67
    %s69 = sphi 0, %s67
    %s70 = sphi 0, %s69
    %s84 = sphi 0, %s70
    %s88 = sphi 0, %s88
    %s90 = sphi 0, %s88
    %s91 = sphi 0, %s90
    %s105 = sphi 0, %s91
    %s109 = sphi 0, %s109
    %s111 = sphi 0, %s109
    %s112 = sphi 0, %s111
    %s126 = sphi 0, %s112
    %s134 = sphi 0, %s136
    %s137 = sphi 0, %s134
    %s138 = sphi 0, %s137
    %s154 = sphi 0, %s138
  $region4: #{motion_encoder_3d.4} parent=0 // loop_header_branch
    %13 = sbr.rel (%p11) target = $region8
  $region5: #{motion_encoder_3d.4} parent=0 // loop_body
    %s15 = ssub.s32 %s10, 1
    %s16 = ssub.s32 %s10, 2
    %s26 = sadd.s32 1, %s19
    %p27 = scmp.ge.s32.totalorder %s26, 3
    %s28 = scalar_select %p27, 0, %s26
    %s29 = sadd.s32 1, %s18
    %s30 = scalar_select %p27, %s29, %s18
    %p31 = scmp.ge.s32.totalorder %s30, 4
    %s32 = scalar_select %p31, 0, %s30
    %s33 = sadd.s32 1, %s17
    %s34 = scalar_select %p31, %s33, %s17
    %p35 = scmp.ge.s32.totalorder %s34, 2
    %s36 = scalar_select %p35, 0, %s34
    %s37 = sadd.s32 %s18, %s19
    %s38 = sadd.s32 %s32, %s28
    %s39 = ssub.s32 %s17, %s36
    %s40 = ssub.s32 %s37, %s38
    %s41 = sor.u32 %s39, %s40
    %p42 = scmp.eq.s32.totalorder %s41, 0
    %s44 = sadd.s32 %s43, 1
    %s45 = scalar_select %p42, %s43, %s44
    %p48 = pneg %p42
    %p49 = scmp.eq.s32.totalorder %s10, 23
    %p50 = por %p48, %p49
    %p51 = scmp.ne.s32.totalorder %s43, %s46
    %p52 = scmp.eq.s32.totalorder %s10, 0
    %p53 = por %p51, %p52
    %p54 = scmp.ne.s32.totalorder %s43, %s46
    %p55 = scmp.eq.s32.totalorder %s15, 23
    %p56 = por %p54, %p55
    %p57 = scmp.ne.s32.totalorder %s46, %s47
    %p58 = scmp.eq.s32.totalorder %s15, 0
    %p59 = por %p57, %p58
    %p60 = scmp.ne.s32.totalorder %s46, %s47
    %p61 = scmp.eq.s32.totalorder %s16, 23
    %p62 = por %p60, %p61
    %p64 = scmp.ne.s32.totalorder %s47, %s63
    %p65 = scmp.eq.s32.totalorder %s16, 0
    %p66 = por %p64, %p65
    %s68 = sadd.s32 %s67, 1
    %p71 = scmp.eq.s32.totalorder %s10, 23
    %p72 = scmp.ne.s32.totalorder %s67, %s69
    %p73 = scmp.eq.s32.totalorder %s10, 0
    %p74 = por %p72, %p73
    %p75 = scmp.ne.s32.totalorder %s67, %s69
    %p76 = scmp.eq.s32.totalorder %s15, 23
    %p77 = por %p75, %p76
    %p78 = scmp.ne.s32.totalorder %s69, %s70
    %p79 = scmp.eq.s32.totalorder %s15, 0
    %p80 = por %p78, %p79
    %p81 = scmp.ne.s32.totalorder %s69, %s70
    %p82 = scmp.eq.s32.totalorder %s16, 23
    %p83 = por %p81, %p82
    %p85 = scmp.ne.s32.totalorder %s70, %s84
    %p86 = scmp.eq.s32.totalorder %s16, 0
    %p87 = por %p85, %p86
    %s89 = sadd.s32 %s88, 1
    %p92 = scmp.eq.s32.totalorder %s10, 23
    %p93 = scmp.ne.s32.totalorder %s88, %s90
    %p94 = scmp.eq.s32.totalorder %s10, 0
    %p95 = por %p93, %p94
    %p96 = scmp.ne.s32.totalorder %s88, %s90
    %p97 = scmp.eq.s32.totalorder %s15, 23
    %p98 = por %p96, %p97
    %p99 = scmp.ne.s32.totalorder %s90, %s91
    %p100 = scmp.eq.s32.totalorder %s15, 0
    %p101 = por %p99, %p100
    %p102 = scmp.ne.s32.totalorder %s90, %s91
    %p103 = scmp.eq.s32.totalorder %s16, 23
    %p104 = por %p102, %p103
    %p106 = scmp.ne.s32.totalorder %s91, %s105
    %p107 = scmp.eq.s32.totalorder %s16, 0
    %p108 = por %p106, %p107
    %s110 = sadd.s32 %s109, 1
    %p113 = scmp.eq.s32.totalorder %s10, 23
    %p114 = scmp.ne.s32.totalorder %s109, %s111
    %p115 = scmp.eq.s32.totalorder %s10, 0
    %p116 = por %p114, %p115
    %p117 = scmp.ne.s32.totalorder %s109, %s111
    %p118 = scmp.eq.s32.totalorder %s15, 23
    %p119 = por %p117, %p118
    %p120 = scmp.ne.s32.totalorder %s111, %s112
    %p121 = scmp.eq.s32.totalorder %s15, 0
    %p122 = por %p120, %p121
    %p123 = scmp.ne.s32.totalorder %s111, %s112
    %p124 = scmp.eq.s32.totalorder %s16, 23
    %p125 = por %p123, %p124
    %p127 = scmp.ne.s32.totalorder %s112, %s126
    %p128 = scmp.eq.s32.totalorder %s16, 0
    %p129 = por %p127, %p128
    %s130 = ssub.s32 %s17, %s36
    %s131 = ssub.s32 %s18, %s32
    %s132 = sor.u32 %s130, %s131
    %p133 = scmp.eq.s32.totalorder %s132, 0
    %s135 = sadd.s32 %s134, 1
    %s136 = scalar_select %p133, %s134, %s135
    %p139 = pneg %p133
    %p140 = scmp.eq.s32.totalorder %s10, 23
    %p141 = por %p139, %p140
    %p142 = scmp.ne.s32.totalorder %s134, %s137
    %p143 = scmp.eq.s32.totalorder %s10, 0
    %p144 = por %p142, %p143
    %p145 = scmp.ne.s32.totalorder %s134, %s137
    %p146 = scmp.eq.s32.totalorder %s15, 23
    %p147 = por %p145, %p146
    %p148 = scmp.ne.s32.totalorder %s137, %s138
    %p149 = scmp.eq.s32.totalorder %s15, 0
    %p150 = por %p148, %p149
    %p151 = scmp.ne.s32.totalorder %s137, %s138
    %p152 = scmp.eq.s32.totalorder %s16, 23
    %p153 = por %p151, %p152
    %p155 = scmp.ne.s32.totalorder %s138, %s154
    %p156 = scmp.eq.s32.totalorder %s16, 0
    %p157 = por %p155, %p156
    %p158 = scmp.le.s32.totalorder 1, %s10
    %p159 = scmp.lt.s32.totalorder %s10, 25
    %p160 = pnand %p158, %p159
    %p161 = pneg %p160
    // Predicated region
    $region9: #{motion_encoder_3d.4} parent=5 // pred_check
      _
    $region10: #{motion_encoder_3d.4} parent=5 // pred_check_branch
      %163 = sbr.rel (%p160) target = $region12
    $region11: #{motion_encoder_3d.4} parent=5 // pred_region
      %s164 = ssub.s32 %s10, 1
      // Predicated region
      $region13: #{motion_encoder_3d.4} parent=11 // pred_check
        %p165 = pneg %p80
      $region14: #{motion_encoder_3d.4} parent=11 // pred_check_branch
        %167 = sbr.rel (%p165) target = $region16
      $region15: #{motion_encoder_3d.4} parent=11 // pred_region
        _
      $region16: #{motion_encoder_3d.4} parent=11 // pred_fallthru
        _
      // Predicated region
      $region17: #{motion_encoder_3d.4} parent=11 // pred_check
        %p168 = pneg %p101
      $region18: #{motion_encoder_3d.4} parent=11 // pred_check_branch
        %170 = sbr.rel (%p168) target = $region20
      $region19: #{motion_encoder_3d.4} parent=11 // pred_region
        _
      $region20: #{motion_encoder_3d.4} parent=11 // pred_fallthru
        _
      // Predicated region
      $region21: #{motion_encoder_3d.4} parent=11 // pred_check
        %p171 = pneg %p122
      $region22: #{motion_encoder_3d.4} parent=11 // pred_check_branch
        %173 = sbr.rel (%p171) target = $region24
      $region23: #{motion_encoder_3d.4} parent=11 // pred_region
        _
      $region24: #{motion_encoder_3d.4} parent=11 // pred_fallthru
        _
    $region12: #{motion_encoder_3d.4} parent=5 // pred_fallthru
      _
    %p174 = scmp.lt.s32.totalorder %s10, 24
    // Predicated region
    $region25: #{motion_encoder_3d.4} parent=5 // pred_check
      %p175 = pneg %p174
    $region26: #{motion_encoder_3d.4} parent=5 // pred_check_branch
      %177 = sbr.rel (%p175) target = $region28
    $region27: #{motion_encoder_3d.4} parent=5 // pred_region
      // Predicated region
      $region29: #{motion_encoder_3d.4} parent=27 // pred_check
        %p178 = pneg %p53
      $region30: #{motion_encoder_3d.4} parent=27 // pred_check_branch
        %180 = sbr.rel (%p178) target = $region32
      $region31: #{motion_encoder_3d.4} parent=27 // pred_region
        %s181 = sadd.s32 %s18, %s19
        %p182 = scmp.lt.s32.totalorder %s17, 1
        %s183 = scalar_select %p182, %s17, 1
        %p184 = scmp.lt.s32.totalorder %s181, 5
        %s185 = scalar_select %p184, %s181, 5
        %s186 = smul.addr %s185, 10
        %s187 = smul.addr %s183, 60
        %s188 = sadd.s32 %s186, %s187
        %s189 = smul.addr %s188, 4
        %s190 = scalar_lea.vmem %s0, %s189
        %s191 = sadd.s32 %s18, %s19
      $region32: #{motion_encoder_3d.4} parent=27 // pred_fallthru
        _
    $region28: #{motion_encoder_3d.4} parent=5 // pred_fallthru
      _
    %p192 = scmp.le.s32.totalorder 1, %s10
    %p193 = scmp.lt.s32.totalorder %s10, 25
    %p194 = pnand %p192, %p193
    %p195 = pneg %p194
    // Predicated region
    $region33: #{motion_encoder_3d.4} parent=5 // pred_check
      _
    $region34: #{motion_encoder_3d.4} parent=5 // pred_check_branch
      %197 = sbr.rel (%p194) target = $region36
    $region35: #{motion_encoder_3d.4} parent=5 // pred_region
      %s198 = ssub.s32 %s10, 1
      %s199 = sadd.s32 %s21, %s22
      %p200 = scmp.lt.s32.totalorder %s20, 1
      %s201 = scalar_select %p200, %s20, 1
      %p202 = scmp.lt.s32.totalorder %s199, 5
      %s203 = scalar_select %p202, %s199, 5
      %s204 = smul.addr %s203, 10
      %s205 = smul.addr %s201, 60
      %s206 = sadd.s32 %s204, %s205
      %s207 = smul.addr %s206, 4
      %s208 = scalar_lea.vmem %s0, %s207
      %p209 = pneg %p59
      %p210 = pneg %p56
      %p211 = pneg %p80
      %p212 = pneg %p77
      %p213 = pneg %p101
      %p214 = pneg %p98
      %p215 = pneg %p122
      %p216 = pneg %p119
      %p217 = pneg %p150
      %p218 = pneg %p147
      %p219 = scmp.lt.s32.totalorder %s20, 1
      %s220 = scalar_select %p219, %s20, 1
      %p221 = scmp.lt.s32.totalorder %s21, 3
      %s222 = scalar_select %p221, %s21, 3
      %s223 = smul.addr %s222, 8
      %s224 = smul.addr %s220, 32
      %s225 = sadd.s32 %s223, %s224
      %s226 = smul.addr %s225, 4
      %s227 = scalar_lea.vmem %s4, %s226
      %s228 = sadd.s32 %s21, %s22
      %p229 = scmp.lt.s32.totalorder %s20, 1
      %s230 = scalar_select %p229, %s20, 1
      %p231 = scmp.lt.s32.totalorder %s228, 5
      %s232 = scalar_select %p231, %s228, 5
      %s233 = smul.addr %s232, 10
      %s234 = smul.addr %s230, 60
      %s235 = sadd.s32 %s233, %s234
      %s236 = smul.addr %s235, 4
      %s237 = scalar_lea.vmem %s0, %s236
      %s238 = sadd.s32 %s21, %s22
      %p239 = scmp.lt.s32.totalorder %s20, 1
      %s240 = scalar_select %p239, %s20, 1
      %p241 = scmp.lt.s32.totalorder %s21, 3
      %s242 = scalar_select %p241, %s21, 3
      %s243 = smul.addr %s242, 8
      %s244 = smul.addr %s240, 32
      %s245 = sadd.s32 %s243, %s244
      %s246 = smul.addr %s245, 4
      %s247 = scalar_lea.vmem %s4, %s246
      %p249 = scmp.eq.s32.totalorder %s22, 0
      // Predicated region
      $region37: #{motion_encoder_3d.4} parent=35 // pred_check
        %p250 = pneg %p249
      $region38: #{motion_encoder_3d.4} parent=35 // pred_check_branch
        %252 = sbr.rel (%p250) target = $region40
      $region39: #{motion_encoder_3d.4} parent=35 // pred_region
        %253 = vst [vmem:[#allocation2] sm:$0xff] 0.0
        %254 = vst [vmem:[#allocation2 + $0x8] sm:$0xff] 0.0
        %255 = vst [vmem:[#allocation2 + $0x10] sm:$0xff] 0.0
        %256 = vst [vmem:[#allocation2 + $0x18] sm:$0xff] 0.0
        %257 = vst [vmem:[#allocation2 + $0x20] sm:$0xff] 0.0
        %258 = vst [vmem:[#allocation2 + $0x28] sm:$0xff] 0.0
        %259 = vst [vmem:[#allocation2 + $0x30] sm:$0xff] 0.0
        %260 = vst [vmem:[#allocation2 + $0x38] sm:$0xff] 0.0
      $region40: #{motion_encoder_3d.4} parent=35 // pred_fallthru
        _
      %v261 = vld [vmem:[%s237] sm:$0xf]
      %v262 = vld [vmem:[%s237 + $0x4] sm:$0xf]
      %v263 = vld [vmem:[%s237 + $0x8] sm:$0xf]
      %v264 = vld [vmem:[%s237 + $0xc] sm:$0xf]
      %v265 = vld [vmem:[%s237 + $0x10] sm:$0xf]
      %v266 = vld [vmem:[%s237 + $0x14] sm:$0xf]
      %v267 = vld [vmem:[%s237 + $0x18] sm:$0xf]
      %v268 = vld [vmem:[%s237 + $0x1c] sm:$0xf]
      %v269 = vld [vmem:[%s237 + $0x20] sm:$0xf]
      %v270 = vld [vmem:[%s237 + $0x24] sm:$0xf]
      %v271 = vld [vmem:[%s1] sm:$0xff]
      %v272 = vld [vmem:[%s1 + $0x8] sm:$0xff]
      %v273 = vld [vmem:[%s1 + $0x10] sm:$0xff]
      %v274 = vld [vmem:[%s1 + $0x18] sm:$0xff]
      %v275 = vld [vmem:[%s1 + $0x20] sm:$0xff]
      %v276 = vld [vmem:[%s1 + $0x28] sm:$0xff]
      %v277 = vld [vmem:[%s1 + $0x30] sm:$0xff]
      %v278 = vld [vmem:[%s1 + $0x38] sm:$0xff]
      %v279 = vld [vmem:[%s1 + $0x40] sm:$0xff]
      %v280 = vld [vmem:[%s1 + $0x48] sm:$0xff]
      %v281 = vld [vmem:[%s1 + $0x50] sm:$0xff]
      %v282 = vld [vmem:[%s1 + $0x58] sm:$0xff]
      %v283 = vld [vmem:[%s1 + $0x60] sm:$0xff]
      %v284 = vld [vmem:[%s1 + $0x68] sm:$0xff]
      %v285 = vld [vmem:[%s1 + $0x70] sm:$0xff]
      %v286 = vld [vmem:[%s1 + $0x78] sm:$0xff]
      %v287 = vld [vmem:[%s1 + $0x80] sm:$0xff]
      %v288 = vld [vmem:[%s1 + $0x88] sm:$0xff]
      %v289 = vld [vmem:[%s1 + $0x90] sm:$0xff]
      %v290 = vld [vmem:[%s1 + $0x98] sm:$0xff]
      %v291 = vld [vmem:[%s1 + $0xa0] sm:$0xff]
      %v292 = vld [vmem:[%s1 + $0xa8] sm:$0xff]
      %v293 = vld [vmem:[%s1 + $0xb0] sm:$0xff]
      %v294 = vld [vmem:[%s1 + $0xb8] sm:$0xff]
      %v295 = vld [vmem:[%s1 + $0xc0] sm:$0xff]
      %v296 = vld [vmem:[%s1 + $0xc8] sm:$0xff]
      %v297 = vld [vmem:[%s1 + $0xd0] sm:$0xff]
      %v298 = vld [vmem:[%s1 + $0xd8] sm:$0xff]
      %v299 = vld [vmem:[%s1 + $0xe0] sm:$0xff]
      %v300 = vld [vmem:[%s1 + $0xe8] sm:$0xff]
      %v301 = vld [vmem:[%s1 + $0xf0] sm:$0x33]
      %v302 = vld [vmem:[%s1 + $0xf8] sm:$0x33]
      %v303 = vld [vmem:[%s1 + $0x100] sm:$0x33]
      %v314 = vunpack.c.l.b16 %v261
      %v315 = vunpack.c.l.b16 %v262
      %v316 = vunpack.c.l.b16 %v263
      %v317 = vunpack.c.l.b16 %v264
      %v318 = vunpack.c.l.b16 %v265
      %v319 = vunpack.c.l.b16 %v266
      %v320 = vunpack.c.l.b16 %v267
      %v321 = vunpack.c.l.b16 %v268
      %v322 = vunpack.c.l.b16 %v269
      %v323 = vunpack.c.l.b16 %v270
      %v324 = vpack.c.b16 %v315, %v314
      %v325 = vpack.c.b16 %v317, %v316
      %v326 = vpack.c.b16 %v319, %v318
      %v327 = vpack.c.b16 %v321, %v320
      %v328 = vpack.c.b16 %v323, %v322
      %v362 = vunpack.c.l.b16 %v271
      %v363 = vunpack.c.h.b16 %v271
      %v364 = vunpack.c.l.b16 %v272
      %v365 = vunpack.c.h.b16 %v272
      %v366 = vunpack.c.l.b16 %v273
      %v367 = vunpack.c.h.b16 %v273
      %v368 = vunpack.c.l.b16 %v274
      %v369 = vunpack.c.h.b16 %v274
      %v370 = vunpack.c.l.b16 %v275
      %v371 = vunpack.c.h.b16 %v275
      %v372 = vunpack.c.l.b16 %v276
      %v373 = vunpack.c.h.b16 %v276
      %v374 = vunpack.c.l.b16 %v277
      %v375 = vunpack.c.h.b16 %v277
      %v376 = vunpack.c.l.b16 %v278
      %v377 = vunpack.c.h.b16 %v278
      %v378 = vunpack.c.l.b16 %v279
      %v379 = vunpack.c.h.b16 %v279
      %v380 = vunpack.c.l.b16 %v280
      %v381 = vunpack.c.h.b16 %v280
      %v382 = vunpack.c.l.b16 %v281
      %v383 = vunpack.c.h.b16 %v281
      %v384 = vunpack.c.l.b16 %v282
      %v385 = vunpack.c.h.b16 %v282
      %v386 = vunpack.c.l.b16 %v283
      %v387 = vunpack.c.h.b16 %v283
      %v388 = vunpack.c.l.b16 %v284
      %v389 = vunpack.c.h.b16 %v284
      %v390 = vunpack.c.l.b16 %v285
      %v391 = vunpack.c.h.b16 %v285
      %v392 = vunpack.c.l.b16 %v286
      %v393 = vunpack.c.h.b16 %v286
      %v394 = vunpack.c.l.b16 %v287
      %v395 = vunpack.c.h.b16 %v287
      %v396 = vunpack.c.l.b16 %v288
      %v397 = vunpack.c.h.b16 %v288
      %v398 = vunpack.c.l.b16 %v289
      %v399 = vunpack.c.h.b16 %v289
      %v400 = vunpack.c.l.b16 %v290
      %v401 = vunpack.c.h.b16 %v290
      %v402 = vunpack.c.l.b16 %v291
      %v403 = vunpack.c.h.b16 %v291
      %v404 = vunpack.c.l.b16 %v292
      %v405 = vunpack.c.h.b16 %v292
      %v406 = vunpack.c.l.b16 %v293
      %v407 = vunpack.c.h.b16 %v293
      %v408 = vunpack.c.l.b16 %v294
      %v409 = vunpack.c.h.b16 %v294
      %v410 = vunpack.c.l.b16 %v295
      %v411 = vunpack.c.h.b16 %v295
      %v412 = vunpack.c.l.b16 %v296
      %v413 = vunpack.c.h.b16 %v296
      %v414 = vunpack.c.l.b16 %v297
      %v415 = vunpack.c.h.b16 %v297
      %v416 = vunpack.c.l.b16 %v298
      %v417 = vunpack.c.h.b16 %v298
      %v418 = vunpack.c.l.b16 %v299
      %v419 = vunpack.c.h.b16 %v299
      %v420 = vunpack.c.l.b16 %v300
      %v421 = vunpack.c.h.b16 %v300
      %v422 = vunpack.c.l.b16 %v301
      %v423 = vunpack.c.h.b16 %v301
      %v424 = vunpack.c.l.b16 %v302
      %v425 = vunpack.c.h.b16 %v302
      %v426 = vunpack.c.l.b16 %v303
      %v427 = vunpack.c.h.b16 %v303
      %v428 = vpack.c.b16 %v368, %v362
      %v429 = vpack.c.b16 %v369, %v363
      %v430 = vpack.c.b16 %v370, %v364
      %v431 = vpack.c.b16 %v371, %v365
      %v432 = vpack.c.b16 %v372, %v366
      %v433 = vpack.c.b16 %v373, %v367
      %v434 = vpack.c.b16 %v380, %v374
      %v435 = vpack.c.b16 %v381, %v375
      %v436 = vpack.c.b16 %v382, %v376
      %v437 = vpack.c.b16 %v383, %v377
      %v438 = vpack.c.b16 %v384, %v378
      %v439 = vpack.c.b16 %v385, %v379
      %v440 = vpack.c.b16 %v392, %v386
      %v441 = vpack.c.b16 %v393, %v387
      %v442 = vpack.c.b16 %v394, %v388
      %v443 = vpack.c.b16 %v395, %v389
      %v444 = vpack.c.b16 %v396, %v390
      %v445 = vpack.c.b16 %v397, %v391
      %v446 = vpack.c.b16 %v404, %v398
      %v447 = vpack.c.b16 %v405, %v399
      %v448 = vpack.c.b16 %v406, %v400
      %v449 = vpack.c.b16 %v407, %v401
      %v450 = vpack.c.b16 %v408, %v402
      %v451 = vpack.c.b16 %v409, %v403
      %v452 = vpack.c.b16 %v416, %v410
      %v453 = vpack.c.b16 %v417, %v411
      %v454 = vpack.c.b16 %v418, %v412
      %v455 = vpack.c.b16 %v419, %v413
      %v456 = vpack.c.b16 %v420, %v414
      %v457 = vpack.c.b16 %v421, %v415
      %v458 = vpack.c.b16 %v422, %v422
      %v459 = vpack.c.b16 %v423, %v423
      %v460 = vpack.c.b16 %v424, %v424
      %v461 = vpack.c.b16 %v425, %v425
      %v462 = vpack.c.b16 %v426, %v426
      %v463 = vpack.c.b16 %v427, %v427
      %vm494 = vcmask 687104
      %v496 = vsel %vm494, %v324, 0
      %v499 = vsel %vm494, %v325, 0
      %v502 = vsel %vm494, %v326, 0
      %v505 = vsel %vm494, %v327, 0
      %v508 = vsel %vm494, %v328, 0
      %vm510 = vcmask 1041408
      %v512 = vsel %vm510, %v458, 0
      %v515 = vsel %vm510, %v459, 0
      %v518 = vsel %vm510, %v460, 0
      %v521 = vsel %vm510, %v461, 0
      %v524 = vsel %vm510, %v462, 0
      %v527 = vsel %vm510, %v463, 0
      %529 = vmatpush.bf16.msra.mxu0 0
      %530 = vmatpush.bf16.msra.mxu0 0
      %531 = vmatpush.bf16.msra.mxu0 %v512
      %532 = vmatpush.bf16.msra.mxu0 %v452
      %533 = vmatpush.bf16.msra.mxu0 %v446
      %534 = vmatpush.bf16.msra.mxu0 %v440
      %535 = vmatpush.bf16.msra.mxu0 %v434
      %536 = vmatpush.bf16.msra.mxu0 %v428
      %537 = vmatmul.bf16.gmra.mxu0 %v496
      %v538 = vpop.f32.mrf.mxu0
      %v539 = vadd.f32 0.0, %v538
      %v540 = vpop.f32.mrf.mxu0
      %v541 = vadd.f32 0.0, %v540
      %542 = vmatmul.bf16.gmra.mxu0 %v499
      %v543 = vpop.f32.mrf.mxu0
      %v544 = vadd.f32 0.0, %v543
      %v545 = vpop.f32.mrf.mxu0
      %v546 = vadd.f32 0.0, %v545
      %547 = vmatmul.bf16.gmra.mxu0 %v502
      %v548 = vpop.f32.mrf.mxu0
      %v549 = vadd.f32 0.0, %v548
      %v550 = vpop.f32.mrf.mxu0
      %v551 = vadd.f32 0.0, %v550
      %552 = vmatmul.bf16.gmra.mxu0 %v505
      %v553 = vpop.f32.mrf.mxu0
      %v554 = vadd.f32 0.0, %v553
      %v555 = vpop.f32.mrf.mxu0
      %v556 = vadd.f32 0.0, %v555
      %557 = vmatmul.bf16.gmra.mxu0 %v508
      %v558 = vpop.f32.mrf.mxu0
      %v559 = vadd.f32 0.0, %v558
      %v560 = vpop.f32.mrf.mxu0
      %v561 = vadd.f32 0.0, %v560
      %562 = vdwg.mxu0
      %563 = vmatpush.bf16.msra.mxu0 0
      %564 = vmatpush.bf16.msra.mxu0 0
      %565 = vmatpush.bf16.msra.mxu0 %v515
      %566 = vmatpush.bf16.msra.mxu0 %v453
      %567 = vmatpush.bf16.msra.mxu0 %v447
      %568 = vmatpush.bf16.msra.mxu0 %v441
      %569 = vmatpush.bf16.msra.mxu0 %v435
      %570 = vmatpush.bf16.msra.mxu0 %v429
      %571 = vmatmul.bf16.gmra.mxu0 %v496
      %v572 = vpop.f32.mrf.mxu0
      %v573 = vadd.f32 0.0, %v572
      %v574 = vpop.f32.mrf.mxu0
      %v575 = vadd.f32 0.0, %v574
      %576 = vmatmul.bf16.gmra.mxu0 %v499
      %v577 = vpop.f32.mrf.mxu0
      %v578 = vadd.f32 0.0, %v577
      %v579 = vpop.f32.mrf.mxu0
      %v580 = vadd.f32 0.0, %v579
      %581 = vmatmul.bf16.gmra.mxu0 %v502
      %v582 = vpop.f32.mrf.mxu0
      %v583 = vadd.f32 0.0, %v582
      %v584 = vpop.f32.mrf.mxu0
      %v585 = vadd.f32 0.0, %v584
      %586 = vmatmul.bf16.gmra.mxu0 %v505
      %v587 = vpop.f32.mrf.mxu0
      %v588 = vadd.f32 0.0, %v587
      %v589 = vpop.f32.mrf.mxu0
      %v590 = vadd.f32 0.0, %v589
      %591 = vmatmul.bf16.gmra.mxu0 %v508
      %v592 = vpop.f32.mrf.mxu0
      %v593 = vadd.f32 0.0, %v592
      %v594 = vpop.f32.mrf.mxu0
      %v595 = vadd.f32 0.0, %v594
      %596 = vdwg.mxu0
      %597 = vmatpush.bf16.msra.mxu0 0
      %598 = vmatpush.bf16.msra.mxu0 0
      %599 = vmatpush.bf16.msra.mxu0 %v518
      %600 = vmatpush.bf16.msra.mxu0 %v454
      %601 = vmatpush.bf16.msra.mxu0 %v448
      %602 = vmatpush.bf16.msra.mxu0 %v442
      %603 = vmatpush.bf16.msra.mxu0 %v436
      %604 = vmatpush.bf16.msra.mxu0 %v430
      %605 = vmatmul.bf16.gmra.mxu0 %v496
      %v606 = vpop.f32.mrf.mxu0
      %v607 = vadd.f32 0.0, %v606
      %v608 = vpop.f32.mrf.mxu0
      %v609 = vadd.f32 0.0, %v608
      %610 = vmatmul.bf16.gmra.mxu0 %v499
      %v611 = vpop.f32.mrf.mxu0
      %v612 = vadd.f32 0.0, %v611
      %v613 = vpop.f32.mrf.mxu0
      %v614 = vadd.f32 0.0, %v613
      %615 = vmatmul.bf16.gmra.mxu0 %v502
      %v616 = vpop.f32.mrf.mxu0
      %v617 = vadd.f32 0.0, %v616
      %v618 = vpop.f32.mrf.mxu0
      %v619 = vadd.f32 0.0, %v618
      %620 = vmatmul.bf16.gmra.mxu0 %v505
      %v621 = vpop.f32.mrf.mxu0
      %v622 = vadd.f32 0.0, %v621
      %v623 = vpop.f32.mrf.mxu0
      %v624 = vadd.f32 0.0, %v623
      %625 = vmatmul.bf16.gmra.mxu0 %v508
      %v626 = vpop.f32.mrf.mxu0
      %v627 = vadd.f32 0.0, %v626
      %v628 = vpop.f32.mrf.mxu0
      %v629 = vadd.f32 0.0, %v628
      %630 = vdwg.mxu0
      %631 = vmatpush.bf16.msra.mxu0 0
      %632 = vmatpush.bf16.msra.mxu0 0
      %633 = vmatpush.bf16.msra.mxu0 %v521
      %634 = vmatpush.bf16.msra.mxu0 %v455
      %635 = vmatpush.bf16.msra.mxu0 %v449
      %636 = vmatpush.bf16.msra.mxu0 %v443
      %637 = vmatpush.bf16.msra.mxu0 %v437
      %638 = vmatpush.bf16.msra.mxu0 %v431
      %639 = vmatmul.bf16.gmra.mxu0 %v496
      %v640 = vpop.f32.mrf.mxu0
      %v641 = vadd.f32 0.0, %v640
      %v642 = vpop.f32.mrf.mxu0
      %v643 = vadd.f32 0.0, %v642
      %644 = vmatmul.bf16.gmra.mxu0 %v499
      %v645 = vpop.f32.mrf.mxu0
      %v646 = vadd.f32 0.0, %v645
      %v647 = vpop.f32.mrf.mxu0
      %v648 = vadd.f32 0.0, %v647
      %649 = vmatmul.bf16.gmra.mxu0 %v502
      %v650 = vpop.f32.mrf.mxu0
      %v651 = vadd.f32 0.0, %v650
      %v652 = vpop.f32.mrf.mxu0
      %v653 = vadd.f32 0.0, %v652
      %654 = vmatmul.bf16.gmra.mxu0 %v505
      %v655 = vpop.f32.mrf.mxu0
      %v656 = vadd.f32 0.0, %v655
      %v657 = vpop.f32.mrf.mxu0
      %v658 = vadd.f32 0.0, %v657
      %659 = vmatmul.bf16.gmra.mxu0 %v508
      %v660 = vpop.f32.mrf.mxu0
      %v661 = vadd.f32 0.0, %v660
      %v662 = vpop.f32.mrf.mxu0
      %v663 = vadd.f32 0.0, %v662
      %664 = vdwg.mxu0
      %665 = vmatpush.bf16.msra.mxu0 0
      %666 = vmatpush.bf16.msra.mxu0 0
      %667 = vmatpush.bf16.msra.mxu0 %v524
      %668 = vmatpush.bf16.msra.mxu0 %v456
      %669 = vmatpush.bf16.msra.mxu0 %v450
      %670 = vmatpush.bf16.msra.mxu0 %v444
      %671 = vmatpush.bf16.msra.mxu0 %v438
      %672 = vmatpush.bf16.msra.mxu0 %v432
      %673 = vmatmul.bf16.gmra.mxu0 %v496
      %v674 = vpop.f32.mrf.mxu0
      %v675 = vadd.f32 0.0, %v674
      %v676 = vpop.f32.mrf.mxu0
      %v677 = vadd.f32 0.0, %v676
      %678 = vmatmul.bf16.gmra.mxu0 %v499
      %v679 = vpop.f32.mrf.mxu0
      %v680 = vadd.f32 0.0, %v679
      %v681 = vpop.f32.mrf.mxu0
      %v682 = vadd.f32 0.0, %v681
      %683 = vmatmul.bf16.gmra.mxu0 %v502
      %v684 = vpop.f32.mrf.mxu0
      %v685 = vadd.f32 0.0, %v684
      %v686 = vpop.f32.mrf.mxu0
      %v687 = vadd.f32 0.0, %v686
      %688 = vmatmul.bf16.gmra.mxu0 %v505
      %v689 = vpop.f32.mrf.mxu0
      %v690 = vadd.f32 0.0, %v689
      %v691 = vpop.f32.mrf.mxu0
      %v692 = vadd.f32 0.0, %v691
      %693 = vmatmul.bf16.gmra.mxu0 %v508
      %v694 = vpop.f32.mrf.mxu0
      %v695 = vadd.f32 0.0, %v694
      %v696 = vpop.f32.mrf.mxu0
      %v697 = vadd.f32 0.0, %v696
      %698 = vdwg.mxu0
      %699 = vmatpush.bf16.msra.mxu0 0
      %700 = vmatpush.bf16.msra.mxu0 0
      %701 = vmatpush.bf16.msra.mxu0 %v527
      %702 = vmatpush.bf16.msra.mxu0 %v457
      %703 = vmatpush.bf16.msra.mxu0 %v451
      %704 = vmatpush.bf16.msra.mxu0 %v445
      %705 = vmatpush.bf16.msra.mxu0 %v439
      %706 = vmatpush.bf16.msra.mxu0 %v433
      %707 = vmatmul.bf16.gmra.mxu0 %v496
      %v708 = vpop.f32.mrf.mxu0
      %v709 = vadd.f32 0.0, %v708
      %v710 = vpop.f32.mrf.mxu0
      %v711 = vadd.f32 0.0, %v710
      %712 = vmatmul.bf16.gmra.mxu0 %v499
      %v713 = vpop.f32.mrf.mxu0
      %v714 = vadd.f32 0.0, %v713
      %v715 = vpop.f32.mrf.mxu0
      %v716 = vadd.f32 0.0, %v715
      %717 = vmatmul.bf16.gmra.mxu0 %v502
      %v718 = vpop.f32.mrf.mxu0
      %v719 = vadd.f32 0.0, %v718
      %v720 = vpop.f32.mrf.mxu0
      %v721 = vadd.f32 0.0, %v720
      %722 = vmatmul.bf16.gmra.mxu0 %v505
      %v723 = vpop.f32.mrf.mxu0
      %v724 = vadd.f32 0.0, %v723
      %v725 = vpop.f32.mrf.mxu0
      %v726 = vadd.f32 0.0, %v725
      %727 = vmatmul.bf16.gmra.mxu0 %v508
      %v728 = vpop.f32.mrf.mxu0
      %v729 = vadd.f32 0.0, %v728
      %v730 = vpop.f32.mrf.mxu0
      %v731 = vadd.f32 0.0, %v730
      %732 = vdwg.mxu0
      %v733 = vmax.f32 %v539, 0.0
      %v734 = vmax.f32 %v573, 0.0
      %v735 = vmax.f32 %v607, 0.0
      %v736 = vmax.f32 %v641, 0.0
      %v737 = vmax.f32 %v675, 0.0
      %v738 = vmax.f32 %v709, 0.0
      %v739 = vmax.f32 %v541, 0.0
      %v740 = vmax.f32 %v575, 0.0
      %v741 = vmax.f32 %v609, 0.0
      %v742 = vmax.f32 %v643, 0.0
      %v743 = vmax.f32 %v677, 0.0
      %v744 = vmax.f32 %v711, 0.0
      %v745 = vmax.f32 %v544, 0.0
      %v746 = vmax.f32 %v578, 0.0
      %v747 = vmax.f32 %v612, 0.0
      %v748 = vmax.f32 %v646, 0.0
      %v749 = vmax.f32 %v680, 0.0
      %v750 = vmax.f32 %v714, 0.0
      %v751 = vmax.f32 %v546, 0.0
      %v752 = vmax.f32 %v580, 0.0
      %v753 = vmax.f32 %v614, 0.0
      %v754 = vmax.f32 %v648, 0.0
      %v755 = vmax.f32 %v682, 0.0
      %v756 = vmax.f32 %v716, 0.0
      %v757 = vmax.f32 %v549, 0.0
      %v758 = vmax.f32 %v583, 0.0
      %v759 = vmax.f32 %v617, 0.0
      %v760 = vmax.f32 %v651, 0.0
      %v761 = vmax.f32 %v685, 0.0
      %v762 = vmax.f32 %v719, 0.0
      %v763 = vmax.f32 %v551, 0.0
      %v764 = vmax.f32 %v585, 0.0
      %v765 = vmax.f32 %v619, 0.0
      %v766 = vmax.f32 %v653, 0.0
      %v767 = vmax.f32 %v687, 0.0
      %v768 = vmax.f32 %v721, 0.0
      %v769 = vmax.f32 %v554, 0.0
      %v770 = vmax.f32 %v588, 0.0
      %v771 = vmax.f32 %v622, 0.0
      %v772 = vmax.f32 %v656, 0.0
      %v773 = vmax.f32 %v690, 0.0
      %v774 = vmax.f32 %v724, 0.0
      %v775 = vmax.f32 %v556, 0.0
      %v776 = vmax.f32 %v590, 0.0
      %v777 = vmax.f32 %v624, 0.0
      %v778 = vmax.f32 %v658, 0.0
      %v779 = vmax.f32 %v692, 0.0
      %v780 = vmax.f32 %v726, 0.0
      %v781 = vmax.f32 %v559, 0.0
      %v782 = vmax.f32 %v593, 0.0
      %v783 = vmax.f32 %v627, 0.0
      %v784 = vmax.f32 %v661, 0.0
      %v785 = vmax.f32 %v695, 0.0
      %v786 = vmax.f32 %v729, 0.0
      %v787 = vmax.f32 %v561, 0.0
      %v788 = vmax.f32 %v595, 0.0
      %v789 = vmax.f32 %v629, 0.0
      %v790 = vmax.f32 %v663, 0.0
      %v791 = vmax.f32 %v697, 0.0
      %v792 = vmax.f32 %v731, 0.0
      %v793 = vpack.c.bf16 %v734, %v733
      %v794 = vpack.c.bf16 %v736, %v735
      %v795 = vpack.c.bf16 %v738, %v737
      %v796 = vpack.c.bf16 %v740, %v739
      %v797 = vpack.c.bf16 %v742, %v741
      %v798 = vpack.c.bf16 %v744, %v743
      %v799 = vpack.c.bf16 %v746, %v745
      %v800 = vpack.c.bf16 %v748, %v747
      %v801 = vpack.c.bf16 %v750, %v749
      %v802 = vpack.c.bf16 %v752, %v751
      %v803 = vpack.c.bf16 %v754, %v753
      %v804 = vpack.c.bf16 %v756, %v755
      %v805 = vpack.c.bf16 %v758, %v757
      %v806 = vpack.c.bf16 %v760, %v759
      %v807 = vpack.c.bf16 %v762, %v761
      %v808 = vpack.c.bf16 %v764, %v763
      %v809 = vpack.c.bf16 %v766, %v765
      %v810 = vpack.c.bf16 %v768, %v767
      %v811 = vpack.c.bf16 %v770, %v769
      %v812 = vpack.c.bf16 %v772, %v771
      %v813 = vpack.c.bf16 %v774, %v773
      %v814 = vpack.c.bf16 %v776, %v775
      %v815 = vpack.c.bf16 %v778, %v777
      %v816 = vpack.c.bf16 %v780, %v779
      %v817 = vpack.c.bf16 %v782, %v781
      %v818 = vpack.c.bf16 %v784, %v783
      %v819 = vpack.c.bf16 %v786, %v785
      %v820 = vpack.c.bf16 %v788, %v787
      %v821 = vpack.c.bf16 %v790, %v789
      %v822 = vpack.c.bf16 %v792, %v791
      %823 = vst [vmem:[#allocation3] sm:$0xff] %v793
      %824 = vst [vmem:[#allocation3 + $0x8] sm:$0xff] %v794
      %825 = vst [vmem:[#allocation3 + $0x10] sm:$0xff] %v795
      %826 = vst [vmem:[#allocation3 + $0x18] sm:$0xff] %v796
      %827 = vst [vmem:[#allocation3 + $0x20] sm:$0xff] %v797
      %828 = vst [vmem:[#allocation3 + $0x28] sm:$0xff] %v798
      %829 = vst [vmem:[#allocation3 + $0x30] sm:$0xff] %v799
      %830 = vst [vmem:[#allocation3 + $0x38] sm:$0xff] %v800
      %831 = vst [vmem:[#allocation3 + $0x40] sm:$0xff] %v801
      %832 = vst [vmem:[#allocation3 + $0x48] sm:$0xff] %v802
      %833 = vst [vmem:[#allocation3 + $0x50] sm:$0xff] %v803
      %834 = vst [vmem:[#allocation3 + $0x58] sm:$0xff] %v804
      %835 = vst [vmem:[#allocation3 + $0x60] sm:$0xff] %v805
      %836 = vst [vmem:[#allocation3 + $0x68] sm:$0xff] %v806
      %837 = vst [vmem:[#allocation3 + $0x70] sm:$0xff] %v807
      %838 = vst [vmem:[#allocation3 + $0x78] sm:$0xff] %v808
      %839 = vst [vmem:[#allocation3 + $0x80] sm:$0xff] %v809
      %840 = vst [vmem:[#allocation3 + $0x88] sm:$0xff] %v810
      %841 = vst [vmem:[#allocation3 + $0x90] sm:$0xff] %v811
      %842 = vst [vmem:[#allocation3 + $0x98] sm:$0xff] %v812
      %843 = vst [vmem:[#allocation3 + $0xa0] sm:$0xff] %v813
      %844 = vst [vmem:[#allocation3 + $0xa8] sm:$0xff] %v814
      %845 = vst [vmem:[#allocation3 + $0xb0] sm:$0xff] %v815
      %846 = vst [vmem:[#allocation3 + $0xb8] sm:$0xff] %v816
      %847 = vst [vmem:[#allocation3 + $0xc0] sm:$0xff] %v817
      %848 = vst [vmem:[#allocation3 + $0xc8] sm:$0xff] %v818
      %849 = vst [vmem:[#allocation3 + $0xd0] sm:$0xff] %v819
      %850 = vst [vmem:[#allocation3 + $0xd8] sm:$0xff] %v820
      %851 = vst [vmem:[#allocation3 + $0xe0] sm:$0xff] %v821
      %852 = vst [vmem:[#allocation3 + $0xe8] sm:$0xff] %v822
      %v853 = vld [vmem:[#allocation3] sm:$0xff]
      %v854 = vld [vmem:[#allocation3 + $0x8] sm:$0xff]
      %v855 = vld [vmem:[#allocation3 + $0x10] sm:$0xff]
      %v856 = vld [vmem:[#allocation3 + $0x18] sm:$0xff]
      %v857 = vld [vmem:[#allocation3 + $0x20] sm:$0xff]
      %v858 = vld [vmem:[#allocation3 + $0x28] sm:$0xff]
      %v859 = vld [vmem:[#allocation3 + $0x30] sm:$0xff]
      %v860 = vld [vmem:[#allocation3 + $0x38] sm:$0xff]
      %v861 = vld [vmem:[#allocation3 + $0x40] sm:$0xff]
      %v862 = vld [vmem:[#allocation3 + $0x48] sm:$0xff]
      %v863 = vld [vmem:[#allocation3 + $0x50] sm:$0xff]
      %v864 = vld [vmem:[#allocation3 + $0x58] sm:$0xff]
      %v865 = vld [vmem:[#allocation3 + $0x60] sm:$0xff]
      %v866 = vld [vmem:[#allocation3 + $0x68] sm:$0xff]
      %v867 = vld [vmem:[#allocation3 + $0x70] sm:$0xff]
      %v868 = vld [vmem:[#allocation3 + $0x78] sm:$0xff]
      %v869 = vld [vmem:[#allocation3 + $0x80] sm:$0xff]
      %v870 = vld [vmem:[#allocation3 + $0x88] sm:$0xff]
      %v871 = vld [vmem:[#allocation3 + $0x90] sm:$0xff]
      %v872 = vld [vmem:[#allocation3 + $0x98] sm:$0xff]
      %v873 = vld [vmem:[#allocation3 + $0xa0] sm:$0xff]
      %v874 = vld [vmem:[#allocation3 + $0xa8] sm:$0xff]
      %v875 = vld [vmem:[#allocation3 + $0xb0] sm:$0xff]
      %v876 = vld [vmem:[#allocation3 + $0xb8] sm:$0xff]
      %s877 = smul.u32 %s22, 3
      %s878 = smul.u32 %s877, 96
      %s879 = smul.addr %s878, 4
      %s880 = scalar_lea.vmem %s2, %s879
      %v881 = vld [vmem:[%s880] sm:$0xf]
      %v882 = vld [vmem:[%s880 + $0x4] sm:$0xf]
      %v883 = vld [vmem:[%s880 + $0x8] sm:$0xf]
      %v884 = vld [vmem:[%s880 + $0xc] sm:$0xf]
      %v885 = vld [vmem:[%s880 + $0x10] sm:$0xf]
      %v886 = vld [vmem:[%s880 + $0x14] sm:$0xf]
      %v887 = vld [vmem:[%s880 + $0x18] sm:$0xf]
      %v888 = vld [vmem:[%s880 + $0x1c] sm:$0xf]
      %v889 = vld [vmem:[%s880 + $0x20] sm:$0xf]
      %v890 = vld [vmem:[%s880 + $0x24] sm:$0xf]
      %v891 = vld [vmem:[%s880 + $0x28] sm:$0xf]
      %v892 = vld [vmem:[%s880 + $0x2c] sm:$0xf]
      %v893 = vld [vmem:[%s880 + $0x30] sm:$0xf]
      %v894 = vld [vmem:[%s880 + $0x34] sm:$0xf]
      %v895 = vld [vmem:[%s880 + $0x38] sm:$0xf]
      %v896 = vld [vmem:[%s880 + $0x3c] sm:$0xf]
      %v897 = vld [vmem:[%s880 + $0x40] sm:$0xf]
      %v898 = vld [vmem:[%s880 + $0x44] sm:$0xf]
      %v899 = vld [vmem:[%s880 + $0x48] sm:$0xf]
      %v900 = vld [vmem:[%s880 + $0x4c] sm:$0xf]
      %v901 = vld [vmem:[%s880 + $0x50] sm:$0xf]
      %v902 = vld [vmem:[%s880 + $0x54] sm:$0xf]
      %v903 = vld [vmem:[%s880 + $0x58] sm:$0xf]
      %v904 = vld [vmem:[%s880 + $0x5c] sm:$0xf]
      %v905 = vld [vmem:[%s880 + $0x60] sm:$0xf]
      %v906 = vld [vmem:[%s880 + $0x64] sm:$0xf]
      %v907 = vld [vmem:[%s880 + $0x68] sm:$0xf]
      %v908 = vld [vmem:[%s880 + $0x6c] sm:$0xf]
      %v909 = vld [vmem:[%s880 + $0x70] sm:$0xf]
      %v910 = vld [vmem:[%s880 + $0x74] sm:$0xf]
      %v911 = vld [vmem:[%s880 + $0x78] sm:$0xf]
      %v912 = vld [vmem:[%s880 + $0x7c] sm:$0xf]
      %v913 = vld [vmem:[%s880 + $0x80] sm:$0xf]
      %v914 = vld [vmem:[%s880 + $0x84] sm:$0xf]
      %v915 = vld [vmem:[%s880 + $0x88] sm:$0xf]
      %v916 = vld [vmem:[%s880 + $0x8c] sm:$0xf]
      %v917 = vld [vmem:[%s880 + $0x90] sm:$0xf]
      %v918 = vld [vmem:[%s880 + $0x94] sm:$0xf]
      %v919 = vld [vmem:[%s880 + $0x98] sm:$0xf]
      %v920 = vld [vmem:[%s880 + $0x9c] sm:$0xf]
      %v921 = vld [vmem:[%s880 + $0xa0] sm:$0xf]
      %v922 = vld [vmem:[%s880 + $0xa4] sm:$0xf]
      %v923 = vld [vmem:[%s880 + $0xa8] sm:$0xf]
      %v924 = vld [vmem:[%s880 + $0xac] sm:$0xf]
      %v925 = vld [vmem:[%s880 + $0xb0] sm:$0xf]
      %v926 = vld [vmem:[%s880 + $0xb4] sm:$0xf]
      %v927 = vld [vmem:[%s880 + $0xb8] sm:$0xf]
      %v928 = vld [vmem:[%s880 + $0xbc] sm:$0xf]
      %v929 = vld [vmem:[%s880 + $0xc0] sm:$0xf]
      %v930 = vld [vmem:[%s880 + $0xc4] sm:$0xf]
      %v931 = vld [vmem:[%s880 + $0xc8] sm:$0xf]
      %v932 = vld [vmem:[%s880 + $0xcc] sm:$0xf]
      %v933 = vld [vmem:[%s880 + $0xd0] sm:$0xf]
      %v934 = vld [vmem:[%s880 + $0xd4] sm:$0xf]
      %v935 = vld [vmem:[%s880 + $0xd8] sm:$0xf]
      %v936 = vld [vmem:[%s880 + $0xdc] sm:$0xf]
      %v937 = vld [vmem:[%s880 + $0xe0] sm:$0xf]
      %v938 = vld [vmem:[%s880 + $0xe4] sm:$0xf]
      %v939 = vld [vmem:[%s880 + $0xe8] sm:$0xf]
      %v940 = vld [vmem:[%s880 + $0xec] sm:$0xf]
      %v941 = vld [vmem:[%s880 + $0xf0] sm:$0xf]
      %v942 = vld [vmem:[%s880 + $0xf4] sm:$0xf]
      %v943 = vld [vmem:[%s880 + $0xf8] sm:$0xf]
      %v944 = vld [vmem:[%s880 + $0xfc] sm:$0xf]
      %v945 = vld [vmem:[%s880 + $0x100] sm:$0xf]
      %v946 = vld [vmem:[%s880 + $0x104] sm:$0xf]
      %v947 = vld [vmem:[%s880 + $0x108] sm:$0xf]
      %v948 = vld [vmem:[%s880 + $0x10c] sm:$0xf]
      %v949 = vld [vmem:[%s880 + $0x110] sm:$0xf]
      %v950 = vld [vmem:[%s880 + $0x114] sm:$0xf]
      %v951 = vld [vmem:[%s880 + $0x118] sm:$0xf]
      %v952 = vld [vmem:[%s880 + $0x11c] sm:$0xf]
      %v953 = vld [vmem:[%s880 + $0x120] sm:$0xf]
      %v954 = vld [vmem:[%s880 + $0x124] sm:$0xf]
      %v955 = vld [vmem:[%s880 + $0x128] sm:$0xf]
      %v956 = vld [vmem:[%s880 + $0x12c] sm:$0xf]
      %v957 = vld [vmem:[%s880 + $0x130] sm:$0xf]
      %v958 = vld [vmem:[%s880 + $0x134] sm:$0xf]
      %v959 = vld [vmem:[%s880 + $0x138] sm:$0xf]
      %v960 = vld [vmem:[%s880 + $0x13c] sm:$0xf]
      %v961 = vld [vmem:[%s880 + $0x140] sm:$0xf]
      %v962 = vld [vmem:[%s880 + $0x144] sm:$0xf]
      %v963 = vld [vmem:[%s880 + $0x148] sm:$0xf]
      %v964 = vld [vmem:[%s880 + $0x14c] sm:$0xf]
      %v965 = vld [vmem:[%s880 + $0x150] sm:$0xf]
      %v966 = vld [vmem:[%s880 + $0x154] sm:$0xf]
      %v967 = vld [vmem:[%s880 + $0x158] sm:$0xf]
      %v968 = vld [vmem:[%s880 + $0x15c] sm:$0xf]
      %v969 = vld [vmem:[%s880 + $0x160] sm:$0xf]
      %v970 = vld [vmem:[%s880 + $0x164] sm:$0xf]
      %v971 = vld [vmem:[%s880 + $0x168] sm:$0xf]
      %v972 = vld [vmem:[%s880 + $0x16c] sm:$0xf]
      %v973 = vld [vmem:[%s880 + $0x170] sm:$0xf]
      %v974 = vld [vmem:[%s880 + $0x174] sm:$0xf]
      %v975 = vld [vmem:[%s880 + $0x178] sm:$0xf]
      %v976 = vld [vmem:[%s880 + $0x17c] sm:$0xf]
      %v1001 = vunpack.c.l.b16 %v853
      %v1002 = vunpack.c.h.b16 %v853
      %v1003 = vunpack.c.l.b16 %v854
      %v1004 = vunpack.c.h.b16 %v854
      %v1005 = vunpack.c.l.b16 %v855
      %v1006 = vunpack.c.h.b16 %v855
      %v1007 = vunpack.c.l.b16 %v856
      %v1008 = vunpack.c.h.b16 %v856
      %v1009 = vunpack.c.l.b16 %v857
      %v1010 = vunpack.c.h.b16 %v857
      %v1011 = vunpack.c.l.b16 %v858
      %v1012 = vunpack.c.h.b16 %v858
      %v1013 = vunpack.c.l.b16 %v859
      %v1014 = vunpack.c.h.b16 %v859
      %v1015 = vunpack.c.l.b16 %v860
      %v1016 = vunpack.c.h.b16 %v860
      %v1017 = vunpack.c.l.b16 %v861
      %v1018 = vunpack.c.h.b16 %v861
      %v1019 = vunpack.c.l.b16 %v862
      %v1020 = vunpack.c.h.b16 %v862
      %v1021 = vunpack.c.l.b16 %v863
      %v1022 = vunpack.c.h.b16 %v863
      %v1023 = vunpack.c.l.b16 %v864
      %v1024 = vunpack.c.h.b16 %v864
      %v1025 = vunpack.c.l.b16 %v865
      %v1026 = vunpack.c.h.b16 %v865
      %v1027 = vunpack.c.l.b16 %v866
      %v1028 = vunpack.c.h.b16 %v866
      %v1029 = vunpack.c.l.b16 %v867
      %v1030 = vunpack.c.h.b16 %v867
      %v1031 = vunpack.c.l.b16 %v868
      %v1032 = vunpack.c.h.b16 %v868
      %v1033 = vunpack.c.l.b16 %v869
      %v1034 = vunpack.c.h.b16 %v869
      %v1035 = vunpack.c.l.b16 %v870
      %v1036 = vunpack.c.h.b16 %v870
      %v1037 = vunpack.c.l.b16 %v871
      %v1038 = vunpack.c.h.b16 %v871
      %v1039 = vunpack.c.l.b16 %v872
      %v1040 = vunpack.c.h.b16 %v872
      %v1041 = vunpack.c.l.b16 %v873
      %v1042 = vunpack.c.h.b16 %v873
      %v1043 = vunpack.c.l.b16 %v874
      %v1044 = vunpack.c.h.b16 %v874
      %v1045 = vunpack.c.l.b16 %v875
      %v1046 = vunpack.c.h.b16 %v875
      %v1047 = vunpack.c.l.b16 %v876
      %v1048 = vunpack.c.h.b16 %v876
      %v1049 = vpack.c.b16 %v1007, %v1001
      %v1050 = vpack.c.b16 %v1008, %v1002
      %v1051 = vpack.c.b16 %v1009, %v1003
      %v1052 = vpack.c.b16 %v1010, %v1004
      %v1053 = vpack.c.b16 %v1011, %v1005
      %v1054 = vpack.c.b16 %v1012, %v1006
      %v1055 = vpack.c.b16 %v1019, %v1013
      %v1056 = vpack.c.b16 %v1020, %v1014
      %v1057 = vpack.c.b16 %v1021, %v1015
      %v1058 = vpack.c.b16 %v1022, %v1016
      %v1059 = vpack.c.b16 %v1023, %v1017
      %v1060 = vpack.c.b16 %v1024, %v1018
      %v1061 = vpack.c.b16 %v1031, %v1025
      %v1062 = vpack.c.b16 %v1032, %v1026
      %v1063 = vpack.c.b16 %v1033, %v1027
      %v1064 = vpack.c.b16 %v1034, %v1028
      %v1065 = vpack.c.b16 %v1035, %v1029
      %v1066 = vpack.c.b16 %v1036, %v1030
      %v1067 = vpack.c.b16 %v1043, %v1037
      %v1068 = vpack.c.b16 %v1044, %v1038
      %v1069 = vpack.c.b16 %v1045, %v1039
      %v1070 = vpack.c.b16 %v1046, %v1040
      %v1071 = vpack.c.b16 %v1047, %v1041
      %v1072 = vpack.c.b16 %v1048, %v1042
      %v1193 = vunpack.c.l.b16 %v881
      %v1194 = vunpack.c.l.b16 %v882
      %v1195 = vunpack.c.l.b16 %v883
      %v1196 = vunpack.c.l.b16 %v884
      %v1197 = vunpack.c.l.b16 %v885
      %v1198 = vunpack.c.l.b16 %v886
      %v1199 = vunpack.c.l.b16 %v887
      %v1200 = vunpack.c.l.b16 %v888
      %v1201 = vunpack.c.l.b16 %v889
      %v1202 = vunpack.c.l.b16 %v890
      %v1203 = vunpack.c.l.b16 %v891
      %v1204 = vunpack.c.l.b16 %v892
      %v1205 = vunpack.c.l.b16 %v893
      %v1206 = vunpack.c.l.b16 %v894
      %v1207 = vunpack.c.l.b16 %v895
      %v1208 = vunpack.c.l.b16 %v896
      %v1209 = vunpack.c.l.b16 %v897
      %v1210 = vunpack.c.l.b16 %v898
      %v1211 = vunpack.c.l.b16 %v899
      %v1212 = vunpack.c.l.b16 %v900
      %v1213 = vunpack.c.l.b16 %v901
      %v1214 = vunpack.c.l.b16 %v902
      %v1215 = vunpack.c.l.b16 %v903
      %v1216 = vunpack.c.l.b16 %v904
      %v1217 = vunpack.c.l.b16 %v905
      %v1218 = vunpack.c.l.b16 %v906
      %v1219 = vunpack.c.l.b16 %v907
      %v1220 = vunpack.c.l.b16 %v908
      %v1221 = vunpack.c.l.b16 %v909
      %v1222 = vunpack.c.l.b16 %v910
      %v1223 = vunpack.c.l.b16 %v911
      %v1224 = vunpack.c.l.b16 %v912
      %v1225 = vunpack.c.l.b16 %v913
      %v1226 = vunpack.c.l.b16 %v914
      %v1227 = vunpack.c.l.b16 %v915
      %v1228 = vunpack.c.l.b16 %v916
      %v1229 = vunpack.c.l.b16 %v917
      %v1230 = vunpack.c.l.b16 %v918
      %v1231 = vunpack.c.l.b16 %v919
      %v1232 = vunpack.c.l.b16 %v920
      %v1233 = vunpack.c.l.b16 %v921
      %v1234 = vunpack.c.l.b16 %v922
      %v1235 = vunpack.c.l.b16 %v923
      %v1236 = vunpack.c.l.b16 %v924
      %v1237 = vunpack.c.l.b16 %v925
      %v1238 = vunpack.c.l.b16 %v926
      %v1239 = vunpack.c.l.b16 %v927
      %v1240 = vunpack.c.l.b16 %v928
      %v1241 = vunpack.c.l.b16 %v929
      %v1242 = vunpack.c.l.b16 %v930
      %v1243 = vunpack.c.l.b16 %v931
      %v1244 = vunpack.c.l.b16 %v932
      %v1245 = vunpack.c.l.b16 %v933
      %v1246 = vunpack.c.l.b16 %v934
      %v1247 = vunpack.c.l.b16 %v935
      %v1248 = vunpack.c.l.b16 %v936
      %v1249 = vunpack.c.l.b16 %v937
      %v1250 = vunpack.c.l.b16 %v938
      %v1251 = vunpack.c.l.b16 %v939
      %v1252 = vunpack.c.l.b16 %v940
      %v1253 = vunpack.c.l.b16 %v941
      %v1254 = vunpack.c.l.b16 %v942
      %v1255 = vunpack.c.l.b16 %v943
      %v1256 = vunpack.c.l.b16 %v944
      %v1257 = vunpack.c.l.b16 %v945
      %v1258 = vunpack.c.l.b16 %v946
      %v1259 = vunpack.c.l.b16 %v947
      %v1260 = vunpack.c.l.b16 %v948
      %v1261 = vunpack.c.l.b16 %v949
      %v1262 = vunpack.c.l.b16 %v950
      %v1263 = vunpack.c.l.b16 %v951
      %v1264 = vunpack.c.l.b16 %v952
      %v1265 = vunpack.c.l.b16 %v953
      %v1266 = vunpack.c.l.b16 %v954
      %v1267 = vunpack.c.l.b16 %v955
      %v1268 = vunpack.c.l.b16 %v956
      %v1269 = vunpack.c.l.b16 %v957
      %v1270 = vunpack.c.l.b16 %v958
      %v1271 = vunpack.c.l.b16 %v959
      %v1272 = vunpack.c.l.b16 %v960
      %v1273 = vunpack.c.l.b16 %v961
      %v1274 = vunpack.c.l.b16 %v962
      %v1275 = vunpack.c.l.b16 %v963
      %v1276 = vunpack.c.l.b16 %v964
      %v1277 = vunpack.c.l.b16 %v965
      %v1278 = vunpack.c.l.b16 %v966
      %v1279 = vunpack.c.l.b16 %v967
      %v1280 = vunpack.c.l.b16 %v968
      %v1281 = vunpack.c.l.b16 %v969
      %v1282 = vunpack.c.l.b16 %v970
      %v1283 = vunpack.c.l.b16 %v971
      %v1284 = vunpack.c.l.b16 %v972
      %v1285 = vunpack.c.l.b16 %v973
      %v1286 = vunpack.c.l.b16 %v974
      %v1287 = vunpack.c.l.b16 %v975
      %v1288 = vunpack.c.l.b16 %v976
      %v1289 = vpack.c.b16 %v1194, %v1193
      %v1290 = vpack.c.b16 %v1196, %v1195
      %v1291 = vpack.c.b16 %v1198, %v1197
      %v1292 = vpack.c.b16 %v1200, %v1199
      %v1293 = vpack.c.b16 %v1202, %v1201
      %v1294 = vpack.c.b16 %v1204, %v1203
      %v1295 = vpack.c.b16 %v1206, %v1205
      %v1296 = vpack.c.b16 %v1208, %v1207
      %v1297 = vpack.c.b16 %v1210, %v1209
      %v1298 = vpack.c.b16 %v1212, %v1211
      %v1299 = vpack.c.b16 %v1214, %v1213
      %v1300 = vpack.c.b16 %v1216, %v1215
      %v1301 = vpack.c.b16 %v1218, %v1217
      %v1302 = vpack.c.b16 %v1220, %v1219
      %v1303 = vpack.c.b16 %v1222, %v1221
      %v1304 = vpack.c.b16 %v1224, %v1223
      %v1305 = vpack.c.b16 %v1226, %v1225
      %v1306 = vpack.c.b16 %v1228, %v1227
      %v1307 = vpack.c.b16 %v1230, %v1229
      %v1308 = vpack.c.b16 %v1232, %v1231
      %v1309 = vpack.c.b16 %v1234, %v1233
      %v1310 = vpack.c.b16 %v1236, %v1235
      %v1311 = vpack.c.b16 %v1238, %v1237
      %v1312 = vpack.c.b16 %v1240, %v1239
      %v1313 = vpack.c.b16 %v1242, %v1241
      %v1314 = vpack.c.b16 %v1244, %v1243
      %v1315 = vpack.c.b16 %v1246, %v1245
      %v1316 = vpack.c.b16 %v1248, %v1247
      %v1317 = vpack.c.b16 %v1250, %v1249
      %v1318 = vpack.c.b16 %v1252, %v1251
      %v1319 = vpack.c.b16 %v1254, %v1253
      %v1320 = vpack.c.b16 %v1256, %v1255
      %v1321 = vpack.c.b16 %v1258, %v1257
      %v1322 = vpack.c.b16 %v1260, %v1259
      %v1323 = vpack.c.b16 %v1262, %v1261
      %v1324 = vpack.c.b16 %v1264, %v1263
      %v1325 = vpack.c.b16 %v1266, %v1265
      %v1326 = vpack.c.b16 %v1268, %v1267
      %v1327 = vpack.c.b16 %v1270, %v1269
      %v1328 = vpack.c.b16 %v1272, %v1271
      %v1329 = vpack.c.b16 %v1274, %v1273
      %v1330 = vpack.c.b16 %v1276, %v1275
      %v1331 = vpack.c.b16 %v1278, %v1277
      %v1332 = vpack.c.b16 %v1280, %v1279
      %v1333 = vpack.c.b16 %v1282, %v1281
      %v1334 = vpack.c.b16 %v1284, %v1283
      %v1335 = vpack.c.b16 %v1286, %v1285
      %v1336 = vpack.c.b16 %v1288, %v1287
      %1385 = vmatpush.bf16.msra.mxu0 %v1296
      %1386 = vmatpush.bf16.msra.mxu0 %v1295
      %1387 = vmatpush.bf16.msra.mxu0 %v1294
      %1388 = vmatpush.bf16.msra.mxu0 %v1293
      %1389 = vmatpush.bf16.msra.mxu0 %v1292
      %1390 = vmatpush.bf16.msra.mxu0 %v1291
      %1391 = vmatpush.bf16.msra.mxu0 %v1290
      %1392 = vmatpush.bf16.msra.mxu0 %v1289
      %1393 = vmatmul.bf16.gmra.mxu0 %v1049
      %v1394 = vpop.f32.mrf.mxu0
      %v1395 = vadd.f32 0.0, %v1394
      %v1396 = vpop.f32.mrf.mxu0
      %v1397 = vadd.f32 0.0, %v1396
      %1398 = vmatmul.bf16.gmra.mxu0 %v1055
      %v1399 = vpop.f32.mrf.mxu0
      %v1400 = vadd.f32 0.0, %v1399
      %v1401 = vpop.f32.mrf.mxu0
      %v1402 = vadd.f32 0.0, %v1401
      %1403 = vmatmul.bf16.gmra.mxu0 %v1061
      %v1404 = vpop.f32.mrf.mxu0
      %v1405 = vadd.f32 0.0, %v1404
      %v1406 = vpop.f32.mrf.mxu0
      %v1407 = vadd.f32 0.0, %v1406
      %1408 = vmatmul.bf16.gmra.mxu0 %v1067
      %v1409 = vpop.f32.mrf.mxu0
      %v1410 = vadd.f32 0.0, %v1409
      %v1411 = vpop.f32.mrf.mxu0
      %v1412 = vadd.f32 0.0, %v1411
      %1413 = vdwg.mxu0
      %1414 = vmatpush.bf16.msra.mxu0 %v1304
      %1415 = vmatpush.bf16.msra.mxu0 %v1303
      %1416 = vmatpush.bf16.msra.mxu0 %v1302
      %1417 = vmatpush.bf16.msra.mxu0 %v1301
      %1418 = vmatpush.bf16.msra.mxu0 %v1300
      %1419 = vmatpush.bf16.msra.mxu0 %v1299
      %1420 = vmatpush.bf16.msra.mxu0 %v1298
      %1421 = vmatpush.bf16.msra.mxu0 %v1297
      %1422 = vmatmul.bf16.gmra.mxu0 %v1050
      %v1423 = vpop.f32.mrf.mxu0
      %v1424 = vadd.f32 %v1395, %v1423
      %v1425 = vpop.f32.mrf.mxu0
      %v1426 = vadd.f32 %v1397, %v1425
      %1427 = vmatmul.bf16.gmra.mxu0 %v1056
      %v1428 = vpop.f32.mrf.mxu0
      %v1429 = vadd.f32 %v1400, %v1428
      %v1430 = vpop.f32.mrf.mxu0
      %v1431 = vadd.f32 %v1402, %v1430
      %1432 = vmatmul.bf16.gmra.mxu0 %v1062
      %v1433 = vpop.f32.mrf.mxu0
      %v1434 = vadd.f32 %v1405, %v1433
      %v1435 = vpop.f32.mrf.mxu0
      %v1436 = vadd.f32 %v1407, %v1435
      %1437 = vmatmul.bf16.gmra.mxu0 %v1068
      %v1438 = vpop.f32.mrf.mxu0
      %v1439 = vadd.f32 %v1410, %v1438
      %v1440 = vpop.f32.mrf.mxu0
      %v1441 = vadd.f32 %v1412, %v1440
      %1442 = vdwg.mxu0
      %1443 = vmatpush.bf16.msra.mxu0 %v1312
      %1444 = vmatpush.bf16.msra.mxu0 %v1311
      %1445 = vmatpush.bf16.msra.mxu0 %v1310
      %1446 = vmatpush.bf16.msra.mxu0 %v1309
      %1447 = vmatpush.bf16.msra.mxu0 %v1308
      %1448 = vmatpush.bf16.msra.mxu0 %v1307
      %1449 = vmatpush.bf16.msra.mxu0 %v1306
      %1450 = vmatpush.bf16.msra.mxu0 %v1305
      %1451 = vmatmul.bf16.gmra.mxu0 %v1051
      %v1452 = vpop.f32.mrf.mxu0
      %v1453 = vadd.f32 %v1424, %v1452
      %v1454 = vpop.f32.mrf.mxu0
      %v1455 = vadd.f32 %v1426, %v1454
      %1456 = vmatmul.bf16.gmra.mxu0 %v1057
      %v1457 = vpop.f32.mrf.mxu0
      %v1458 = vadd.f32 %v1429, %v1457
      %v1459 = vpop.f32.mrf.mxu0
      %v1460 = vadd.f32 %v1431, %v1459
      %1461 = vmatmul.bf16.gmra.mxu0 %v1063
      %v1462 = vpop.f32.mrf.mxu0
      %v1463 = vadd.f32 %v1434, %v1462
      %v1464 = vpop.f32.mrf.mxu0
      %v1465 = vadd.f32 %v1436, %v1464
      %1466 = vmatmul.bf16.gmra.mxu0 %v1069
      %v1467 = vpop.f32.mrf.mxu0
      %v1468 = vadd.f32 %v1439, %v1467
      %v1469 = vpop.f32.mrf.mxu0
      %v1470 = vadd.f32 %v1441, %v1469
      %1471 = vdwg.mxu0
      %1472 = vmatpush.bf16.msra.mxu0 %v1320
      %1473 = vmatpush.bf16.msra.mxu0 %v1319
      %1474 = vmatpush.bf16.msra.mxu0 %v1318
      %1475 = vmatpush.bf16.msra.mxu0 %v1317
      %1476 = vmatpush.bf16.msra.mxu0 %v1316
      %1477 = vmatpush.bf16.msra.mxu0 %v1315
      %1478 = vmatpush.bf16.msra.mxu0 %v1314
      %1479 = vmatpush.bf16.msra.mxu0 %v1313
      %1480 = vmatmul.bf16.gmra.mxu0 %v1052
      %v1481 = vpop.f32.mrf.mxu0
      %v1482 = vadd.f32 %v1453, %v1481
      %v1483 = vpop.f32.mrf.mxu0
      %v1484 = vadd.f32 %v1455, %v1483
      %1485 = vmatmul.bf16.gmra.mxu0 %v1058
      %v1486 = vpop.f32.mrf.mxu0
      %v1487 = vadd.f32 %v1458, %v1486
      %v1488 = vpop.f32.mrf.mxu0
      %v1489 = vadd.f32 %v1460, %v1488
      %1490 = vmatmul.bf16.gmra.mxu0 %v1064
      %v1491 = vpop.f32.mrf.mxu0
      %v1492 = vadd.f32 %v1463, %v1491
      %v1493 = vpop.f32.mrf.mxu0
      %v1494 = vadd.f32 %v1465, %v1493
      %1495 = vmatmul.bf16.gmra.mxu0 %v1070
      %v1496 = vpop.f32.mrf.mxu0
      %v1497 = vadd.f32 %v1468, %v1496
      %v1498 = vpop.f32.mrf.mxu0
      %v1499 = vadd.f32 %v1470, %v1498
      %1500 = vdwg.mxu0
      %1501 = vmatpush.bf16.msra.mxu0 %v1328
      %1502 = vmatpush.bf16.msra.mxu0 %v1327
      %1503 = vmatpush.bf16.msra.mxu0 %v1326
      %1504 = vmatpush.bf16.msra.mxu0 %v1325
      %1505 = vmatpush.bf16.msra.mxu0 %v1324
      %1506 = vmatpush.bf16.msra.mxu0 %v1323
      %1507 = vmatpush.bf16.msra.mxu0 %v1322
      %1508 = vmatpush.bf16.msra.mxu0 %v1321
      %1509 = vmatmul.bf16.gmra.mxu0 %v1053
      %v1510 = vpop.f32.mrf.mxu0
      %v1511 = vadd.f32 %v1482, %v1510
      %v1512 = vpop.f32.mrf.mxu0
      %v1513 = vadd.f32 %v1484, %v1512
      %1514 = vmatmul.bf16.gmra.mxu0 %v1059
      %v1515 = vpop.f32.mrf.mxu0
      %v1516 = vadd.f32 %v1487, %v1515
      %v1517 = vpop.f32.mrf.mxu0
      %v1518 = vadd.f32 %v1489, %v1517
      %1519 = vmatmul.bf16.gmra.mxu0 %v1065
      %v1520 = vpop.f32.mrf.mxu0
      %v1521 = vadd.f32 %v1492, %v1520
      %v1522 = vpop.f32.mrf.mxu0
      %v1523 = vadd.f32 %v1494, %v1522
      %1524 = vmatmul.bf16.gmra.mxu0 %v1071
      %v1525 = vpop.f32.mrf.mxu0
      %v1526 = vadd.f32 %v1497, %v1525
      %v1527 = vpop.f32.mrf.mxu0
      %v1528 = vadd.f32 %v1499, %v1527
      %1529 = vdwg.mxu0
      %1530 = vmatpush.bf16.msra.mxu0 %v1336
      %1531 = vmatpush.bf16.msra.mxu0 %v1335
      %1532 = vmatpush.bf16.msra.mxu0 %v1334
      %1533 = vmatpush.bf16.msra.mxu0 %v1333
      %1534 = vmatpush.bf16.msra.mxu0 %v1332
      %1535 = vmatpush.bf16.msra.mxu0 %v1331
      %1536 = vmatpush.bf16.msra.mxu0 %v1330
      %1537 = vmatpush.bf16.msra.mxu0 %v1329
      %1538 = vmatmul.bf16.gmra.mxu0 %v1054
      %v1539 = vpop.f32.mrf.mxu0
      %v1540 = vadd.f32 %v1511, %v1539
      %v1541 = vpop.f32.mrf.mxu0
      %v1542 = vadd.f32 %v1513, %v1541
      %1543 = vmatmul.bf16.gmra.mxu0 %v1060
      %v1544 = vpop.f32.mrf.mxu0
      %v1545 = vadd.f32 %v1516, %v1544
      %v1546 = vpop.f32.mrf.mxu0
      %v1547 = vadd.f32 %v1518, %v1546
      %1548 = vmatmul.bf16.gmra.mxu0 %v1066
      %v1549 = vpop.f32.mrf.mxu0
      %v1550 = vadd.f32 %v1521, %v1549
      %v1551 = vpop.f32.mrf.mxu0
      %v1552 = vadd.f32 %v1523, %v1551
      %1553 = vmatmul.bf16.gmra.mxu0 %v1072
      %v1554 = vpop.f32.mrf.mxu0
      %v1555 = vadd.f32 %v1526, %v1554
      %v1556 = vpop.f32.mrf.mxu0
      %v1557 = vadd.f32 %v1528, %v1556
      %1558 = vdwg.mxu0
      %v1559 = vld [vmem:[#allocation2] sm:$0xff]
      %v1560 = vld [vmem:[#allocation2 + $0x8] sm:$0xff]
      %v1561 = vld [vmem:[#allocation2 + $0x10] sm:$0xff]
      %v1562 = vld [vmem:[#allocation2 + $0x18] sm:$0xff]
      %v1563 = vld [vmem:[#allocation2 + $0x20] sm:$0xff]
      %v1564 = vld [vmem:[#allocation2 + $0x28] sm:$0xff]
      %v1565 = vld [vmem:[#allocation2 + $0x30] sm:$0xff]
      %v1566 = vld [vmem:[#allocation2 + $0x38] sm:$0xff]
      %v1567 = vadd.f32 %v1559, %v1540
      %v1568 = vadd.f32 %v1560, %v1542
      %v1569 = vadd.f32 %v1561, %v1545
      %v1570 = vadd.f32 %v1562, %v1547
      %v1571 = vadd.f32 %v1563, %v1550
      %v1572 = vadd.f32 %v1564, %v1552
      %v1573 = vadd.f32 %v1565, %v1555
      %v1574 = vadd.f32 %v1566, %v1557
      %1575 = vst [vmem:[#allocation2] sm:$0xff] %v1567
      %1576 = vst [vmem:[#allocation2 + $0x8] sm:$0xff] %v1568
      %1577 = vst [vmem:[#allocation2 + $0x10] sm:$0xff] %v1569
      %1578 = vst [vmem:[#allocation2 + $0x18] sm:$0xff] %v1570
      %1579 = vst [vmem:[#allocation2 + $0x20] sm:$0xff] %v1571
      %1580 = vst [vmem:[#allocation2 + $0x28] sm:$0xff] %v1572
      %1581 = vst [vmem:[#allocation2 + $0x30] sm:$0xff] %v1573
      %1582 = vst [vmem:[#allocation2 + $0x38] sm:$0xff] %v1574
      %v1583 = vld [vmem:[#allocation3 + $0x18] sm:$0xff]
      %v1584 = vld [vmem:[#allocation3 + $0x20] sm:$0xff]
      %v1585 = vld [vmem:[#allocation3 + $0x28] sm:$0xff]
      %v1586 = vld [vmem:[#allocation3 + $0x30] sm:$0xff]
      %v1587 = vld [vmem:[#allocation3 + $0x38] sm:$0xff]
      %v1588 = vld [vmem:[#allocation3 + $0x40] sm:$0xff]
      %v1589 = vld [vmem:[#allocation3 + $0x48] sm:$0xff]
      %v1590 = vld [vmem:[#allocation3 + $0x50] sm:$0xff]
      %v1591 = vld [vmem:[#allocation3 + $0x58] sm:$0xff]
      %v1592 = vld [vmem:[#allocation3 + $0x60] sm:$0xff]
      %v1593 = vld [vmem:[#allocation3 + $0x68] sm:$0xff]
      %v1594 = vld [vmem:[#allocation3 + $0x70] sm:$0xff]
      %v1595 = vld [vmem:[#allocation3 + $0x78] sm:$0xff]
      %v1596 = vld [vmem:[#allocation3 + $0x80] sm:$0xff]
      %v1597 = vld [vmem:[#allocation3 + $0x88] sm:$0xff]
      %v1598 = vld [vmem:[#allocation3 + $0x90] sm:$0xff]
      %v1599 = vld [vmem:[#allocation3 + $0x98] sm:$0xff]
      %v1600 = vld [vmem:[#allocation3 + $0xa0] sm:$0xff]
      %v1601 = vld [vmem:[#allocation3 + $0xa8] sm:$0xff]
      %v1602 = vld [vmem:[#allocation3 + $0xb0] sm:$0xff]
      %v1603 = vld [vmem:[#allocation3 + $0xb8] sm:$0xff]
      %v1604 = vld [vmem:[#allocation3 + $0xc0] sm:$0xff]
      %v1605 = vld [vmem:[#allocation3 + $0xc8] sm:$0xff]
      %v1606 = vld [vmem:[#allocation3 + $0xd0] sm:$0xff]
      %s1607 = sadd.s32 %s877, 1
      %s1608 = smul.u32 %s1607, 96
      %s1609 = smul.addr %s1608, 4
      %s1610 = scalar_lea.vmem %s2, %s1609
      %v1611 = vld [vmem:[%s1610] sm:$0xf]
      %v1612 = vld [vmem:[%s1610 + $0x4] sm:$0xf]
      %v1613 = vld [vmem:[%s1610 + $0x8] sm:$0xf]
      %v1614 = vld [vmem:[%s1610 + $0xc] sm:$0xf]
      %v1615 = vld [vmem:[%s1610 + $0x10] sm:$0xf]
      %v1616 = vld [vmem:[%s1610 + $0x14] sm:$0xf]
      %v1617 = vld [vmem:[%s1610 + $0x18] sm:$0xf]
      %v1618 = vld [vmem:[%s1610 + $0x1c] sm:$0xf]
      %v1619 = vld [vmem:[%s1610 + $0x20] sm:$0xf]
      %v1620 = vld [vmem:[%s1610 + $0x24] sm:$0xf]
      %v1621 = vld [vmem:[%s1610 + $0x28] sm:$0xf]
      %v1622 = vld [vmem:[%s1610 + $0x2c] sm:$0xf]
      %v1623 = vld [vmem:[%s1610 + $0x30] sm:$0xf]
      %v1624 = vld [vmem:[%s1610 + $0x34] sm:$0xf]
      %v1625 = vld [vmem:[%s1610 + $0x38] sm:$0xf]
      %v1626 = vld [vmem:[%s1610 + $0x3c] sm:$0xf]
      %v1627 = vld [vmem:[%s1610 + $0x40] sm:$0xf]
      %v1628 = vld [vmem:[%s1610 + $0x44] sm:$0xf]
      %v1629 = vld [vmem:[%s1610 + $0x48] sm:$0xf]
      %v1630 = vld [vmem:[%s1610 + $0x4c] sm:$0xf]
      %v1631 = vld [vmem:[%s1610 + $0x50] sm:$0xf]
      %v1632 = vld [vmem:[%s1610 + $0x54] sm:$0xf]
      %v1633 = vld [vmem:[%s1610 + $0x58] sm:$0xf]
      %v1634 = vld [vmem:[%s1610 + $0x5c] sm:$0xf]
      %v1635 = vld [vmem:[%s1610 + $0x60] sm:$0xf]
      %v1636 = vld [vmem:[%s1610 + $0x64] sm:$0xf]
      %v1637 = vld [vmem:[%s1610 + $0x68] sm:$0xf]
      %v1638 = vld [vmem:[%s1610 + $0x6c] sm:$0xf]
      %v1639 = vld [vmem:[%s1610 + $0x70] sm:$0xf]
      %v1640 = vld [vmem:[%s1610 + $0x74] sm:$0xf]
      %v1641 = vld [vmem:[%s1610 + $0x78] sm:$0xf]
      %v1642 = vld [vmem:[%s1610 + $0x7c] sm:$0xf]
      %v1643 = vld [vmem:[%s1610 + $0x80] sm:$0xf]
      %v1644 = vld [vmem:[%s1610 + $0x84] sm:$0xf]
      %v1645 = vld [vmem:[%s1610 + $0x88] sm:$0xf]
      %v1646 = vld [vmem:[%s1610 + $0x8c] sm:$0xf]
      %v1647 = vld [vmem:[%s1610 + $0x90] sm:$0xf]
      %v1648 = vld [vmem:[%s1610 + $0x94] sm:$0xf]
      %v1649 = vld [vmem:[%s1610 + $0x98] sm:$0xf]
      %v1650 = vld [vmem:[%s1610 + $0x9c] sm:$0xf]
      %v1651 = vld [vmem:[%s1610 + $0xa0] sm:$0xf]
      %v1652 = vld [vmem:[%s1610 + $0xa4] sm:$0xf]
      %v1653 = vld [vmem:[%s1610 + $0xa8] sm:$0xf]
      %v1654 = vld [vmem:[%s1610 + $0xac] sm:$0xf]
      %v1655 = vld [vmem:[%s1610 + $0xb0] sm:$0xf]
      %v1656 = vld [vmem:[%s1610 + $0xb4] sm:$0xf]
      %v1657 = vld [vmem:[%s1610 + $0xb8] sm:$0xf]
      %v1658 = vld [vmem:[%s1610 + $0xbc] sm:$0xf]
      %v1659 = vld [vmem:[%s1610 + $0xc0] sm:$0xf]
      %v1660 = vld [vmem:[%s1610 + $0xc4] sm:$0xf]
      %v1661 = vld [vmem:[%s1610 + $0xc8] sm:$0xf]
      %v1662 = vld [vmem:[%s1610 + $0xcc] sm:$0xf]
      %v1663 = vld [vmem:[%s1610 + $0xd0] sm:$0xf]
      %v1664 = vld [vmem:[%s1610 + $0xd4] sm:$0xf]
      %v1665 = vld [vmem:[%s1610 + $0xd8] sm:$0xf]
      %v1666 = vld [vmem:[%s1610 + $0xdc] sm:$0xf]
      %v1667 = vld [vmem:[%s1610 + $0xe0] sm:$0xf]
      %v1668 = vld [vmem:[%s1610 + $0xe4] sm:$0xf]
      %v1669 = vld [vmem:[%s1610 + $0xe8] sm:$0xf]
      %v1670 = vld [vmem:[%s1610 + $0xec] sm:$0xf]
      %v1671 = vld [vmem:[%s1610 + $0xf0] sm:$0xf]
      %v1672 = vld [vmem:[%s1610 + $0xf4] sm:$0xf]
      %v1673 = vld [vmem:[%s1610 + $0xf8] sm:$0xf]
      %v1674 = vld [vmem:[%s1610 + $0xfc] sm:$0xf]
      %v1675 = vld [vmem:[%s1610 + $0x100] sm:$0xf]
      %v1676 = vld [vmem:[%s1610 + $0x104] sm:$0xf]
      %v1677 = vld [vmem:[%s1610 + $0x108] sm:$0xf]
      %v1678 = vld [vmem:[%s1610 + $0x10c] sm:$0xf]
      %v1679 = vld [vmem:[%s1610 + $0x110] sm:$0xf]
      %v1680 = vld [vmem:[%s1610 + $0x114] sm:$0xf]
      %v1681 = vld [vmem:[%s1610 + $0x118] sm:$0xf]
      %v1682 = vld [vmem:[%s1610 + $0x11c] sm:$0xf]
      %v1683 = vld [vmem:[%s1610 + $0x120] sm:$0xf]
      %v1684 = vld [vmem:[%s1610 + $0x124] sm:$0xf]
      %v1685 = vld [vmem:[%s1610 + $0x128] sm:$0xf]
      %v1686 = vld [vmem:[%s1610 + $0x12c] sm:$0xf]
      %v1687 = vld [vmem:[%s1610 + $0x130] sm:$0xf]
      %v1688 = vld [vmem:[%s1610 + $0x134] sm:$0xf]
      %v1689 = vld [vmem:[%s1610 + $0x138] sm:$0xf]
      %v1690 = vld [vmem:[%s1610 + $0x13c] sm:$0xf]
      %v1691 = vld [vmem:[%s1610 + $0x140] sm:$0xf]
      %v1692 = vld [vmem:[%s1610 + $0x144] sm:$0xf]
      %v1693 = vld [vmem:[%s1610 + $0x148] sm:$0xf]
      %v1694 = vld [vmem:[%s1610 + $0x14c] sm:$0xf]
      %v1695 = vld [vmem:[%s1610 + $0x150] sm:$0xf]
      %v1696 = vld [vmem:[%s1610 + $0x154] sm:$0xf]
      %v1697 = vld [vmem:[%s1610 + $0x158] sm:$0xf]
      %v1698 = vld [vmem:[%s1610 + $0x15c] sm:$0xf]
      %v1699 = vld [vmem:[%s1610 + $0x160] sm:$0xf]
      %v1700 = vld [vmem:[%s1610 + $0x164] sm:$0xf]
      %v1701 = vld [vmem:[%s1610 + $0x168] sm:$0xf]
      %v1702 = vld [vmem:[%s1610 + $0x16c] sm:$0xf]
      %v1703 = vld [vmem:[%s1610 + $0x170] sm:$0xf]
      %v1704 = vld [vmem:[%s1610 + $0x174] sm:$0xf]
      %v1705 = vld [vmem:[%s1610 + $0x178] sm:$0xf]
      %v1706 = vld [vmem:[%s1610 + $0x17c] sm:$0xf]
      %v1731 = vunpack.c.l.b16 %v1583
      %v1732 = vunpack.c.h.b16 %v1583
      %v1733 = vunpack.c.l.b16 %v1584
      %v1734 = vunpack.c.h.b16 %v1584
      %v1735 = vunpack.c.l.b16 %v1585
      %v1736 = vunpack.c.h.b16 %v1585
      %v1737 = vunpack.c.l.b16 %v1586
      %v1738 = vunpack.c.h.b16 %v1586
      %v1739 = vunpack.c.l.b16 %v1587
      %v1740 = vunpack.c.h.b16 %v1587
      %v1741 = vunpack.c.l.b16 %v1588
      %v1742 = vunpack.c.h.b16 %v1588
      %v1743 = vunpack.c.l.b16 %v1589
      %v1744 = vunpack.c.h.b16 %v1589
      %v1745 = vunpack.c.l.b16 %v1590
      %v1746 = vunpack.c.h.b16 %v1590
      %v1747 = vunpack.c.l.b16 %v1591
      %v1748 = vunpack.c.h.b16 %v1591
      %v1749 = vunpack.c.l.b16 %v1592
      %v1750 = vunpack.c.h.b16 %v1592
      %v1751 = vunpack.c.l.b16 %v1593
      %v1752 = vunpack.c.h.b16 %v1593
      %v1753 = vunpack.c.l.b16 %v1594
      %v1754 = vunpack.c.h.b16 %v1594
      %v1755 = vunpack.c.l.b16 %v1595
      %v1756 = vunpack.c.h.b16 %v1595
      %v1757 = vunpack.c.l.b16 %v1596
      %v1758 = vunpack.c.h.b16 %v1596
      %v1759 = vunpack.c.l.b16 %v1597
      %v1760 = vunpack.c.h.b16 %v1597
      %v1761 = vunpack.c.l.b16 %v1598
      %v1762 = vunpack.c.h.b16 %v1598
      %v1763 = vunpack.c.l.b16 %v1599
      %v1764 = vunpack.c.h.b16 %v1599
      %v1765 = vunpack.c.l.b16 %v1600
      %v1766 = vunpack.c.h.b16 %v1600
      %v1767 = vunpack.c.l.b16 %v1601
      %v1768 = vunpack.c.h.b16 %v1601
      %v1769 = vunpack.c.l.b16 %v1602
      %v1770 = vunpack.c.h.b16 %v1602
      %v1771 = vunpack.c.l.b16 %v1603
      %v1772 = vunpack.c.h.b16 %v1603
      %v1773 = vunpack.c.l.b16 %v1604
      %v1774 = vunpack.c.h.b16 %v1604
      %v1775 = vunpack.c.l.b16 %v1605
      %v1776 = vunpack.c.h.b16 %v1605
      %v1777 = vunpack.c.l.b16 %v1606
      %v1778 = vunpack.c.h.b16 %v1606
      %v1779 = vpack.c.b16 %v1737, %v1731
      %v1780 = vpack.c.b16 %v1738, %v1732
      %v1781 = vpack.c.b16 %v1739, %v1733
      %v1782 = vpack.c.b16 %v1740, %v1734
      %v1783 = vpack.c.b16 %v1741, %v1735
      %v1784 = vpack.c.b16 %v1742, %v1736
      %v1785 = vpack.c.b16 %v1749, %v1743
      %v1786 = vpack.c.b16 %v1750, %v1744
      %v1787 = vpack.c.b16 %v1751, %v1745
      %v1788 = vpack.c.b16 %v1752, %v1746
      %v1789 = vpack.c.b16 %v1753, %v1747
      %v1790 = vpack.c.b16 %v1754, %v1748
      %v1791 = vpack.c.b16 %v1761, %v1755
      %v1792 = vpack.c.b16 %v1762, %v1756
      %v1793 = vpack.c.b16 %v1763, %v1757
      %v1794 = vpack.c.b16 %v1764, %v1758
      %v1795 = vpack.c.b16 %v1765, %v1759
      %v1796 = vpack.c.b16 %v1766, %v1760
      %v1797 = vpack.c.b16 %v1773, %v1767
      %v1798 = vpack.c.b16 %v1774, %v1768
      %v1799 = vpack.c.b16 %v1775, %v1769
      %v1800 = vpack.c.b16 %v1776, %v1770
      %v1801 = vpack.c.b16 %v1777, %v1771
      %v1802 = vpack.c.b16 %v1778, %v1772
      %v1923 = vunpack.c.l.b16 %v1611
      %v1924 = vunpack.c.l.b16 %v1612
      %v1925 = vunpack.c.l.b16 %v1613
      %v1926 = vunpack.c.l.b16 %v1614
      %v1927 = vunpack.c.l.b16 %v1615
      %v1928 = vunpack.c.l.b16 %v1616
      %v1929 = vunpack.c.l.b16 %v1617
      %v1930 = vunpack.c.l.b16 %v1618
      %v1931 = vunpack.c.l.b16 %v1619
      %v1932 = vunpack.c.l.b16 %v1620
      %v1933 = vunpack.c.l.b16 %v1621
      %v1934 = vunpack.c.l.b16 %v1622
      %v1935 = vunpack.c.l.b16 %v1623
      %v1936 = vunpack.c.l.b16 %v1624
      %v1937 = vunpack.c.l.b16 %v1625
      %v1938 = vunpack.c.l.b16 %v1626
      %v1939 = vunpack.c.l.b16 %v1627
      %v1940 = vunpack.c.l.b16 %v1628
      %v1941 = vunpack.c.l.b16 %v1629
      %v1942 = vunpack.c.l.b16 %v1630
      %v1943 = vunpack.c.l.b16 %v1631
      %v1944 = vunpack.c.l.b16 %v1632
      %v1945 = vunpack.c.l.b16 %v1633
      %v1946 = vunpack.c.l.b16 %v1634
      %v1947 = vunpack.c.l.b16 %v1635
      %v1948 = vunpack.c.l.b16 %v1636
      %v1949 = vunpack.c.l.b16 %v1637
      %v1950 = vunpack.c.l.b16 %v1638
      %v1951 = vunpack.c.l.b16 %v1639
      %v1952 = vunpack.c.l.b16 %v1640
      %v1953 = vunpack.c.l.b16 %v1641
      %v1954 = vunpack.c.l.b16 %v1642
      %v1955 = vunpack.c.l.b16 %v1643
      %v1956 = vunpack.c.l.b16 %v1644
      %v1957 = vunpack.c.l.b16 %v1645
      %v1958 = vunpack.c.l.b16 %v1646
      %v1959 = vunpack.c.l.b16 %v1647
      %v1960 = vunpack.c.l.b16 %v1648
      %v1961 = vunpack.c.l.b16 %v1649
      %v1962 = vunpack.c.l.b16 %v1650
      %v1963 = vunpack.c.l.b16 %v1651
      %v1964 = vunpack.c.l.b16 %v1652
      %v1965 = vunpack.c.l.b16 %v1653
      %v1966 = vunpack.c.l.b16 %v1654
      %v1967 = vunpack.c.l.b16 %v1655
      %v1968 = vunpack.c.l.b16 %v1656
      %v1969 = vunpack.c.l.b16 %v1657
      %v1970 = vunpack.c.l.b16 %v1658
      %v1971 = vunpack.c.l.b16 %v1659
      %v1972 = vunpack.c.l.b16 %v1660
      %v1973 = vunpack.c.l.b16 %v1661
      %v1974 = vunpack.c.l.b16 %v1662
      %v1975 = vunpack.c.l.b16 %v1663
      %v1976 = vunpack.c.l.b16 %v1664
      %v1977 = vunpack.c.l.b16 %v1665
      %v1978 = vunpack.c.l.b16 %v1666
      %v1979 = vunpack.c.l.b16 %v1667
      %v1980 = vunpack.c.l.b16 %v1668
      %v1981 = vunpack.c.l.b16 %v1669
      %v1982 = vunpack.c.l.b16 %v1670
      %v1983 = vunpack.c.l.b16 %v1671
      %v1984 = vunpack.c.l.b16 %v1672
      %v1985 = vunpack.c.l.b16 %v1673
      %v1986 = vunpack.c.l.b16 %v1674
      %v1987 = vunpack.c.l.b16 %v1675
      %v1988 = vunpack.c.l.b16 %v1676
      %v1989 = vunpack.c.l.b16 %v1677
      %v1990 = vunpack.c.l.b16 %v1678
      %v1991 = vunpack.c.l.b16 %v1679
      %v1992 = vunpack.c.l.b16 %v1680
      %v1993 = vunpack.c.l.b16 %v1681
      %v1994 = vunpack.c.l.b16 %v1682
      %v1995 = vunpack.c.l.b16 %v1683
      %v1996 = vunpack.c.l.b16 %v1684
      %v1997 = vunpack.c.l.b16 %v1685
      %v1998 = vunpack.c.l.b16 %v1686
      %v1999 = vunpack.c.l.b16 %v1687
      %v2000 = vunpack.c.l.b16 %v1688
      %v2001 = vunpack.c.l.b16 %v1689
      %v2002 = vunpack.c.l.b16 %v1690
      %v2003 = vunpack.c.l.b16 %v1691
      %v2004 = vunpack.c.l.b16 %v1692
      %v2005 = vunpack.c.l.b16 %v1693
      %v2006 = vunpack.c.l.b16 %v1694
      %v2007 = vunpack.c.l.b16 %v1695
      %v2008 = vunpack.c.l.b16 %v1696
      %v2009 = vunpack.c.l.b16 %v1697
      %v2010 = vunpack.c.l.b16 %v1698
      %v2011 = vunpack.c.l.b16 %v1699
      %v2012 = vunpack.c.l.b16 %v1700
      %v2013 = vunpack.c.l.b16 %v1701
      %v2014 = vunpack.c.l.b16 %v1702
      %v2015 = vunpack.c.l.b16 %v1703
      %v2016 = vunpack.c.l.b16 %v1704
      %v2017 = vunpack.c.l.b16 %v1705
      %v2018 = vunpack.c.l.b16 %v1706
      %v2019 = vpack.c.b16 %v1924, %v1923
      %v2020 = vpack.c.b16 %v1926, %v1925
      %v2021 = vpack.c.b16 %v1928, %v1927
      %v2022 = vpack.c.b16 %v1930, %v1929
      %v2023 = vpack.c.b16 %v1932, %v1931
      %v2024 = vpack.c.b16 %v1934, %v1933
      %v2025 = vpack.c.b16 %v1936, %v1935
      %v2026 = vpack.c.b16 %v1938, %v1937
      %v2027 = vpack.c.b16 %v1940, %v1939
      %v2028 = vpack.c.b16 %v1942, %v1941
      %v2029 = vpack.c.b16 %v1944, %v1943
      %v2030 = vpack.c.b16 %v1946, %v1945
      %v2031 = vpack.c.b16 %v1948, %v1947
      %v2032 = vpack.c.b16 %v1950, %v1949
      %v2033 = vpack.c.b16 %v1952, %v1951
      %v2034 = vpack.c.b16 %v1954, %v1953
      %v2035 = vpack.c.b16 %v1956, %v1955
      %v2036 = vpack.c.b16 %v1958, %v1957
      %v2037 = vpack.c.b16 %v1960, %v1959
      %v2038 = vpack.c.b16 %v1962, %v1961
      %v2039 = vpack.c.b16 %v1964, %v1963
      %v2040 = vpack.c.b16 %v1966, %v1965
      %v2041 = vpack.c.b16 %v1968, %v1967
      %v2042 = vpack.c.b16 %v1970, %v1969
      %v2043 = vpack.c.b16 %v1972, %v1971
      %v2044 = vpack.c.b16 %v1974, %v1973
      %v2045 = vpack.c.b16 %v1976, %v1975
      %v2046 = vpack.c.b16 %v1978, %v1977
      %v2047 = vpack.c.b16 %v1980, %v1979
      %v2048 = vpack.c.b16 %v1982, %v1981
      %v2049 = vpack.c.b16 %v1984, %v1983
      %v2050 = vpack.c.b16 %v1986, %v1985
      %v2051 = vpack.c.b16 %v1988, %v1987
      %v2052 = vpack.c.b16 %v1990, %v1989
      %v2053 = vpack.c.b16 %v1992, %v1991
      %v2054 = vpack.c.b16 %v1994, %v1993
      %v2055 = vpack.c.b16 %v1996, %v1995
      %v2056 = vpack.c.b16 %v1998, %v1997
      %v2057 = vpack.c.b16 %v2000, %v1999
      %v2058 = vpack.c.b16 %v2002, %v2001
      %v2059 = vpack.c.b16 %v2004, %v2003
      %v2060 = vpack.c.b16 %v2006, %v2005
      %v2061 = vpack.c.b16 %v2008, %v2007
      %v2062 = vpack.c.b16 %v2010, %v2009
      %v2063 = vpack.c.b16 %v2012, %v2011
      %v2064 = vpack.c.b16 %v2014, %v2013
      %v2065 = vpack.c.b16 %v2016, %v2015
      %v2066 = vpack.c.b16 %v2018, %v2017
      %2115 = vmatpush.bf16.msra.mxu0 %v2026
      %2116 = vmatpush.bf16.msra.mxu0 %v2025
      %2117 = vmatpush.bf16.msra.mxu0 %v2024
      %2118 = vmatpush.bf16.msra.mxu0 %v2023
      %2119 = vmatpush.bf16.msra.mxu0 %v2022
      %2120 = vmatpush.bf16.msra.mxu0 %v2021
      %2121 = vmatpush.bf16.msra.mxu0 %v2020
      %2122 = vmatpush.bf16.msra.mxu0 %v2019
      %2123 = vmatmul.bf16.gmra.mxu0 %v1779
      %v2124 = vpop.f32.mrf.mxu0
      %v2125 = vadd.f32 0.0, %v2124
      %v2126 = vpop.f32.mrf.mxu0
      %v2127 = vadd.f32 0.0, %v2126
      %2128 = vmatmul.bf16.gmra.mxu0 %v1785
      %v2129 = vpop.f32.mrf.mxu0
      %v2130 = vadd.f32 0.0, %v2129
      %v2131 = vpop.f32.mrf.mxu0
      %v2132 = vadd.f32 0.0, %v2131
      %2133 = vmatmul.bf16.gmra.mxu0 %v1791
      %v2134 = vpop.f32.mrf.mxu0
      %v2135 = vadd.f32 0.0, %v2134
      %v2136 = vpop.f32.mrf.mxu0
      %v2137 = vadd.f32 0.0, %v2136
      %2138 = vmatmul.bf16.gmra.mxu0 %v1797
      %v2139 = vpop.f32.mrf.mxu0
      %v2140 = vadd.f32 0.0, %v2139
      %v2141 = vpop.f32.mrf.mxu0
      %v2142 = vadd.f32 0.0, %v2141
      %2143 = vdwg.mxu0
      %2144 = vmatpush.bf16.msra.mxu0 %v2034
      %2145 = vmatpush.bf16.msra.mxu0 %v2033
      %2146 = vmatpush.bf16.msra.mxu0 %v2032
      %2147 = vmatpush.bf16.msra.mxu0 %v2031
      %2148 = vmatpush.bf16.msra.mxu0 %v2030
      %2149 = vmatpush.bf16.msra.mxu0 %v2029
      %2150 = vmatpush.bf16.msra.mxu0 %v2028
      %2151 = vmatpush.bf16.msra.mxu0 %v2027
      %2152 = vmatmul.bf16.gmra.mxu0 %v1780
      %v2153 = vpop.f32.mrf.mxu0
      %v2154 = vadd.f32 %v2125, %v2153
      %v2155 = vpop.f32.mrf.mxu0
      %v2156 = vadd.f32 %v2127, %v2155
      %2157 = vmatmul.bf16.gmra.mxu0 %v1786
      %v2158 = vpop.f32.mrf.mxu0
      %v2159 = vadd.f32 %v2130, %v2158
      %v2160 = vpop.f32.mrf.mxu0
      %v2161 = vadd.f32 %v2132, %v2160
      %2162 = vmatmul.bf16.gmra.mxu0 %v1792
      %v2163 = vpop.f32.mrf.mxu0
      %v2164 = vadd.f32 %v2135, %v2163
      %v2165 = vpop.f32.mrf.mxu0
      %v2166 = vadd.f32 %v2137, %v2165
      %2167 = vmatmul.bf16.gmra.mxu0 %v1798
      %v2168 = vpop.f32.mrf.mxu0
      %v2169 = vadd.f32 %v2140, %v2168
      %v2170 = vpop.f32.mrf.mxu0
      %v2171 = vadd.f32 %v2142, %v2170
      %2172 = vdwg.mxu0
      %2173 = vmatpush.bf16.msra.mxu0 %v2042
      %2174 = vmatpush.bf16.msra.mxu0 %v2041
      %2175 = vmatpush.bf16.msra.mxu0 %v2040
      %2176 = vmatpush.bf16.msra.mxu0 %v2039
      %2177 = vmatpush.bf16.msra.mxu0 %v2038
      %2178 = vmatpush.bf16.msra.mxu0 %v2037
      %2179 = vmatpush.bf16.msra.mxu0 %v2036
      %2180 = vmatpush.bf16.msra.mxu0 %v2035
      %2181 = vmatmul.bf16.gmra.mxu0 %v1781
      %v2182 = vpop.f32.mrf.mxu0
      %v2183 = vadd.f32 %v2154, %v2182
      %v2184 = vpop.f32.mrf.mxu0
      %v2185 = vadd.f32 %v2156, %v2184
      %2186 = vmatmul.bf16.gmra.mxu0 %v1787
      %v2187 = vpop.f32.mrf.mxu0
      %v2188 = vadd.f32 %v2159, %v2187
      %v2189 = vpop.f32.mrf.mxu0
      %v2190 = vadd.f32 %v2161, %v2189
      %2191 = vmatmul.bf16.gmra.mxu0 %v1793
      %v2192 = vpop.f32.mrf.mxu0
      %v2193 = vadd.f32 %v2164, %v2192
      %v2194 = vpop.f32.mrf.mxu0
      %v2195 = vadd.f32 %v2166, %v2194
      %2196 = vmatmul.bf16.gmra.mxu0 %v1799
      %v2197 = vpop.f32.mrf.mxu0
      %v2198 = vadd.f32 %v2169, %v2197
      %v2199 = vpop.f32.mrf.mxu0
      %v2200 = vadd.f32 %v2171, %v2199
      %2201 = vdwg.mxu0
      %2202 = vmatpush.bf16.msra.mxu0 %v2050
      %2203 = vmatpush.bf16.msra.mxu0 %v2049
      %2204 = vmatpush.bf16.msra.mxu0 %v2048
      %2205 = vmatpush.bf16.msra.mxu0 %v2047
      %2206 = vmatpush.bf16.msra.mxu0 %v2046
      %2207 = vmatpush.bf16.msra.mxu0 %v2045
      %2208 = vmatpush.bf16.msra.mxu0 %v2044
      %2209 = vmatpush.bf16.msra.mxu0 %v2043
      %2210 = vmatmul.bf16.gmra.mxu0 %v1782
      %v2211 = vpop.f32.mrf.mxu0
      %v2212 = vadd.f32 %v2183, %v2211
      %v2213 = vpop.f32.mrf.mxu0
      %v2214 = vadd.f32 %v2185, %v2213
      %2215 = vmatmul.bf16.gmra.mxu0 %v1788
      %v2216 = vpop.f32.mrf.mxu0
      %v2217 = vadd.f32 %v2188, %v2216
      %v2218 = vpop.f32.mrf.mxu0
      %v2219 = vadd.f32 %v2190, %v2218
      %2220 = vmatmul.bf16.gmra.mxu0 %v1794
      %v2221 = vpop.f32.mrf.mxu0
      %v2222 = vadd.f32 %v2193, %v2221
      %v2223 = vpop.f32.mrf.mxu0
      %v2224 = vadd.f32 %v2195, %v2223
      %2225 = vmatmul.bf16.gmra.mxu0 %v1800
      %v2226 = vpop.f32.mrf.mxu0
      %v2227 = vadd.f32 %v2198, %v2226
      %v2228 = vpop.f32.mrf.mxu0
      %v2229 = vadd.f32 %v2200, %v2228
      %2230 = vdwg.mxu0
      %2231 = vmatpush.bf16.msra.mxu0 %v2058
      %2232 = vmatpush.bf16.msra.mxu0 %v2057
      %2233 = vmatpush.bf16.msra.mxu0 %v2056
      %2234 = vmatpush.bf16.msra.mxu0 %v2055
      %2235 = vmatpush.bf16.msra.mxu0 %v2054
      %2236 = vmatpush.bf16.msra.mxu0 %v2053
      %2237 = vmatpush.bf16.msra.mxu0 %v2052
      %2238 = vmatpush.bf16.msra.mxu0 %v2051
      %2239 = vmatmul.bf16.gmra.mxu0 %v1783
      %v2240 = vpop.f32.mrf.mxu0
      %v2241 = vadd.f32 %v2212, %v2240
      %v2242 = vpop.f32.mrf.mxu0
      %v2243 = vadd.f32 %v2214, %v2242
      %2244 = vmatmul.bf16.gmra.mxu0 %v1789
      %v2245 = vpop.f32.mrf.mxu0
      %v2246 = vadd.f32 %v2217, %v2245
      %v2247 = vpop.f32.mrf.mxu0
      %v2248 = vadd.f32 %v2219, %v2247
      %2249 = vmatmul.bf16.gmra.mxu0 %v1795
      %v2250 = vpop.f32.mrf.mxu0
      %v2251 = vadd.f32 %v2222, %v2250
      %v2252 = vpop.f32.mrf.mxu0
      %v2253 = vadd.f32 %v2224, %v2252
      %2254 = vmatmul.bf16.gmra.mxu0 %v1801
      %v2255 = vpop.f32.mrf.mxu0
      %v2256 = vadd.f32 %v2227, %v2255
      %v2257 = vpop.f32.mrf.mxu0
      %v2258 = vadd.f32 %v2229, %v2257
      %2259 = vdwg.mxu0
      %2260 = vmatpush.bf16.msra.mxu0 %v2066
      %2261 = vmatpush.bf16.msra.mxu0 %v2065
      %2262 = vmatpush.bf16.msra.mxu0 %v2064
      %2263 = vmatpush.bf16.msra.mxu0 %v2063
      %2264 = vmatpush.bf16.msra.mxu0 %v2062
      %2265 = vmatpush.bf16.msra.mxu0 %v2061
      %2266 = vmatpush.bf16.msra.mxu0 %v2060
      %2267 = vmatpush.bf16.msra.mxu0 %v2059
      %2268 = vmatmul.bf16.gmra.mxu0 %v1784
      %v2269 = vpop.f32.mrf.mxu0
      %v2270 = vadd.f32 %v2241, %v2269
      %v2271 = vpop.f32.mrf.mxu0
      %v2272 = vadd.f32 %v2243, %v2271
      %2273 = vmatmul.bf16.gmra.mxu0 %v1790
      %v2274 = vpop.f32.mrf.mxu0
      %v2275 = vadd.f32 %v2246, %v2274
      %v2276 = vpop.f32.mrf.mxu0
      %v2277 = vadd.f32 %v2248, %v2276
      %2278 = vmatmul.bf16.gmra.mxu0 %v1796
      %v2279 = vpop.f32.mrf.mxu0
      %v2280 = vadd.f32 %v2251, %v2279
      %v2281 = vpop.f32.mrf.mxu0
      %v2282 = vadd.f32 %v2253, %v2281
      %2283 = vmatmul.bf16.gmra.mxu0 %v1802
      %v2284 = vpop.f32.mrf.mxu0
      %v2285 = vadd.f32 %v2256, %v2284
      %v2286 = vpop.f32.mrf.mxu0
      %v2287 = vadd.f32 %v2258, %v2286
      %2288 = vdwg.mxu0
      %v2289 = vld [vmem:[#allocation2] sm:$0xff]
      %v2290 = vld [vmem:[#allocation2 + $0x8] sm:$0xff]
      %v2291 = vld [vmem:[#allocation2 + $0x10] sm:$0xff]
      %v2292 = vld [vmem:[#allocation2 + $0x18] sm:$0xff]
      %v2293 = vld [vmem:[#allocation2 + $0x20] sm:$0xff]
      %v2294 = vld [vmem:[#allocation2 + $0x28] sm:$0xff]
      %v2295 = vld [vmem:[#allocation2 + $0x30] sm:$0xff]
      %v2296 = vld [vmem:[#allocation2 + $0x38] sm:$0xff]
      %v2297 = vadd.f32 %v2289, %v2270
      %v2298 = vadd.f32 %v2290, %v2272
      %v2299 = vadd.f32 %v2291, %v2275
      %v2300 = vadd.f32 %v2292, %v2277
      %v2301 = vadd.f32 %v2293, %v2280
      %v2302 = vadd.f32 %v2294, %v2282
      %v2303 = vadd.f32 %v2295, %v2285
      %v2304 = vadd.f32 %v2296, %v2287
      %2305 = vst [vmem:[#allocation2] sm:$0xff] %v2297
      %2306 = vst [vmem:[#allocation2 + $0x8] sm:$0xff] %v2298
      %2307 = vst [vmem:[#allocation2 + $0x10] sm:$0xff] %v2299
      %2308 = vst [vmem:[#allocation2 + $0x18] sm:$0xff] %v2300
      %2309 = vst [vmem:[#allocation2 + $0x20] sm:$0xff] %v2301
      %2310 = vst [vmem:[#allocation2 + $0x28] sm:$0xff] %v2302
      %2311 = vst [vmem:[#allocation2 + $0x30] sm:$0xff] %v2303
      %2312 = vst [vmem:[#allocation2 + $0x38] sm:$0xff] %v2304
      %v2313 = vld [vmem:[#allocation3 + $0x30] sm:$0xff]
      %v2314 = vld [vmem:[#allocation3 + $0x38] sm:$0xff]
      %v2315 = vld [vmem:[#allocation3 + $0x40] sm:$0xff]
      %v2316 = vld [vmem:[#allocation3 + $0x48] sm:$0xff]
      %v2317 = vld [vmem:[#allocation3 + $0x50] sm:$0xff]
      %v2318 = vld [vmem:[#allocation3 + $0x58] sm:$0xff]
      %v2319 = vld [vmem:[#allocation3 + $0x60] sm:$0xff]
      %v2320 = vld [vmem:[#allocation3 + $0x68] sm:$0xff]
      %v2321 = vld [vmem:[#allocation3 + $0x70] sm:$0xff]
      %v2322 = vld [vmem:[#allocation3 + $0x78] sm:$0xff]
      %v2323 = vld [vmem:[#allocation3 + $0x80] sm:$0xff]
      %v2324 = vld [vmem:[#allocation3 + $0x88] sm:$0xff]
      %v2325 = vld [vmem:[#allocation3 + $0x90] sm:$0xff]
      %v2326 = vld [vmem:[#allocation3 + $0x98] sm:$0xff]
      %v2327 = vld [vmem:[#allocation3 + $0xa0] sm:$0xff]
      %v2328 = vld [vmem:[#allocation3 + $0xa8] sm:$0xff]
      %v2329 = vld [vmem:[#allocation3 + $0xb0] sm:$0xff]
      %v2330 = vld [vmem:[#allocation3 + $0xb8] sm:$0xff]
      %v2331 = vld [vmem:[#allocation3 + $0xc0] sm:$0xff]
      %v2332 = vld [vmem:[#allocation3 + $0xc8] sm:$0xff]
      %v2333 = vld [vmem:[#allocation3 + $0xd0] sm:$0xff]
      %v2334 = vld [vmem:[#allocation3 + $0xd8] sm:$0xff]
      %v2335 = vld [vmem:[#allocation3 + $0xe0] sm:$0xff]
      %v2336 = vld [vmem:[#allocation3 + $0xe8] sm:$0xff]
      %s2337 = sadd.s32 %s877, 2
      %s2338 = smul.u32 %s2337, 96
      %s2339 = smul.addr %s2338, 4
      %s2340 = scalar_lea.vmem %s2, %s2339
      %v2341 = vld [vmem:[%s2340] sm:$0xf]
      %v2342 = vld [vmem:[%s2340 + $0x4] sm:$0xf]
      %v2343 = vld [vmem:[%s2340 + $0x8] sm:$0xf]
      %v2344 = vld [vmem:[%s2340 + $0xc] sm:$0xf]
      %v2345 = vld [vmem:[%s2340 + $0x10] sm:$0xf]
      %v2346 = vld [vmem:[%s2340 + $0x14] sm:$0xf]
      %v2347 = vld [vmem:[%s2340 + $0x18] sm:$0xf]
      %v2348 = vld [vmem:[%s2340 + $0x1c] sm:$0xf]
      %v2349 = vld [vmem:[%s2340 + $0x20] sm:$0xf]
      %v2350 = vld [vmem:[%s2340 + $0x24] sm:$0xf]
      %v2351 = vld [vmem:[%s2340 + $0x28] sm:$0xf]
      %v2352 = vld [vmem:[%s2340 + $0x2c] sm:$0xf]
      %v2353 = vld [vmem:[%s2340 + $0x30] sm:$0xf]
      %v2354 = vld [vmem:[%s2340 + $0x34] sm:$0xf]
      %v2355 = vld [vmem:[%s2340 + $0x38] sm:$0xf]
      %v2356 = vld [vmem:[%s2340 + $0x3c] sm:$0xf]
      %v2357 = vld [vmem:[%s2340 + $0x40] sm:$0xf]
      %v2358 = vld [vmem:[%s2340 + $0x44] sm:$0xf]
      %v2359 = vld [vmem:[%s2340 + $0x48] sm:$0xf]
      %v2360 = vld [vmem:[%s2340 + $0x4c] sm:$0xf]
      %v2361 = vld [vmem:[%s2340 + $0x50] sm:$0xf]
      %v2362 = vld [vmem:[%s2340 + $0x54] sm:$0xf]
      %v2363 = vld [vmem:[%s2340 + $0x58] sm:$0xf]
      %v2364 = vld [vmem:[%s2340 + $0x5c] sm:$0xf]
      %v2365 = vld [vmem:[%s2340 + $0x60] sm:$0xf]
      %v2366 = vld [vmem:[%s2340 + $0x64] sm:$0xf]
      %v2367 = vld [vmem:[%s2340 + $0x68] sm:$0xf]
      %v2368 = vld [vmem:[%s2340 + $0x6c] sm:$0xf]
      %v2369 = vld [vmem:[%s2340 + $0x70] sm:$0xf]
      %v2370 = vld [vmem:[%s2340 + $0x74] sm:$0xf]
      %v2371 = vld [vmem:[%s2340 + $0x78] sm:$0xf]
      %v2372 = vld [vmem:[%s2340 + $0x7c] sm:$0xf]
      %v2373 = vld [vmem:[%s2340 + $0x80] sm:$0xf]
      %v2374 = vld [vmem:[%s2340 + $0x84] sm:$0xf]
      %v2375 = vld [vmem:[%s2340 + $0x88] sm:$0xf]
      %v2376 = vld [vmem:[%s2340 + $0x8c] sm:$0xf]
      %v2377 = vld [vmem:[%s2340 + $0x90] sm:$0xf]
      %v2378 = vld [vmem:[%s2340 + $0x94] sm:$0xf]
      %v2379 = vld [vmem:[%s2340 + $0x98] sm:$0xf]
      %v2380 = vld [vmem:[%s2340 + $0x9c] sm:$0xf]
      %v2381 = vld [vmem:[%s2340 + $0xa0] sm:$0xf]
      %v2382 = vld [vmem:[%s2340 + $0xa4] sm:$0xf]
      %v2383 = vld [vmem:[%s2340 + $0xa8] sm:$0xf]
      %v2384 = vld [vmem:[%s2340 + $0xac] sm:$0xf]
      %v2385 = vld [vmem:[%s2340 + $0xb0] sm:$0xf]
      %v2386 = vld [vmem:[%s2340 + $0xb4] sm:$0xf]
      %v2387 = vld [vmem:[%s2340 + $0xb8] sm:$0xf]
      %v2388 = vld [vmem:[%s2340 + $0xbc] sm:$0xf]
      %v2389 = vld [vmem:[%s2340 + $0xc0] sm:$0xf]
      %v2390 = vld [vmem:[%s2340 + $0xc4] sm:$0xf]
      %v2391 = vld [vmem:[%s2340 + $0xc8] sm:$0xf]
      %v2392 = vld [vmem:[%s2340 + $0xcc] sm:$0xf]
      %v2393 = vld [vmem:[%s2340 + $0xd0] sm:$0xf]
      %v2394 = vld [vmem:[%s2340 + $0xd4] sm:$0xf]
      %v2395 = vld [vmem:[%s2340 + $0xd8] sm:$0xf]
      %v2396 = vld [vmem:[%s2340 + $0xdc] sm:$0xf]
      %v2397 = vld [vmem:[%s2340 + $0xe0] sm:$0xf]
      %v2398 = vld [vmem:[%s2340 + $0xe4] sm:$0xf]
      %v2399 = vld [vmem:[%s2340 + $0xe8] sm:$0xf]
      %v2400 = vld [vmem:[%s2340 + $0xec] sm:$0xf]
      %v2401 = vld [vmem:[%s2340 + $0xf0] sm:$0xf]
      %v2402 = vld [vmem:[%s2340 + $0xf4] sm:$0xf]
      %v2403 = vld [vmem:[%s2340 + $0xf8] sm:$0xf]
      %v2404 = vld [vmem:[%s2340 + $0xfc] sm:$0xf]
      %v2405 = vld [vmem:[%s2340 + $0x100] sm:$0xf]
      %v2406 = vld [vmem:[%s2340 + $0x104] sm:$0xf]
      %v2407 = vld [vmem:[%s2340 + $0x108] sm:$0xf]
      %v2408 = vld [vmem:[%s2340 + $0x10c] sm:$0xf]
      %v2409 = vld [vmem:[%s2340 + $0x110] sm:$0xf]
      %v2410 = vld [vmem:[%s2340 + $0x114] sm:$0xf]
      %v2411 = vld [vmem:[%s2340 + $0x118] sm:$0xf]
      %v2412 = vld [vmem:[%s2340 + $0x11c] sm:$0xf]
      %v2413 = vld [vmem:[%s2340 + $0x120] sm:$0xf]
      %v2414 = vld [vmem:[%s2340 + $0x124] sm:$0xf]
      %v2415 = vld [vmem:[%s2340 + $0x128] sm:$0xf]
      %v2416 = vld [vmem:[%s2340 + $0x12c] sm:$0xf]
      %v2417 = vld [vmem:[%s2340 + $0x130] sm:$0xf]
      %v2418 = vld [vmem:[%s2340 + $0x134] sm:$0xf]
      %v2419 = vld [vmem:[%s2340 + $0x138] sm:$0xf]
      %v2420 = vld [vmem:[%s2340 + $0x13c] sm:$0xf]
      %v2421 = vld [vmem:[%s2340 + $0x140] sm:$0xf]
      %v2422 = vld [vmem:[%s2340 + $0x144] sm:$0xf]
      %v2423 = vld [vmem:[%s2340 + $0x148] sm:$0xf]
      %v2424 = vld [vmem:[%s2340 + $0x14c] sm:$0xf]
      %v2425 = vld [vmem:[%s2340 + $0x150] sm:$0xf]
      %v2426 = vld [vmem:[%s2340 + $0x154] sm:$0xf]
      %v2427 = vld [vmem:[%s2340 + $0x158] sm:$0xf]
      %v2428 = vld [vmem:[%s2340 + $0x15c] sm:$0xf]
      %v2429 = vld [vmem:[%s2340 + $0x160] sm:$0xf]
      %v2430 = vld [vmem:[%s2340 + $0x164] sm:$0xf]
      %v2431 = vld [vmem:[%s2340 + $0x168] sm:$0xf]
      %v2432 = vld [vmem:[%s2340 + $0x16c] sm:$0xf]
      %v2433 = vld [vmem:[%s2340 + $0x170] sm:$0xf]
      %v2434 = vld [vmem:[%s2340 + $0x174] sm:$0xf]
      %v2435 = vld [vmem:[%s2340 + $0x178] sm:$0xf]
      %v2436 = vld [vmem:[%s2340 + $0x17c] sm:$0xf]
      %v2461 = vunpack.c.l.b16 %v2313
      %v2462 = vunpack.c.h.b16 %v2313
      %v2463 = vunpack.c.l.b16 %v2314
      %v2464 = vunpack.c.h.b16 %v2314
      %v2465 = vunpack.c.l.b16 %v2315
      %v2466 = vunpack.c.h.b16 %v2315
      %v2467 = vunpack.c.l.b16 %v2316
      %v2468 = vunpack.c.h.b16 %v2316
      %v2469 = vunpack.c.l.b16 %v2317
      %v2470 = vunpack.c.h.b16 %v2317
      %v2471 = vunpack.c.l.b16 %v2318
      %v2472 = vunpack.c.h.b16 %v2318
      %v2473 = vunpack.c.l.b16 %v2319
      %v2474 = vunpack.c.h.b16 %v2319
      %v2475 = vunpack.c.l.b16 %v2320
      %v2476 = vunpack.c.h.b16 %v2320
      %v2477 = vunpack.c.l.b16 %v2321
      %v2478 = vunpack.c.h.b16 %v2321
      %v2479 = vunpack.c.l.b16 %v2322
      %v2480 = vunpack.c.h.b16 %v2322
      %v2481 = vunpack.c.l.b16 %v2323
      %v2482 = vunpack.c.h.b16 %v2323
      %v2483 = vunpack.c.l.b16 %v2324
      %v2484 = vunpack.c.h.b16 %v2324
      %v2485 = vunpack.c.l.b16 %v2325
      %v2486 = vunpack.c.h.b16 %v2325
      %v2487 = vunpack.c.l.b16 %v2326
      %v2488 = vunpack.c.h.b16 %v2326
      %v2489 = vunpack.c.l.b16 %v2327
      %v2490 = vunpack.c.h.b16 %v2327
      %v2491 = vunpack.c.l.b16 %v2328
      %v2492 = vunpack.c.h.b16 %v2328
      %v2493 = vunpack.c.l.b16 %v2329
      %v2494 = vunpack.c.h.b16 %v2329
      %v2495 = vunpack.c.l.b16 %v2330
      %v2496 = vunpack.c.h.b16 %v2330
      %v2497 = vunpack.c.l.b16 %v2331
      %v2498 = vunpack.c.h.b16 %v2331
      %v2499 = vunpack.c.l.b16 %v2332
      %v2500 = vunpack.c.h.b16 %v2332
      %v2501 = vunpack.c.l.b16 %v2333
      %v2502 = vunpack.c.h.b16 %v2333
      %v2503 = vunpack.c.l.b16 %v2334
      %v2504 = vunpack.c.h.b16 %v2334
      %v2505 = vunpack.c.l.b16 %v2335
      %v2506 = vunpack.c.h.b16 %v2335
      %v2507 = vunpack.c.l.b16 %v2336
      %v2508 = vunpack.c.h.b16 %v2336
      %v2509 = vpack.c.b16 %v2467, %v2461
      %v2510 = vpack.c.b16 %v2468, %v2462
      %v2511 = vpack.c.b16 %v2469, %v2463
      %v2512 = vpack.c.b16 %v2470, %v2464
      %v2513 = vpack.c.b16 %v2471, %v2465
      %v2514 = vpack.c.b16 %v2472, %v2466
      %v2515 = vpack.c.b16 %v2479, %v2473
      %v2516 = vpack.c.b16 %v2480, %v2474
      %v2517 = vpack.c.b16 %v2481, %v2475
      %v2518 = vpack.c.b16 %v2482, %v2476
      %v2519 = vpack.c.b16 %v2483, %v2477
      %v2520 = vpack.c.b16 %v2484, %v2478
      %v2521 = vpack.c.b16 %v2491, %v2485
      %v2522 = vpack.c.b16 %v2492, %v2486
      %v2523 = vpack.c.b16 %v2493, %v2487
      %v2524 = vpack.c.b16 %v2494, %v2488
      %v2525 = vpack.c.b16 %v2495, %v2489
      %v2526 = vpack.c.b16 %v2496, %v2490
      %v2527 = vpack.c.b16 %v2503, %v2497
      %v2528 = vpack.c.b16 %v2504, %v2498
      %v2529 = vpack.c.b16 %v2505, %v2499
      %v2530 = vpack.c.b16 %v2506, %v2500
      %v2531 = vpack.c.b16 %v2507, %v2501
      %v2532 = vpack.c.b16 %v2508, %v2502
      %v2653 = vunpack.c.l.b16 %v2341
      %v2654 = vunpack.c.l.b16 %v2342
      %v2655 = vunpack.c.l.b16 %v2343
      %v2656 = vunpack.c.l.b16 %v2344
      %v2657 = vunpack.c.l.b16 %v2345
      %v2658 = vunpack.c.l.b16 %v2346
      %v2659 = vunpack.c.l.b16 %v2347
      %v2660 = vunpack.c.l.b16 %v2348
      %v2661 = vunpack.c.l.b16 %v2349
      %v2662 = vunpack.c.l.b16 %v2350
      %v2663 = vunpack.c.l.b16 %v2351
      %v2664 = vunpack.c.l.b16 %v2352
      %v2665 = vunpack.c.l.b16 %v2353
      %v2666 = vunpack.c.l.b16 %v2354
      %v2667 = vunpack.c.l.b16 %v2355
      %v2668 = vunpack.c.l.b16 %v2356
      %v2669 = vunpack.c.l.b16 %v2357
      %v2670 = vunpack.c.l.b16 %v2358
      %v2671 = vunpack.c.l.b16 %v2359
      %v2672 = vunpack.c.l.b16 %v2360
      %v2673 = vunpack.c.l.b16 %v2361
      %v2674 = vunpack.c.l.b16 %v2362
      %v2675 = vunpack.c.l.b16 %v2363
      %v2676 = vunpack.c.l.b16 %v2364
      %v2677 = vunpack.c.l.b16 %v2365
      %v2678 = vunpack.c.l.b16 %v2366
      %v2679 = vunpack.c.l.b16 %v2367
      %v2680 = vunpack.c.l.b16 %v2368
      %v2681 = vunpack.c.l.b16 %v2369
      %v2682 = vunpack.c.l.b16 %v2370
      %v2683 = vunpack.c.l.b16 %v2371
      %v2684 = vunpack.c.l.b16 %v2372
      %v2685 = vunpack.c.l.b16 %v2373
      %v2686 = vunpack.c.l.b16 %v2374
      %v2687 = vunpack.c.l.b16 %v2375
      %v2688 = vunpack.c.l.b16 %v2376
      %v2689 = vunpack.c.l.b16 %v2377
      %v2690 = vunpack.c.l.b16 %v2378
      %v2691 = vunpack.c.l.b16 %v2379
      %v2692 = vunpack.c.l.b16 %v2380
      %v2693 = vunpack.c.l.b16 %v2381
      %v2694 = vunpack.c.l.b16 %v2382
      %v2695 = vunpack.c.l.b16 %v2383
      %v2696 = vunpack.c.l.b16 %v2384
      %v2697 = vunpack.c.l.b16 %v2385
      %v2698 = vunpack.c.l.b16 %v2386
      %v2699 = vunpack.c.l.b16 %v2387
      %v2700 = vunpack.c.l.b16 %v2388
      %v2701 = vunpack.c.l.b16 %v2389
      %v2702 = vunpack.c.l.b16 %v2390
      %v2703 = vunpack.c.l.b16 %v2391
      %v2704 = vunpack.c.l.b16 %v2392
      %v2705 = vunpack.c.l.b16 %v2393
      %v2706 = vunpack.c.l.b16 %v2394
      %v2707 = vunpack.c.l.b16 %v2395
      %v2708 = vunpack.c.l.b16 %v2396
      %v2709 = vunpack.c.l.b16 %v2397
      %v2710 = vunpack.c.l.b16 %v2398
      %v2711 = vunpack.c.l.b16 %v2399
      %v2712 = vunpack.c.l.b16 %v2400
      %v2713 = vunpack.c.l.b16 %v2401
      %v2714 = vunpack.c.l.b16 %v2402
      %v2715 = vunpack.c.l.b16 %v2403
      %v2716 = vunpack.c.l.b16 %v2404
      %v2717 = vunpack.c.l.b16 %v2405
      %v2718 = vunpack.c.l.b16 %v2406
      %v2719 = vunpack.c.l.b16 %v2407
      %v2720 = vunpack.c.l.b16 %v2408
      %v2721 = vunpack.c.l.b16 %v2409
      %v2722 = vunpack.c.l.b16 %v2410
      %v2723 = vunpack.c.l.b16 %v2411
      %v2724 = vunpack.c.l.b16 %v2412
      %v2725 = vunpack.c.l.b16 %v2413
      %v2726 = vunpack.c.l.b16 %v2414
      %v2727 = vunpack.c.l.b16 %v2415
      %v2728 = vunpack.c.l.b16 %v2416
      %v2729 = vunpack.c.l.b16 %v2417
      %v2730 = vunpack.c.l.b16 %v2418
      %v2731 = vunpack.c.l.b16 %v2419
      %v2732 = vunpack.c.l.b16 %v2420
      %v2733 = vunpack.c.l.b16 %v2421
      %v2734 = vunpack.c.l.b16 %v2422
      %v2735 = vunpack.c.l.b16 %v2423
      %v2736 = vunpack.c.l.b16 %v2424
      %v2737 = vunpack.c.l.b16 %v2425
      %v2738 = vunpack.c.l.b16 %v2426
      %v2739 = vunpack.c.l.b16 %v2427
      %v2740 = vunpack.c.l.b16 %v2428
      %v2741 = vunpack.c.l.b16 %v2429
      %v2742 = vunpack.c.l.b16 %v2430
      %v2743 = vunpack.c.l.b16 %v2431
      %v2744 = vunpack.c.l.b16 %v2432
      %v2745 = vunpack.c.l.b16 %v2433
      %v2746 = vunpack.c.l.b16 %v2434
      %v2747 = vunpack.c.l.b16 %v2435
      %v2748 = vunpack.c.l.b16 %v2436
      %v2749 = vpack.c.b16 %v2654, %v2653
      %v2750 = vpack.c.b16 %v2656, %v2655
      %v2751 = vpack.c.b16 %v2658, %v2657
      %v2752 = vpack.c.b16 %v2660, %v2659
      %v2753 = vpack.c.b16 %v2662, %v2661
      %v2754 = vpack.c.b16 %v2664, %v2663
      %v2755 = vpack.c.b16 %v2666, %v2665
      %v2756 = vpack.c.b16 %v2668, %v2667
      %v2757 = vpack.c.b16 %v2670, %v2669
      %v2758 = vpack.c.b16 %v2672, %v2671
      %v2759 = vpack.c.b16 %v2674, %v2673
      %v2760 = vpack.c.b16 %v2676, %v2675
      %v2761 = vpack.c.b16 %v2678, %v2677
      %v2762 = vpack.c.b16 %v2680, %v2679
      %v2763 = vpack.c.b16 %v2682, %v2681
      %v2764 = vpack.c.b16 %v2684, %v2683
      %v2765 = vpack.c.b16 %v2686, %v2685
      %v2766 = vpack.c.b16 %v2688, %v2687
      %v2767 = vpack.c.b16 %v2690, %v2689
      %v2768 = vpack.c.b16 %v2692, %v2691
      %v2769 = vpack.c.b16 %v2694, %v2693
      %v2770 = vpack.c.b16 %v2696, %v2695
      %v2771 = vpack.c.b16 %v2698, %v2697
      %v2772 = vpack.c.b16 %v2700, %v2699
      %v2773 = vpack.c.b16 %v2702, %v2701
      %v2774 = vpack.c.b16 %v2704, %v2703
      %v2775 = vpack.c.b16 %v2706, %v2705
      %v2776 = vpack.c.b16 %v2708, %v2707
      %v2777 = vpack.c.b16 %v2710, %v2709
      %v2778 = vpack.c.b16 %v2712, %v2711
      %v2779 = vpack.c.b16 %v2714, %v2713
      %v2780 = vpack.c.b16 %v2716, %v2715
      %v2781 = vpack.c.b16 %v2718, %v2717
      %v2782 = vpack.c.b16 %v2720, %v2719
      %v2783 = vpack.c.b16 %v2722, %v2721
      %v2784 = vpack.c.b16 %v2724, %v2723
      %v2785 = vpack.c.b16 %v2726, %v2725
      %v2786 = vpack.c.b16 %v2728, %v2727
      %v2787 = vpack.c.b16 %v2730, %v2729
      %v2788 = vpack.c.b16 %v2732, %v2731
      %v2789 = vpack.c.b16 %v2734, %v2733
      %v2790 = vpack.c.b16 %v2736, %v2735
      %v2791 = vpack.c.b16 %v2738, %v2737
      %v2792 = vpack.c.b16 %v2740, %v2739
      %v2793 = vpack.c.b16 %v2742, %v2741
      %v2794 = vpack.c.b16 %v2744, %v2743
      %v2795 = vpack.c.b16 %v2746, %v2745
      %v2796 = vpack.c.b16 %v2748, %v2747
      %2845 = vmatpush.bf16.msra.mxu0 %v2756
      %2846 = vmatpush.bf16.msra.mxu0 %v2755
      %2847 = vmatpush.bf16.msra.mxu0 %v2754
      %2848 = vmatpush.bf16.msra.mxu0 %v2753
      %2849 = vmatpush.bf16.msra.mxu0 %v2752
      %2850 = vmatpush.bf16.msra.mxu0 %v2751
      %2851 = vmatpush.bf16.msra.mxu0 %v2750
      %2852 = vmatpush.bf16.msra.mxu0 %v2749
      %2853 = vmatmul.bf16.gmra.mxu0 %v2509
      %v2854 = vpop.f32.mrf.mxu0
      %v2855 = vadd.f32 0.0, %v2854
      %v2856 = vpop.f32.mrf.mxu0
      %v2857 = vadd.f32 0.0, %v2856
      %2858 = vmatmul.bf16.gmra.mxu0 %v2515
      %v2859 = vpop.f32.mrf.mxu0
      %v2860 = vadd.f32 0.0, %v2859
      %v2861 = vpop.f32.mrf.mxu0
      %v2862 = vadd.f32 0.0, %v2861
      %2863 = vmatmul.bf16.gmra.mxu0 %v2521
      %v2864 = vpop.f32.mrf.mxu0
      %v2865 = vadd.f32 0.0, %v2864
      %v2866 = vpop.f32.mrf.mxu0
      %v2867 = vadd.f32 0.0, %v2866
      %2868 = vmatmul.bf16.gmra.mxu0 %v2527
      %v2869 = vpop.f32.mrf.mxu0
      %v2870 = vadd.f32 0.0, %v2869
      %v2871 = vpop.f32.mrf.mxu0
      %v2872 = vadd.f32 0.0, %v2871
      %2873 = vdwg.mxu0
      %2874 = vmatpush.bf16.msra.mxu0 %v2764
      %2875 = vmatpush.bf16.msra.mxu0 %v2763
      %2876 = vmatpush.bf16.msra.mxu0 %v2762
      %2877 = vmatpush.bf16.msra.mxu0 %v2761
      %2878 = vmatpush.bf16.msra.mxu0 %v2760
      %2879 = vmatpush.bf16.msra.mxu0 %v2759
      %2880 = vmatpush.bf16.msra.mxu0 %v2758
      %2881 = vmatpush.bf16.msra.mxu0 %v2757
      %2882 = vmatmul.bf16.gmra.mxu0 %v2510
      %v2883 = vpop.f32.mrf.mxu0
      %v2884 = vadd.f32 %v2855, %v2883
      %v2885 = vpop.f32.mrf.mxu0
      %v2886 = vadd.f32 %v2857, %v2885
      %2887 = vmatmul.bf16.gmra.mxu0 %v2516
      %v2888 = vpop.f32.mrf.mxu0
      %v2889 = vadd.f32 %v2860, %v2888
      %v2890 = vpop.f32.mrf.mxu0
      %v2891 = vadd.f32 %v2862, %v2890
      %2892 = vmatmul.bf16.gmra.mxu0 %v2522
      %v2893 = vpop.f32.mrf.mxu0
      %v2894 = vadd.f32 %v2865, %v2893
      %v2895 = vpop.f32.mrf.mxu0
      %v2896 = vadd.f32 %v2867, %v2895
      %2897 = vmatmul.bf16.gmra.mxu0 %v2528
      %v2898 = vpop.f32.mrf.mxu0
      %v2899 = vadd.f32 %v2870, %v2898
      %v2900 = vpop.f32.mrf.mxu0
      %v2901 = vadd.f32 %v2872, %v2900
      %2902 = vdwg.mxu0
      %2903 = vmatpush.bf16.msra.mxu0 %v2772
      %2904 = vmatpush.bf16.msra.mxu0 %v2771
      %2905 = vmatpush.bf16.msra.mxu0 %v2770
      %2906 = vmatpush.bf16.msra.mxu0 %v2769
      %2907 = vmatpush.bf16.msra.mxu0 %v2768
      %2908 = vmatpush.bf16.msra.mxu0 %v2767
      %2909 = vmatpush.bf16.msra.mxu0 %v2766
      %2910 = vmatpush.bf16.msra.mxu0 %v2765
      %2911 = vmatmul.bf16.gmra.mxu0 %v2511
      %v2912 = vpop.f32.mrf.mxu0
      %v2913 = vadd.f32 %v2884, %v2912
      %v2914 = vpop.f32.mrf.mxu0
      %v2915 = vadd.f32 %v2886, %v2914
      %2916 = vmatmul.bf16.gmra.mxu0 %v2517
      %v2917 = vpop.f32.mrf.mxu0
      %v2918 = vadd.f32 %v2889, %v2917
      %v2919 = vpop.f32.mrf.mxu0
      %v2920 = vadd.f32 %v2891, %v2919
      %2921 = vmatmul.bf16.gmra.mxu0 %v2523
      %v2922 = vpop.f32.mrf.mxu0
      %v2923 = vadd.f32 %v2894, %v2922
      %v2924 = vpop.f32.mrf.mxu0
      %v2925 = vadd.f32 %v2896, %v2924
      %2926 = vmatmul.bf16.gmra.mxu0 %v2529
      %v2927 = vpop.f32.mrf.mxu0
      %v2928 = vadd.f32 %v2899, %v2927
      %v2929 = vpop.f32.mrf.mxu0
      %v2930 = vadd.f32 %v2901, %v2929
      %2931 = vdwg.mxu0
      %2932 = vmatpush.bf16.msra.mxu0 %v2780
      %2933 = vmatpush.bf16.msra.mxu0 %v2779
      %2934 = vmatpush.bf16.msra.mxu0 %v2778
      %2935 = vmatpush.bf16.msra.mxu0 %v2777
      %2936 = vmatpush.bf16.msra.mxu0 %v2776
      %2937 = vmatpush.bf16.msra.mxu0 %v2775
      %2938 = vmatpush.bf16.msra.mxu0 %v2774
      %2939 = vmatpush.bf16.msra.mxu0 %v2773
      %2940 = vmatmul.bf16.gmra.mxu0 %v2512
      %v2941 = vpop.f32.mrf.mxu0
      %v2942 = vadd.f32 %v2913, %v2941
      %v2943 = vpop.f32.mrf.mxu0
      %v2944 = vadd.f32 %v2915, %v2943
      %2945 = vmatmul.bf16.gmra.mxu0 %v2518
      %v2946 = vpop.f32.mrf.mxu0
      %v2947 = vadd.f32 %v2918, %v2946
      %v2948 = vpop.f32.mrf.mxu0
      %v2949 = vadd.f32 %v2920, %v2948
      %2950 = vmatmul.bf16.gmra.mxu0 %v2524
      %v2951 = vpop.f32.mrf.mxu0
      %v2952 = vadd.f32 %v2923, %v2951
      %v2953 = vpop.f32.mrf.mxu0
      %v2954 = vadd.f32 %v2925, %v2953
      %2955 = vmatmul.bf16.gmra.mxu0 %v2530
      %v2956 = vpop.f32.mrf.mxu0
      %v2957 = vadd.f32 %v2928, %v2956
      %v2958 = vpop.f32.mrf.mxu0
      %v2959 = vadd.f32 %v2930, %v2958
      %2960 = vdwg.mxu0
      %2961 = vmatpush.bf16.msra.mxu0 %v2788
      %2962 = vmatpush.bf16.msra.mxu0 %v2787
      %2963 = vmatpush.bf16.msra.mxu0 %v2786
      %2964 = vmatpush.bf16.msra.mxu0 %v2785
      %2965 = vmatpush.bf16.msra.mxu0 %v2784
      %2966 = vmatpush.bf16.msra.mxu0 %v2783
      %2967 = vmatpush.bf16.msra.mxu0 %v2782
      %2968 = vmatpush.bf16.msra.mxu0 %v2781
      %2969 = vmatmul.bf16.gmra.mxu0 %v2513
      %v2970 = vpop.f32.mrf.mxu0
      %v2971 = vadd.f32 %v2942, %v2970
      %v2972 = vpop.f32.mrf.mxu0
      %v2973 = vadd.f32 %v2944, %v2972
      %2974 = vmatmul.bf16.gmra.mxu0 %v2519
      %v2975 = vpop.f32.mrf.mxu0
      %v2976 = vadd.f32 %v2947, %v2975
      %v2977 = vpop.f32.mrf.mxu0
      %v2978 = vadd.f32 %v2949, %v2977
      %2979 = vmatmul.bf16.gmra.mxu0 %v2525
      %v2980 = vpop.f32.mrf.mxu0
      %v2981 = vadd.f32 %v2952, %v2980
      %v2982 = vpop.f32.mrf.mxu0
      %v2983 = vadd.f32 %v2954, %v2982
      %2984 = vmatmul.bf16.gmra.mxu0 %v2531
      %v2985 = vpop.f32.mrf.mxu0
      %v2986 = vadd.f32 %v2957, %v2985
      %v2987 = vpop.f32.mrf.mxu0
      %v2988 = vadd.f32 %v2959, %v2987
      %2989 = vdwg.mxu0
      %2990 = vmatpush.bf16.msra.mxu0 %v2796
      %2991 = vmatpush.bf16.msra.mxu0 %v2795
      %2992 = vmatpush.bf16.msra.mxu0 %v2794
      %2993 = vmatpush.bf16.msra.mxu0 %v2793
      %2994 = vmatpush.bf16.msra.mxu0 %v2792
      %2995 = vmatpush.bf16.msra.mxu0 %v2791
      %2996 = vmatpush.bf16.msra.mxu0 %v2790
      %2997 = vmatpush.bf16.msra.mxu0 %v2789
      %2998 = vmatmul.bf16.gmra.mxu0 %v2514
      %v2999 = vpop.f32.mrf.mxu0
      %v3000 = vadd.f32 %v2971, %v2999
      %v3001 = vpop.f32.mrf.mxu0
      %v3002 = vadd.f32 %v2973, %v3001
      %3003 = vmatmul.bf16.gmra.mxu0 %v2520
      %v3004 = vpop.f32.mrf.mxu0
      %v3005 = vadd.f32 %v2976, %v3004
      %v3006 = vpop.f32.mrf.mxu0
      %v3007 = vadd.f32 %v2978, %v3006
      %3008 = vmatmul.bf16.gmra.mxu0 %v2526
      %v3009 = vpop.f32.mrf.mxu0
      %v3010 = vadd.f32 %v2981, %v3009
      %v3011 = vpop.f32.mrf.mxu0
      %v3012 = vadd.f32 %v2983, %v3011
      %3013 = vmatmul.bf16.gmra.mxu0 %v2532
      %v3014 = vpop.f32.mrf.mxu0
      %v3015 = vadd.f32 %v2986, %v3014
      %v3016 = vpop.f32.mrf.mxu0
      %v3017 = vadd.f32 %v2988, %v3016
      %3018 = vdwg.mxu0
      %v3019 = vld [vmem:[#allocation2] sm:$0xff]
      %v3020 = vld [vmem:[#allocation2 + $0x8] sm:$0xff]
      %v3021 = vld [vmem:[#allocation2 + $0x10] sm:$0xff]
      %v3022 = vld [vmem:[#allocation2 + $0x18] sm:$0xff]
      %v3023 = vld [vmem:[#allocation2 + $0x20] sm:$0xff]
      %v3024 = vld [vmem:[#allocation2 + $0x28] sm:$0xff]
      %v3025 = vld [vmem:[#allocation2 + $0x30] sm:$0xff]
      %v3026 = vld [vmem:[#allocation2 + $0x38] sm:$0xff]
      %v3027 = vadd.f32 %v3019, %v3000
      %v3028 = vadd.f32 %v3020, %v3002
      %v3029 = vadd.f32 %v3021, %v3005
      %v3030 = vadd.f32 %v3022, %v3007
      %v3031 = vadd.f32 %v3023, %v3010
      %v3032 = vadd.f32 %v3024, %v3012
      %v3033 = vadd.f32 %v3025, %v3015
      %v3034 = vadd.f32 %v3026, %v3017
      %3035 = vst [vmem:[#allocation2] sm:$0xff] %v3027
      %3036 = vst [vmem:[#allocation2 + $0x8] sm:$0xff] %v3028
      %3037 = vst [vmem:[#allocation2 + $0x10] sm:$0xff] %v3029
      %3038 = vst [vmem:[#allocation2 + $0x18] sm:$0xff] %v3030
      %3039 = vst [vmem:[#allocation2 + $0x20] sm:$0xff] %v3031
      %3040 = vst [vmem:[#allocation2 + $0x28] sm:$0xff] %v3032
      %3041 = vst [vmem:[#allocation2 + $0x30] sm:$0xff] %v3033
      %3042 = vst [vmem:[#allocation2 + $0x38] sm:$0xff] %v3034
      %p3043 = scmp.eq.s32.totalorder %s22, 2
      // Predicated region
      $region41: #{motion_encoder_3d.4} parent=35 // pred_check
        %p3044 = pneg %p3043
      $region42: #{motion_encoder_3d.4} parent=35 // pred_check_branch
        %3046 = sbr.rel (%p3044) target = $region44
      $region43: #{motion_encoder_3d.4} parent=35 // pred_region
        %v3047 = vld [vmem:[#allocation2] sm:$0xff]
        %v3048 = vld [vmem:[#allocation2 + $0x8] sm:$0xff]
        %v3049 = vld [vmem:[#allocation2 + $0x10] sm:$0xff]
        %v3050 = vld [vmem:[#allocation2 + $0x18] sm:$0xff]
        %v3051 = vld [vmem:[#allocation2 + $0x20] sm:$0xff]
        %v3052 = vld [vmem:[#allocation2 + $0x28] sm:$0xff]
        %v3053 = vld [vmem:[#allocation2 + $0x30] sm:$0xff]
        %v3054 = vld [vmem:[#allocation2 + $0x38] sm:$0xff]
        %v3055 = vld [vmem:[%s3] sm:$0x1]
        %v3057 = vperm.slane %v3055, 0
        %v3059 = vadd.f32 %v3047, %v3057
        %v3060 = vadd.f32 %v3048, %v3057
        %v3061 = vadd.f32 %v3049, %v3057
        %v3062 = vadd.f32 %v3050, %v3057
        %v3063 = vadd.f32 %v3051, %v3057
        %v3064 = vadd.f32 %v3052, %v3057
        %v3065 = vadd.f32 %v3053, %v3057
        %v3066 = vadd.f32 %v3054, %v3057
        %v3067 = vmax.f32 %v3059, 0.0
        %v3068 = vmax.f32 %v3060, 0.0
        %v3069 = vmax.f32 %v3061, 0.0
        %v3070 = vmax.f32 %v3062, 0.0
        %v3071 = vmax.f32 %v3063, 0.0
        %v3072 = vmax.f32 %v3064, 0.0
        %v3073 = vmax.f32 %v3065, 0.0
        %v3074 = vmax.f32 %v3066, 0.0
        %v3075 = vpack.c.bf16 %v3067, %v3067
        %v3076 = vpack.c.bf16 %v3068, %v3068
        %v3077 = vpack.c.bf16 %v3069, %v3069
        %v3078 = vpack.c.bf16 %v3070, %v3070
        %v3079 = vpack.c.bf16 %v3071, %v3071
        %v3080 = vpack.c.bf16 %v3072, %v3072
        %v3081 = vpack.c.bf16 %v3073, %v3073
        %v3082 = vpack.c.bf16 %v3074, %v3074
        %3083 = vst [vmem:[%s247] sm:$0xf] %v3075
        %3084 = vst [vmem:[%s247 + $0x4] sm:$0xf] %v3076
        %3085 = vst [vmem:[%s247 + $0x8] sm:$0xf] %v3077
        %3086 = vst [vmem:[%s247 + $0xc] sm:$0xf] %v3078
        %3087 = vst [vmem:[%s247 + $0x10] sm:$0xf] %v3079
        %3088 = vst [vmem:[%s247 + $0x14] sm:$0xf] %v3080
        %3089 = vst [vmem:[%s247 + $0x18] sm:$0xf] %v3081
        %3090 = vst [vmem:[%s247 + $0x1c] sm:$0xf] %v3082
      $region44: #{motion_encoder_3d.4} parent=35 // pred_fallthru
        _
      %p3091 = scmp.lt.s32.totalorder %s20, 1
      %s3092 = scalar_select %p3091, %s20, 1
      %p3093 = scmp.lt.s32.totalorder %s21, 3
      %s3094 = scalar_select %p3093, %s21, 3
      %s3095 = smul.addr %s3094, 8
      %s3096 = smul.addr %s3092, 32
      %s3097 = sadd.s32 %s3095, %s3096
      %s3098 = smul.addr %s3097, 4
      %s3099 = scalar_lea.vmem %s4, %s3098
      // Predicated region
      $region45: #{motion_encoder_3d.4} parent=35 // pred_check
        %p3100 = pneg %p147
      $region46: #{motion_encoder_3d.4} parent=35 // pred_check_branch
        %3102 = sbr.rel (%p3100) target = $region48
      $region47: #{motion_encoder_3d.4} parent=35 // pred_region
        _
      $region48: #{motion_encoder_3d.4} parent=35 // pred_fallthru
        _
    $region36: #{motion_encoder_3d.4} parent=5 // pred_fallthru
      _
    %p3103 = scmp.le.s32.totalorder 2, %s10
    // Predicated region
    $region49: #{motion_encoder_3d.4} parent=5 // pred_check
      %p3104 = pneg %p3103
    $region50: #{motion_encoder_3d.4} parent=5 // pred_check_branch
      %3106 = sbr.rel (%p3104) target = $region52
    $region51: #{motion_encoder_3d.4} parent=5 // pred_region
      %s3107 = ssub.s32 %s10, 2
      // Predicated region
      $region53: #{motion_encoder_3d.4} parent=51 // pred_check
        %p3108 = pneg %p153
      $region54: #{motion_encoder_3d.4} parent=51 // pred_check_branch
        %3110 = sbr.rel (%p3108) target = $region56
      $region55: #{motion_encoder_3d.4} parent=51 // pred_region
        %p3111 = scmp.lt.s32.totalorder %s23, 1
        %s3112 = scalar_select %p3111, %s23, 1
        %p3113 = scmp.lt.s32.totalorder %s24, 3
        %s3114 = scalar_select %p3113, %s24, 3
        %s3115 = smul.addr %s3114, 8
        %s3116 = smul.addr %s3112, 32
        %s3117 = sadd.s32 %s3115, %s3116
        %s3118 = smul.addr %s3117, 4
        %s3119 = scalar_lea.vmem %s4, %s3118
      $region56: #{motion_encoder_3d.4} parent=51 // pred_fallthru
        _
    $region52: #{motion_encoder_3d.4} parent=5 // pred_fallthru
      _
  $region6: #{motion_encoder_3d.4} parent=0 // loop_footer
    %s14 = sadd.s32 1, %s10
  $region7: #{motion_encoder_3d.4} parent=0 // loop_footer_branch
    %9 = sbr.rel target = $region3
  $region8: #{motion_encoder_3d.4} parent=0 // loop_exit
    _

// kernel: motion_encoder_3d.7
$region0: #{motion_encoder_3d.7}
  #allocation0 [shape = 'u32[]', space=smem, size = 0x4, offset = 0x4, fixed_abs, tag = 'smem constant byte address 0x4 - core index']
  #allocation1 [shape = 'u32[72,128]{1,0:T(1,128)}', space=vmem, size = 0x9000, scoped, tag = 'internal scratch']
  %s0 = inlined_call_operand.vmem [shape: bf16[2,6,80,384], index: 0, kind: input, shape index: {}]
  %s1 = inlined_call_operand.vmem [shape: bf16[2,6,80,192], index: 1, kind: input, shape index: {}]
  %s2 = inlined_call_operand.vmem [shape: bf16[9,384,64], index: 2, kind: input, shape index: {}]
  %s3 = inlined_call_operand.vmem [shape: bf16[9,192,64], index: 3, kind: input, shape index: {}]
  %s4 = inlined_call_operand.vmem [shape: f32[1,64], index: 4, kind: input, shape index: {}]
  %s5 = inlined_call_operand.vmem [shape: f32[2,4,64,3], index: 5, kind: input, shape index: {}]
  %s6 = inlined_call_operand.hbm [shape: f32[2,4,64,64], index: 6, kind: output, shape index: {}]
  %s7 = sld [smem:[#allocation0]]
  $region65: #{motion_encoder_3d.7} parent=0
    _
  %s9 = ssub.s32 1, %s7
  %s10 = scalar_select 0, %s9, %s7
  $region1: #{motion_encoder_3d.7} parent=0
    #allocation2 [shape = 'u8[65536]{0}', space=vmem, size = 0x10000, scoped, tag = 'output window, operand 0']
    #allocation3 [shape = 's32[2]{0}', space=sflag, size = 0x8, scoped, tag = 'scoped memory for motion_encoder_3d.7']
    %11 = vsyncpa [#allocation3], 0
    %s12 = scalar_lea.sflag [#allocation3], 1
    %13 = vsyncpa %s12, 0
    loop: start=0, step=1, limit=26
    $region2: #{motion_encoder_3d.7} parent=1 // loop_pre_header
      _
    $region3: #{motion_encoder_3d.7} parent=1 // loop_header
      %s15 = sphi 0, %s19
      %p16 = scmp.ge.s32.totalorder %s15, 26
      %s22 = sphi 0, %s41
      %s23 = sphi 0, %s37
      %s24 = sphi 0, %s33
      %s25 = sphi 0, %s22
      %s26 = sphi 0, %s23
      %s27 = sphi 0, %s24
      %s28 = sphi 0, %s25
      %s29 = sphi 0, %s26
      %s30 = sphi 0, %s27
      %s48 = sphi 0, %s50
      %s51 = sphi 0, %s48
      %s52 = sphi 0, %s51
      %s68 = sphi 0, %s52
      %s78 = sphi 0, %s80
      %s81 = sphi 0, %s78
      %s82 = sphi 0, %s81
      %s98 = sphi 0, %s82
      %s102 = sphi 0, %s102
      %s104 = sphi 0, %s102
      %s105 = sphi 0, %s104
      %s119 = sphi 0, %s105
      %s123 = sphi 0, %s123
      %s125 = sphi 0, %s123
      %s126 = sphi 0, %s125
      %s140 = sphi 0, %s126
      %s144 = sphi 0, %s144
      %s146 = sphi 0, %s144
      %s147 = sphi 0, %s146
      %s161 = sphi 0, %s147
      %s169 = sphi 0, %s171
      %s172 = sphi 0, %s169
      %s173 = sphi 0, %s172
      %s189 = sphi 0, %s173
      %s197 = sphi 0, %s199
      %s200 = sphi 0, %s197
      %s201 = sphi 0, %s200
      %s217 = sphi 0, %s201
    $region4: #{motion_encoder_3d.7} parent=1 // loop_header_branch
      %18 = sbr.rel (%p16) target = $region8
    $region5: #{motion_encoder_3d.7} parent=1 // loop_body
      %s20 = ssub.s32 %s15, 1
      %s21 = ssub.s32 %s15, 2
      %s31 = sadd.s32 1, %s24
      %p32 = scmp.ge.s32.totalorder %s31, 3
      %s33 = scalar_select %p32, 0, %s31
      %s34 = sadd.s32 1, %s23
      %s35 = scalar_select %p32, %s34, %s23
      %p36 = scmp.ge.s32.totalorder %s35, 4
      %s37 = scalar_select %p36, 0, %s35
      %s38 = sadd.s32 1, %s22
      %s39 = scalar_select %p36, %s38, %s22
      %p40 = scmp.ge.s32.totalorder %s39, 2
      %s41 = scalar_select %p40, 0, %s39
      %s42 = sadd.s32 %s23, %s24
      %s43 = sadd.s32 %s37, %s33
      %s44 = ssub.s32 %s22, %s41
      %s45 = ssub.s32 %s42, %s43
      %s46 = sor.u32 %s44, %s45
      %p47 = scmp.eq.s32.totalorder %s46, 0
      %s49 = sadd.s32 %s48, 1
      %s50 = scalar_select %p47, %s48, %s49
      %p53 = pneg %p47
      %p54 = scmp.eq.s32.totalorder %s15, 23
      %p55 = por %p53, %p54
      %p56 = scmp.ne.s32.totalorder %s48, %s51
      %p57 = scmp.eq.s32.totalorder %s15, 0
      %p58 = por %p56, %p57
      %p59 = scmp.ne.s32.totalorder %s48, %s51
      %p60 = scmp.eq.s32.totalorder %s20, 23
      %p61 = por %p59, %p60
      %p62 = scmp.ne.s32.totalorder %s51, %s52
      %p63 = scmp.eq.s32.totalorder %s20, 0
      %p64 = por %p62, %p63
      %p65 = scmp.ne.s32.totalorder %s51, %s52
      %p66 = scmp.eq.s32.totalorder %s21, 23
      %p67 = por %p65, %p66
      %p69 = scmp.ne.s32.totalorder %s52, %s68
      %p70 = scmp.eq.s32.totalorder %s21, 0
      %p71 = por %p69, %p70
      %s72 = sadd.s32 %s23, %s24
      %s73 = sadd.s32 %s37, %s33
      %s74 = ssub.s32 %s22, %s41
      %s75 = ssub.s32 %s72, %s73
      %s76 = sor.u32 %s74, %s75
      %p77 = scmp.eq.s32.totalorder %s76, 0
      %s79 = sadd.s32 %s78, 1
      %s80 = scalar_select %p77, %s78, %s79
      %p83 = pneg %p77
      %p84 = scmp.eq.s32.totalorder %s15, 23
      %p85 = por %p83, %p84
      %p86 = scmp.ne.s32.totalorder %s78, %s81
      %p87 = scmp.eq.s32.totalorder %s15, 0
      %p88 = por %p86, %p87
      %p89 = scmp.ne.s32.totalorder %s78, %s81
      %p90 = scmp.eq.s32.totalorder %s20, 23
      %p91 = por %p89, %p90
      %p92 = scmp.ne.s32.totalorder %s81, %s82
      %p93 = scmp.eq.s32.totalorder %s20, 0
      %p94 = por %p92, %p93
      %p95 = scmp.ne.s32.totalorder %s81, %s82
      %p96 = scmp.eq.s32.totalorder %s21, 23
      %p97 = por %p95, %p96
      %p99 = scmp.ne.s32.totalorder %s82, %s98
      %p100 = scmp.eq.s32.totalorder %s21, 0
      %p101 = por %p99, %p100
      %s103 = sadd.s32 %s102, 1
      %p106 = scmp.eq.s32.totalorder %s15, 23
      %p107 = scmp.ne.s32.totalorder %s102, %s104
      %p108 = scmp.eq.s32.totalorder %s15, 0
      %p109 = por %p107, %p108
      %p110 = scmp.ne.s32.totalorder %s102, %s104
      %p111 = scmp.eq.s32.totalorder %s20, 23
      %p112 = por %p110, %p111
      %p113 = scmp.ne.s32.totalorder %s104, %s105
      %p114 = scmp.eq.s32.totalorder %s20, 0
      %p115 = por %p113, %p114
      %p116 = scmp.ne.s32.totalorder %s104, %s105
      %p117 = scmp.eq.s32.totalorder %s21, 23
      %p118 = por %p116, %p117
      %p120 = scmp.ne.s32.totalorder %s105, %s119
      %p121 = scmp.eq.s32.totalorder %s21, 0
      %p122 = por %p120, %p121
      %s124 = sadd.s32 %s123, 1
      %p127 = scmp.eq.s32.totalorder %s15, 23
      %p128 = scmp.ne.s32.totalorder %s123, %s125
      %p129 = scmp.eq.s32.totalorder %s15, 0
      %p130 = por %p128, %p129
      %p131 = scmp.ne.s32.totalorder %s123, %s125
      %p132 = scmp.eq.s32.totalorder %s20, 23
      %p133 = por %p131, %p132
      %p134 = scmp.ne.s32.totalorder %s125, %s126
      %p135 = scmp.eq.s32.totalorder %s20, 0
      %p136 = por %p134, %p135
      %p137 = scmp.ne.s32.totalorder %s125, %s126
      %p138 = scmp.eq.s32.totalorder %s21, 23
      %p139 = por %p137, %p138
      %p141 = scmp.ne.s32.totalorder %s126, %s140
      %p142 = scmp.eq.s32.totalorder %s21, 0
      %p143 = por %p141, %p142
      %s145 = sadd.s32 %s144, 1
      %p148 = scmp.eq.s32.totalorder %s15, 23
      %p149 = scmp.ne.s32.totalorder %s144, %s146
      %p150 = scmp.eq.s32.totalorder %s15, 0
      %p151 = por %p149, %p150
      %p152 = scmp.ne.s32.totalorder %s144, %s146
      %p153 = scmp.eq.s32.totalorder %s20, 23
      %p154 = por %p152, %p153
      %p155 = scmp.ne.s32.totalorder %s146, %s147
      %p156 = scmp.eq.s32.totalorder %s20, 0
      %p157 = por %p155, %p156
      %p158 = scmp.ne.s32.totalorder %s146, %s147
      %p159 = scmp.eq.s32.totalorder %s21, 23
      %p160 = por %p158, %p159
      %p162 = scmp.ne.s32.totalorder %s147, %s161
      %p163 = scmp.eq.s32.totalorder %s21, 0
      %p164 = por %p162, %p163
      %s165 = ssub.s32 %s22, %s41
      %s166 = ssub.s32 %s23, %s37
      %s167 = sor.u32 %s165, %s166
      %p168 = scmp.eq.s32.totalorder %s167, 0
      %s170 = sadd.s32 %s169, 1
      %s171 = scalar_select %p168, %s169, %s170
      %p174 = pneg %p168
      %p175 = scmp.eq.s32.totalorder %s15, 23
      %p176 = por %p174, %p175
      %p177 = scmp.ne.s32.totalorder %s169, %s172
      %p178 = scmp.eq.s32.totalorder %s15, 0
      %p179 = por %p177, %p178
      %p180 = scmp.ne.s32.totalorder %s169, %s172
      %p181 = scmp.eq.s32.totalorder %s20, 23
      %p182 = por %p180, %p181
      %p183 = scmp.ne.s32.totalorder %s172, %s173
      %p184 = scmp.eq.s32.totalorder %s20, 0
      %p185 = por %p183, %p184
      %p186 = scmp.ne.s32.totalorder %s172, %s173
      %p187 = scmp.eq.s32.totalorder %s21, 23
      %p188 = por %p186, %p187
      %p190 = scmp.ne.s32.totalorder %s173, %s189
      %p191 = scmp.eq.s32.totalorder %s21, 0
      %p192 = por %p190, %p191
      %s193 = ssub.s32 %s22, %s41
      %s194 = ssub.s32 %s23, %s37
      %s195 = sor.u32 %s193, %s194
      %p196 = scmp.eq.s32.totalorder %s195, 0
      %s198 = sadd.s32 %s197, 1
      %s199 = scalar_select %p196, %s197, %s198
      %p202 = pneg %p196
      %p203 = scmp.eq.s32.totalorder %s15, 23
      %p204 = por %p202, %p203
      %p205 = scmp.ne.s32.totalorder %s197, %s200
      %p206 = scmp.eq.s32.totalorder %s15, 0
      %p207 = por %p205, %p206
      %p208 = scmp.ne.s32.totalorder %s197, %s200
      %p209 = scmp.eq.s32.totalorder %s20, 23
      %p210 = por %p208, %p209
      %p211 = scmp.ne.s32.totalorder %s200, %s201
      %p212 = scmp.eq.s32.totalorder %s20, 0
      %p213 = por %p211, %p212
      %p214 = scmp.ne.s32.totalorder %s200, %s201
      %p215 = scmp.eq.s32.totalorder %s21, 23
      %p216 = por %p214, %p215
      %p218 = scmp.ne.s32.totalorder %s201, %s217
      %p219 = scmp.eq.s32.totalorder %s21, 0
      %p220 = por %p218, %p219
      %p221 = scmp.le.s32.totalorder 1, %s15
      %p222 = scmp.lt.s32.totalorder %s15, 25
      %p223 = pnand %p221, %p222
      %p224 = pneg %p223
      // Predicated region
      $region9: #{motion_encoder_3d.7} parent=5 // pred_check
        _
      $region10: #{motion_encoder_3d.7} parent=5 // pred_check_branch
        %226 = sbr.rel (%p223) target = $region12
      $region11: #{motion_encoder_3d.7} parent=5 // pred_region
        %s227 = ssub.s32 %s15, 1
        // Predicated region
        $region13: #{motion_encoder_3d.7} parent=11 // pred_check
          %p228 = pneg %p115
        $region14: #{motion_encoder_3d.7} parent=11 // pred_check_branch
          %230 = sbr.rel (%p228) target = $region16
        $region15: #{motion_encoder_3d.7} parent=11 // pred_region
          _
        $region16: #{motion_encoder_3d.7} parent=11 // pred_fallthru
          _
        // Predicated region
        $region17: #{motion_encoder_3d.7} parent=11 // pred_check
          %p231 = pneg %p136
        $region18: #{motion_encoder_3d.7} parent=11 // pred_check_branch
          %233 = sbr.rel (%p231) target = $region20
        $region19: #{motion_encoder_3d.7} parent=11 // pred_region
          _
        $region20: #{motion_encoder_3d.7} parent=11 // pred_fallthru
          _
        // Predicated region
        $region21: #{motion_encoder_3d.7} parent=11 // pred_check
          %p234 = pneg %p157
        $region22: #{motion_encoder_3d.7} parent=11 // pred_check_branch
          %236 = sbr.rel (%p234) target = $region24
        $region23: #{motion_encoder_3d.7} parent=11 // pred_region
          _
        $region24: #{motion_encoder_3d.7} parent=11 // pred_fallthru
          _
      $region12: #{motion_encoder_3d.7} parent=5 // pred_fallthru
        _
      %p237 = scmp.lt.s32.totalorder %s15, 24
      // Predicated region
      $region25: #{motion_encoder_3d.7} parent=5 // pred_check
        %p238 = pneg %p237
      $region26: #{motion_encoder_3d.7} parent=5 // pred_check_branch
        %240 = sbr.rel (%p238) target = $region28
      $region27: #{motion_encoder_3d.7} parent=5 // pred_region
        // Predicated region
        $region29: #{motion_encoder_3d.7} parent=27 // pred_check
          %p241 = pneg %p58
        $region30: #{motion_encoder_3d.7} parent=27 // pred_check_branch
          %243 = sbr.rel (%p241) target = $region32
        $region31: #{motion_encoder_3d.7} parent=27 // pred_region
          %s244 = sadd.s32 %s23, %s24
          %p245 = scmp.lt.s32.totalorder %s22, 1
          %s246 = scalar_select %p245, %s22, 1
          %p247 = scmp.lt.s32.totalorder %s244, 5
          %s248 = scalar_select %p247, %s244, 5
          %s249 = smul.addr %s248, 30
          %s250 = smul.addr %s246, 180
          %s251 = sadd.s32 %s249, %s250
          %s252 = smul.addr %s251, 4
          %s253 = scalar_lea.vmem %s0, %s252
          %s254 = sadd.s32 %s23, %s24
        $region32: #{motion_encoder_3d.7} parent=27 // pred_fallthru
          _
        // Predicated region
        $region33: #{motion_encoder_3d.7} parent=27 // pred_check
          %p255 = pneg %p88
        $region34: #{motion_encoder_3d.7} parent=27 // pred_check_branch
          %257 = sbr.rel (%p255) target = $region36
        $region35: #{motion_encoder_3d.7} parent=27 // pred_region
          %s258 = sadd.s32 %s23, %s24
          %p259 = scmp.lt.s32.totalorder %s22, 1
          %s260 = scalar_select %p259, %s22, 1
          %p261 = scmp.lt.s32.totalorder %s258, 5
          %s262 = scalar_select %p261, %s258, 5
          %s263 = smul.addr %s262, 20
          %s264 = smul.addr %s260, 120
          %s265 = sadd.s32 %s263, %s264
          %s266 = smul.addr %s265, 4
          %s267 = scalar_lea.vmem %s1, %s266
          %s268 = sadd.s32 %s23, %s24
        $region36: #{motion_encoder_3d.7} parent=27 // pred_fallthru
          _
        // Predicated region
        $region37: #{motion_encoder_3d.7} parent=27 // pred_check
          %p269 = pneg %p179
        $region38: #{motion_encoder_3d.7} parent=27 // pred_check_branch
          %271 = sbr.rel (%p269) target = $region40
        $region39: #{motion_encoder_3d.7} parent=27 // pred_region
          %p272 = scmp.lt.s32.totalorder %s22, 1
          %s273 = scalar_select %p272, %s22, 1
          %p274 = scmp.lt.s32.totalorder %s23, 3
          %s275 = scalar_select %p274, %s23, 3
          %s276 = smul.addr %s275, 8
          %s277 = smul.addr %s273, 32
          %s278 = sadd.s32 %s276, %s277
          %s279 = smul.addr %s278, 8
          %s280 = scalar_lea.vmem %s5, %s279
        $region40: #{motion_encoder_3d.7} parent=27 // pred_fallthru
          _
      $region28: #{motion_encoder_3d.7} parent=5 // pred_fallthru
        _
      %p281 = scmp.le.s32.totalorder 1, %s15
      %p282 = scmp.lt.s32.totalorder %s15, 25
      %p283 = pnand %p281, %p282
      %p284 = pneg %p283
      // Predicated region
      $region41: #{motion_encoder_3d.7} parent=5 // pred_check
        _
      $region42: #{motion_encoder_3d.7} parent=5 // pred_check_branch
        %286 = sbr.rel (%p283) target = $region44
      $region43: #{motion_encoder_3d.7} parent=5 // pred_region
        %s287 = ssub.s32 %s15, 1
        %s288 = sadd.s32 %s26, %s27
        %p289 = scmp.lt.s32.totalorder %s25, 1
        %s290 = scalar_select %p289, %s25, 1
        %p291 = scmp.lt.s32.totalorder %s288, 5
        %s292 = scalar_select %p291, %s288, 5
        %s293 = smul.addr %s292, 30
        %s294 = smul.addr %s290, 180
        %s295 = sadd.s32 %s293, %s294
        %s296 = smul.addr %s295, 4
        %s297 = scalar_lea.vmem %s0, %s296
        %p298 = pneg %p64
        %p299 = pneg %p61
        %s300 = sadd.s32 %s26, %s27
        %p301 = scmp.lt.s32.totalorder %s25, 1
        %s302 = scalar_select %p301, %s25, 1
        %p303 = scmp.lt.s32.totalorder %s300, 5
        %s304 = scalar_select %p303, %s300, 5
        %s305 = smul.addr %s304, 20
        %s306 = smul.addr %s302, 120
        %s307 = sadd.s32 %s305, %s306
        %s308 = smul.addr %s307, 4
        %s309 = scalar_lea.vmem %s1, %s308
        %p310 = pneg %p94
        %p311 = pneg %p91
        %p312 = pneg %p115
        %p313 = pneg %p112
        %p314 = pneg %p136
        %p315 = pneg %p133
        %p316 = pneg %p157
        %p317 = pneg %p154
        %p318 = scmp.lt.s32.totalorder %s25, 1
        %s319 = scalar_select %p318, %s25, 1
        %p320 = scmp.lt.s32.totalorder %s26, 3
        %s321 = scalar_select %p320, %s26, 3
        %s322 = smul.addr %s321, 8
        %s323 = smul.addr %s319, 32
        %s324 = sadd.s32 %s322, %s323
        %s325 = smul.addr %s324, 8
        %s326 = scalar_lea.vmem %s5, %s325
        %p327 = pneg %p185
        %p328 = pneg %p182
        %p329 = pneg %p213
        %p330 = pneg %p210
        %s331 = sand.u32 %s200, 1
        %s332 = scalar_lea.sflag [#allocation3], %s331
        %s333 = sand.u32 %s200, 1
        %s334 = smul.addr %s333, 64
        %s335 = scalar_lea.vmem [#allocation2], %s334
        %s336 = sadd.s32 %s26, %s27
        %p337 = scmp.lt.s32.totalorder %s25, 1
        %s338 = scalar_select %p337, %s25, 1
        %p339 = scmp.lt.s32.totalorder %s336, 5
        %s340 = scalar_select %p339, %s336, 5
        %s341 = smul.addr %s340, 30
        %s342 = smul.addr %s338, 180
        %s343 = sadd.s32 %s341, %s342
        %s344 = smul.addr %s343, 4
        %s345 = scalar_lea.vmem %s0, %s344
        %s346 = sadd.s32 %s26, %s27
        %s347 = sadd.s32 %s26, %s27
        %p348 = scmp.lt.s32.totalorder %s25, 1
        %s349 = scalar_select %p348, %s25, 1
        %p350 = scmp.lt.s32.totalorder %s347, 5
        %s351 = scalar_select %p350, %s347, 5
        %s352 = smul.addr %s351, 20
        %s353 = smul.addr %s349, 120
        %s354 = sadd.s32 %s352, %s353
        %s355 = smul.addr %s354, 4
        %s356 = scalar_lea.vmem %s1, %s355
        %s357 = sadd.s32 %s26, %s27
        %p358 = scmp.lt.s32.totalorder %s25, 1
        %s359 = scalar_select %p358, %s25, 1
        %p360 = scmp.lt.s32.totalorder %s26, 3
        %s361 = scalar_select %p360, %s26, 3
        %s362 = smul.addr %s361, 8
        %s363 = smul.addr %s359, 32
        %s364 = sadd.s32 %s362, %s363
        %s365 = smul.addr %s364, 8
        %s366 = scalar_lea.vmem %s5, %s365
        %p368 = scmp.eq.s32.totalorder %s27, 0
        // Predicated region
        $region45: #{motion_encoder_3d.7} parent=43 // pred_check
          %p369 = pneg %p368
        $region46: #{motion_encoder_3d.7} parent=43 // pred_check_branch
          %371 = sbr.rel (%p369) target = $region48
        $region47: #{motion_encoder_3d.7} parent=43 // pred_region
          %vm372 = vcmask 523264
          %373 = vst.msk [vmem:[%s335] sm:$0xff] %vm372, 0.0
          %374 = vst.msk [vmem:[%s335 + $0x8] sm:$0xff] %vm372, 0.0
          %375 = vst.msk [vmem:[%s335 + $0x10] sm:$0xff] %vm372, 0.0
          %376 = vst.msk [vmem:[%s335 + $0x18] sm:$0xff] %vm372, 0.0
          %377 = vst.msk [vmem:[%s335 + $0x20] sm:$0xff] %vm372, 0.0
          %378 = vst.msk [vmem:[%s335 + $0x28] sm:$0xff] %vm372, 0.0
          %379 = vst.msk [vmem:[%s335 + $0x30] sm:$0xff] %vm372, 0.0
          %380 = vst.msk [vmem:[%s335 + $0x38] sm:$0xff] %vm372, 0.0
        $region48: #{motion_encoder_3d.7} parent=43 // pred_fallthru
          _
        %v381 = vld [vmem:[%s345] sm:$0xff]
        %v382 = vld [vmem:[%s345 + $0x8] sm:$0xf]
        %v383 = vld [vmem:[%s345 + $0xc] sm:$0xff]
        %v384 = vld [vmem:[%s345 + $0x14] sm:$0xf]
        %v385 = vld [vmem:[%s345 + $0x18] sm:$0xff]
        %v386 = vld [vmem:[%s345 + $0x20] sm:$0xf]
        %v387 = vld [vmem:[%s345 + $0x24] sm:$0xff]
        %v388 = vld [vmem:[%s345 + $0x2c] sm:$0xf]
        %v389 = vld [vmem:[%s345 + $0x30] sm:$0xff]
        %v390 = vld [vmem:[%s345 + $0x38] sm:$0xf]
        %v391 = vld [vmem:[%s345 + $0x3c] sm:$0xff]
        %v392 = vld [vmem:[%s345 + $0x44] sm:$0xf]
        %v393 = vld [vmem:[%s345 + $0x48] sm:$0xff]
        %v394 = vld [vmem:[%s345 + $0x50] sm:$0xf]
        %v395 = vld [vmem:[%s345 + $0x54] sm:$0xff]
        %v396 = vld [vmem:[%s345 + $0x5c] sm:$0xf]
        %s397 = smul.u32 %s27, 3
        %s398 = smul.u32 %s397, 48
        %s399 = smul.addr %s398, 4
        %s400 = scalar_lea.vmem %s2, %s399
        %v401 = vld [vmem:[%s400] sm:$0xf]
        %v402 = vld [vmem:[%s400 + $0x4] sm:$0xf]
        %v403 = vld [vmem:[%s400 + $0x8] sm:$0xf]
        %v404 = vld [vmem:[%s400 + $0xc] sm:$0xf]
        %v405 = vld [vmem:[%s400 + $0x10] sm:$0xf]
        %v406 = vld [vmem:[%s400 + $0x14] sm:$0xf]
        %v407 = vld [vmem:[%s400 + $0x18] sm:$0xf]
        %v408 = vld [vmem:[%s400 + $0x1c] sm:$0xf]
        %v409 = vld [vmem:[%s400 + $0x20] sm:$0xf]
        %v410 = vld [vmem:[%s400 + $0x24] sm:$0xf]
        %v411 = vld [vmem:[%s400 + $0x28] sm:$0xf]
        %v412 = vld [vmem:[%s400 + $0x2c] sm:$0xf]
        %v413 = vld [vmem:[%s400 + $0x30] sm:$0xf]
        %v414 = vld [vmem:[%s400 + $0x34] sm:$0xf]
        %v415 = vld [vmem:[%s400 + $0x38] sm:$0xf]
        %v416 = vld [vmem:[%s400 + $0x3c] sm:$0xf]
        %v417 = vld [vmem:[%s400 + $0x40] sm:$0xf]
        %v418 = vld [vmem:[%s400 + $0x44] sm:$0xf]
        %v419 = vld [vmem:[%s400 + $0x48] sm:$0xf]
        %v420 = vld [vmem:[%s400 + $0x4c] sm:$0xf]
        %v421 = vld [vmem:[%s400 + $0x50] sm:$0xf]
        %v422 = vld [vmem:[%s400 + $0x54] sm:$0xf]
        %v423 = vld [vmem:[%s400 + $0x58] sm:$0xf]
        %v424 = vld [vmem:[%s400 + $0x5c] sm:$0xf]
        %v425 = vld [vmem:[%s400 + $0x60] sm:$0xf]
        %v426 = vld [vmem:[%s400 + $0x64] sm:$0xf]
        %v427 = vld [vmem:[%s400 + $0x68] sm:$0xf]
        %v428 = vld [vmem:[%s400 + $0x6c] sm:$0xf]
        %v429 = vld [vmem:[%s400 + $0x70] sm:$0xf]
        %v430 = vld [vmem:[%s400 + $0x74] sm:$0xf]
        %v431 = vld [vmem:[%s400 + $0x78] sm:$0xf]
        %v432 = vld [vmem:[%s400 + $0x7c] sm:$0xf]
        %v433 = vld [vmem:[%s400 + $0x80] sm:$0xf]
        %v434 = vld [vmem:[%s400 + $0x84] sm:$0xf]
        %v435 = vld [vmem:[%s400 + $0x88] sm:$0xf]
        %v436 = vld [vmem:[%s400 + $0x8c] sm:$0xf]
        %v437 = vld [vmem:[%s400 + $0x90] sm:$0xf]
        %v438 = vld [vmem:[%s400 + $0x94] sm:$0xf]
        %v439 = vld [vmem:[%s400 + $0x98] sm:$0xf]
        %v440 = vld [vmem:[%s400 + $0x9c] sm:$0xf]
        %v441 = vld [vmem:[%s400 + $0xa0] sm:$0xf]
        %v442 = vld [vmem:[%s400 + $0xa4] sm:$0xf]
        %v443 = vld [vmem:[%s400 + $0xa8] sm:$0xf]
        %v444 = vld [vmem:[%s400 + $0xac] sm:$0xf]
        %v445 = vld [vmem:[%s400 + $0xb0] sm:$0xf]
        %v446 = vld [vmem:[%s400 + $0xb4] sm:$0xf]
        %v447 = vld [vmem:[%s400 + $0xb8] sm:$0xf]
        %v448 = vld [vmem:[%s400 + $0xbc] sm:$0xf]
        %v465 = vunpack.c.l.b16 %v381
        %v466 = vunpack.c.h.b16 %v381
        %v467 = vunpack.c.l.b16 %v382
        %v468 = vunpack.c.l.b16 %v383
        %v469 = vunpack.c.h.b16 %v383
        %v470 = vunpack.c.l.b16 %v384
        %v471 = vunpack.c.l.b16 %v385
        %v472 = vunpack.c.h.b16 %v385
        %v473 = vunpack.c.l.b16 %v386
        %v474 = vunpack.c.l.b16 %v387
        %v475 = vunpack.c.h.b16 %v387
        %v476 = vunpack.c.l.b16 %v388
        %v477 = vunpack.c.l.b16 %v389
        %v478 = vunpack.c.h.b16 %v389
        %v479 = vunpack.c.l.b16 %v390
        %v480 = vunpack.c.l.b16 %v391
        %v481 = vunpack.c.h.b16 %v391
        %v482 = vunpack.c.l.b16 %v392
        %v483 = vunpack.c.l.b16 %v393
        %v484 = vunpack.c.h.b16 %v393
        %v485 = vunpack.c.l.b16 %v394
        %v486 = vunpack.c.l.b16 %v395
        %v487 = vunpack.c.h.b16 %v395
        %v488 = vunpack.c.l.b16 %v396
        %v489 = vpack.c.b16 %v468, %v465
        %v490 = vpack.c.b16 %v469, %v466
        %v491 = vpack.c.b16 %v470, %v467
        %v492 = vpack.c.b16 %v474, %v471
        %v493 = vpack.c.b16 %v475, %v472
        %v494 = vpack.c.b16 %v476, %v473
        %v495 = vpack.c.b16 %v480, %v477
        %v496 = vpack.c.b16 %v481, %v478
        %v497 = vpack.c.b16 %v482, %v479
        %v498 = vpack.c.b16 %v486, %v483
        %v499 = vpack.c.b16 %v487, %v484
        %v500 = vpack.c.b16 %v488, %v485
        %v561 = vunpack.c.l.b16 %v401
        %v562 = vunpack.c.l.b16 %v402
        %v563 = vunpack.c.l.b16 %v403
        %v564 = vunpack.c.l.b16 %v404
        %v565 = vunpack.c.l.b16 %v405
        %v566 = vunpack.c.l.b16 %v406
        %v567 = vunpack.c.l.b16 %v407
        %v568 = vunpack.c.l.b16 %v408
        %v569 = vunpack.c.l.b16 %v409
        %v570 = vunpack.c.l.b16 %v410
        %v571 = vunpack.c.l.b16 %v411
        %v572 = vunpack.c.l.b16 %v412
        %v573 = vunpack.c.l.b16 %v413
        %v574 = vunpack.c.l.b16 %v414
        %v575 = vunpack.c.l.b16 %v415
        %v576 = vunpack.c.l.b16 %v416
        %v577 = vunpack.c.l.b16 %v417
        %v578 = vunpack.c.l.b16 %v418
        %v579 = vunpack.c.l.b16 %v419
        %v580 = vunpack.c.l.b16 %v420
        %v581 = vunpack.c.l.b16 %v421
        %v582 = vunpack.c.l.b16 %v422
        %v583 = vunpack.c.l.b16 %v423
        %v584 = vunpack.c.l.b16 %v424
        %v585 = vunpack.c.l.b16 %v425
        %v586 = vunpack.c.l.b16 %v426
        %v587 = vunpack.c.l.b16 %v427
        %v588 = vunpack.c.l.b16 %v428
        %v589 = vunpack.c.l.b16 %v429
        %v590 = vunpack.c.l.b16 %v430
        %v591 = vunpack.c.l.b16 %v431
        %v592 = vunpack.c.l.b16 %v432
        %v593 = vunpack.c.l.b16 %v433
        %v594 = vunpack.c.l.b16 %v434
        %v595 = vunpack.c.l.b16 %v435
        %v596 = vunpack.c.l.b16 %v436
        %v597 = vunpack.c.l.b16 %v437
        %v598 = vunpack.c.l.b16 %v438
        %v599 = vunpack.c.l.b16 %v439
        %v600 = vunpack.c.l.b16 %v440
        %v601 = vunpack.c.l.b16 %v441
        %v602 = vunpack.c.l.b16 %v442
        %v603 = vunpack.c.l.b16 %v443
        %v604 = vunpack.c.l.b16 %v444
        %v605 = vunpack.c.l.b16 %v445
        %v606 = vunpack.c.l.b16 %v446
        %v607 = vunpack.c.l.b16 %v447
        %v608 = vunpack.c.l.b16 %v448
        %v609 = vpack.c.b16 %v562, %v561
        %v610 = vpack.c.b16 %v564, %v563
        %v611 = vpack.c.b16 %v566, %v565
        %v612 = vpack.c.b16 %v568, %v567
        %v613 = vpack.c.b16 %v570, %v569
        %v614 = vpack.c.b16 %v572, %v571
        %v615 = vpack.c.b16 %v574, %v573
        %v616 = vpack.c.b16 %v576, %v575
        %v617 = vpack.c.b16 %v578, %v577
        %v618 = vpack.c.b16 %v580, %v579
        %v619 = vpack.c.b16 %v582, %v581
        %v620 = vpack.c.b16 %v584, %v583
        %v621 = vpack.c.b16 %v586, %v585
        %v622 = vpack.c.b16 %v588, %v587
        %v623 = vpack.c.b16 %v590, %v589
        %v624 = vpack.c.b16 %v592, %v591
        %v625 = vpack.c.b16 %v594, %v593
        %v626 = vpack.c.b16 %v596, %v595
        %v627 = vpack.c.b16 %v598, %v597
        %v628 = vpack.c.b16 %v600, %v599
        %v629 = vpack.c.b16 %v602, %v601
        %v630 = vpack.c.b16 %v604, %v603
        %v631 = vpack.c.b16 %v606, %v605
        %v632 = vpack.c.b16 %v608, %v607
        %657 = vmatpush.bf16.msra.mxu0 %v616
        %658 = vmatpush.bf16.msra.mxu0 %v615
        %659 = vmatpush.bf16.msra.mxu0 %v614
        %660 = vmatpush.bf16.msra.mxu0 %v613
        %661 = vmatpush.bf16.msra.mxu0 %v612
        %662 = vmatpush.bf16.msra.mxu0 %v611
        %663 = vmatpush.bf16.msra.mxu0 %v610
        %664 = vmatpush.bf16.msra.mxu0 %v609
        %665 = vmatmul.bf16.gmra.mxu0 %v489
        %v666 = vpop.f32.mrf.mxu0
        %v667 = vadd.f32 0.0, %v666
        %v668 = vpop.f32.mrf.mxu0
        %v669 = vadd.f32 0.0, %v668
        %670 = vmatmul.bf16.gmra.mxu0 %v492
        %v671 = vpop.f32.mrf.mxu0
        %v672 = vadd.f32 0.0, %v671
        %v673 = vpop.f32.mrf.mxu0
        %v674 = vadd.f32 0.0, %v673
        %675 = vmatmul.bf16.gmra.mxu0 %v495
        %v676 = vpop.f32.mrf.mxu0
        %v677 = vadd.f32 0.0, %v676
        %v678 = vpop.f32.mrf.mxu0
        %v679 = vadd.f32 0.0, %v678
        %680 = vmatmul.bf16.gmra.mxu0 %v498
        %v681 = vpop.f32.mrf.mxu0
        %v682 = vadd.f32 0.0, %v681
        %v683 = vpop.f32.mrf.mxu0
        %v684 = vadd.f32 0.0, %v683
        %685 = vdwg.mxu0
        %686 = vmatpush.bf16.msra.mxu0 %v624
        %687 = vmatpush.bf16.msra.mxu0 %v623
        %688 = vmatpush.bf16.msra.mxu0 %v622
        %689 = vmatpush.bf16.msra.mxu0 %v621
        %690 = vmatpush.bf16.msra.mxu0 %v620
        %691 = vmatpush.bf16.msra.mxu0 %v619
        %692 = vmatpush.bf16.msra.mxu0 %v618
        %693 = vmatpush.bf16.msra.mxu0 %v617
        %694 = vmatmul.bf16.gmra.mxu0 %v490
        %v695 = vpop.f32.mrf.mxu0
        %v696 = vadd.f32 %v667, %v695
        %v697 = vpop.f32.mrf.mxu0
        %v698 = vadd.f32 %v669, %v697
        %699 = vmatmul.bf16.gmra.mxu0 %v493
        %v700 = vpop.f32.mrf.mxu0
        %v701 = vadd.f32 %v672, %v700
        %v702 = vpop.f32.mrf.mxu0
        %v703 = vadd.f32 %v674, %v702
        %704 = vmatmul.bf16.gmra.mxu0 %v496
        %v705 = vpop.f32.mrf.mxu0
        %v706 = vadd.f32 %v677, %v705
        %v707 = vpop.f32.mrf.mxu0
        %v708 = vadd.f32 %v679, %v707
        %709 = vmatmul.bf16.gmra.mxu0 %v499
        %v710 = vpop.f32.mrf.mxu0
        %v711 = vadd.f32 %v682, %v710
        %v712 = vpop.f32.mrf.mxu0
        %v713 = vadd.f32 %v684, %v712
        %714 = vdwg.mxu0
        %715 = vmatpush.bf16.msra.mxu0 %v632
        %716 = vmatpush.bf16.msra.mxu0 %v631
        %717 = vmatpush.bf16.msra.mxu0 %v630
        %718 = vmatpush.bf16.msra.mxu0 %v629
        %719 = vmatpush.bf16.msra.mxu0 %v628
        %720 = vmatpush.bf16.msra.mxu0 %v627
        %721 = vmatpush.bf16.msra.mxu0 %v626
        %722 = vmatpush.bf16.msra.mxu0 %v625
        %723 = vmatmul.bf16.gmra.mxu0 %v491
        %v724 = vpop.f32.mrf.mxu0
        %v725 = vadd.f32 %v696, %v724
        %v726 = vpop.f32.mrf.mxu0
        %v727 = vadd.f32 %v698, %v726
        %728 = vmatmul.bf16.gmra.mxu0 %v494
        %v729 = vpop.f32.mrf.mxu0
        %v730 = vadd.f32 %v701, %v729
        %v731 = vpop.f32.mrf.mxu0
        %v732 = vadd.f32 %v703, %v731
        %733 = vmatmul.bf16.gmra.mxu0 %v497
        %v734 = vpop.f32.mrf.mxu0
        %v735 = vadd.f32 %v706, %v734
        %v736 = vpop.f32.mrf.mxu0
        %v737 = vadd.f32 %v708, %v736
        %738 = vmatmul.bf16.gmra.mxu0 %v500
        %v739 = vpop.f32.mrf.mxu0
        %v740 = vadd.f32 %v711, %v739
        %v741 = vpop.f32.mrf.mxu0
        %v742 = vadd.f32 %v713, %v741
        %743 = vdwg.mxu0
        %v744 = vld [vmem:[%s335] sm:$0xff]
        %v745 = vld [vmem:[%s335 + $0x8] sm:$0xff]
        %v746 = vld [vmem:[%s335 + $0x10] sm:$0xff]
        %v747 = vld [vmem:[%s335 + $0x18] sm:$0xff]
        %v748 = vld [vmem:[%s335 + $0x20] sm:$0xff]
        %v749 = vld [vmem:[%s335 + $0x28] sm:$0xff]
        %v750 = vld [vmem:[%s335 + $0x30] sm:$0xff]
        %v751 = vld [vmem:[%s335 + $0x38] sm:$0xff]
        %v752 = vadd.f32 %v744, %v725
        %v753 = vadd.f32 %v745, %v727
        %v754 = vadd.f32 %v746, %v730
        %v755 = vadd.f32 %v747, %v732
        %v756 = vadd.f32 %v748, %v735
        %v757 = vadd.f32 %v749, %v737
        %v758 = vadd.f32 %v750, %v740
        %v759 = vadd.f32 %v751, %v742
        %vm760 = vcmask 523264
        %761 = vst.msk [vmem:[%s335] sm:$0xff] %vm760, %v752
        %762 = vst.msk [vmem:[%s335 + $0x8] sm:$0xff] %vm760, %v753
        %763 = vst.msk [vmem:[%s335 + $0x10] sm:$0xff] %vm760, %v754
        %764 = vst.msk [vmem:[%s335 + $0x18] sm:$0xff] %vm760, %v755
        %765 = vst.msk [vmem:[%s335 + $0x20] sm:$0xff] %vm760, %v756
        %766 = vst.msk [vmem:[%s335 + $0x28] sm:$0xff] %vm760, %v757
        %767 = vst.msk [vmem:[%s335 + $0x30] sm:$0xff] %vm760, %v758
        %768 = vst.msk [vmem:[%s335 + $0x38] sm:$0xff] %vm760, %v759
        %v769 = vld [vmem:[%s345 + $0xc] sm:$0xff]
        %v770 = vld [vmem:[%s345 + $0x14] sm:$0xf]
        %v771 = vld [vmem:[%s345 + $0x18] sm:$0xff]
        %v772 = vld [vmem:[%s345 + $0x20] sm:$0xf]
        %v773 = vld [vmem:[%s345 + $0x24] sm:$0xff]
        %v774 = vld [vmem:[%s345 + $0x2c] sm:$0xf]
        %v775 = vld [vmem:[%s345 + $0x30] sm:$0xff]
        %v776 = vld [vmem:[%s345 + $0x38] sm:$0xf]
        %v777 = vld [vmem:[%s345 + $0x3c] sm:$0xff]
        %v778 = vld [vmem:[%s345 + $0x44] sm:$0xf]
        %v779 = vld [vmem:[%s345 + $0x48] sm:$0xff]
        %v780 = vld [vmem:[%s345 + $0x50] sm:$0xf]
        %v781 = vld [vmem:[%s345 + $0x54] sm:$0xff]
        %v782 = vld [vmem:[%s345 + $0x5c] sm:$0xf]
        %v783 = vld [vmem:[%s345 + $0x60] sm:$0xff]
        %v784 = vld [vmem:[%s345 + $0x68] sm:$0xf]
        %s785 = sadd.s32 %s397, 1
        %s786 = smul.u32 %s785, 48
        %s787 = smul.addr %s786, 4
        %s788 = scalar_lea.vmem %s2, %s787
        %v789 = vld [vmem:[%s788] sm:$0xf]
        %v790 = vld [vmem:[%s788 + $0x4] sm:$0xf]
        %v791 = vld [vmem:[%s788 + $0x8] sm:$0xf]
        %v792 = vld [vmem:[%s788 + $0xc] sm:$0xf]
        %v793 = vld [vmem:[%s788 + $0x10] sm:$0xf]
        %v794 = vld [vmem:[%s788 + $0x14] sm:$0xf]
        %v795 = vld [vmem:[%s788 + $0x18] sm:$0xf]
        %v796 = vld [vmem:[%s788 + $0x1c] sm:$0xf]
        %v797 = vld [vmem:[%s788 + $0x20] sm:$0xf]
        %v798 = vld [vmem:[%s788 + $0x24] sm:$0xf]
        %v799 = vld [vmem:[%s788 + $0x28] sm:$0xf]
        %v800 = vld [vmem:[%s788 + $0x2c] sm:$0xf]
        %v801 = vld [vmem:[%s788 + $0x30] sm:$0xf]
        %v802 = vld [vmem:[%s788 + $0x34] sm:$0xf]
        %v803 = vld [vmem:[%s788 + $0x38] sm:$0xf]
        %v804 = vld [vmem:[%s788 + $0x3c] sm:$0xf]
        %v805 = vld [vmem:[%s788 + $0x40] sm:$0xf]
        %v806 = vld [vmem:[%s788 + $0x44] sm:$0xf]
        %v807 = vld [vmem:[%s788 + $0x48] sm:$0xf]
        %v808 = vld [vmem:[%s788 + $0x4c] sm:$0xf]
        %v809 = vld [vmem:[%s788 + $0x50] sm:$0xf]
        %v810 = vld [vmem:[%s788 + $0x54] sm:$0xf]
        %v811 = vld [vmem:[%s788 + $0x58] sm:$0xf]
        %v812 = vld [vmem:[%s788 + $0x5c] sm:$0xf]
        %v813 = vld [vmem:[%s788 + $0x60] sm:$0xf]
        %v814 = vld [vmem:[%s788 + $0x64] sm:$0xf]
        %v815 = vld [vmem:[%s788 + $0x68] sm:$0xf]
        %v816 = vld [vmem:[%s788 + $0x6c] sm:$0xf]
        %v817 = vld [vmem:[%s788 + $0x70] sm:$0xf]
        %v818 = vld [vmem:[%s788 + $0x74] sm:$0xf]
        %v819 = vld [vmem:[%s788 + $0x78] sm:$0xf]
        %v820 = vld [vmem:[%s788 + $0x7c] sm:$0xf]
        %v821 = vld [vmem:[%s788 + $0x80] sm:$0xf]
        %v822 = vld [vmem:[%s788 + $0x84] sm:$0xf]
        %v823 = vld [vmem:[%s788 + $0x88] sm:$0xf]
        %v824 = vld [vmem:[%s788 + $0x8c] sm:$0xf]
        %v825 = vld [vmem:[%s788 + $0x90] sm:$0xf]
        %v826 = vld [vmem:[%s788 + $0x94] sm:$0xf]
        %v827 = vld [vmem:[%s788 + $0x98] sm:$0xf]
        %v828 = vld [vmem:[%s788 + $0x9c] sm:$0xf]
        %v829 = vld [vmem:[%s788 + $0xa0] sm:$0xf]
        %v830 = vld [vmem:[%s788 + $0xa4] sm:$0xf]
        %v831 = vld [vmem:[%s788 + $0xa8] sm:$0xf]
        %v832 = vld [vmem:[%s788 + $0xac] sm:$0xf]
        %v833 = vld [vmem:[%s788 + $0xb0] sm:$0xf]
        %v834 = vld [vmem:[%s788 + $0xb4] sm:$0xf]
        %v835 = vld [vmem:[%s788 + $0xb8] sm:$0xf]
        %v836 = vld [vmem:[%s788 + $0xbc] sm:$0xf]
        %v853 = vunpack.c.l.b16 %v769
        %v854 = vunpack.c.h.b16 %v769
        %v855 = vunpack.c.l.b16 %v770
        %v856 = vunpack.c.l.b16 %v771
        %v857 = vunpack.c.h.b16 %v771
        %v858 = vunpack.c.l.b16 %v772
        %v859 = vunpack.c.l.b16 %v773
        %v860 = vunpack.c.h.b16 %v773
        %v861 = vunpack.c.l.b16 %v774
        %v862 = vunpack.c.l.b16 %v775
        %v863 = vunpack.c.h.b16 %v775
        %v864 = vunpack.c.l.b16 %v776
        %v865 = vunpack.c.l.b16 %v777
        %v866 = vunpack.c.h.b16 %v777
        %v867 = vunpack.c.l.b16 %v778
        %v868 = vunpack.c.l.b16 %v779
        %v869 = vunpack.c.h.b16 %v779
        %v870 = vunpack.c.l.b16 %v780
        %v871 = vunpack.c.l.b16 %v781
        %v872 = vunpack.c.h.b16 %v781
        %v873 = vunpack.c.l.b16 %v782
        %v874 = vunpack.c.l.b16 %v783
        %v875 = vunpack.c.h.b16 %v783
        %v876 = vunpack.c.l.b16 %v784
        %v877 = vpack.c.b16 %v856, %v853
        %v878 = vpack.c.b16 %v857, %v854
        %v879 = vpack.c.b16 %v858, %v855
        %v880 = vpack.c.b16 %v862, %v859
        %v881 = vpack.c.b16 %v863, %v860
        %v882 = vpack.c.b16 %v864, %v861
        %v883 = vpack.c.b16 %v868, %v865
        %v884 = vpack.c.b16 %v869, %v866
        %v885 = vpack.c.b16 %v870, %v867
        %v886 = vpack.c.b16 %v874, %v871
        %v887 = vpack.c.b16 %v875, %v872
        %v888 = vpack.c.b16 %v876, %v873
        %v949 = vunpack.c.l.b16 %v789
        %v950 = vunpack.c.l.b16 %v790
        %v951 = vunpack.c.l.b16 %v791
        %v952 = vunpack.c.l.b16 %v792
        %v953 = vunpack.c.l.b16 %v793
        %v954 = vunpack.c.l.b16 %v794
        %v955 = vunpack.c.l.b16 %v795
        %v956 = vunpack.c.l.b16 %v796
        %v957 = vunpack.c.l.b16 %v797
        %v958 = vunpack.c.l.b16 %v798
        %v959 = vunpack.c.l.b16 %v799
        %v960 = vunpack.c.l.b16 %v800
        %v961 = vunpack.c.l.b16 %v801
        %v962 = vunpack.c.l.b16 %v802
        %v963 = vunpack.c.l.b16 %v803
        %v964 = vunpack.c.l.b16 %v804
        %v965 = vunpack.c.l.b16 %v805
        %v966 = vunpack.c.l.b16 %v806
        %v967 = vunpack.c.l.b16 %v807
        %v968 = vunpack.c.l.b16 %v808
        %v969 = vunpack.c.l.b16 %v809
        %v970 = vunpack.c.l.b16 %v810
        %v971 = vunpack.c.l.b16 %v811
        %v972 = vunpack.c.l.b16 %v812
        %v973 = vunpack.c.l.b16 %v813
        %v974 = vunpack.c.l.b16 %v814
        %v975 = vunpack.c.l.b16 %v815
        %v976 = vunpack.c.l.b16 %v816
        %v977 = vunpack.c.l.b16 %v817
        %v978 = vunpack.c.l.b16 %v818
        %v979 = vunpack.c.l.b16 %v819
        %v980 = vunpack.c.l.b16 %v820
        %v981 = vunpack.c.l.b16 %v821
        %v982 = vunpack.c.l.b16 %v822
        %v983 = vunpack.c.l.b16 %v823
        %v984 = vunpack.c.l.b16 %v824
        %v985 = vunpack.c.l.b16 %v825
        %v986 = vunpack.c.l.b16 %v826
        %v987 = vunpack.c.l.b16 %v827
        %v988 = vunpack.c.l.b16 %v828
        %v989 = vunpack.c.l.b16 %v829
        %v990 = vunpack.c.l.b16 %v830
        %v991 = vunpack.c.l.b16 %v831
        %v992 = vunpack.c.l.b16 %v832
        %v993 = vunpack.c.l.b16 %v833
        %v994 = vunpack.c.l.b16 %v834
        %v995 = vunpack.c.l.b16 %v835
        %v996 = vunpack.c.l.b16 %v836
        %v997 = vpack.c.b16 %v950, %v949
        %v998 = vpack.c.b16 %v952, %v951
        %v999 = vpack.c.b16 %v954, %v953
        %v1000 = vpack.c.b16 %v956, %v955
        %v1001 = vpack.c.b16 %v958, %v957
        %v1002 = vpack.c.b16 %v960, %v959
        %v1003 = vpack.c.b16 %v962, %v961
        %v1004 = vpack.c.b16 %v964, %v963
        %v1005 = vpack.c.b16 %v966, %v965
        %v1006 = vpack.c.b16 %v968, %v967
        %v1007 = vpack.c.b16 %v970, %v969
        %v1008 = vpack.c.b16 %v972, %v971
        %v1009 = vpack.c.b16 %v974, %v973
        %v1010 = vpack.c.b16 %v976, %v975
        %v1011 = vpack.c.b16 %v978, %v977
        %v1012 = vpack.c.b16 %v980, %v979
        %v1013 = vpack.c.b16 %v982, %v981
        %v1014 = vpack.c.b16 %v984, %v983
        %v1015 = vpack.c.b16 %v986, %v985
        %v1016 = vpack.c.b16 %v988, %v987
        %v1017 = vpack.c.b16 %v990, %v989
        %v1018 = vpack.c.b16 %v992, %v991
        %v1019 = vpack.c.b16 %v994, %v993
        %v1020 = vpack.c.b16 %v996, %v995
        %1045 = vmatpush.bf16.msra.mxu0 %v1004
        %1046 = vmatpush.bf16.msra.mxu0 %v1003
        %1047 = vmatpush.bf16.msra.mxu0 %v1002
        %1048 = vmatpush.bf16.msra.mxu0 %v1001
        %1049 = vmatpush.bf16.msra.mxu0 %v1000
        %1050 = vmatpush.bf16.msra.mxu0 %v999
        %1051 = vmatpush.bf16.msra.mxu0 %v998
        %1052 = vmatpush.bf16.msra.mxu0 %v997
        %1053 = vmatmul.bf16.gmra.mxu0 %v877
        %v1054 = vpop.f32.mrf.mxu0
        %v1055 = vadd.f32 0.0, %v1054
        %v1056 = vpop.f32.mrf.mxu0
        %v1057 = vadd.f32 0.0, %v1056
        %1058 = vmatmul.bf16.gmra.mxu0 %v880
        %v1059 = vpop.f32.mrf.mxu0
        %v1060 = vadd.f32 0.0, %v1059
        %v1061 = vpop.f32.mrf.mxu0
        %v1062 = vadd.f32 0.0, %v1061
        %1063 = vmatmul.bf16.gmra.mxu0 %v883
        %v1064 = vpop.f32.mrf.mxu0
        %v1065 = vadd.f32 0.0, %v1064
        %v1066 = vpop.f32.mrf.mxu0
        %v1067 = vadd.f32 0.0, %v1066
        %1068 = vmatmul.bf16.gmra.mxu0 %v886
        %v1069 = vpop.f32.mrf.mxu0
        %v1070 = vadd.f32 0.0, %v1069
        %v1071 = vpop.f32.mrf.mxu0
        %v1072 = vadd.f32 0.0, %v1071
        %1073 = vdwg.mxu0
        %1074 = vmatpush.bf16.msra.mxu0 %v1012
        %1075 = vmatpush.bf16.msra.mxu0 %v1011
        %1076 = vmatpush.bf16.msra.mxu0 %v1010
        %1077 = vmatpush.bf16.msra.mxu0 %v1009
        %1078 = vmatpush.bf16.msra.mxu0 %v1008
        %1079 = vmatpush.bf16.msra.mxu0 %v1007
        %1080 = vmatpush.bf16.msra.mxu0 %v1006
        %1081 = vmatpush.bf16.msra.mxu0 %v1005
        %1082 = vmatmul.bf16.gmra.mxu0 %v878
        %v1083 = vpop.f32.mrf.mxu0
        %v1084 = vadd.f32 %v1055, %v1083
        %v1085 = vpop.f32.mrf.mxu0
        %v1086 = vadd.f32 %v1057, %v1085
        %1087 = vmatmul.bf16.gmra.mxu0 %v881
        %v1088 = vpop.f32.mrf.mxu0
        %v1089 = vadd.f32 %v1060, %v1088
        %v1090 = vpop.f32.mrf.mxu0
        %v1091 = vadd.f32 %v1062, %v1090
        %1092 = vmatmul.bf16.gmra.mxu0 %v884
        %v1093 = vpop.f32.mrf.mxu0
        %v1094 = vadd.f32 %v1065, %v1093
        %v1095 = vpop.f32.mrf.mxu0
        %v1096 = vadd.f32 %v1067, %v1095
        %1097 = vmatmul.bf16.gmra.mxu0 %v887
        %v1098 = vpop.f32.mrf.mxu0
        %v1099 = vadd.f32 %v1070, %v1098
        %v1100 = vpop.f32.mrf.mxu0
        %v1101 = vadd.f32 %v1072, %v1100
        %1102 = vdwg.mxu0
        %1103 = vmatpush.bf16.msra.mxu0 %v1020
        %1104 = vmatpush.bf16.msra.mxu0 %v1019
        %1105 = vmatpush.bf16.msra.mxu0 %v1018
        %1106 = vmatpush.bf16.msra.mxu0 %v1017
        %1107 = vmatpush.bf16.msra.mxu0 %v1016
        %1108 = vmatpush.bf16.msra.mxu0 %v1015
        %1109 = vmatpush.bf16.msra.mxu0 %v1014
        %1110 = vmatpush.bf16.msra.mxu0 %v1013
        %1111 = vmatmul.bf16.gmra.mxu0 %v879
        %v1112 = vpop.f32.mrf.mxu0
        %v1113 = vadd.f32 %v1084, %v1112
        %v1114 = vpop.f32.mrf.mxu0
        %v1115 = vadd.f32 %v1086, %v1114
        %1116 = vmatmul.bf16.gmra.mxu0 %v882
        %v1117 = vpop.f32.mrf.mxu0
        %v1118 = vadd.f32 %v1089, %v1117
        %v1119 = vpop.f32.mrf.mxu0
        %v1120 = vadd.f32 %v1091, %v1119
        %1121 = vmatmul.bf16.gmra.mxu0 %v885
        %v1122 = vpop.f32.mrf.mxu0
        %v1123 = vadd.f32 %v1094, %v1122
        %v1124 = vpop.f32.mrf.mxu0
        %v1125 = vadd.f32 %v1096, %v1124
        %1126 = vmatmul.bf16.gmra.mxu0 %v888
        %v1127 = vpop.f32.mrf.mxu0
        %v1128 = vadd.f32 %v1099, %v1127
        %v1129 = vpop.f32.mrf.mxu0
        %v1130 = vadd.f32 %v1101, %v1129
        %1131 = vdwg.mxu0
        %v1132 = vld [vmem:[%s335] sm:$0xff]
        %v1133 = vld [vmem:[%s335 + $0x8] sm:$0xff]
        %v1134 = vld [vmem:[%s335 + $0x10] sm:$0xff]
        %v1135 = vld [vmem:[%s335 + $0x18] sm:$0xff]
        %v1136 = vld [vmem:[%s335 + $0x20] sm:$0xff]
        %v1137 = vld [vmem:[%s335 + $0x28] sm:$0xff]
        %v1138 = vld [vmem:[%s335 + $0x30] sm:$0xff]
        %v1139 = vld [vmem:[%s335 + $0x38] sm:$0xff]
        %v1140 = vadd.f32 %v1132, %v1113
        %v1141 = vadd.f32 %v1133, %v1115
        %v1142 = vadd.f32 %v1134, %v1118
        %v1143 = vadd.f32 %v1135, %v1120
        %v1144 = vadd.f32 %v1136, %v1123
        %v1145 = vadd.f32 %v1137, %v1125
        %v1146 = vadd.f32 %v1138, %v1128
        %v1147 = vadd.f32 %v1139, %v1130
        %1148 = vst.msk [vmem:[%s335] sm:$0xff] %vm760, %v1140
        %1149 = vst.msk [vmem:[%s335 + $0x8] sm:$0xff] %vm760, %v1141
        %1150 = vst.msk [vmem:[%s335 + $0x10] sm:$0xff] %vm760, %v1142
        %1151 = vst.msk [vmem:[%s335 + $0x18] sm:$0xff] %vm760, %v1143
        %1152 = vst.msk [vmem:[%s335 + $0x20] sm:$0xff] %vm760, %v1144
        %1153 = vst.msk [vmem:[%s335 + $0x28] sm:$0xff] %vm760, %v1145
        %1154 = vst.msk [vmem:[%s335 + $0x30] sm:$0xff] %vm760, %v1146
        %1155 = vst.msk [vmem:[%s335 + $0x38] sm:$0xff] %vm760, %v1147
        %v1156 = vld [vmem:[%s345 + $0x18] sm:$0xff]
        %v1157 = vld [vmem:[%s345 + $0x20] sm:$0xf]
        %v1158 = vld [vmem:[%s345 + $0x24] sm:$0xff]
        %v1159 = vld [vmem:[%s345 + $0x2c] sm:$0xf]
        %v1160 = vld [vmem:[%s345 + $0x30] sm:$0xff]
        %v1161 = vld [vmem:[%s345 + $0x38] sm:$0xf]
        %v1162 = vld [vmem:[%s345 + $0x3c] sm:$0xff]
        %v1163 = vld [vmem:[%s345 + $0x44] sm:$0xf]
        %v1164 = vld [vmem:[%s345 + $0x48] sm:$0xff]
        %v1165 = vld [vmem:[%s345 + $0x50] sm:$0xf]
        %v1166 = vld [vmem:[%s345 + $0x54] sm:$0xff]
        %v1167 = vld [vmem:[%s345 + $0x5c] sm:$0xf]
        %v1168 = vld [vmem:[%s345 + $0x60] sm:$0xff]
        %v1169 = vld [vmem:[%s345 + $0x68] sm:$0xf]
        %v1170 = vld [vmem:[%s345 + $0x6c] sm:$0xff]
        %v1171 = vld [vmem:[%s345 + $0x74] sm:$0xf]
        %s1172 = sadd.s32 %s397, 2
        %s1173 = smul.u32 %s1172, 48
        %s1174 = smul.addr %s1173, 4
        %s1175 = scalar_lea.vmem %s2, %s1174
        %v1176 = vld [vmem:[%s1175] sm:$0xf]
        %v1177 = vld [vmem:[%s1175 + $0x4] sm:$0xf]
        %v1178 = vld [vmem:[%s1175 + $0x8] sm:$0xf]
        %v1179 = vld [vmem:[%s1175 + $0xc] sm:$0xf]
        %v1180 = vld [vmem:[%s1175 + $0x10] sm:$0xf]
        %v1181 = vld [vmem:[%s1175 + $0x14] sm:$0xf]
        %v1182 = vld [vmem:[%s1175 + $0x18] sm:$0xf]
        %v1183 = vld [vmem:[%s1175 + $0x1c] sm:$0xf]
        %v1184 = vld [vmem:[%s1175 + $0x20] sm:$0xf]
        %v1185 = vld [vmem:[%s1175 + $0x24] sm:$0xf]
        %v1186 = vld [vmem:[%s1175 + $0x28] sm:$0xf]
        %v1187 = vld [vmem:[%s1175 + $0x2c] sm:$0xf]
        %v1188 = vld [vmem:[%s1175 + $0x30] sm:$0xf]
        %v1189 = vld [vmem:[%s1175 + $0x34] sm:$0xf]
        %v1190 = vld [vmem:[%s1175 + $0x38] sm:$0xf]
        %v1191 = vld [vmem:[%s1175 + $0x3c] sm:$0xf]
        %v1192 = vld [vmem:[%s1175 + $0x40] sm:$0xf]
        %v1193 = vld [vmem:[%s1175 + $0x44] sm:$0xf]
        %v1194 = vld [vmem:[%s1175 + $0x48] sm:$0xf]
        %v1195 = vld [vmem:[%s1175 + $0x4c] sm:$0xf]
        %v1196 = vld [vmem:[%s1175 + $0x50] sm:$0xf]
        %v1197 = vld [vmem:[%s1175 + $0x54] sm:$0xf]
        %v1198 = vld [vmem:[%s1175 + $0x58] sm:$0xf]
        %v1199 = vld [vmem:[%s1175 + $0x5c] sm:$0xf]
        %v1200 = vld [vmem:[%s1175 + $0x60] sm:$0xf]
        %v1201 = vld [vmem:[%s1175 + $0x64] sm:$0xf]
        %v1202 = vld [vmem:[%s1175 + $0x68] sm:$0xf]
        %v1203 = vld [vmem:[%s1175 + $0x6c] sm:$0xf]
        %v1204 = vld [vmem:[%s1175 + $0x70] sm:$0xf]
        %v1205 = vld [vmem:[%s1175 + $0x74] sm:$0xf]
        %v1206 = vld [vmem:[%s1175 + $0x78] sm:$0xf]
        %v1207 = vld [vmem:[%s1175 + $0x7c] sm:$0xf]
        %v1208 = vld [vmem:[%s1175 + $0x80] sm:$0xf]
        %v1209 = vld [vmem:[%s1175 + $0x84] sm:$0xf]
        %v1210 = vld [vmem:[%s1175 + $0x88] sm:$0xf]
        %v1211 = vld [vmem:[%s1175 + $0x8c] sm:$0xf]
        %v1212 = vld [vmem:[%s1175 + $0x90] sm:$0xf]
        %v1213 = vld [vmem:[%s1175 + $0x94] sm:$0xf]
        %v1214 = vld [vmem:[%s1175 + $0x98] sm:$0xf]
        %v1215 = vld [vmem:[%s1175 + $0x9c] sm:$0xf]
        %v1216 = vld [vmem:[%s1175 + $0xa0] sm:$0xf]
        %v1217 = vld [vmem:[%s1175 + $0xa4] sm:$0xf]
        %v1218 = vld [vmem:[%s1175 + $0xa8] sm:$0xf]
        %v1219 = vld [vmem:[%s1175 + $0xac] sm:$0xf]
        %v1220 = vld [vmem:[%s1175 + $0xb0] sm:$0xf]
        %v1221 = vld [vmem:[%s1175 + $0xb4] sm:$0xf]
        %v1222 = vld [vmem:[%s1175 + $0xb8] sm:$0xf]
        %v1223 = vld [vmem:[%s1175 + $0xbc] sm:$0xf]
        %v1240 = vunpack.c.l.b16 %v1156
        %v1241 = vunpack.c.h.b16 %v1156
        %v1242 = vunpack.c.l.b16 %v1157
        %v1243 = vunpack.c.l.b16 %v1158
        %v1244 = vunpack.c.h.b16 %v1158
        %v1245 = vunpack.c.l.b16 %v1159
        %v1246 = vunpack.c.l.b16 %v1160
        %v1247 = vunpack.c.h.b16 %v1160
        %v1248 = vunpack.c.l.b16 %v1161
        %v1249 = vunpack.c.l.b16 %v1162
        %v1250 = vunpack.c.h.b16 %v1162
        %v1251 = vunpack.c.l.b16 %v1163
        %v1252 = vunpack.c.l.b16 %v1164
        %v1253 = vunpack.c.h.b16 %v1164
        %v1254 = vunpack.c.l.b16 %v1165
        %v1255 = vunpack.c.l.b16 %v1166
        %v1256 = vunpack.c.h.b16 %v1166
        %v1257 = vunpack.c.l.b16 %v1167
        %v1258 = vunpack.c.l.b16 %v1168
        %v1259 = vunpack.c.h.b16 %v1168
        %v1260 = vunpack.c.l.b16 %v1169
        %v1261 = vunpack.c.l.b16 %v1170
        %v1262 = vunpack.c.h.b16 %v1170
        %v1263 = vunpack.c.l.b16 %v1171
        %v1264 = vpack.c.b16 %v1243, %v1240
        %v1265 = vpack.c.b16 %v1244, %v1241
        %v1266 = vpack.c.b16 %v1245, %v1242
        %v1267 = vpack.c.b16 %v1249, %v1246
        %v1268 = vpack.c.b16 %v1250, %v1247
        %v1269 = vpack.c.b16 %v1251, %v1248
        %v1270 = vpack.c.b16 %v1255, %v1252
        %v1271 = vpack.c.b16 %v1256, %v1253
        %v1272 = vpack.c.b16 %v1257, %v1254
        %v1273 = vpack.c.b16 %v1261, %v1258
        %v1274 = vpack.c.b16 %v1262, %v1259
        %v1275 = vpack.c.b16 %v1263, %v1260
        %v1336 = vunpack.c.l.b16 %v1176
        %v1337 = vunpack.c.l.b16 %v1177
        %v1338 = vunpack.c.l.b16 %v1178
        %v1339 = vunpack.c.l.b16 %v1179
        %v1340 = vunpack.c.l.b16 %v1180
        %v1341 = vunpack.c.l.b16 %v1181
        %v1342 = vunpack.c.l.b16 %v1182
        %v1343 = vunpack.c.l.b16 %v1183
        %v1344 = vunpack.c.l.b16 %v1184
        %v1345 = vunpack.c.l.b16 %v1185
        %v1346 = vunpack.c.l.b16 %v1186
        %v1347 = vunpack.c.l.b16 %v1187
        %v1348 = vunpack.c.l.b16 %v1188
        %v1349 = vunpack.c.l.b16 %v1189
        %v1350 = vunpack.c.l.b16 %v1190
        %v1351 = vunpack.c.l.b16 %v1191
        %v1352 = vunpack.c.l.b16 %v1192
        %v1353 = vunpack.c.l.b16 %v1193
        %v1354 = vunpack.c.l.b16 %v1194
        %v1355 = vunpack.c.l.b16 %v1195
        %v1356 = vunpack.c.l.b16 %v1196
        %v1357 = vunpack.c.l.b16 %v1197
        %v1358 = vunpack.c.l.b16 %v1198
        %v1359 = vunpack.c.l.b16 %v1199
        %v1360 = vunpack.c.l.b16 %v1200
        %v1361 = vunpack.c.l.b16 %v1201
        %v1362 = vunpack.c.l.b16 %v1202
        %v1363 = vunpack.c.l.b16 %v1203
        %v1364 = vunpack.c.l.b16 %v1204
        %v1365 = vunpack.c.l.b16 %v1205
        %v1366 = vunpack.c.l.b16 %v1206
        %v1367 = vunpack.c.l.b16 %v1207
        %v1368 = vunpack.c.l.b16 %v1208
        %v1369 = vunpack.c.l.b16 %v1209
        %v1370 = vunpack.c.l.b16 %v1210
        %v1371 = vunpack.c.l.b16 %v1211
        %v1372 = vunpack.c.l.b16 %v1212
        %v1373 = vunpack.c.l.b16 %v1213
        %v1374 = vunpack.c.l.b16 %v1214
        %v1375 = vunpack.c.l.b16 %v1215
        %v1376 = vunpack.c.l.b16 %v1216
        %v1377 = vunpack.c.l.b16 %v1217
        %v1378 = vunpack.c.l.b16 %v1218
        %v1379 = vunpack.c.l.b16 %v1219
        %v1380 = vunpack.c.l.b16 %v1220
        %v1381 = vunpack.c.l.b16 %v1221
        %v1382 = vunpack.c.l.b16 %v1222
        %v1383 = vunpack.c.l.b16 %v1223
        %v1384 = vpack.c.b16 %v1337, %v1336
        %v1385 = vpack.c.b16 %v1339, %v1338
        %v1386 = vpack.c.b16 %v1341, %v1340
        %v1387 = vpack.c.b16 %v1343, %v1342
        %v1388 = vpack.c.b16 %v1345, %v1344
        %v1389 = vpack.c.b16 %v1347, %v1346
        %v1390 = vpack.c.b16 %v1349, %v1348
        %v1391 = vpack.c.b16 %v1351, %v1350
        %v1392 = vpack.c.b16 %v1353, %v1352
        %v1393 = vpack.c.b16 %v1355, %v1354
        %v1394 = vpack.c.b16 %v1357, %v1356
        %v1395 = vpack.c.b16 %v1359, %v1358
        %v1396 = vpack.c.b16 %v1361, %v1360
        %v1397 = vpack.c.b16 %v1363, %v1362
        %v1398 = vpack.c.b16 %v1365, %v1364
        %v1399 = vpack.c.b16 %v1367, %v1366
        %v1400 = vpack.c.b16 %v1369, %v1368
        %v1401 = vpack.c.b16 %v1371, %v1370
        %v1402 = vpack.c.b16 %v1373, %v1372
        %v1403 = vpack.c.b16 %v1375, %v1374
        %v1404 = vpack.c.b16 %v1377, %v1376
        %v1405 = vpack.c.b16 %v1379, %v1378
        %v1406 = vpack.c.b16 %v1381, %v1380
        %v1407 = vpack.c.b16 %v1383, %v1382
        %1432 = vmatpush.bf16.msra.mxu0 %v1391
        %1433 = vmatpush.bf16.msra.mxu0 %v1390
        %1434 = vmatpush.bf16.msra.mxu0 %v1389
        %1435 = vmatpush.bf16.msra.mxu0 %v1388
        %1436 = vmatpush.bf16.msra.mxu0 %v1387
        %1437 = vmatpush.bf16.msra.mxu0 %v1386
        %1438 = vmatpush.bf16.msra.mxu0 %v1385
        %1439 = vmatpush.bf16.msra.mxu0 %v1384
        %1440 = vmatmul.bf16.gmra.mxu0 %v1264
        %v1441 = vpop.f32.mrf.mxu0
        %v1442 = vadd.f32 0.0, %v1441
        %v1443 = vpop.f32.mrf.mxu0
        %v1444 = vadd.f32 0.0, %v1443
        %1445 = vmatmul.bf16.gmra.mxu0 %v1267
        %v1446 = vpop.f32.mrf.mxu0
        %v1447 = vadd.f32 0.0, %v1446
        %v1448 = vpop.f32.mrf.mxu0
        %v1449 = vadd.f32 0.0, %v1448
        %1450 = vmatmul.bf16.gmra.mxu0 %v1270
        %v1451 = vpop.f32.mrf.mxu0
        %v1452 = vadd.f32 0.0, %v1451
        %v1453 = vpop.f32.mrf.mxu0
        %v1454 = vadd.f32 0.0, %v1453
        %1455 = vmatmul.bf16.gmra.mxu0 %v1273
        %v1456 = vpop.f32.mrf.mxu0
        %v1457 = vadd.f32 0.0, %v1456
        %v1458 = vpop.f32.mrf.mxu0
        %v1459 = vadd.f32 0.0, %v1458
        %1460 = vdwg.mxu0
        %1461 = vmatpush.bf16.msra.mxu0 %v1399
        %1462 = vmatpush.bf16.msra.mxu0 %v1398
        %1463 = vmatpush.bf16.msra.mxu0 %v1397
        %1464 = vmatpush.bf16.msra.mxu0 %v1396
        %1465 = vmatpush.bf16.msra.mxu0 %v1395
        %1466 = vmatpush.bf16.msra.mxu0 %v1394
        %1467 = vmatpush.bf16.msra.mxu0 %v1393
        %1468 = vmatpush.bf16.msra.mxu0 %v1392
        %1469 = vmatmul.bf16.gmra.mxu0 %v1265
        %v1470 = vpop.f32.mrf.mxu0
        %v1471 = vadd.f32 %v1442, %v1470
        %v1472 = vpop.f32.mrf.mxu0
        %v1473 = vadd.f32 %v1444, %v1472
        %1474 = vmatmul.bf16.gmra.mxu0 %v1268
        %v1475 = vpop.f32.mrf.mxu0
        %v1476 = vadd.f32 %v1447, %v1475
        %v1477 = vpop.f32.mrf.mxu0
        %v1478 = vadd.f32 %v1449, %v1477
        %1479 = vmatmul.bf16.gmra.mxu0 %v1271
        %v1480 = vpop.f32.mrf.mxu0
        %v1481 = vadd.f32 %v1452, %v1480
        %v1482 = vpop.f32.mrf.mxu0
        %v1483 = vadd.f32 %v1454, %v1482
        %1484 = vmatmul.bf16.gmra.mxu0 %v1274
        %v1485 = vpop.f32.mrf.mxu0
        %v1486 = vadd.f32 %v1457, %v1485
        %v1487 = vpop.f32.mrf.mxu0
        %v1488 = vadd.f32 %v1459, %v1487
        %1489 = vdwg.mxu0
        %1490 = vmatpush.bf16.msra.mxu0 %v1407
        %1491 = vmatpush.bf16.msra.mxu0 %v1406
        %1492 = vmatpush.bf16.msra.mxu0 %v1405
        %1493 = vmatpush.bf16.msra.mxu0 %v1404
        %1494 = vmatpush.bf16.msra.mxu0 %v1403
        %1495 = vmatpush.bf16.msra.mxu0 %v1402
        %1496 = vmatpush.bf16.msra.mxu0 %v1401
        %1497 = vmatpush.bf16.msra.mxu0 %v1400
        %1498 = vmatmul.bf16.gmra.mxu0 %v1266
        %v1499 = vpop.f32.mrf.mxu0
        %v1500 = vadd.f32 %v1471, %v1499
        %v1501 = vpop.f32.mrf.mxu0
        %v1502 = vadd.f32 %v1473, %v1501
        %1503 = vmatmul.bf16.gmra.mxu0 %v1269
        %v1504 = vpop.f32.mrf.mxu0
        %v1505 = vadd.f32 %v1476, %v1504
        %v1506 = vpop.f32.mrf.mxu0
        %v1507 = vadd.f32 %v1478, %v1506
        %1508 = vmatmul.bf16.gmra.mxu0 %v1272
        %v1509 = vpop.f32.mrf.mxu0
        %v1510 = vadd.f32 %v1481, %v1509
        %v1511 = vpop.f32.mrf.mxu0
        %v1512 = vadd.f32 %v1483, %v1511
        %1513 = vmatmul.bf16.gmra.mxu0 %v1275
        %v1514 = vpop.f32.mrf.mxu0
        %v1515 = vadd.f32 %v1486, %v1514
        %v1516 = vpop.f32.mrf.mxu0
        %v1517 = vadd.f32 %v1488, %v1516
        %1518 = vdwg.mxu0
        %v1519 = vld [vmem:[%s335] sm:$0xff]
        %v1520 = vld [vmem:[%s335 + $0x8] sm:$0xff]
        %v1521 = vld [vmem:[%s335 + $0x10] sm:$0xff]
        %v1522 = vld [vmem:[%s335 + $0x18] sm:$0xff]
        %v1523 = vld [vmem:[%s335 + $0x20] sm:$0xff]
        %v1524 = vld [vmem:[%s335 + $0x28] sm:$0xff]
        %v1525 = vld [vmem:[%s335 + $0x30] sm:$0xff]
        %v1526 = vld [vmem:[%s335 + $0x38] sm:$0xff]
        %v1527 = vadd.f32 %v1519, %v1500
        %v1528 = vadd.f32 %v1520, %v1502
        %v1529 = vadd.f32 %v1521, %v1505
        %v1530 = vadd.f32 %v1522, %v1507
        %v1531 = vadd.f32 %v1523, %v1510
        %v1532 = vadd.f32 %v1524, %v1512
        %v1533 = vadd.f32 %v1525, %v1515
        %v1534 = vadd.f32 %v1526, %v1517
        %1535 = vst.msk [vmem:[%s335] sm:$0xff] %vm760, %v1527
        %1536 = vst.msk [vmem:[%s335 + $0x8] sm:$0xff] %vm760, %v1528
        %1537 = vst.msk [vmem:[%s335 + $0x10] sm:$0xff] %vm760, %v1529
        %1538 = vst.msk [vmem:[%s335 + $0x18] sm:$0xff] %vm760, %v1530
        %1539 = vst.msk [vmem:[%s335 + $0x20] sm:$0xff] %vm760, %v1531
        %1540 = vst.msk [vmem:[%s335 + $0x28] sm:$0xff] %vm760, %v1532
        %1541 = vst.msk [vmem:[%s335 + $0x30] sm:$0xff] %vm760, %v1533
        %1542 = vst.msk [vmem:[%s335 + $0x38] sm:$0xff] %vm760, %v1534
        %v1543 = vld [vmem:[%s356] sm:$0xff]
        %v1544 = vld [vmem:[%s356 + $0x8] sm:$0xff]
        %v1545 = vld [vmem:[%s356 + $0x10] sm:$0xff]
        %v1546 = vld [vmem:[%s356 + $0x18] sm:$0xff]
        %v1547 = vld [vmem:[%s356 + $0x20] sm:$0xff]
        %v1548 = vld [vmem:[%s356 + $0x28] sm:$0xff]
        %v1549 = vld [vmem:[%s356 + $0x30] sm:$0xff]
        %v1550 = vld [vmem:[%s356 + $0x38] sm:$0xff]
        %s1551 = smul.u32 %s397, 24
        %s1552 = smul.addr %s1551, 4
        %s1553 = scalar_lea.vmem %s3, %s1552
        %v1554 = vld [vmem:[%s1553] sm:$0xf]
        %v1555 = vld [vmem:[%s1553 + $0x4] sm:$0xf]
        %v1556 = vld [vmem:[%s1553 + $0x8] sm:$0xf]
        %v1557 = vld [vmem:[%s1553 + $0xc] sm:$0xf]
        %v1558 = vld [vmem:[%s1553 + $0x10] sm:$0xf]
        %v1559 = vld [vmem:[%s1553 + $0x14] sm:$0xf]
        %v1560 = vld [vmem:[%s1553 + $0x18] sm:$0xf]
        %v1561 = vld [vmem:[%s1553 + $0x1c] sm:$0xf]
        %v1562 = vld [vmem:[%s1553 + $0x20] sm:$0xf]
        %v1563 = vld [vmem:[%s1553 + $0x24] sm:$0xf]
        %v1564 = vld [vmem:[%s1553 + $0x28] sm:$0xf]
        %v1565 = vld [vmem:[%s1553 + $0x2c] sm:$0xf]
        %v1566 = vld [vmem:[%s1553 + $0x30] sm:$0xf]
        %v1567 = vld [vmem:[%s1553 + $0x34] sm:$0xf]
        %v1568 = vld [vmem:[%s1553 + $0x38] sm:$0xf]
        %v1569 = vld [vmem:[%s1553 + $0x3c] sm:$0xf]
        %v1570 = vld [vmem:[%s1553 + $0x40] sm:$0xf]
        %v1571 = vld [vmem:[%s1553 + $0x44] sm:$0xf]
        %v1572 = vld [vmem:[%s1553 + $0x48] sm:$0xf]
        %v1573 = vld [vmem:[%s1553 + $0x4c] sm:$0xf]
        %v1574 = vld [vmem:[%s1553 + $0x50] sm:$0xf]
        %v1575 = vld [vmem:[%s1553 + $0x54] sm:$0xf]
        %v1576 = vld [vmem:[%s1553 + $0x58] sm:$0xf]
        %v1577 = vld [vmem:[%s1553 + $0x5c] sm:$0xf]
        %v1586 = vunpack.c.l.b16 %v1543
        %v1587 = vunpack.c.h.b16 %v1543
        %v1588 = vunpack.c.l.b16 %v1544
        %v1589 = vunpack.c.h.b16 %v1544
        %v1590 = vunpack.c.l.b16 %v1545
        %v1591 = vunpack.c.h.b16 %v1545
        %v1592 = vunpack.c.l.b16 %v1546
        %v1593 = vunpack.c.h.b16 %v1546
        %v1594 = vunpack.c.l.b16 %v1547
        %v1595 = vunpack.c.h.b16 %v1547
        %v1596 = vunpack.c.l.b16 %v1548
        %v1597 = vunpack.c.h.b16 %v1548
        %v1598 = vunpack.c.l.b16 %v1549
        %v1599 = vunpack.c.h.b16 %v1549
        %v1600 = vunpack.c.l.b16 %v1550
        %v1601 = vunpack.c.h.b16 %v1550
        %v1602 = vpack.c.b16 %v1588, %v1586
        %v1603 = vpack.c.b16 %v1589, %v1587
        %v1604 = vpack.c.b16 %v1592, %v1590
        %v1605 = vpack.c.b16 %v1593, %v1591
        %v1606 = vpack.c.b16 %v1596, %v1594
        %v1607 = vpack.c.b16 %v1597, %v1595
        %v1608 = vpack.c.b16 %v1600, %v1598
        %v1609 = vpack.c.b16 %v1601, %v1599
        %v1638 = vunpack.c.l.b16 %v1554
        %v1639 = vunpack.c.l.b16 %v1555
        %v1640 = vunpack.c.l.b16 %v1556
        %v1641 = vunpack.c.l.b16 %v1557
        %v1642 = vunpack.c.l.b16 %v1558
        %v1643 = vunpack.c.l.b16 %v1559
        %v1644 = vunpack.c.l.b16 %v1560
        %v1645 = vunpack.c.l.b16 %v1561
        %v1646 = vunpack.c.l.b16 %v1562
        %v1647 = vunpack.c.l.b16 %v1563
        %v1648 = vunpack.c.l.b16 %v1564
        %v1649 = vunpack.c.l.b16 %v1565
        %v1650 = vunpack.c.l.b16 %v1566
        %v1651 = vunpack.c.l.b16 %v1567
        %v1652 = vunpack.c.l.b16 %v1568
        %v1653 = vunpack.c.l.b16 %v1569
        %v1654 = vunpack.c.l.b16 %v1570
        %v1655 = vunpack.c.l.b16 %v1571
        %v1656 = vunpack.c.l.b16 %v1572
        %v1657 = vunpack.c.l.b16 %v1573
        %v1658 = vunpack.c.l.b16 %v1574
        %v1659 = vunpack.c.l.b16 %v1575
        %v1660 = vunpack.c.l.b16 %v1576
        %v1661 = vunpack.c.l.b16 %v1577
        %v1662 = vpack.c.b16 %v1639, %v1638
        %v1663 = vpack.c.b16 %v1641, %v1640
        %v1664 = vpack.c.b16 %v1643, %v1642
        %v1665 = vpack.c.b16 %v1645, %v1644
        %v1666 = vpack.c.b16 %v1647, %v1646
        %v1667 = vpack.c.b16 %v1649, %v1648
        %v1668 = vpack.c.b16 %v1651, %v1650
        %v1669 = vpack.c.b16 %v1653, %v1652
        %v1670 = vpack.c.b16 %v1655, %v1654
        %v1671 = vpack.c.b16 %v1657, %v1656
        %v1672 = vpack.c.b16 %v1659, %v1658
        %v1673 = vpack.c.b16 %v1661, %v1660
        %v1687 = vsel %vm760, %v1603, 0
        %v1690 = vsel %vm760, %v1605, 0
        %v1693 = vsel %vm760, %v1607, 0
        %v1696 = vsel %vm760, %v1609, 0
        %1698 = vmatpush.bf16.msra.mxu0 %v1669
        %1699 = vmatpush.bf16.msra.mxu0 %v1668
        %1700 = vmatpush.bf16.msra.mxu0 %v1667
        %1701 = vmatpush.bf16.msra.mxu0 %v1666
        %1702 = vmatpush.bf16.msra.mxu0 %v1665
        %1703 = vmatpush.bf16.msra.mxu0 %v1664
        %1704 = vmatpush.bf16.msra.mxu0 %v1663
        %1705 = vmatpush.bf16.msra.mxu0 %v1662
        %1706 = vmatmul.bf16.gmra.mxu0 %v1602
        %v1707 = vpop.f32.mrf.mxu0
        %v1708 = vadd.f32 0.0, %v1707
        %v1709 = vpop.f32.mrf.mxu0
        %v1710 = vadd.f32 0.0, %v1709
        %1711 = vmatmul.bf16.gmra.mxu0 %v1604
        %v1712 = vpop.f32.mrf.mxu0
        %v1713 = vadd.f32 0.0, %v1712
        %v1714 = vpop.f32.mrf.mxu0
        %v1715 = vadd.f32 0.0, %v1714
        %1716 = vmatmul.bf16.gmra.mxu0 %v1606
        %v1717 = vpop.f32.mrf.mxu0
        %v1718 = vadd.f32 0.0, %v1717
        %v1719 = vpop.f32.mrf.mxu0
        %v1720 = vadd.f32 0.0, %v1719
        %1721 = vmatmul.bf16.gmra.mxu0 %v1608
        %v1722 = vpop.f32.mrf.mxu0
        %v1723 = vadd.f32 0.0, %v1722
        %v1724 = vpop.f32.mrf.mxu0
        %v1725 = vadd.f32 0.0, %v1724
        %1726 = vdwg.mxu0
        %1727 = vmatpush.bf16.msra.mxu0 0
        %1728 = vmatpush.bf16.msra.mxu0 0
        %1729 = vmatpush.bf16.msra.mxu0 0
        %1730 = vmatpush.bf16.msra.mxu0 0
        %1731 = vmatpush.bf16.msra.mxu0 %v1673
        %1732 = vmatpush.bf16.msra.mxu0 %v1672
        %1733 = vmatpush.bf16.msra.mxu0 %v1671
        %1734 = vmatpush.bf16.msra.mxu0 %v1670
        %1735 = vmatmul.bf16.gmra.mxu0 %v1687
        %v1736 = vpop.f32.mrf.mxu0
        %v1737 = vadd.f32 %v1708, %v1736
        %v1738 = vpop.f32.mrf.mxu0
        %v1739 = vadd.f32 %v1710, %v1738
        %1740 = vmatmul.bf16.gmra.mxu0 %v1690
        %v1741 = vpop.f32.mrf.mxu0
        %v1742 = vadd.f32 %v1713, %v1741
        %v1743 = vpop.f32.mrf.mxu0
        %v1744 = vadd.f32 %v1715, %v1743
        %1745 = vmatmul.bf16.gmra.mxu0 %v1693
        %v1746 = vpop.f32.mrf.mxu0
        %v1747 = vadd.f32 %v1718, %v1746
        %v1748 = vpop.f32.mrf.mxu0
        %v1749 = vadd.f32 %v1720, %v1748
        %1750 = vmatmul.bf16.gmra.mxu0 %v1696
        %v1751 = vpop.f32.mrf.mxu0
        %v1752 = vadd.f32 %v1723, %v1751
        %v1753 = vpop.f32.mrf.mxu0
        %v1754 = vadd.f32 %v1725, %v1753
        %1755 = vdwg.mxu0
        %v1756 = vld [vmem:[%s335] sm:$0xff]
        %v1757 = vld [vmem:[%s335 + $0x8] sm:$0xff]
        %v1758 = vld [vmem:[%s335 + $0x10] sm:$0xff]
        %v1759 = vld [vmem:[%s335 + $0x18] sm:$0xff]
        %v1760 = vld [vmem:[%s335 + $0x20] sm:$0xff]
        %v1761 = vld [vmem:[%s335 + $0x28] sm:$0xff]
        %v1762 = vld [vmem:[%s335 + $0x30] sm:$0xff]
        %v1763 = vld [vmem:[%s335 + $0x38] sm:$0xff]
        %v1764 = vadd.f32 %v1756, %v1737
        %v1765 = vadd.f32 %v1757, %v1739
        %v1766 = vadd.f32 %v1758, %v1742
        %v1767 = vadd.f32 %v1759, %v1744
        %v1768 = vadd.f32 %v1760, %v1747
        %v1769 = vadd.f32 %v1761, %v1749
        %v1770 = vadd.f32 %v1762, %v1752
        %v1771 = vadd.f32 %v1763, %v1754
        %1772 = vst.msk [vmem:[%s335] sm:$0xff] %vm760, %v1764
        %1773 = vst.msk [vmem:[%s335 + $0x8] sm:$0xff] %vm760, %v1765
        %1774 = vst.msk [vmem:[%s335 + $0x10] sm:$0xff] %vm760, %v1766
        %1775 = vst.msk [vmem:[%s335 + $0x18] sm:$0xff] %vm760, %v1767
        %1776 = vst.msk [vmem:[%s335 + $0x20] sm:$0xff] %vm760, %v1768
        %1777 = vst.msk [vmem:[%s335 + $0x28] sm:$0xff] %vm760, %v1769
        %1778 = vst.msk [vmem:[%s335 + $0x30] sm:$0xff] %vm760, %v1770
        %1779 = vst.msk [vmem:[%s335 + $0x38] sm:$0xff] %vm760, %v1771
        %v1780 = vld [vmem:[%s356 + $0x8] sm:$0xff]
        %v1781 = vld [vmem:[%s356 + $0x10] sm:$0xff]
        %v1782 = vld [vmem:[%s356 + $0x18] sm:$0xff]
        %v1783 = vld [vmem:[%s356 + $0x20] sm:$0xff]
        %v1784 = vld [vmem:[%s356 + $0x28] sm:$0xff]
        %v1785 = vld [vmem:[%s356 + $0x30] sm:$0xff]
        %v1786 = vld [vmem:[%s356 + $0x38] sm:$0xff]
        %v1787 = vld [vmem:[%s356 + $0x40] sm:$0xff]
        %s1788 = smul.u32 %s785, 24
        %s1789 = smul.addr %s1788, 4
        %s1790 = scalar_lea.vmem %s3, %s1789
        %v1791 = vld [vmem:[%s1790] sm:$0xf]
        %v1792 = vld [vmem:[%s1790 + $0x4] sm:$0xf]
        %v1793 = vld [vmem:[%s1790 + $0x8] sm:$0xf]
        %v1794 = vld [vmem:[%s1790 + $0xc] sm:$0xf]
        %v1795 = vld [vmem:[%s1790 + $0x10] sm:$0xf]
        %v1796 = vld [vmem:[%s1790 + $0x14] sm:$0xf]
        %v1797 = vld [vmem:[%s1790 + $0x18] sm:$0xf]
        %v1798 = vld [vmem:[%s1790 + $0x1c] sm:$0xf]
        %v1799 = vld [vmem:[%s1790 + $0x20] sm:$0xf]
        %v1800 = vld [vmem:[%s1790 + $0x24] sm:$0xf]
        %v1801 = vld [vmem:[%s1790 + $0x28] sm:$0xf]
        %v1802 = vld [vmem:[%s1790 + $0x2c] sm:$0xf]
        %v1803 = vld [vmem:[%s1790 + $0x30] sm:$0xf]
        %v1804 = vld [vmem:[%s1790 + $0x34] sm:$0xf]
        %v1805 = vld [vmem:[%s1790 + $0x38] sm:$0xf]
        %v1806 = vld [vmem:[%s1790 + $0x3c] sm:$0xf]
        %v1807 = vld [vmem:[%s1790 + $0x40] sm:$0xf]
        %v1808 = vld [vmem:[%s1790 + $0x44] sm:$0xf]
        %v1809 = vld [vmem:[%s1790 + $0x48] sm:$0xf]
        %v1810 = vld [vmem:[%s1790 + $0x4c] sm:$0xf]
        %v1811 = vld [vmem:[%s1790 + $0x50] sm:$0xf]
        %v1812 = vld [vmem:[%s1790 + $0x54] sm:$0xf]
        %v1813 = vld [vmem:[%s1790 + $0x58] sm:$0xf]
        %v1814 = vld [vmem:[%s1790 + $0x5c] sm:$0xf]
        %v1823 = vunpack.c.l.b16 %v1780
        %v1824 = vunpack.c.h.b16 %v1780
        %v1825 = vunpack.c.l.b16 %v1781
        %v1826 = vunpack.c.h.b16 %v1781
        %v1827 = vunpack.c.l.b16 %v1782
        %v1828 = vunpack.c.h.b16 %v1782
        %v1829 = vunpack.c.l.b16 %v1783
        %v1830 = vunpack.c.h.b16 %v1783
        %v1831 = vunpack.c.l.b16 %v1784
        %v1832 = vunpack.c.h.b16 %v1784
        %v1833 = vunpack.c.l.b16 %v1785
        %v1834 = vunpack.c.h.b16 %v1785
        %v1835 = vunpack.c.l.b16 %v1786
        %v1836 = vunpack.c.h.b16 %v1786
        %v1837 = vunpack.c.l.b16 %v1787
        %v1838 = vunpack.c.h.b16 %v1787
        %v1839 = vpack.c.b16 %v1825, %v1823
        %v1840 = vpack.c.b16 %v1826, %v1824
        %v1841 = vpack.c.b16 %v1829, %v1827
        %v1842 = vpack.c.b16 %v1830, %v1828
        %v1843 = vpack.c.b16 %v1833, %v1831
        %v1844 = vpack.c.b16 %v1834, %v1832
        %v1845 = vpack.c.b16 %v1837, %v1835
        %v1846 = vpack.c.b16 %v1838, %v1836
        %v1875 = vunpack.c.l.b16 %v1791
        %v1876 = vunpack.c.l.b16 %v1792
        %v1877 = vunpack.c.l.b16 %v1793
        %v1878 = vunpack.c.l.b16 %v1794
        %v1879 = vunpack.c.l.b16 %v1795
        %v1880 = vunpack.c.l.b16 %v1796
        %v1881 = vunpack.c.l.b16 %v1797
        %v1882 = vunpack.c.l.b16 %v1798
        %v1883 = vunpack.c.l.b16 %v1799
        %v1884 = vunpack.c.l.b16 %v1800
        %v1885 = vunpack.c.l.b16 %v1801
        %v1886 = vunpack.c.l.b16 %v1802
        %v1887 = vunpack.c.l.b16 %v1803
        %v1888 = vunpack.c.l.b16 %v1804
        %v1889 = vunpack.c.l.b16 %v1805
        %v1890 = vunpack.c.l.b16 %v1806
        %v1891 = vunpack.c.l.b16 %v1807
        %v1892 = vunpack.c.l.b16 %v1808
        %v1893 = vunpack.c.l.b16 %v1809
        %v1894 = vunpack.c.l.b16 %v1810
        %v1895 = vunpack.c.l.b16 %v1811
        %v1896 = vunpack.c.l.b16 %v1812
        %v1897 = vunpack.c.l.b16 %v1813
        %v1898 = vunpack.c.l.b16 %v1814
        %v1899 = vpack.c.b16 %v1876, %v1875
        %v1900 = vpack.c.b16 %v1878, %v1877
        %v1901 = vpack.c.b16 %v1880, %v1879
        %v1902 = vpack.c.b16 %v1882, %v1881
        %v1903 = vpack.c.b16 %v1884, %v1883
        %v1904 = vpack.c.b16 %v1886, %v1885
        %v1905 = vpack.c.b16 %v1888, %v1887
        %v1906 = vpack.c.b16 %v1890, %v1889
        %v1907 = vpack.c.b16 %v1892, %v1891
        %v1908 = vpack.c.b16 %v1894, %v1893
        %v1909 = vpack.c.b16 %v1896, %v1895
        %v1910 = vpack.c.b16 %v1898, %v1897
        %v1924 = vsel %vm760, %v1840, 0
        %v1927 = vsel %vm760, %v1842, 0
        %v1930 = vsel %vm760, %v1844, 0
        %v1933 = vsel %vm760, %v1846, 0
        %1935 = vmatpush.bf16.msra.mxu0 %v1906
        %1936 = vmatpush.bf16.msra.mxu0 %v1905
        %1937 = vmatpush.bf16.msra.mxu0 %v1904
        %1938 = vmatpush.bf16.msra.mxu0 %v1903
        %1939 = vmatpush.bf16.msra.mxu0 %v1902
        %1940 = vmatpush.bf16.msra.mxu0 %v1901
        %1941 = vmatpush.bf16.msra.mxu0 %v1900
        %1942 = vmatpush.bf16.msra.mxu0 %v1899
        %1943 = vmatmul.bf16.gmra.mxu0 %v1839
        %v1944 = vpop.f32.mrf.mxu0
        %v1945 = vadd.f32 0.0, %v1944
        %v1946 = vpop.f32.mrf.mxu0
        %v1947 = vadd.f32 0.0, %v1946
        %1948 = vmatmul.bf16.gmra.mxu0 %v1841
        %v1949 = vpop.f32.mrf.mxu0
        %v1950 = vadd.f32 0.0, %v1949
        %v1951 = vpop.f32.mrf.mxu0
        %v1952 = vadd.f32 0.0, %v1951
        %1953 = vmatmul.bf16.gmra.mxu0 %v1843
        %v1954 = vpop.f32.mrf.mxu0
        %v1955 = vadd.f32 0.0, %v1954
        %v1956 = vpop.f32.mrf.mxu0
        %v1957 = vadd.f32 0.0, %v1956
        %1958 = vmatmul.bf16.gmra.mxu0 %v1845
        %v1959 = vpop.f32.mrf.mxu0
        %v1960 = vadd.f32 0.0, %v1959
        %v1961 = vpop.f32.mrf.mxu0
        %v1962 = vadd.f32 0.0, %v1961
        %1963 = vdwg.mxu0
        %1964 = vmatpush.bf16.msra.mxu0 0
        %1965 = vmatpush.bf16.msra.mxu0 0
        %1966 = vmatpush.bf16.msra.mxu0 0
        %1967 = vmatpush.bf16.msra.mxu0 0
        %1968 = vmatpush.bf16.msra.mxu0 %v1910
        %1969 = vmatpush.bf16.msra.mxu0 %v1909
        %1970 = vmatpush.bf16.msra.mxu0 %v1908
        %1971 = vmatpush.bf16.msra.mxu0 %v1907
        %1972 = vmatmul.bf16.gmra.mxu0 %v1924
        %v1973 = vpop.f32.mrf.mxu0
        %v1974 = vadd.f32 %v1945, %v1973
        %v1975 = vpop.f32.mrf.mxu0
        %v1976 = vadd.f32 %v1947, %v1975
        %1977 = vmatmul.bf16.gmra.mxu0 %v1927
        %v1978 = vpop.f32.mrf.mxu0
        %v1979 = vadd.f32 %v1950, %v1978
        %v1980 = vpop.f32.mrf.mxu0
        %v1981 = vadd.f32 %v1952, %v1980
        %1982 = vmatmul.bf16.gmra.mxu0 %v1930
        %v1983 = vpop.f32.mrf.mxu0
        %v1984 = vadd.f32 %v1955, %v1983
        %v1985 = vpop.f32.mrf.mxu0
        %v1986 = vadd.f32 %v1957, %v1985
        %1987 = vmatmul.bf16.gmra.mxu0 %v1933
        %v1988 = vpop.f32.mrf.mxu0
        %v1989 = vadd.f32 %v1960, %v1988
        %v1990 = vpop.f32.mrf.mxu0
        %v1991 = vadd.f32 %v1962, %v1990
        %1992 = vdwg.mxu0
        %v1993 = vld [vmem:[%s335] sm:$0xff]
        %v1994 = vld [vmem:[%s335 + $0x8] sm:$0xff]
        %v1995 = vld [vmem:[%s335 + $0x10] sm:$0xff]
        %v1996 = vld [vmem:[%s335 + $0x18] sm:$0xff]
        %v1997 = vld [vmem:[%s335 + $0x20] sm:$0xff]
        %v1998 = vld [vmem:[%s335 + $0x28] sm:$0xff]
        %v1999 = vld [vmem:[%s335 + $0x30] sm:$0xff]
        %v2000 = vld [vmem:[%s335 + $0x38] sm:$0xff]
        %v2001 = vadd.f32 %v1993, %v1974
        %v2002 = vadd.f32 %v1994, %v1976
        %v2003 = vadd.f32 %v1995, %v1979
        %v2004 = vadd.f32 %v1996, %v1981
        %v2005 = vadd.f32 %v1997, %v1984
        %v2006 = vadd.f32 %v1998, %v1986
        %v2007 = vadd.f32 %v1999, %v1989
        %v2008 = vadd.f32 %v2000, %v1991
        %2009 = vst.msk [vmem:[%s335] sm:$0xff] %vm760, %v2001
        %2010 = vst.msk [vmem:[%s335 + $0x8] sm:$0xff] %vm760, %v2002
        %2011 = vst.msk [vmem:[%s335 + $0x10] sm:$0xff] %vm760, %v2003
        %2012 = vst.msk [vmem:[%s335 + $0x18] sm:$0xff] %vm760, %v2004
        %2013 = vst.msk [vmem:[%s335 + $0x20] sm:$0xff] %vm760, %v2005
        %2014 = vst.msk [vmem:[%s335 + $0x28] sm:$0xff] %vm760, %v2006
        %2015 = vst.msk [vmem:[%s335 + $0x30] sm:$0xff] %vm760, %v2007
        %2016 = vst.msk [vmem:[%s335 + $0x38] sm:$0xff] %vm760, %v2008
        %v2017 = vld [vmem:[%s356 + $0x10] sm:$0xff]
        %v2018 = vld [vmem:[%s356 + $0x18] sm:$0xff]
        %v2019 = vld [vmem:[%s356 + $0x20] sm:$0xff]
        %v2020 = vld [vmem:[%s356 + $0x28] sm:$0xff]
        %v2021 = vld [vmem:[%s356 + $0x30] sm:$0xff]
        %v2022 = vld [vmem:[%s356 + $0x38] sm:$0xff]
        %v2023 = vld [vmem:[%s356 + $0x40] sm:$0xff]
        %v2024 = vld [vmem:[%s356 + $0x48] sm:$0xff]
        %s2025 = smul.u32 %s1172, 24
        %s2026 = smul.addr %s2025, 4
        %s2027 = scalar_lea.vmem %s3, %s2026
        %v2028 = vld [vmem:[%s2027] sm:$0xf]
        %v2029 = vld [vmem:[%s2027 + $0x4] sm:$0xf]
        %v2030 = vld [vmem:[%s2027 + $0x8] sm:$0xf]
        %v2031 = vld [vmem:[%s2027 + $0xc] sm:$0xf]
        %v2032 = vld [vmem:[%s2027 + $0x10] sm:$0xf]
        %v2033 = vld [vmem:[%s2027 + $0x14] sm:$0xf]
        %v2034 = vld [vmem:[%s2027 + $0x18] sm:$0xf]
        %v2035 = vld [vmem:[%s2027 + $0x1c] sm:$0xf]
        %v2036 = vld [vmem:[%s2027 + $0x20] sm:$0xf]
        %v2037 = vld [vmem:[%s2027 + $0x24] sm:$0xf]
        %v2038 = vld [vmem:[%s2027 + $0x28] sm:$0xf]
        %v2039 = vld [vmem:[%s2027 + $0x2c] sm:$0xf]
        %v2040 = vld [vmem:[%s2027 + $0x30] sm:$0xf]
        %v2041 = vld [vmem:[%s2027 + $0x34] sm:$0xf]
        %v2042 = vld [vmem:[%s2027 + $0x38] sm:$0xf]
        %v2043 = vld [vmem:[%s2027 + $0x3c] sm:$0xf]
        %v2044 = vld [vmem:[%s2027 + $0x40] sm:$0xf]
        %v2045 = vld [vmem:[%s2027 + $0x44] sm:$0xf]
        %v2046 = vld [vmem:[%s2027 + $0x48] sm:$0xf]
        %v2047 = vld [vmem:[%s2027 + $0x4c] sm:$0xf]
        %v2048 = vld [vmem:[%s2027 + $0x50] sm:$0xf]
        %v2049 = vld [vmem:[%s2027 + $0x54] sm:$0xf]
        %v2050 = vld [vmem:[%s2027 + $0x58] sm:$0xf]
        %v2051 = vld [vmem:[%s2027 + $0x5c] sm:$0xf]
        %v2060 = vunpack.c.l.b16 %v2017
        %v2061 = vunpack.c.h.b16 %v2017
        %v2062 = vunpack.c.l.b16 %v2018
        %v2063 = vunpack.c.h.b16 %v2018
        %v2064 = vunpack.c.l.b16 %v2019
        %v2065 = vunpack.c.h.b16 %v2019
        %v2066 = vunpack.c.l.b16 %v2020
        %v2067 = vunpack.c.h.b16 %v2020
        %v2068 = vunpack.c.l.b16 %v2021
        %v2069 = vunpack.c.h.b16 %v2021
        %v2070 = vunpack.c.l.b16 %v2022
        %v2071 = vunpack.c.h.b16 %v2022
        %v2072 = vunpack.c.l.b16 %v2023
        %v2073 = vunpack.c.h.b16 %v2023
        %v2074 = vunpack.c.l.b16 %v2024
        %v2075 = vunpack.c.h.b16 %v2024
        %v2076 = vpack.c.b16 %v2062, %v2060
        %v2077 = vpack.c.b16 %v2063, %v2061
        %v2078 = vpack.c.b16 %v2066, %v2064
        %v2079 = vpack.c.b16 %v2067, %v2065
        %v2080 = vpack.c.b16 %v2070, %v2068
        %v2081 = vpack.c.b16 %v2071, %v2069
        %v2082 = vpack.c.b16 %v2074, %v2072
        %v2083 = vpack.c.b16 %v2075, %v2073
        %v2112 = vunpack.c.l.b16 %v2028
        %v2113 = vunpack.c.l.b16 %v2029
        %v2114 = vunpack.c.l.b16 %v2030
        %v2115 = vunpack.c.l.b16 %v2031
        %v2116 = vunpack.c.l.b16 %v2032
        %v2117 = vunpack.c.l.b16 %v2033
        %v2118 = vunpack.c.l.b16 %v2034
        %v2119 = vunpack.c.l.b16 %v2035
        %v2120 = vunpack.c.l.b16 %v2036
        %v2121 = vunpack.c.l.b16 %v2037
        %v2122 = vunpack.c.l.b16 %v2038
        %v2123 = vunpack.c.l.b16 %v2039
        %v2124 = vunpack.c.l.b16 %v2040
        %v2125 = vunpack.c.l.b16 %v2041
        %v2126 = vunpack.c.l.b16 %v2042
        %v2127 = vunpack.c.l.b16 %v2043
        %v2128 = vunpack.c.l.b16 %v2044
        %v2129 = vunpack.c.l.b16 %v2045
        %v2130 = vunpack.c.l.b16 %v2046
        %v2131 = vunpack.c.l.b16 %v2047
        %v2132 = vunpack.c.l.b16 %v2048
        %v2133 = vunpack.c.l.b16 %v2049
        %v2134 = vunpack.c.l.b16 %v2050
        %v2135 = vunpack.c.l.b16 %v2051
        %v2136 = vpack.c.b16 %v2113, %v2112
        %v2137 = vpack.c.b16 %v2115, %v2114
        %v2138 = vpack.c.b16 %v2117, %v2116
        %v2139 = vpack.c.b16 %v2119, %v2118
        %v2140 = vpack.c.b16 %v2121, %v2120
        %v2141 = vpack.c.b16 %v2123, %v2122
        %v2142 = vpack.c.b16 %v2125, %v2124
        %v2143 = vpack.c.b16 %v2127, %v2126
        %v2144 = vpack.c.b16 %v2129, %v2128
        %v2145 = vpack.c.b16 %v2131, %v2130
        %v2146 = vpack.c.b16 %v2133, %v2132
        %v2147 = vpack.c.b16 %v2135, %v2134
        %v2161 = vsel %vm760, %v2077, 0
        %v2164 = vsel %vm760, %v2079, 0
        %v2167 = vsel %vm760, %v2081, 0
        %v2170 = vsel %vm760, %v2083, 0
        %2172 = vmatpush.bf16.msra.mxu0 %v2143
        %2173 = vmatpush.bf16.msra.mxu0 %v2142
        %2174 = vmatpush.bf16.msra.mxu0 %v2141
        %2175 = vmatpush.bf16.msra.mxu0 %v2140
        %2176 = vmatpush.bf16.msra.mxu0 %v2139
        %2177 = vmatpush.bf16.msra.mxu0 %v2138
        %2178 = vmatpush.bf16.msra.mxu0 %v2137
        %2179 = vmatpush.bf16.msra.mxu0 %v2136
        %2180 = vmatmul.bf16.gmra.mxu0 %v2076
        %v2181 = vpop.f32.mrf.mxu0
        %v2182 = vadd.f32 0.0, %v2181
        %v2183 = vpop.f32.mrf.mxu0
        %v2184 = vadd.f32 0.0, %v2183
        %2185 = vmatmul.bf16.gmra.mxu0 %v2078
        %v2186 = vpop.f32.mrf.mxu0
        %v2187 = vadd.f32 0.0, %v2186
        %v2188 = vpop.f32.mrf.mxu0
        %v2189 = vadd.f32 0.0, %v2188
        %2190 = vmatmul.bf16.gmra.mxu0 %v2080
        %v2191 = vpop.f32.mrf.mxu0
        %v2192 = vadd.f32 0.0, %v2191
        %v2193 = vpop.f32.mrf.mxu0
        %v2194 = vadd.f32 0.0, %v2193
        %2195 = vmatmul.bf16.gmra.mxu0 %v2082
        %v2196 = vpop.f32.mrf.mxu0
        %v2197 = vadd.f32 0.0, %v2196
        %v2198 = vpop.f32.mrf.mxu0
        %v2199 = vadd.f32 0.0, %v2198
        %2200 = vdwg.mxu0
        %2201 = vmatpush.bf16.msra.mxu0 0
        %2202 = vmatpush.bf16.msra.mxu0 0
        %2203 = vmatpush.bf16.msra.mxu0 0
        %2204 = vmatpush.bf16.msra.mxu0 0
        %2205 = vmatpush.bf16.msra.mxu0 %v2147
        %2206 = vmatpush.bf16.msra.mxu0 %v2146
        %2207 = vmatpush.bf16.msra.mxu0 %v2145
        %2208 = vmatpush.bf16.msra.mxu0 %v2144
        %2209 = vmatmul.bf16.gmra.mxu0 %v2161
        %v2210 = vpop.f32.mrf.mxu0
        %v2211 = vadd.f32 %v2182, %v2210
        %v2212 = vpop.f32.mrf.mxu0
        %v2213 = vadd.f32 %v2184, %v2212
        %2214 = vmatmul.bf16.gmra.mxu0 %v2164
        %v2215 = vpop.f32.mrf.mxu0
        %v2216 = vadd.f32 %v2187, %v2215
        %v2217 = vpop.f32.mrf.mxu0
        %v2218 = vadd.f32 %v2189, %v2217
        %2219 = vmatmul.bf16.gmra.mxu0 %v2167
        %v2220 = vpop.f32.mrf.mxu0
        %v2221 = vadd.f32 %v2192, %v2220
        %v2222 = vpop.f32.mrf.mxu0
        %v2223 = vadd.f32 %v2194, %v2222
        %2224 = vmatmul.bf16.gmra.mxu0 %v2170
        %v2225 = vpop.f32.mrf.mxu0
        %v2226 = vadd.f32 %v2197, %v2225
        %v2227 = vpop.f32.mrf.mxu0
        %v2228 = vadd.f32 %v2199, %v2227
        %2229 = vdwg.mxu0
        %v2230 = vld [vmem:[%s335] sm:$0xff]
        %v2231 = vld [vmem:[%s335 + $0x8] sm:$0xff]
        %v2232 = vld [vmem:[%s335 + $0x10] sm:$0xff]
        %v2233 = vld [vmem:[%s335 + $0x18] sm:$0xff]
        %v2234 = vld [vmem:[%s335 + $0x20] sm:$0xff]
        %v2235 = vld [vmem:[%s335 + $0x28] sm:$0xff]
        %v2236 = vld [vmem:[%s335 + $0x30] sm:$0xff]
        %v2237 = vld [vmem:[%s335 + $0x38] sm:$0xff]
        %v2238 = vadd.f32 %v2230, %v2211
        %v2239 = vadd.f32 %v2231, %v2213
        %v2240 = vadd.f32 %v2232, %v2216
        %v2241 = vadd.f32 %v2233, %v2218
        %v2242 = vadd.f32 %v2234, %v2221
        %v2243 = vadd.f32 %v2235, %v2223
        %v2244 = vadd.f32 %v2236, %v2226
        %v2245 = vadd.f32 %v2237, %v2228
        %2246 = vst.msk [vmem:[%s335] sm:$0xff] %vm760, %v2238
        %2247 = vst.msk [vmem:[%s335 + $0x8] sm:$0xff] %vm760, %v2239
        %2248 = vst.msk [vmem:[%s335 + $0x10] sm:$0xff] %vm760, %v2240
        %2249 = vst.msk [vmem:[%s335 + $0x18] sm:$0xff] %vm760, %v2241
        %2250 = vst.msk [vmem:[%s335 + $0x20] sm:$0xff] %vm760, %v2242
        %2251 = vst.msk [vmem:[%s335 + $0x28] sm:$0xff] %vm760, %v2243
        %2252 = vst.msk [vmem:[%s335 + $0x30] sm:$0xff] %vm760, %v2244
        %2253 = vst.msk [vmem:[%s335 + $0x38] sm:$0xff] %vm760, %v2245
        %p2254 = scmp.eq.s32.totalorder %s27, 2
        // Predicated region
        $region49: #{motion_encoder_3d.7} parent=43 // pred_check
          %p2255 = pneg %p2254
        $region50: #{motion_encoder_3d.7} parent=43 // pred_check_branch
          %2257 = sbr.rel (%p2255) target = $region52
        $region51: #{motion_encoder_3d.7} parent=43 // pred_region
          %v2258 = vld [vmem:[%s335] sm:$0xff]
          %v2259 = vld [vmem:[%s335 + $0x8] sm:$0xff]
          %v2260 = vld [vmem:[%s335 + $0x10] sm:$0xff]
          %v2261 = vld [vmem:[%s335 + $0x18] sm:$0xff]
          %v2262 = vld [vmem:[%s335 + $0x20] sm:$0xff]
          %v2263 = vld [vmem:[%s335 + $0x28] sm:$0xff]
          %v2264 = vld [vmem:[%s335 + $0x30] sm:$0xff]
          %v2265 = vld [vmem:[%s335 + $0x38] sm:$0xff]
          %v2266 = vld [vmem:[%s4] sm:$0x1]
          %v2268 = vperm.slane %v2266, 0
          %v2270 = vadd.f32 %v2258, %v2268
          %v2271 = vadd.f32 %v2259, %v2268
          %v2272 = vadd.f32 %v2260, %v2268
          %v2273 = vadd.f32 %v2261, %v2268
          %v2274 = vadd.f32 %v2262, %v2268
          %v2275 = vadd.f32 %v2263, %v2268
          %v2276 = vadd.f32 %v2264, %v2268
          %v2277 = vadd.f32 %v2265, %v2268
          %v2278 = vmax.f32 %v2270, 0.0
          %v2279 = vmax.f32 %v2271, 0.0
          %v2280 = vmax.f32 %v2272, 0.0
          %v2281 = vmax.f32 %v2273, 0.0
          %v2282 = vmax.f32 %v2274, 0.0
          %v2283 = vmax.f32 %v2275, 0.0
          %v2284 = vmax.f32 %v2276, 0.0
          %v2285 = vmax.f32 %v2277, 0.0
          %v2286 = vld [vmem:[%s366] sm:$0xff]
          %v2287 = vld [vmem:[%s366 + $0x8] sm:$0xff]
          %v2288 = vld [vmem:[%s366 + $0x10] sm:$0xff]
          %v2289 = vld [vmem:[%s366 + $0x18] sm:$0xff]
          %v2290 = vld [vmem:[%s366 + $0x20] sm:$0xff]
          %v2291 = vld [vmem:[%s366 + $0x28] sm:$0xff]
          %v2292 = vld [vmem:[%s366 + $0x30] sm:$0xff]
          %v2293 = vld [vmem:[%s366 + $0x38] sm:$0xff]
          %2302 = vrot.lane.b32.xlu0 %v2286, 61
          %v2303 = vpop.permute.xlu0 %2302
          %2304 = vrot.lane.b32.xlu0 %v2287, 61
          %v2305 = vpop.permute.xlu0 %2304
          %2306 = vrot.lane.b32.xlu0 %v2288, 61
          %v2307 = vpop.permute.xlu0 %2306
          %2308 = vrot.lane.b32.xlu0 %v2289, 61
          %v2309 = vpop.permute.xlu0 %2308
          %2310 = vrot.lane.b32.xlu0 %v2290, 61
          %v2311 = vpop.permute.xlu0 %2310
          %2312 = vrot.lane.b32.xlu0 %v2291, 61
          %v2313 = vpop.permute.xlu0 %2312
          %2314 = vrot.lane.b32.xlu0 %v2292, 61
          %v2315 = vpop.permute.xlu0 %2314
          %2316 = vrot.lane.b32.xlu0 %v2293, 61
          %v2317 = vpop.permute.xlu0 %2316
          %vm2326 = vcmask 498688
          %v2327 = vsel %vm2326, %v2278, %v2303
          %v2328 = vsel %vm2326, %v2279, %v2305
          %v2329 = vsel %vm2326, %v2280, %v2307
          %v2330 = vsel %vm2326, %v2281, %v2309
          %v2331 = vsel %vm2326, %v2282, %v2311
          %v2332 = vsel %vm2326, %v2283, %v2313
          %v2333 = vsel %vm2326, %v2284, %v2315
          %v2334 = vsel %vm2326, %v2285, %v2317
          %2335 = vst.msk [vmem:[%s335] sm:$0xff] %vm760, %v2327
          %2336 = vst.msk [vmem:[%s335 + $0x8] sm:$0xff] %vm760, %v2328
          %2337 = vst.msk [vmem:[%s335 + $0x10] sm:$0xff] %vm760, %v2329
          %2338 = vst.msk [vmem:[%s335 + $0x18] sm:$0xff] %vm760, %v2330
          %2339 = vst.msk [vmem:[%s335 + $0x20] sm:$0xff] %vm760, %v2331
          %2340 = vst.msk [vmem:[%s335 + $0x28] sm:$0xff] %vm760, %v2332
          %2341 = vst.msk [vmem:[%s335 + $0x30] sm:$0xff] %vm760, %v2333
          %2342 = vst.msk [vmem:[%s335 + $0x38] sm:$0xff] %vm760, %v2334
        $region52: #{motion_encoder_3d.7} parent=43 // pred_fallthru
          _
        %s2343 = sand.u32 %s200, 1
        %s2344 = scalar_lea.sflag [#allocation3], %s2343
        %s2345 = sand.u32 %s200, 1
        %s2346 = smul.addr %s2345, 64
        %s2347 = scalar_lea.vmem [#allocation2], %s2346
        // Predicated region
        $region53: #{motion_encoder_3d.7} parent=43 // pred_check
          %p2348 = pneg %p210
        $region54: #{motion_encoder_3d.7} parent=43 // pred_check_branch
          %2350 = sbr.rel (%p2348) target = $region56
        $region55: #{motion_encoder_3d.7} parent=43 // pred_region
          %2352 = vsyncadd %s2344, 0
          %s2353 = smul.addr %s26, 8
          %s2354 = smul.addr %s25, 32
          %s2355 = sadd.s32 %s2353, %s2354
          %s2356 = smul.addr %s2355, 8
          %s2357 = scalar_lea.hbm %s6, %s2356
          %s2358 = sshll.u32 %s2347, 4
          %s2359 = int_to_ptr.vmem [resolvable:$true] %s2358
          %s2360 = sshll.u32 %s2357, 4
          %s2361 = int_to_ptr.hbm [resolvable:$true] %s2360
          %2366 = dma.vmem_to_hbm [thread:$0]  %s2359, 1024, %s2361, %s2344, 128, 128, 8
        $region56: #{motion_encoder_3d.7} parent=43 // pred_fallthru
          _
      $region44: #{motion_encoder_3d.7} parent=5 // pred_fallthru
        _
      %p2367 = scmp.le.s32.totalorder 2, %s15
      // Predicated region
      $region57: #{motion_encoder_3d.7} parent=5 // pred_check
        %p2368 = pneg %p2367
      $region58: #{motion_encoder_3d.7} parent=5 // pred_check_branch
        %2370 = sbr.rel (%p2368) target = $region60
      $region59: #{motion_encoder_3d.7} parent=5 // pred_region
        %s2371 = ssub.s32 %s15, 2
        // Predicated region
        $region61: #{motion_encoder_3d.7} parent=59 // pred_check
          %p2372 = pneg %p216
        $region62: #{motion_encoder_3d.7} parent=59 // pred_check_branch
          %2374 = sbr.rel (%p2372) target = $region64
        $region63: #{motion_encoder_3d.7} parent=59 // pred_region
          %s2375 = sand.u32 %s201, 1
          %s2376 = scalar_lea.sflag [#allocation3], %s2375
          %s2377 = sand.u32 %s201, 1
          %s2378 = smul.addr %s2377, 64
          %s2379 = scalar_lea.vmem [#allocation2], %s2378
          %2381 = dma.done %s2376, 1024
        $region64: #{motion_encoder_3d.7} parent=59 // pred_fallthru
          _
      $region60: #{motion_encoder_3d.7} parent=5 // pred_fallthru
        _
    $region6: #{motion_encoder_3d.7} parent=1 // loop_footer
      %s19 = sadd.s32 1, %s15
    $region7: #{motion_encoder_3d.7} parent=1 // loop_footer_branch
      %14 = sbr.rel target = $region3
    $region8: #{motion_encoder_3d.7} parent=1 // loop_exit
      _
    %2382 = vsyncpa [#allocation3], 1
    %s2383 = scalar_lea.sflag [#allocation3], 1
    %2384 = vsyncpa %s2383, 1

</llo_original>
